<compile_context>
chip_gen: v7x
topology: tpu7x:2x2x1
jax: 0.10.0
libtpu: 0.0.40
codegen_flags: <defaults>
</compile_context>

<pallas_src>
import functools

import jax
import jax.numpy as jnp
from jax import lax
from jax.experimental import pallas as pl
from jax.experimental.pallas import tpu as pltpu

_LN_EPS = 1e-5                    # torch.nn.LayerNorm default eps
_INV_SQRT2 = 0.7071067811865476   # hoisted 1/sqrt(2) for exact-erf GELU


def _round_up(a, b):
    return pl.cdiv(a, b) * b


def _const_spec(shape):
    """Grid-invariant 2-D parameter: constant index map, single-buffered so it
    stays resident in VMEM exactly once (no double-buffering of weights)."""
    return pl.BlockSpec(shape, lambda i: (0, 0), pipeline_mode=pl.Buffered(1))


def _vmem_limit_bytes(resident_bytes, per_step_stream_bytes, f32_temp_bytes):
    """Scoped-VMEM limit from the actual footprint (+30% and 4 MiB headroom)."""
    need = resident_bytes + 2 * per_step_stream_bytes + f32_temp_bytes
    need = int(need * 1.3) + (4 << 20)
    return int(min(96 << 20, max(32 << 20, need)))


def _layernorm_f32(x_f32, gamma_f32, beta_f32):
    mean = jnp.mean(x_f32, axis=-1, keepdims=True)
    var = jnp.mean(jnp.square(x_f32 - mean), axis=-1, keepdims=True)
    return (x_f32 - mean) * lax.rsqrt(var + _LN_EPS) * gamma_f32 + beta_f32


def _fast_recip(x):
    # EUP approximate reciprocal + one Newton step -> ~f32 accuracy without a
    # VALU-expanded exact divide.
    r = pl.reciprocal(x, approx=True)
    return r * (2.0 - x * r)


# --------------------------------------------------------------------------
# Kernel 1: LN1 + multi-head attention + proj + residual  (one batch / step)
# --------------------------------------------------------------------------
def _attn_block_kernel(x_ref, g1_ref, bt1_ref, wqkv_ref, wproj_ref, bproj_ref,
                       o_ref, *, num_heads):
    N, C = x_ref.shape
    hd = C // num_heads
    scale = hd ** -0.5
    dt = wqkv_ref.dtype                      # native MXU dtype (f32 or bf16)

    x = x_ref[...]                           # (N, C) -- batch dim squeezed
    xf = x.astype(jnp.float32)

    ln = _layernorm_f32(xf,
                        g1_ref[...].astype(jnp.float32),
                        bt1_ref[...].astype(jnp.float32)).astype(dt)

    # qkv = LN(x) @ Wqkv   (qkv_bias=False in this Block)
    qkv = jnp.dot(ln, wqkv_ref[...],
                  preferred_element_type=jnp.float32).astype(dt)   # (N, 3C)

    # Per-head softmax attention; the per-head outputs are concatenated along
    # the lane axis and projected with ONE (N,C) @ (C,C) matmul so the MXU sees
    # a full-width K = C contraction instead of num_heads narrow K = hd matmuls
    # plus VALU accumulation.
    head_outs = []
    for h in range(num_heads):
        q = qkv[:, h * hd:(h + 1) * hd]
        k = qkv[:, C + h * hd: C + (h + 1) * hd]
        v = qkv[:, 2 * C + h * hd: 2 * C + (h + 1) * hd]

        s = lax.dot_general(q, k, (((1,), (1,)), ((), ())),
                            preferred_element_type=jnp.float32) * scale  # (N,N)
        s = s - jnp.max(s, axis=-1, keepdims=True)
        p = jnp.exp(s)
        p = p * _fast_recip(jnp.sum(p, axis=-1, keepdims=True))
        head_outs.append(jnp.dot(p.astype(dt), v,
                                 preferred_element_type=jnp.float32))    # (N,hd)

    attn_out = jnp.concatenate(head_outs, axis=-1).astype(dt)            # (N,C)
    proj = jnp.dot(attn_out, wproj_ref[...],
                   preferred_element_type=jnp.float32)
    proj = proj + bproj_ref[...].astype(jnp.float32)

    o_ref[...] = (xf + proj).astype(o_ref.dtype)                # residual add


def _attention_residual(x, gamma1, beta1, wqkv_t, wproj_t, bproj, *, num_heads):
    B, N, C = x.shape
    act_sz = jnp.dtype(x.dtype).itemsize
    w_sz = jnp.dtype(wqkv_t.dtype).itemsize

    resident = (w_sz * (wqkv_t.size + wproj_t.size)
                + act_sz * (bproj.size + gamma1.size + beta1.size))
    per_step_stream = act_sz * 2 * N * C                   # x tile in + out tile
    f32_temps = 4 * N * (3 * C + N + 3 * C)                # qkv, scores, ln/out
    vmem_limit = _vmem_limit_bytes(resident, per_step_stream, f32_temps)

    flops = 2 * B * N * C * (3 * C) + 4 * B * N * N * C + 2 * B * N * C * C
    cost = pl.CostEstimate(
        flops=int(flops),
        transcendentals=int(B * num_heads * N * N),
        bytes_accessed=int(act_sz * 2 * B * N * C
                           + w_sz * (wqkv_t.size + wproj_t.size)
                           + act_sz * (bproj.size + gamma1.size + beta1.size)))

    kernel = functools.partial(_attn_block_kernel, num_heads=num_heads)
    return pl.pallas_call(
        kernel,
        out_shape=jax.ShapeDtypeStruct((B, N, C), x.dtype),
        grid_spec=pltpu.PrefetchScalarGridSpec(
            num_scalar_prefetch=0,
            grid=(B,),
            in_specs=[
                pl.BlockSpec((pl.Squeezed(), N, C), lambda b: (b, 0, 0)),
                _const_spec((1, C)),            # gamma1
                _const_spec((1, C)),            # beta1
                _const_spec((C, 3 * C)),        # Wqkv  (in, out)
                _const_spec((C, C)),            # Wproj (in, out)
                _const_spec((1, C)),            # proj bias
            ],
            out_specs=pl.BlockSpec((pl.Squeezed(), N, C), lambda b: (b, 0, 0)),
        ),
        compiler_params=pltpu.CompilerParams(
            dimension_semantics=("parallel",),
            vmem_limit_bytes=vmem_limit),
        cost_estimate=cost,
    )(x, gamma1, beta1, wqkv_t, wproj_t, bproj)


# --------------------------------------------------------------------------
# Kernel 2: LN2 + fc1 + GELU + fc2 + residual  (tm token rows / step)
# --------------------------------------------------------------------------
def _mlp_block_kernel(y_ref, g2_ref, bt2_ref, w1_ref, b1_ref, w2_ref, b2_ref,
                      o_ref):
    yf = y_ref[...].astype(jnp.float32)                   # (tm, C)

    ln = _layernorm_f32(yf,
                        g2_ref[...].astype(jnp.float32),
                        bt2_ref[...].astype(jnp.float32)).astype(w1_ref.dtype)

    h = jnp.dot(ln, w1_ref[...], preferred_element_type=jnp.float32)
    h = h + b1_ref[...].astype(jnp.float32)
    # exact GELU (erf form) -- matches PyTorch nn.GELU default
    h = 0.5 * h * (1.0 + lax.erf(h * _INV_SQRT2))
    h = h.astype(w2_ref.dtype)

    out = jnp.dot(h, w2_ref[...], preferred_element_type=jnp.float32)
    out = out + b2_ref[...].astype(jnp.float32)

    o_ref[...] = (yf + out).astype(o_ref.dtype)           # residual add


def _mlp_residual(y, gamma2, beta2, w1_t, b1, w2_t, b2, *, tm=256):
    B, N, C = y.shape
    HID = w1_t.shape[1]
    M = B * N
    assert tm % 8 == 0, "row tile must be a multiple of the sublane count (8)"

    # No host-side pad/slice: tile rows directly; when tm does not divide M the
    # last grid block is partial (reads of the pad region feed only discarded
    # rows; stores outside the array are masked by Pallas).
    tm_eff = min(tm, _round_up(M, 8))
    grid_m = pl.cdiv(M, tm_eff)

    y2 = y.reshape(M, C)

    act_sz = jnp.dtype(y.dtype).itemsize
    w_sz = jnp.dtype(w1_t.dtype).itemsize
    resident = (w_sz * (w1_t.size + w2_t.size)
                + act_sz * (b1.size + b2.size + gamma2.size + beta2.size))
    per_step_stream = act_sz * 2 * tm_eff * C
    f32_temps = 4 * tm_eff * (2 * HID + 2 * C)
    vmem_limit = _vmem_limit_bytes(resident, per_step_stream, f32_temps)

    cost = pl.CostEstimate(
        flops=int(4 * M * C * HID),
        transcendentals=int(M * HID),
        bytes_accessed=int(act_sz * 2 * M * C + w_sz * (w1_t.size + w2_t.size)
                           + act_sz * (b1.size + b2.size + 2 * C)))

    out2 = pl.pallas_call(
        _mlp_block_kernel,
        out_shape=jax.ShapeDtypeStruct((M, C), y.dtype),
        grid_spec=pltpu.PrefetchScalarGridSpec(
            num_scalar_prefetch=0,
            grid=(grid_m,),
            in_specs=[
                pl.BlockSpec((tm_eff, C), lambda i: (i, 0)),
                _const_spec((1, C)),            # gamma2
                _const_spec((1, C)),            # beta2
                _const_spec((C, HID)),          # fc1 weight (in, out)
                _const_spec((1, HID)),          # fc1 bias
                _const_spec((HID, C)),          # fc2 weight (in, out)
                _const_spec((1, C)),            # fc2 bias
            ],
            out_specs=pl.BlockSpec((tm_eff, C), lambda i: (i, 0)),
        ),
        compiler_params=pltpu.CompilerParams(
            dimension_semantics=("parallel",),
            vmem_limit_bytes=vmem_limit),
        cost_estimate=cost,
    )(y2, gamma2, beta2, w1_t, b1, w2_t, b2)

    return out2.reshape(B, N, C)


# --------------------------------------------------------------------------
# Block forward + parameter construction (weights pre-transposed once)
# --------------------------------------------------------------------------
def vit_block_forward(x, params, *, num_heads, tm=256):
    """x: (B, N, C).  params: dict with weights already in (in, out) layout."""
    assert x.shape[-1] % num_heads == 0
    y = _attention_residual(x, params["gamma1"], params["beta1"],
                            params["wqkv_t"], params["wproj_t"],
                            params["bproj"], num_heads=num_heads)
    return _mlp_residual(y, params["gamma2"], params["beta2"],
                         params["w1_t"], params["b1"],
                         params["w2_t"], params["b2"], tm=tm)


def init_block_params(key, dim, mlp_ratio=4.0, dtype=jnp.float32):
    """Builds Block parameters directly in (in, out) layout (transpose of the
    PyTorch (out, in) Linear layout), so the forward never pays a transpose.
    Pass dtype=jnp.bfloat16 on v6e/v7x to halve weight VMEM/HBM traffic and
    reach bf16 MXU peak (accumulation stays f32)."""
    hid = int(dim * mlp_ratio)
    ks = jax.random.split(key, 11)
    s = 0.02
    n = jax.random.normal
    return dict(
        gamma1=(1.0 + s * n(ks[0], (1, dim))).astype(dtype),
        beta1=(s * n(ks[1], (1, dim))).astype(dtype),
        wqkv_t=(s * n(ks[2], (dim, 3 * dim))).astype(dtype),   # qkv_bias=False
        wproj_t=(s * n(ks[3], (dim, dim))).astype(dtype),
        bproj=(s * n(ks[4], (1, dim))).astype(dtype),
        gamma2=(1.0 + s * n(ks[5], (1, dim))).astype(dtype),
        beta2=(s * n(ks[6], (1, dim))).astype(dtype),
        w1_t=(s * n(ks[7], (dim, hid))).astype(dtype),
        b1=(s * n(ks[8], (1, hid))).astype(dtype),
        w2_t=(s * n(ks[9], (hid, dim))).astype(dtype),
        b2=(s * n(ks[10], (1, dim))).astype(dtype),
    )


# --------------------------------------------------------------------------
# Pure-JAX reference (same math as the PyTorch Block forward)
# --------------------------------------------------------------------------
def _reference_block(x, p, num_heads):
    B, N, C = x.shape
    hd = C // num_heads

    def ln(z, g, b):
        m = jnp.mean(z, axis=-1, keepdims=True)
        v = jnp.mean(jnp.square(z - m), axis=-1, keepdims=True)
        return (z - m) * lax.rsqrt(v + _LN_EPS) * g + b

    h1 = ln(x, p["gamma1"], p["beta1"])
    qkv = h1 @ p["wqkv_t"]
    q, k, v = jnp.split(qkv, 3, axis=-1)

    def heads(t):
        return t.reshape(B, N, num_heads, hd).transpose(0, 2, 1, 3)

    q, k, v = heads(q), heads(k), heads(v)
    attn = jax.nn.softmax((q @ jnp.swapaxes(k, -1, -2)) * (hd ** -0.5), axis=-1)
    ao = (attn @ v).transpose(0, 2, 1, 3).reshape(B, N, C)
    y = x + (ao @ p["wproj_t"] + p["bproj"])

    h2 = ln(y, p["gamma2"], p["beta2"])
    h = h2 @ p["w1_t"] + p["b1"]
    h = 0.5 * h * (1.0 + lax.erf(h * _INV_SQRT2))
    return y + (h @ p["w2_t"] + p["b2"])


if __name__ == "__main__":
    # Small but lane-dense ViT-like shapes: B=2 images, N=128 tokens,
    # dim=128, 4 heads (head_dim=32), mlp hidden = 512.
    B, N, DIM, HEADS = 2, 128, 128, 4

    key = jax.random.PRNGKey(0)
    kx, kp = jax.random.split(key)
    x = jax.random.normal(kx, (B, N, DIM), dtype=jnp.float32)
    params = init_block_params(kp, DIM, mlp_ratio=4.0, dtype=jnp.float32)

    fwd = jax.jit(functools.partial(vit_block_forward, num_heads=HEADS, tm=256))
    out = jax.block_until_ready(fwd(x, params))

    ref = _reference_block(x, params, HEADS)
    assert out.shape == (B, N, DIM)
    assert bool(jnp.allclose(out, ref, atol=2e-3, rtol=2e-3)), \
        "mismatch vs reference"

    print("KERNEL_OK")
</pallas_src>

<mosaic_0001>
module attributes {stable_mosaic.version = 11 : i64} {
  func.func @_mlp_block_kernel(%arg0: i32, %arg1: memref<256x128xf32, #tpu.memory_space<vmem>>, %arg2: memref<1x128xf32, #tpu.memory_space<vmem>>, %arg3: memref<1x128xf32, #tpu.memory_space<vmem>>, %arg4: memref<128x512xf32, #tpu.memory_space<vmem>>, %arg5: memref<1x512xf32, #tpu.memory_space<vmem>>, %arg6: memref<512x128xf32, #tpu.memory_space<vmem>>, %arg7: memref<1x128xf32, #tpu.memory_space<vmem>>, %arg8: memref<256x128xf32, #tpu.memory_space<vmem>>) attributes {dimension_semantics = [#tpu.dimension_semantics<parallel>], iteration_bounds = array<i64: 1>, scalar_prefetch = 0 : i64, scratch_operands = 0 : i64, tpu.core_type = #tpu.core_type<tc>, window_params = [{transform_indices = @transform_0, window_bounds = array<i64: 256, 128>}, {pipeline_mode = #tpu.pipeline_mode<synchronous>, transform_indices = @transform_1, window_bounds = array<i64: 1, 128>}, {pipeline_mode = #tpu.pipeline_mode<synchronous>, transform_indices = @transform_2, window_bounds = array<i64: 1, 128>}, {pipeline_mode = #tpu.pipeline_mode<synchronous>, transform_indices = @transform_3, window_bounds = array<i64: 128, 512>}, {pipeline_mode = #tpu.pipeline_mode<synchronous>, transform_indices = @transform_4, window_bounds = array<i64: 1, 512>}, {pipeline_mode = #tpu.pipeline_mode<synchronous>, transform_indices = @transform_5, window_bounds = array<i64: 512, 128>}, {pipeline_mode = #tpu.pipeline_mode<synchronous>, transform_indices = @transform_6, window_bounds = array<i64: 1, 128>}, {transform_indices = @transform_7, window_bounds = array<i64: 256, 128>}]} {
    %c0 = arith.constant 0 : index
    %c0_0 = arith.constant 0 : index
    %0 = vector.load %arg1[%c0, %c0_0] : memref<256x128xf32, #tpu.memory_space<vmem>>, vector<256x128xf32>
    %c0_1 = arith.constant 0 : index
    %c0_2 = arith.constant 0 : index
    %1 = vector.load %arg2[%c0_1, %c0_2] : memref<1x128xf32, #tpu.memory_space<vmem>>, vector<1x128xf32>
    %c0_3 = arith.constant 0 : index
    %c0_4 = arith.constant 0 : index
    %2 = vector.load %arg3[%c0_3, %c0_4] : memref<1x128xf32, #tpu.memory_space<vmem>>, vector<1x128xf32>
    %cst = arith.constant dense<0.000000e+00> : vector<256xf32>
    %3 = vector.multi_reduction <add>, %0, %cst [1] : vector<256x128xf32> to vector<256xf32>
    %4 = vector.shape_cast %3 : vector<256xf32> to vector<256x1xf32>
    %cst_5 = arith.constant 1.280000e+02 : f32
    %5 = vector.broadcast %cst_5 : f32 to vector<256x1xf32>
    %6 = arith.divf %4, %5 : vector<256x1xf32>
    %7 = vector.broadcast %6 : vector<256x1xf32> to vector<256x128xf32>
    %8 = arith.subf %0, %7 : vector<256x128xf32>
    %9 = arith.mulf %8, %8 : vector<256x128xf32>
    %cst_6 = arith.constant dense<0.000000e+00> : vector<256xf32>
    %10 = vector.multi_reduction <add>, %9, %cst_6 [1] : vector<256x128xf32> to vector<256xf32>
    %11 = vector.shape_cast %10 : vector<256xf32> to vector<256x1xf32>
    %cst_7 = arith.constant 1.280000e+02 : f32
    %12 = vector.broadcast %cst_7 : f32 to vector<256x1xf32>
    %13 = arith.divf %11, %12 : vector<256x1xf32>
    %14 = vector.broadcast %6 : vector<256x1xf32> to vector<256x128xf32>
    %15 = arith.subf %0, %14 : vector<256x128xf32>
    %cst_8 = arith.constant 9.99999974E-6 : f32
    %16 = vector.broadcast %cst_8 : f32 to vector<256x1xf32>
    %17 = arith.addf %13, %16 : vector<256x1xf32>
    %18 = math.rsqrt %17 : vector<256x1xf32>
    %19 = vector.broadcast %18 : vector<256x1xf32> to vector<256x128xf32>
    %20 = arith.mulf %15, %19 : vector<256x128xf32>
    %21 = vector.broadcast %1 : vector<1x128xf32> to vector<256x128xf32>
    %22 = arith.mulf %20, %21 : vector<256x128xf32>
    %23 = vector.broadcast %2 : vector<1x128xf32> to vector<256x128xf32>
    %24 = arith.addf %22, %23 : vector<256x128xf32>
    %c0_9 = arith.constant 0 : index
    %c0_10 = arith.constant 0 : index
    %25 = vector.load %arg4[%c0_9, %c0_10] : memref<128x512xf32, #tpu.memory_space<vmem>>, vector<128x512xf32>
    %cst_11 = arith.constant dense<0.000000e+00> : vector<256x512xf32>
    %26 = tpu.matmul %24, %25, %cst_11 {dimension_numbers = #tpu.dot_dimension_numbers<[1], [0], [0], [1], [0, 0, 1, 1], [], []>} : vector<256x128xf32>, vector<128x512xf32>, vector<256x512xf32> -> vector<256x512xf32>
    %c0_12 = arith.constant 0 : index
    %c0_13 = arith.constant 0 : index
    %27 = vector.load %arg5[%c0_12, %c0_13] : memref<1x512xf32, #tpu.memory_space<vmem>>, vector<1x512xf32>
    %28 = vector.broadcast %27 : vector<1x512xf32> to vector<256x512xf32>
    %29 = arith.addf %26, %28 : vector<256x512xf32>
    %cst_14 = arith.constant 5.000000e-01 : f32
    %30 = vector.broadcast %cst_14 : f32 to vector<256x512xf32>
    %31 = arith.mulf %30, %29 : vector<256x512xf32>
    %cst_15 = arith.constant 0.707106769 : f32
    %32 = vector.broadcast %cst_15 : f32 to vector<256x512xf32>
    %33 = arith.mulf %29, %32 : vector<256x512xf32>
    %34 = math.erf %33 : vector<256x512xf32>
    %cst_16 = arith.constant 1.000000e+00 : f32
    %35 = vector.broadcast %cst_16 : f32 to vector<256x512xf32>
    %36 = arith.addf %35, %34 : vector<256x512xf32>
    %37 = arith.mulf %31, %36 : vector<256x512xf32>
    %c0_17 = arith.constant 0 : index
    %c0_18 = arith.constant 0 : index
    %38 = vector.load %arg6[%c0_17, %c0_18] : memref<512x128xf32, #tpu.memory_space<vmem>>, vector<512x128xf32>
    %cst_19 = arith.constant dense<0.000000e+00> : vector<256x128xf32>
    %39 = tpu.matmul %37, %38, %cst_19 {dimension_numbers = #tpu.dot_dimension_numbers<[1], [0], [0], [1], [0, 0, 1, 1], [], []>} : vector<256x512xf32>, vector<512x128xf32>, vector<256x128xf32> -> vector<256x128xf32>
    %c0_20 = arith.constant 0 : index
    %c0_21 = arith.constant 0 : index
    %40 = vector.load %arg7[%c0_20, %c0_21] : memref<1x128xf32, #tpu.memory_space<vmem>>, vector<1x128xf32>
    %41 = vector.broadcast %40 : vector<1x128xf32> to vector<256x128xf32>
    %42 = arith.addf %39, %41 : vector<256x128xf32>
    %43 = arith.addf %0, %42 : vector<256x128xf32>
    %c0_22 = arith.constant 0 : index
    %c0_23 = arith.constant 0 : index
    %44 = vector.load %arg8[%c0_22, %c0_23] : memref<256x128xf32, #tpu.memory_space<vmem>>, vector<256x128xf32>
    tpu.vector_store %arg8[%c0_22, %c0_23], %43 {strides = array<i32>} : memref<256x128xf32, #tpu.memory_space<vmem>>, vector<256x128xf32>,
    return
  }
  func.func @transform_0(%arg0: i32) -> (i32, i32) {
    %c0_i32 = arith.constant 0 : i32
    %c0_i32_0 = arith.constant 0 : i32
    return %arg0, %c0_i32 : i32, i32
  }
  func.func @transform_1(%arg0: i32) -> (i32, i32) {
    %c0_i32 = arith.constant 0 : i32
    %c0_i32_0 = arith.constant 0 : i32
    %c0_i32_1 = arith.constant 0 : i32
    return %c0_i32, %c0_i32_0 : i32, i32
  }
  func.func @transform_2(%arg0: i32) -> (i32, i32) {
    %c0_i32 = arith.constant 0 : i32
    %c0_i32_0 = arith.constant 0 : i32
    %c0_i32_1 = arith.constant 0 : i32
    return %c0_i32, %c0_i32_0 : i32, i32
  }
  func.func @transform_3(%arg0: i32) -> (i32, i32) {
    %c0_i32 = arith.constant 0 : i32
    %c0_i32_0 = arith.constant 0 : i32
    %c0_i32_1 = arith.constant 0 : i32
    return %c0_i32, %c0_i32_0 : i32, i32
  }
  func.func @transform_4(%arg0: i32) -> (i32, i32) {
    %c0_i32 = arith.constant 0 : i32
    %c0_i32_0 = arith.constant 0 : i32
    %c0_i32_1 = arith.constant 0 : i32
    return %c0_i32, %c0_i32_0 : i32, i32
  }
  func.func @transform_5(%arg0: i32) -> (i32, i32) {
    %c0_i32 = arith.constant 0 : i32
    %c0_i32_0 = arith.constant 0 : i32
    %c0_i32_1 = arith.constant 0 : i32
    return %c0_i32, %c0_i32_0 : i32, i32
  }
  func.func @transform_6(%arg0: i32) -> (i32, i32) {
    %c0_i32 = arith.constant 0 : i32
    %c0_i32_0 = arith.constant 0 : i32
    %c0_i32_1 = arith.constant 0 : i32
    return %c0_i32, %c0_i32_0 : i32, i32
  }
  func.func @transform_7(%arg0: i32) -> (i32, i32) {
    %c0_i32 = arith.constant 0 : i32
    %c0_i32_0 = arith.constant 0 : i32
    return %arg0, %c0_i32 : i32, i32
  }
}

module attributes {stable_mosaic.version = 11 : i64} {
  func.func @_attn_block_kernel(%arg0: i32, %arg1: memref<1x128x128xf32, #tpu.memory_space<vmem>>, %arg2: memref<1x128xf32, #tpu.memory_space<vmem>>, %arg3: memref<1x128xf32, #tpu.memory_space<vmem>>, %arg4: memref<128x384xf32, #tpu.memory_space<vmem>>, %arg5: memref<128x128xf32, #tpu.memory_space<vmem>>, %arg6: memref<1x128xf32, #tpu.memory_space<vmem>>, %arg7: memref<1x128x128xf32, #tpu.memory_space<vmem>>) attributes {dimension_semantics = [#tpu.dimension_semantics<parallel>], iteration_bounds = array<i64: 2>, scalar_prefetch = 0 : i64, scratch_operands = 0 : i64, tpu.core_type = #tpu.core_type<tc>, window_params = [{transform_indices = @transform_0, window_bounds = array<i64: 1, 128, 128>}, {pipeline_mode = #tpu.pipeline_mode<synchronous>, transform_indices = @transform_1, window_bounds = array<i64: 1, 128>}, {pipeline_mode = #tpu.pipeline_mode<synchronous>, transform_indices = @transform_2, window_bounds = array<i64: 1, 128>}, {pipeline_mode = #tpu.pipeline_mode<synchronous>, transform_indices = @transform_3, window_bounds = array<i64: 128, 384>}, {pipeline_mode = #tpu.pipeline_mode<synchronous>, transform_indices = @transform_4, window_bounds = array<i64: 128, 128>}, {pipeline_mode = #tpu.pipeline_mode<synchronous>, transform_indices = @transform_5, window_bounds = array<i64: 1, 128>}, {transform_indices = @transform_6, window_bounds = array<i64: 1, 128, 128>}]} {
    %c0 = arith.constant 0 : index
    %c0_0 = arith.constant 0 : index
    %c0_1 = arith.constant 0 : index
    %0 = vector.load %arg1[%c0, %c0_0, %c0_1] : memref<1x128x128xf32, #tpu.memory_space<vmem>>, vector<1x128x128xf32>
    %1 = vector.shape_cast %0 : vector<1x128x128xf32> to vector<128x128xf32>
    %c0_2 = arith.constant 0 : index
    %c0_3 = arith.constant 0 : index
    %2 = vector.load %arg2[%c0_2, %c0_3] : memref<1x128xf32, #tpu.memory_space<vmem>>, vector<1x128xf32>
    %c0_4 = arith.constant 0 : index
    %c0_5 = arith.constant 0 : index
    %3 = vector.load %arg3[%c0_4, %c0_5] : memref<1x128xf32, #tpu.memory_space<vmem>>, vector<1x128xf32>
    %cst = arith.constant dense<0.000000e+00> : vector<128xf32>
    %4 = vector.multi_reduction <add>, %1, %cst [1] : vector<128x128xf32> to vector<128xf32>
    %5 = vector.shape_cast %4 : vector<128xf32> to vector<128x1xf32>
    %cst_6 = arith.constant 1.280000e+02 : f32
    %6 = vector.broadcast %cst_6 : f32 to vector<128x1xf32>
    %7 = arith.divf %5, %6 : vector<128x1xf32>
    %8 = vector.broadcast %7 : vector<128x1xf32> to vector<128x128xf32>
    %9 = arith.subf %1, %8 : vector<128x128xf32>
    %10 = arith.mulf %9, %9 : vector<128x128xf32>
    %cst_7 = arith.constant dense<0.000000e+00> : vector<128xf32>
    %11 = vector.multi_reduction <add>, %10, %cst_7 [1] : vector<128x128xf32> to vector<128xf32>
    %12 = vector.shape_cast %11 : vector<128xf32> to vector<128x1xf32>
    %cst_8 = arith.constant 1.280000e+02 : f32
    %13 = vector.broadcast %cst_8 : f32 to vector<128x1xf32>
    %14 = arith.divf %12, %13 : vector<128x1xf32>
    %15 = vector.broadcast %7 : vector<128x1xf32> to vector<128x128xf32>
    %16 = arith.subf %1, %15 : vector<128x128xf32>
    %cst_9 = arith.constant 9.99999974E-6 : f32
    %17 = vector.broadcast %cst_9 : f32 to vector<128x1xf32>
    %18 = arith.addf %14, %17 : vector<128x1xf32>
    %19 = math.rsqrt %18 : vector<128x1xf32>
    %20 = vector.broadcast %19 : vector<128x1xf32> to vector<128x128xf32>
    %21 = arith.mulf %16, %20 : vector<128x128xf32>
    %22 = vector.broadcast %2 : vector<1x128xf32> to vector<128x128xf32>
    %23 = arith.mulf %21, %22 : vector<128x128xf32>
    %24 = vector.broadcast %3 : vector<1x128xf32> to vector<128x128xf32>
    %25 = arith.addf %23, %24 : vector<128x128xf32>
    %c0_10 = arith.constant 0 : index
    %c0_11 = arith.constant 0 : index
    %26 = vector.load %arg4[%c0_10, %c0_11] : memref<128x384xf32, #tpu.memory_space<vmem>>, vector<128x384xf32>
    %cst_12 = arith.constant dense<0.000000e+00> : vector<128x384xf32>
    %27 = tpu.matmul %25, %26, %cst_12 {dimension_numbers = #tpu.dot_dimension_numbers<[1], [0], [0], [1], [0, 0, 1, 1], [], []>} : vector<128x128xf32>, vector<128x384xf32>, vector<128x384xf32> -> vector<128x384xf32>
    %28 = vector.extract_strided_slice %27 {offsets = [0, 0], sizes = [128, 32], strides = [1, 1]} : vector<128x384xf32> to vector<128x32xf32>
    %29 = vector.extract_strided_slice %27 {offsets = [0, 128], sizes = [128, 32], strides = [1, 1]} : vector<128x384xf32> to vector<128x32xf32>
    %30 = vector.extract_strided_slice %27 {offsets = [0, 256], sizes = [128, 32], strides = [1, 1]} : vector<128x384xf32> to vector<128x32xf32>
    %cst_13 = arith.constant dense<0.000000e+00> : vector<128x128xf32>
    %31 = tpu.matmul %28, %29, %cst_13 {dimension_numbers = #tpu.dot_dimension_numbers<[1], [1], [0], [0], [0, 0, 1, 0], [], []>} : vector<128x32xf32>, vector<128x32xf32>, vector<128x128xf32> -> vector<128x128xf32>
    %cst_14 = arith.constant 0.176776692 : f32
    %32 = vector.broadcast %cst_14 : f32 to vector<128x128xf32>
    %33 = arith.mulf %31, %32 : vector<128x128xf32>
    %cst_15 = arith.constant dense<0xFF800000> : vector<128xf32>
    %34 = vector.multi_reduction <maximumf>, %33, %cst_15 [1] : vector<128x128xf32> to vector<128xf32>
    %35 = vector.shape_cast %34 : vector<128xf32> to vector<128x1xf32>
    %36 = vector.broadcast %35 : vector<128x1xf32> to vector<128x128xf32>
    %37 = arith.subf %33, %36 : vector<128x128xf32>
    %38 = math.exp %37 : vector<128x128xf32>
    %cst_16 = arith.constant dense<0.000000e+00> : vector<128xf32>
    %39 = vector.multi_reduction <add>, %38, %cst_16 [1] : vector<128x128xf32> to vector<128xf32>
    %40 = vector.shape_cast %39 : vector<128xf32> to vector<128x1xf32>
    %41 = tpu.reciprocal %40 {approx = true} : vector<128x1xf32> -> vector<128x1xf32>
    %42 = arith.mulf %40, %41 : vector<128x1xf32>
    %cst_17 = arith.constant 2.000000e+00 : f32
    %43 = vector.broadcast %cst_17 : f32 to vector<128x1xf32>
    %44 = arith.subf %43, %42 : vector<128x1xf32>
    %45 = arith.mulf %41, %44 : vector<128x1xf32>
    %46 = vector.broadcast %45 : vector<128x1xf32> to vector<128x128xf32>
    %47 = arith.mulf %38, %46 : vector<128x128xf32>
    %cst_18 = arith.constant dense<0.000000e+00> : vector<128x32xf32>
    %48 = tpu.matmul %47, %30, %cst_18 {dimension_numbers = #tpu.dot_dimension_numbers<[1], [0], [0], [1], [0, 0, 1, 1], [], []>} : vector<128x128xf32>, vector<128x32xf32>, vector<128x32xf32> -> vector<128x32xf32>
    %49 = vector.extract_strided_slice %27 {offsets = [0, 32], sizes = [128, 32], strides = [1, 1]} : vector<128x384xf32> to vector<128x32xf32>
    %50 = vector.extract_strided_slice %27 {offsets = [0, 160], sizes = [128, 32], strides = [1, 1]} : vector<128x384xf32> to vector<128x32xf32>
    %51 = vector.extract_strided_slice %27 {offsets = [0, 288], sizes = [128, 32], strides = [1, 1]} : vector<128x384xf32> to vector<128x32xf32>
    %cst_19 = arith.constant dense<0.000000e+00> : vector<128x128xf32>
    %52 = tpu.matmul %49, %50, %cst_19 {dimension_numbers = #tpu.dot_dimension_numbers<[1], [1], [0], [0], [0, 0, 1, 0], [], []>} : vector<128x32xf32>, vector<128x32xf32>, vector<128x128xf32> -> vector<128x128xf32>
    %cst_20 = arith.constant 0.176776692 : f32
    %53 = vector.broadcast %cst_20 : f32 to vector<128x128xf32>
    %54 = arith.mulf %52, %53 : vector<128x128xf32>
    %cst_21 = arith.constant dense<0xFF800000> : vector<128xf32>
    %55 = vector.multi_reduction <maximumf>, %54, %cst_21 [1] : vector<128x128xf32> to vector<128xf32>
    %56 = vector.shape_cast %55 : vector<128xf32> to vector<128x1xf32>
    %57 = vector.broadcast %56 : vector<128x1xf32> to vector<128x128xf32>
    %58 = arith.subf %54, %57 : vector<128x128xf32>
    %59 = math.exp %58 : vector<128x128xf32>
    %cst_22 = arith.constant dense<0.000000e+00> : vector<128xf32>
    %60 = vector.multi_reduction <add>, %59, %cst_22 [1] : vector<128x128xf32> to vector<128xf32>
    %61 = vector.shape_cast %60 : vector<128xf32> to vector<128x1xf32>
    %62 = tpu.reciprocal %61 {approx = true} : vector<128x1xf32> -> vector<128x1xf32>
    %63 = arith.mulf %61, %62 : vector<128x1xf32>
    %cst_23 = arith.constant 2.000000e+00 : f32
    %64 = vector.broadcast %cst_23 : f32 to vector<128x1xf32>
    %65 = arith.subf %64, %63 : vector<128x1xf32>
    %66 = arith.mulf %62, %65 : vector<128x1xf32>
    %67 = vector.broadcast %66 : vector<128x1xf32> to vector<128x128xf32>
    %68 = arith.mulf %59, %67 : vector<128x128xf32>
    %cst_24 = arith.constant dense<0.000000e+00> : vector<128x32xf32>
    %69 = tpu.matmul %68, %51, %cst_24 {dimension_numbers = #tpu.dot_dimension_numbers<[1], [0], [0], [1], [0, 0, 1, 1], [], []>} : vector<128x128xf32>, vector<128x32xf32>, vector<128x32xf32> -> vector<128x32xf32>
    %70 = vector.extract_strided_slice %27 {offsets = [0, 64], sizes = [128, 32], strides = [1, 1]} : vector<128x384xf32> to vector<128x32xf32>
    %71 = vector.extract_strided_slice %27 {offsets = [0, 192], sizes = [128, 32], strides = [1, 1]} : vector<128x384xf32> to vector<128x32xf32>
    %72 = vector.extract_strided_slice %27 {offsets = [0, 320], sizes = [128, 32], strides = [1, 1]} : vector<128x384xf32> to vector<128x32xf32>
    %cst_25 = arith.constant dense<0.000000e+00> : vector<128x128xf32>
    %73 = tpu.matmul %70, %71, %cst_25 {dimension_numbers = #tpu.dot_dimension_numbers<[1], [1], [0], [0], [0, 0, 1, 0], [], []>} : vector<128x32xf32>, vector<128x32xf32>, vector<128x128xf32> -> vector<128x128xf32>
    %cst_26 = arith.constant 0.176776692 : f32
    %74 = vector.broadcast %cst_26 : f32 to vector<128x128xf32>
    %75 = arith.mulf %73, %74 : vector<128x128xf32>
    %cst_27 = arith.constant dense<0xFF800000> : vector<128xf32>
    %76 = vector.multi_reduction <maximumf>, %75, %cst_27 [1] : vector<128x128xf32> to vector<128xf32>
    %77 = vector.shape_cast %76 : vector<128xf32> to vector<128x1xf32>
    %78 = vector.broadcast %77 : vector<128x1xf32> to vector<128x128xf32>
    %79 = arith.subf %75, %78 : vector<128x128xf32>
    %80 = math.exp %79 : vector<128x128xf32>
    %cst_28 = arith.constant dense<0.000000e+00> : vector<128xf32>
    %81 = vector.multi_reduction <add>, %80, %cst_28 [1] : vector<128x128xf32> to vector<128xf32>
    %82 = vector.shape_cast %81 : vector<128xf32> to vector<128x1xf32>
    %83 = tpu.reciprocal %82 {approx = true} : vector<128x1xf32> -> vector<128x1xf32>
    %84 = arith.mulf %82, %83 : vector<128x1xf32>
    %cst_29 = arith.constant 2.000000e+00 : f32
    %85 = vector.broadcast %cst_29 : f32 to vector<128x1xf32>
    %86 = arith.subf %85, %84 : vector<128x1xf32>
    %87 = arith.mulf %83, %86 : vector<128x1xf32>
    %88 = vector.broadcast %87 : vector<128x1xf32> to vector<128x128xf32>
    %89 = arith.mulf %80, %88 : vector<128x128xf32>
    %cst_30 = arith.constant dense<0.000000e+00> : vector<128x32xf32>
    %90 = tpu.matmul %89, %72, %cst_30 {dimension_numbers = #tpu.dot_dimension_numbers<[1], [0], [0], [1], [0, 0, 1, 1], [], []>} : vector<128x128xf32>, vector<128x32xf32>, vector<128x32xf32> -> vector<128x32xf32>
    %91 = vector.extract_strided_slice %27 {offsets = [0, 96], sizes = [128, 32], strides = [1, 1]} : vector<128x384xf32> to vector<128x32xf32>
    %92 = vector.extract_strided_slice %27 {offsets = [0, 224], sizes = [128, 32], strides = [1, 1]} : vector<128x384xf32> to vector<128x32xf32>
    %93 = vector.extract_strided_slice %27 {offsets = [0, 352], sizes = [128, 32], strides = [1, 1]} : vector<128x384xf32> to vector<128x32xf32>
    %cst_31 = arith.constant dense<0.000000e+00> : vector<128x128xf32>
    %94 = tpu.matmul %91, %92, %cst_31 {dimension_numbers = #tpu.dot_dimension_numbers<[1], [1], [0], [0], [0, 0, 1, 0], [], []>} : vector<128x32xf32>, vector<128x32xf32>, vector<128x128xf32> -> vector<128x128xf32>
    %cst_32 = arith.constant 0.176776692 : f32
    %95 = vector.broadcast %cst_32 : f32 to vector<128x128xf32>
    %96 = arith.mulf %94, %95 : vector<128x128xf32>
    %cst_33 = arith.constant dense<0xFF800000> : vector<128xf32>
    %97 = vector.multi_reduction <maximumf>, %96, %cst_33 [1] : vector<128x128xf32> to vector<128xf32>
    %98 = vector.shape_cast %97 : vector<128xf32> to vector<128x1xf32>
    %99 = vector.broadcast %98 : vector<128x1xf32> to vector<128x128xf32>
    %100 = arith.subf %96, %99 : vector<128x128xf32>
    %101 = math.exp %100 : vector<128x128xf32>
    %cst_34 = arith.constant dense<0.000000e+00> : vector<128xf32>
    %102 = vector.multi_reduction <add>, %101, %cst_34 [1] : vector<128x128xf32> to vector<128xf32>
    %103 = vector.shape_cast %102 : vector<128xf32> to vector<128x1xf32>
    %104 = tpu.reciprocal %103 {approx = true} : vector<128x1xf32> -> vector<128x1xf32>
    %105 = arith.mulf %103, %104 : vector<128x1xf32>
    %cst_35 = arith.constant 2.000000e+00 : f32
    %106 = vector.broadcast %cst_35 : f32 to vector<128x1xf32>
    %107 = arith.subf %106, %105 : vector<128x1xf32>
    %108 = arith.mulf %104, %107 : vector<128x1xf32>
    %109 = vector.broadcast %108 : vector<128x1xf32> to vector<128x128xf32>
    %110 = arith.mulf %101, %109 : vector<128x128xf32>
    %cst_36 = arith.constant dense<0.000000e+00> : vector<128x32xf32>
    %111 = tpu.matmul %110, %93, %cst_36 {dimension_numbers = #tpu.dot_dimension_numbers<[1], [0], [0], [1], [0, 0, 1, 1], [], []>} : vector<128x128xf32>, vector<128x32xf32>, vector<128x32xf32> -> vector<128x32xf32>
    %112 = tpu.concatenate %48, %69, %90, %111 in 1 : vector<128x32xf32>, vector<128x32xf32>, vector<128x32xf32>, vector<128x32xf32> -> vector<128x128xf32>
    %c0_37 = arith.constant 0 : index
    %c0_38 = arith.constant 0 : index
    %113 = vector.load %arg5[%c0_37, %c0_38] : memref<128x128xf32, #tpu.memory_space<vmem>>, vector<128x128xf32>
    %cst_39 = arith.constant dense<0.000000e+00> : vector<128x128xf32>
    %114 = tpu.matmul %112, %113, %cst_39 {dimension_numbers = #tpu.dot_dimension_numbers<[1], [0], [0], [1], [0, 0, 1, 1], [], []>} : vector<128x128xf32>, vector<128x128xf32>, vector<128x128xf32> -> vector<128x128xf32>
    %c0_40 = arith.constant 0 : index
    %c0_41 = arith.constant 0 : index
    %115 = vector.load %arg6[%c0_40, %c0_41] : memref<1x128xf32, #tpu.memory_space<vmem>>, vector<1x128xf32>
    %116 = vector.broadcast %115 : vector<1x128xf32> to vector<128x128xf32>
    %117 = arith.addf %114, %116 : vector<128x128xf32>
    %118 = arith.addf %1, %117 : vector<128x128xf32>
    %c0_42 = arith.constant 0 : index
    %c0_43 = arith.constant 0 : index
    %c0_44 = arith.constant 0 : index
    %119 = vector.load %arg7[%c0_42, %c0_43, %c0_44] : memref<1x128x128xf32, #tpu.memory_space<vmem>>, vector<1x128x128xf32>
    %120 = vector.shape_cast %119 : vector<1x128x128xf32> to vector<128x128xf32>
    %121 = vector.shape_cast %118 : vector<128x128xf32> to vector<1x128x128xf32>
    tpu.vector_store %arg7[%c0_42, %c0_43, %c0_44], %121 {strides = array<i32>} : memref<1x128x128xf32, #tpu.memory_space<vmem>>, vector<1x128x128xf32>,
    return
  }
  func.func @transform_0(%arg0: i32) -> (i32, i32, i32) {
    %c0_i32 = arith.constant 0 : i32
    %c0_i32_0 = arith.constant 0 : i32
    %c0_i32_1 = arith.constant 0 : i32
    return %arg0, %c0_i32, %c0_i32_0 : i32, i32, i32
  }
  func.func @transform_1(%arg0: i32) -> (i32, i32) {
    %c0_i32 = arith.constant 0 : i32
    %c0_i32_0 = arith.constant 0 : i32
    %c0_i32_1 = arith.constant 0 : i32
    return %c0_i32, %c0_i32_0 : i32, i32
  }
  func.func @transform_2(%arg0: i32) -> (i32, i32) {
    %c0_i32 = arith.constant 0 : i32
    %c0_i32_0 = arith.constant 0 : i32
    %c0_i32_1 = arith.constant 0 : i32
    return %c0_i32, %c0_i32_0 : i32, i32
  }
  func.func @transform_3(%arg0: i32) -> (i32, i32) {
    %c0_i32 = arith.constant 0 : i32
    %c0_i32_0 = arith.constant 0 : i32
    %c0_i32_1 = arith.constant 0 : i32
    return %c0_i32, %c0_i32_0 : i32, i32
  }
  func.func @transform_4(%arg0: i32) -> (i32, i32) {
    %c0_i32 = arith.constant 0 : i32
    %c0_i32_0 = arith.constant 0 : i32
    %c0_i32_1 = arith.constant 0 : i32
    return %c0_i32, %c0_i32_0 : i32, i32
  }
  func.func @transform_5(%arg0: i32) -> (i32, i32) {
    %c0_i32 = arith.constant 0 : i32
    %c0_i32_0 = arith.constant 0 : i32
    %c0_i32_1 = arith.constant 0 : i32
    return %c0_i32, %c0_i32_0 : i32, i32
  }
  func.func @transform_6(%arg0: i32) -> (i32, i32, i32) {
    %c0_i32 = arith.constant 0 : i32
    %c0_i32_0 = arith.constant 0 : i32
    %c0_i32_1 = arith.constant 0 : i32
    return %arg0, %c0_i32, %c0_i32_0 : i32, i32, i32
  }
}

</mosaic_0001>

<llo_original>
// kernel: vit_block_forward.3
$region0: #{vit_block_forward.3}
  #allocation0 [shape = 'u32[]', space=smem, size = 0x4, offset = 0x4, fixed_abs, tag = 'smem constant byte address 0x4 - core index']
  #allocation1 [shape = 'u32[144,128]{1,0:T(1,128)}', space=vmem, size = 0x12000, scoped, tag = 'internal scratch']
  %s0 = inlined_call_operand.vmem [shape: f32[256,128], index: 0, kind: input, shape index: {}]
  %s1 = inlined_call_operand.vmem [shape: f32[1,128], index: 1, kind: input, shape index: {}]
  %s2 = inlined_call_operand.vmem [shape: f32[1,128], index: 2, kind: input, shape index: {}]
  %s3 = inlined_call_operand.vmem [shape: f32[128,512], index: 3, kind: input, shape index: {}]
  %s4 = inlined_call_operand.vmem [shape: f32[1,512], index: 4, kind: input, shape index: {}]
  %s5 = inlined_call_operand.vmem [shape: f32[512,128], index: 5, kind: input, shape index: {}]
  %s6 = inlined_call_operand.hbm [shape: f32[1,128], index: 6, kind: input, shape index: {}]
  %s7 = inlined_call_operand.hbm [shape: f32[256,128], index: 7, kind: output, shape index: {}]
  %s8 = sld [smem:[#allocation0]]
  $region42: #{vit_block_forward.3} parent=0
    _
  %s10 = ssub.s32 1, %s8
  %s11 = scalar_select 0, %s10, %s8
  $region1: #{vit_block_forward.3} parent=0
    #allocation2 [shape = 'u8[512]{0}', space=vmem, size = 0x400, scoped, tag = 'input window, operand 6, single buffered']
    #allocation3 [shape = 's32[1]{0}', space=sflag, size = 0x4, scoped, tag = 'scoped memory for vit_block_forward.3']
    #allocation4 [shape = 's32[1]{0}', space=sflag, size = 0x4, scoped, tag = 'scoped memory for vit_block_forward.3']
    #allocation5 [shape = 'u8[131072]{0}', space=vmem, size = 0x20000, scoped, tag = 'output window, operand 0, single buffered']
    %12 = vsyncpa [#allocation3], 0
    %13 = vsyncpa [#allocation4], 0
    // Predicated region
    $region2: #{vit_block_forward.3} parent=1 // pred_check
      _
    $region3: #{vit_block_forward.3} parent=1 // pred_check_branch
      %15 = sbr.rel (0) target = $region5
    $region4: #{vit_block_forward.3} parent=1 // pred_region
      _
    $region5: #{vit_block_forward.3} parent=1 // pred_fallthru
      _
    // Predicated region
    $region6: #{vit_block_forward.3} parent=1 // pred_check
      _
    $region7: #{vit_block_forward.3} parent=1 // pred_check_branch
      %17 = sbr.rel (0) target = $region9
    $region8: #{vit_block_forward.3} parent=1 // pred_region
      _
    $region9: #{vit_block_forward.3} parent=1 // pred_fallthru
      _
    // Predicated region
    $region10: #{vit_block_forward.3} parent=1 // pred_check
      _
    $region11: #{vit_block_forward.3} parent=1 // pred_check_branch
      %19 = sbr.rel (0) target = $region13
    $region12: #{vit_block_forward.3} parent=1 // pred_region
      _
    $region13: #{vit_block_forward.3} parent=1 // pred_fallthru
      _
    // Predicated region
    $region14: #{vit_block_forward.3} parent=1 // pred_check
      _
    $region15: #{vit_block_forward.3} parent=1 // pred_check_branch
      %21 = sbr.rel (0) target = $region17
    $region16: #{vit_block_forward.3} parent=1 // pred_region
      _
    $region17: #{vit_block_forward.3} parent=1 // pred_fallthru
      _
    // Predicated region
    $region18: #{vit_block_forward.3} parent=1 // pred_check
      _
    $region19: #{vit_block_forward.3} parent=1 // pred_check_branch
      %23 = sbr.rel (0) target = $region21
    $region20: #{vit_block_forward.3} parent=1 // pred_region
      _
    $region21: #{vit_block_forward.3} parent=1 // pred_fallthru
      _
    // Predicated region
    $region22: #{vit_block_forward.3} parent=1 // pred_check
      _
    $region23: #{vit_block_forward.3} parent=1 // pred_check_branch
      %25 = sbr.rel (0) target = $region25
    $region24: #{vit_block_forward.3} parent=1 // pred_region
      _
    $region25: #{vit_block_forward.3} parent=1 // pred_fallthru
      _
    // Predicated region
    $region26: #{vit_block_forward.3} parent=1 // pred_check
      _
    $region27: #{vit_block_forward.3} parent=1 // pred_check_branch
      %27 = sbr.rel (0) target = $region29
    $region28: #{vit_block_forward.3} parent=1 // pred_region
      %s29 = ssub.s32 16, 16
      %30 = vsyncadd [#allocation3], %s29
      %s32 = sshll.u32 [#allocation2], 4
      %s33 = int_to_ptr.vmem [resolvable:$true] %s32
      %35 = dma.hbm_to_vmem [thread:$0]  %s6, 16, %s33, [#allocation3]
    $region29: #{vit_block_forward.3} parent=1 // pred_fallthru
      _
    // Predicated region
    $region30: #{vit_block_forward.3} parent=1 // pred_check
      _
    $region31: #{vit_block_forward.3} parent=1 // pred_check_branch
      %37 = sbr.rel (0) target = $region33
    $region32: #{vit_block_forward.3} parent=1 // pred_region
      %38 = dma.done [#allocation3], 16
    $region33: #{vit_block_forward.3} parent=1 // pred_fallthru
      _
    %v39 = vld [vmem:[%s0] sm:$0xff]
    %v40 = vld [vmem:[%s0 + $0x8] sm:$0xff]
    %v41 = vld [vmem:[%s0 + $0x10] sm:$0xff]
    %v42 = vld [vmem:[%s0 + $0x18] sm:$0xff]
    %v43 = vld [vmem:[%s0 + $0x20] sm:$0xff]
    %v44 = vld [vmem:[%s0 + $0x28] sm:$0xff]
    %v45 = vld [vmem:[%s0 + $0x30] sm:$0xff]
    %v46 = vld [vmem:[%s0 + $0x38] sm:$0xff]
    %v47 = vld [vmem:[%s0 + $0x40] sm:$0xff]
    %v48 = vld [vmem:[%s0 + $0x48] sm:$0xff]
    %v49 = vld [vmem:[%s0 + $0x50] sm:$0xff]
    %v50 = vld [vmem:[%s0 + $0x58] sm:$0xff]
    %v51 = vld [vmem:[%s0 + $0x60] sm:$0xff]
    %v52 = vld [vmem:[%s0 + $0x68] sm:$0xff]
    %v53 = vld [vmem:[%s0 + $0x70] sm:$0xff]
    %v54 = vld [vmem:[%s0 + $0x78] sm:$0xff]
    %v55 = vld [vmem:[%s0 + $0x80] sm:$0xff]
    %v56 = vld [vmem:[%s0 + $0x88] sm:$0xff]
    %v57 = vld [vmem:[%s0 + $0x90] sm:$0xff]
    %v58 = vld [vmem:[%s0 + $0x98] sm:$0xff]
    %v59 = vld [vmem:[%s0 + $0xa0] sm:$0xff]
    %v60 = vld [vmem:[%s0 + $0xa8] sm:$0xff]
    %v61 = vld [vmem:[%s0 + $0xb0] sm:$0xff]
    %v62 = vld [vmem:[%s0 + $0xb8] sm:$0xff]
    %v63 = vld [vmem:[%s0 + $0xc0] sm:$0xff]
    %v64 = vld [vmem:[%s0 + $0xc8] sm:$0xff]
    %v65 = vld [vmem:[%s0 + $0xd0] sm:$0xff]
    %v66 = vld [vmem:[%s0 + $0xd8] sm:$0xff]
    %v67 = vld [vmem:[%s0 + $0xe0] sm:$0xff]
    %v68 = vld [vmem:[%s0 + $0xe8] sm:$0xff]
    %v69 = vld [vmem:[%s0 + $0xf0] sm:$0xff]
    %v70 = vld [vmem:[%s0 + $0xf8] sm:$0xff]
    %v71 = vld [vmem:[%s1] sm:$0x1]
    %v72 = vld [vmem:[%s2] sm:$0x1]
    %73 = vadd.xlane.f32.xlu0 %v39
    %v74 = vpop.xlane.xlu0 %73
    %75 = vadd.xlane.f32.xlu0 %v40
    %v76 = vpop.xlane.xlu0 %75
    %77 = vadd.xlane.f32.xlu0 %v41
    %v78 = vpop.xlane.xlu0 %77
    %79 = vadd.xlane.f32.xlu0 %v42
    %v80 = vpop.xlane.xlu0 %79
    %81 = vadd.xlane.f32.xlu0 %v43
    %v82 = vpop.xlane.xlu0 %81
    %83 = vadd.xlane.f32.xlu0 %v44
    %v84 = vpop.xlane.xlu0 %83
    %85 = vadd.xlane.f32.xlu0 %v45
    %v86 = vpop.xlane.xlu0 %85
    %87 = vadd.xlane.f32.xlu0 %v46
    %v88 = vpop.xlane.xlu0 %87
    %89 = vadd.xlane.f32.xlu0 %v47
    %v90 = vpop.xlane.xlu0 %89
    %91 = vadd.xlane.f32.xlu0 %v48
    %v92 = vpop.xlane.xlu0 %91
    %93 = vadd.xlane.f32.xlu0 %v49
    %v94 = vpop.xlane.xlu0 %93
    %95 = vadd.xlane.f32.xlu0 %v50
    %v96 = vpop.xlane.xlu0 %95
    %97 = vadd.xlane.f32.xlu0 %v51
    %v98 = vpop.xlane.xlu0 %97
    %99 = vadd.xlane.f32.xlu0 %v52
    %v100 = vpop.xlane.xlu0 %99
    %101 = vadd.xlane.f32.xlu0 %v53
    %v102 = vpop.xlane.xlu0 %101
    %103 = vadd.xlane.f32.xlu0 %v54
    %v104 = vpop.xlane.xlu0 %103
    %105 = vadd.xlane.f32.xlu0 %v55
    %v106 = vpop.xlane.xlu0 %105
    %107 = vadd.xlane.f32.xlu0 %v56
    %v108 = vpop.xlane.xlu0 %107
    %109 = vadd.xlane.f32.xlu0 %v57
    %v110 = vpop.xlane.xlu0 %109
    %111 = vadd.xlane.f32.xlu0 %v58
    %v112 = vpop.xlane.xlu0 %111
    %113 = vadd.xlane.f32.xlu0 %v59
    %v114 = vpop.xlane.xlu0 %113
    %115 = vadd.xlane.f32.xlu0 %v60
    %v116 = vpop.xlane.xlu0 %115
    %117 = vadd.xlane.f32.xlu0 %v61
    %v118 = vpop.xlane.xlu0 %117
    %119 = vadd.xlane.f32.xlu0 %v62
    %v120 = vpop.xlane.xlu0 %119
    %121 = vadd.xlane.f32.xlu0 %v63
    %v122 = vpop.xlane.xlu0 %121
    %123 = vadd.xlane.f32.xlu0 %v64
    %v124 = vpop.xlane.xlu0 %123
    %125 = vadd.xlane.f32.xlu0 %v65
    %v126 = vpop.xlane.xlu0 %125
    %127 = vadd.xlane.f32.xlu0 %v66
    %v128 = vpop.xlane.xlu0 %127
    %129 = vadd.xlane.f32.xlu0 %v67
    %v130 = vpop.xlane.xlu0 %129
    %131 = vadd.xlane.f32.xlu0 %v68
    %v132 = vpop.xlane.xlu0 %131
    %133 = vadd.xlane.f32.xlu0 %v69
    %v134 = vpop.xlane.xlu0 %133
    %135 = vadd.xlane.f32.xlu0 %v70
    %v136 = vpop.xlane.xlu0 %135
    %v137 = vrcp.pop 128.0
    %v138 = vmul.f32 %v74, %v137
    %v139 = vmul.f32 %v76, %v137
    %v140 = vmul.f32 %v78, %v137
    %v141 = vmul.f32 %v80, %v137
    %v142 = vmul.f32 %v82, %v137
    %v143 = vmul.f32 %v84, %v137
    %v144 = vmul.f32 %v86, %v137
    %v145 = vmul.f32 %v88, %v137
    %v146 = vmul.f32 %v90, %v137
    %v147 = vmul.f32 %v92, %v137
    %v148 = vmul.f32 %v94, %v137
    %v149 = vmul.f32 %v96, %v137
    %v150 = vmul.f32 %v98, %v137
    %v151 = vmul.f32 %v100, %v137
    %v152 = vmul.f32 %v102, %v137
    %v153 = vmul.f32 %v104, %v137
    %v154 = vmul.f32 %v106, %v137
    %v155 = vmul.f32 %v108, %v137
    %v156 = vmul.f32 %v110, %v137
    %v157 = vmul.f32 %v112, %v137
    %v158 = vmul.f32 %v114, %v137
    %v159 = vmul.f32 %v116, %v137
    %v160 = vmul.f32 %v118, %v137
    %v161 = vmul.f32 %v120, %v137
    %v162 = vmul.f32 %v122, %v137
    %v163 = vmul.f32 %v124, %v137
    %v164 = vmul.f32 %v126, %v137
    %v165 = vmul.f32 %v128, %v137
    %v166 = vmul.f32 %v130, %v137
    %v167 = vmul.f32 %v132, %v137
    %v168 = vmul.f32 %v134, %v137
    %v169 = vmul.f32 %v136, %v137
    %v170 = vsub.f32 %v39, %v138
    %v171 = vsub.f32 %v40, %v139
    %v172 = vsub.f32 %v41, %v140
    %v173 = vsub.f32 %v42, %v141
    %v174 = vsub.f32 %v43, %v142
    %v175 = vsub.f32 %v44, %v143
    %v176 = vsub.f32 %v45, %v144
    %v177 = vsub.f32 %v46, %v145
    %v178 = vsub.f32 %v47, %v146
    %v179 = vsub.f32 %v48, %v147
    %v180 = vsub.f32 %v49, %v148
    %v181 = vsub.f32 %v50, %v149
    %v182 = vsub.f32 %v51, %v150
    %v183 = vsub.f32 %v52, %v151
    %v184 = vsub.f32 %v53, %v152
    %v185 = vsub.f32 %v54, %v153
    %v186 = vsub.f32 %v55, %v154
    %v187 = vsub.f32 %v56, %v155
    %v188 = vsub.f32 %v57, %v156
    %v189 = vsub.f32 %v58, %v157
    %v190 = vsub.f32 %v59, %v158
    %v191 = vsub.f32 %v60, %v159
    %v192 = vsub.f32 %v61, %v160
    %v193 = vsub.f32 %v62, %v161
    %v194 = vsub.f32 %v63, %v162
    %v195 = vsub.f32 %v64, %v163
    %v196 = vsub.f32 %v65, %v164
    %v197 = vsub.f32 %v66, %v165
    %v198 = vsub.f32 %v67, %v166
    %v199 = vsub.f32 %v68, %v167
    %v200 = vsub.f32 %v69, %v168
    %v201 = vsub.f32 %v70, %v169
    %v202 = vmul.f32 %v170, %v170
    %v203 = vmul.f32 %v171, %v171
    %v204 = vmul.f32 %v172, %v172
    %v205 = vmul.f32 %v173, %v173
    %v206 = vmul.f32 %v174, %v174
    %v207 = vmul.f32 %v175, %v175
    %v208 = vmul.f32 %v176, %v176
    %v209 = vmul.f32 %v177, %v177
    %v210 = vmul.f32 %v178, %v178
    %v211 = vmul.f32 %v179, %v179
    %v212 = vmul.f32 %v180, %v180
    %v213 = vmul.f32 %v181, %v181
    %v214 = vmul.f32 %v182, %v182
    %v215 = vmul.f32 %v183, %v183
    %v216 = vmul.f32 %v184, %v184
    %v217 = vmul.f32 %v185, %v185
    %v218 = vmul.f32 %v186, %v186
    %v219 = vmul.f32 %v187, %v187
    %v220 = vmul.f32 %v188, %v188
    %v221 = vmul.f32 %v189, %v189
    %v222 = vmul.f32 %v190, %v190
    %v223 = vmul.f32 %v191, %v191
    %v224 = vmul.f32 %v192, %v192
    %v225 = vmul.f32 %v193, %v193
    %v226 = vmul.f32 %v194, %v194
    %v227 = vmul.f32 %v195, %v195
    %v228 = vmul.f32 %v196, %v196
    %v229 = vmul.f32 %v197, %v197
    %v230 = vmul.f32 %v198, %v198
    %v231 = vmul.f32 %v199, %v199
    %v232 = vmul.f32 %v200, %v200
    %v233 = vmul.f32 %v201, %v201
    %234 = vadd.xlane.f32.xlu0 %v202
    %v235 = vpop.xlane.xlu0 %234
    %236 = vadd.xlane.f32.xlu0 %v203
    %v237 = vpop.xlane.xlu0 %236
    %238 = vadd.xlane.f32.xlu0 %v204
    %v239 = vpop.xlane.xlu0 %238
    %240 = vadd.xlane.f32.xlu0 %v205
    %v241 = vpop.xlane.xlu0 %240
    %242 = vadd.xlane.f32.xlu0 %v206
    %v243 = vpop.xlane.xlu0 %242
    %244 = vadd.xlane.f32.xlu0 %v207
    %v245 = vpop.xlane.xlu0 %244
    %246 = vadd.xlane.f32.xlu0 %v208
    %v247 = vpop.xlane.xlu0 %246
    %248 = vadd.xlane.f32.xlu0 %v209
    %v249 = vpop.xlane.xlu0 %248
    %250 = vadd.xlane.f32.xlu0 %v210
    %v251 = vpop.xlane.xlu0 %250
    %252 = vadd.xlane.f32.xlu0 %v211
    %v253 = vpop.xlane.xlu0 %252
    %254 = vadd.xlane.f32.xlu0 %v212
    %v255 = vpop.xlane.xlu0 %254
    %256 = vadd.xlane.f32.xlu0 %v213
    %v257 = vpop.xlane.xlu0 %256
    %258 = vadd.xlane.f32.xlu0 %v214
    %v259 = vpop.xlane.xlu0 %258
    %260 = vadd.xlane.f32.xlu0 %v215
    %v261 = vpop.xlane.xlu0 %260
    %262 = vadd.xlane.f32.xlu0 %v216
    %v263 = vpop.xlane.xlu0 %262
    %264 = vadd.xlane.f32.xlu0 %v217
    %v265 = vpop.xlane.xlu0 %264
    %266 = vadd.xlane.f32.xlu0 %v218
    %v267 = vpop.xlane.xlu0 %266
    %268 = vadd.xlane.f32.xlu0 %v219
    %v269 = vpop.xlane.xlu0 %268
    %270 = vadd.xlane.f32.xlu0 %v220
    %v271 = vpop.xlane.xlu0 %270
    %272 = vadd.xlane.f32.xlu0 %v221
    %v273 = vpop.xlane.xlu0 %272
    %274 = vadd.xlane.f32.xlu0 %v222
    %v275 = vpop.xlane.xlu0 %274
    %276 = vadd.xlane.f32.xlu0 %v223
    %v277 = vpop.xlane.xlu0 %276
    %278 = vadd.xlane.f32.xlu0 %v224
    %v279 = vpop.xlane.xlu0 %278
    %280 = vadd.xlane.f32.xlu0 %v225
    %v281 = vpop.xlane.xlu0 %280
    %282 = vadd.xlane.f32.xlu0 %v226
    %v283 = vpop.xlane.xlu0 %282
    %284 = vadd.xlane.f32.xlu0 %v227
    %v285 = vpop.xlane.xlu0 %284
    %286 = vadd.xlane.f32.xlu0 %v228
    %v287 = vpop.xlane.xlu0 %286
    %288 = vadd.xlane.f32.xlu0 %v229
    %v289 = vpop.xlane.xlu0 %288
    %290 = vadd.xlane.f32.xlu0 %v230
    %v291 = vpop.xlane.xlu0 %290
    %292 = vadd.xlane.f32.xlu0 %v231
    %v293 = vpop.xlane.xlu0 %292
    %294 = vadd.xlane.f32.xlu0 %v232
    %v295 = vpop.xlane.xlu0 %294
    %296 = vadd.xlane.f32.xlu0 %v233
    %v297 = vpop.xlane.xlu0 %296
    %v298 = vmul.f32 %v235, %v137
    %v299 = vmul.f32 %v237, %v137
    %v300 = vmul.f32 %v239, %v137
    %v301 = vmul.f32 %v241, %v137
    %v302 = vmul.f32 %v243, %v137
    %v303 = vmul.f32 %v245, %v137
    %v304 = vmul.f32 %v247, %v137
    %v305 = vmul.f32 %v249, %v137
    %v306 = vmul.f32 %v251, %v137
    %v307 = vmul.f32 %v253, %v137
    %v308 = vmul.f32 %v255, %v137
    %v309 = vmul.f32 %v257, %v137
    %v310 = vmul.f32 %v259, %v137
    %v311 = vmul.f32 %v261, %v137
    %v312 = vmul.f32 %v263, %v137
    %v313 = vmul.f32 %v265, %v137
    %v314 = vmul.f32 %v267, %v137
    %v315 = vmul.f32 %v269, %v137
    %v316 = vmul.f32 %v271, %v137
    %v317 = vmul.f32 %v273, %v137
    %v318 = vmul.f32 %v275, %v137
    %v319 = vmul.f32 %v277, %v137
    %v320 = vmul.f32 %v279, %v137
    %v321 = vmul.f32 %v281, %v137
    %v322 = vmul.f32 %v283, %v137
    %v323 = vmul.f32 %v285, %v137
    %v324 = vmul.f32 %v287, %v137
    %v325 = vmul.f32 %v289, %v137
    %v326 = vmul.f32 %v291, %v137
    %v327 = vmul.f32 %v293, %v137
    %v328 = vmul.f32 %v295, %v137
    %v329 = vmul.f32 %v297, %v137
    %v330 = vadd.f32 %v298, 1e-05
    %v331 = vadd.f32 %v299, 1e-05
    %v332 = vadd.f32 %v300, 1e-05
    %v333 = vadd.f32 %v301, 1e-05
    %v334 = vadd.f32 %v302, 1e-05
    %v335 = vadd.f32 %v303, 1e-05
    %v336 = vadd.f32 %v304, 1e-05
    %v337 = vadd.f32 %v305, 1e-05
    %v338 = vadd.f32 %v306, 1e-05
    %v339 = vadd.f32 %v307, 1e-05
    %v340 = vadd.f32 %v308, 1e-05
    %v341 = vadd.f32 %v309, 1e-05
    %v342 = vadd.f32 %v310, 1e-05
    %v343 = vadd.f32 %v311, 1e-05
    %v344 = vadd.f32 %v312, 1e-05
    %v345 = vadd.f32 %v313, 1e-05
    %v346 = vadd.f32 %v314, 1e-05
    %v347 = vadd.f32 %v315, 1e-05
    %v348 = vadd.f32 %v316, 1e-05
    %v349 = vadd.f32 %v317, 1e-05
    %v350 = vadd.f32 %v318, 1e-05
    %v351 = vadd.f32 %v319, 1e-05
    %v352 = vadd.f32 %v320, 1e-05
    %v353 = vadd.f32 %v321, 1e-05
    %v354 = vadd.f32 %v322, 1e-05
    %v355 = vadd.f32 %v323, 1e-05
    %v356 = vadd.f32 %v324, 1e-05
    %v357 = vadd.f32 %v325, 1e-05
    %v358 = vadd.f32 %v326, 1e-05
    %v359 = vadd.f32 %v327, 1e-05
    %v360 = vadd.f32 %v328, 1e-05
    %v361 = vadd.f32 %v329, 1e-05
    %v362 = vrsqrt.pop %v330
    %v363 = vrsqrt.pop %v331
    %v364 = vrsqrt.pop %v332
    %v365 = vrsqrt.pop %v333
    %v366 = vrsqrt.pop %v334
    %v367 = vrsqrt.pop %v335
    %v368 = vrsqrt.pop %v336
    %v369 = vrsqrt.pop %v337
    %v370 = vrsqrt.pop %v338
    %v371 = vrsqrt.pop %v339
    %v372 = vrsqrt.pop %v340
    %v373 = vrsqrt.pop %v341
    %v374 = vrsqrt.pop %v342
    %v375 = vrsqrt.pop %v343
    %v376 = vrsqrt.pop %v344
    %v377 = vrsqrt.pop %v345
    %v378 = vrsqrt.pop %v346
    %v379 = vrsqrt.pop %v347
    %v380 = vrsqrt.pop %v348
    %v381 = vrsqrt.pop %v349
    %v382 = vrsqrt.pop %v350
    %v383 = vrsqrt.pop %v351
    %v384 = vrsqrt.pop %v352
    %v385 = vrsqrt.pop %v353
    %v386 = vrsqrt.pop %v354
    %v387 = vrsqrt.pop %v355
    %v388 = vrsqrt.pop %v356
    %v389 = vrsqrt.pop %v357
    %v390 = vrsqrt.pop %v358
    %v391 = vrsqrt.pop %v359
    %v392 = vrsqrt.pop %v360
    %v393 = vrsqrt.pop %v361
    %v394 = vmul.f32 %v170, %v362
    %v395 = vmul.f32 %v171, %v363
    %v396 = vmul.f32 %v172, %v364
    %v397 = vmul.f32 %v173, %v365
    %v398 = vmul.f32 %v174, %v366
    %v399 = vmul.f32 %v175, %v367
    %v400 = vmul.f32 %v176, %v368
    %v401 = vmul.f32 %v177, %v369
    %v402 = vmul.f32 %v178, %v370
    %v403 = vmul.f32 %v179, %v371
    %v404 = vmul.f32 %v180, %v372
    %v405 = vmul.f32 %v181, %v373
    %v406 = vmul.f32 %v182, %v374
    %v407 = vmul.f32 %v183, %v375
    %v408 = vmul.f32 %v184, %v376
    %v409 = vmul.f32 %v185, %v377
    %v410 = vmul.f32 %v186, %v378
    %v411 = vmul.f32 %v187, %v379
    %v412 = vmul.f32 %v188, %v380
    %v413 = vmul.f32 %v189, %v381
    %v414 = vmul.f32 %v190, %v382
    %v415 = vmul.f32 %v191, %v383
    %v416 = vmul.f32 %v192, %v384
    %v417 = vmul.f32 %v193, %v385
    %v418 = vmul.f32 %v194, %v386
    %v419 = vmul.f32 %v195, %v387
    %v420 = vmul.f32 %v196, %v388
    %v421 = vmul.f32 %v197, %v389
    %v422 = vmul.f32 %v198, %v390
    %v423 = vmul.f32 %v199, %v391
    %v424 = vmul.f32 %v200, %v392
    %v425 = vmul.f32 %v201, %v393
    %v427 = vlaneseq
    %v428 = vshrl.u32 %v427, 7
    %v429 = vsub.s32 0, %v428
    %v430 = vrot.slane %v71, %v429
    %v432 = vmul.f32 %v394, %v430
    %v433 = vmul.f32 %v395, %v430
    %v434 = vmul.f32 %v396, %v430
    %v435 = vmul.f32 %v397, %v430
    %v436 = vmul.f32 %v398, %v430
    %v437 = vmul.f32 %v399, %v430
    %v438 = vmul.f32 %v400, %v430
    %v439 = vmul.f32 %v401, %v430
    %v440 = vmul.f32 %v402, %v430
    %v441 = vmul.f32 %v403, %v430
    %v442 = vmul.f32 %v404, %v430
    %v443 = vmul.f32 %v405, %v430
    %v444 = vmul.f32 %v406, %v430
    %v445 = vmul.f32 %v407, %v430
    %v446 = vmul.f32 %v408, %v430
    %v447 = vmul.f32 %v409, %v430
    %v448 = vmul.f32 %v410, %v430
    %v449 = vmul.f32 %v411, %v430
    %v450 = vmul.f32 %v412, %v430
    %v451 = vmul.f32 %v413, %v430
    %v452 = vmul.f32 %v414, %v430
    %v453 = vmul.f32 %v415, %v430
    %v454 = vmul.f32 %v416, %v430
    %v455 = vmul.f32 %v417, %v430
    %v456 = vmul.f32 %v418, %v430
    %v457 = vmul.f32 %v419, %v430
    %v458 = vmul.f32 %v420, %v430
    %v459 = vmul.f32 %v421, %v430
    %v460 = vmul.f32 %v422, %v430
    %v461 = vmul.f32 %v423, %v430
    %v462 = vmul.f32 %v424, %v430
    %v463 = vmul.f32 %v425, %v430
    %v465 = vlaneseq
    %v466 = vshrl.u32 %v465, 7
    %v467 = vsub.s32 0, %v466
    %v468 = vrot.slane %v72, %v467
    %v470 = vadd.f32 %v432, %v468
    %v471 = vadd.f32 %v433, %v468
    %v472 = vadd.f32 %v434, %v468
    %v473 = vadd.f32 %v435, %v468
    %v474 = vadd.f32 %v436, %v468
    %v475 = vadd.f32 %v437, %v468
    %v476 = vadd.f32 %v438, %v468
    %v477 = vadd.f32 %v439, %v468
    %v478 = vadd.f32 %v440, %v468
    %v479 = vadd.f32 %v441, %v468
    %v480 = vadd.f32 %v442, %v468
    %v481 = vadd.f32 %v443, %v468
    %v482 = vadd.f32 %v444, %v468
    %v483 = vadd.f32 %v445, %v468
    %v484 = vadd.f32 %v446, %v468
    %v485 = vadd.f32 %v447, %v468
    %v486 = vadd.f32 %v448, %v468
    %v487 = vadd.f32 %v449, %v468
    %v488 = vadd.f32 %v450, %v468
    %v489 = vadd.f32 %v451, %v468
    %v490 = vadd.f32 %v452, %v468
    %v491 = vadd.f32 %v453, %v468
    %v492 = vadd.f32 %v454, %v468
    %v493 = vadd.f32 %v455, %v468
    %v494 = vadd.f32 %v456, %v468
    %v495 = vadd.f32 %v457, %v468
    %v496 = vadd.f32 %v458, %v468
    %v497 = vadd.f32 %v459, %v468
    %v498 = vadd.f32 %v460, %v468
    %v499 = vadd.f32 %v461, %v468
    %v500 = vadd.f32 %v462, %v468
    %v501 = vadd.f32 %v463, %v468
    %v502 = vld [vmem:[%s3] sm:$0xff]
    %v503 = vld [vmem:[%s3 + $0x8] sm:$0xff]
    %v504 = vld [vmem:[%s3 + $0x10] sm:$0xff]
    %v505 = vld [vmem:[%s3 + $0x18] sm:$0xff]
    %v506 = vld [vmem:[%s3 + $0x20] sm:$0xff]
    %v507 = vld [vmem:[%s3 + $0x28] sm:$0xff]
    %v508 = vld [vmem:[%s3 + $0x30] sm:$0xff]
    %v509 = vld [vmem:[%s3 + $0x38] sm:$0xff]
    %v510 = vld [vmem:[%s3 + $0x40] sm:$0xff]
    %v511 = vld [vmem:[%s3 + $0x48] sm:$0xff]
    %v512 = vld [vmem:[%s3 + $0x50] sm:$0xff]
    %v513 = vld [vmem:[%s3 + $0x58] sm:$0xff]
    %v514 = vld [vmem:[%s3 + $0x60] sm:$0xff]
    %v515 = vld [vmem:[%s3 + $0x68] sm:$0xff]
    %v516 = vld [vmem:[%s3 + $0x70] sm:$0xff]
    %v517 = vld [vmem:[%s3 + $0x78] sm:$0xff]
    %v518 = vld [vmem:[%s3 + $0x80] sm:$0xff]
    %v519 = vld [vmem:[%s3 + $0x88] sm:$0xff]
    %v520 = vld [vmem:[%s3 + $0x90] sm:$0xff]
    %v521 = vld [vmem:[%s3 + $0x98] sm:$0xff]
    %v522 = vld [vmem:[%s3 + $0xa0] sm:$0xff]
    %v523 = vld [vmem:[%s3 + $0xa8] sm:$0xff]
    %v524 = vld [vmem:[%s3 + $0xb0] sm:$0xff]
    %v525 = vld [vmem:[%s3 + $0xb8] sm:$0xff]
    %v526 = vld [vmem:[%s3 + $0xc0] sm:$0xff]
    %v527 = vld [vmem:[%s3 + $0xc8] sm:$0xff]
    %v528 = vld [vmem:[%s3 + $0xd0] sm:$0xff]
    %v529 = vld [vmem:[%s3 + $0xd8] sm:$0xff]
    %v530 = vld [vmem:[%s3 + $0xe0] sm:$0xff]
    %v531 = vld [vmem:[%s3 + $0xe8] sm:$0xff]
    %v532 = vld [vmem:[%s3 + $0xf0] sm:$0xff]
    %v533 = vld [vmem:[%s3 + $0xf8] sm:$0xff]
    %v534 = vld [vmem:[%s3 + $0x100] sm:$0xff]
    %v535 = vld [vmem:[%s3 + $0x108] sm:$0xff]
    %v536 = vld [vmem:[%s3 + $0x110] sm:$0xff]
    %v537 = vld [vmem:[%s3 + $0x118] sm:$0xff]
    %v538 = vld [vmem:[%s3 + $0x120] sm:$0xff]
    %v539 = vld [vmem:[%s3 + $0x128] sm:$0xff]
    %v540 = vld [vmem:[%s3 + $0x130] sm:$0xff]
    %v541 = vld [vmem:[%s3 + $0x138] sm:$0xff]
    %v542 = vld [vmem:[%s3 + $0x140] sm:$0xff]
    %v543 = vld [vmem:[%s3 + $0x148] sm:$0xff]
    %v544 = vld [vmem:[%s3 + $0x150] sm:$0xff]
    %v545 = vld [vmem:[%s3 + $0x158] sm:$0xff]
    %v546 = vld [vmem:[%s3 + $0x160] sm:$0xff]
    %v547 = vld [vmem:[%s3 + $0x168] sm:$0xff]
    %v548 = vld [vmem:[%s3 + $0x170] sm:$0xff]
    %v549 = vld [vmem:[%s3 + $0x178] sm:$0xff]
    %v550 = vld [vmem:[%s3 + $0x180] sm:$0xff]
    %v551 = vld [vmem:[%s3 + $0x188] sm:$0xff]
    %v552 = vld [vmem:[%s3 + $0x190] sm:$0xff]
    %v553 = vld [vmem:[%s3 + $0x198] sm:$0xff]
    %v554 = vld [vmem:[%s3 + $0x1a0] sm:$0xff]
    %v555 = vld [vmem:[%s3 + $0x1a8] sm:$0xff]
    %v556 = vld [vmem:[%s3 + $0x1b0] sm:$0xff]
    %v557 = vld [vmem:[%s3 + $0x1b8] sm:$0xff]
    %v558 = vld [vmem:[%s3 + $0x1c0] sm:$0xff]
    %v559 = vld [vmem:[%s3 + $0x1c8] sm:$0xff]
    %v560 = vld [vmem:[%s3 + $0x1d0] sm:$0xff]
    %v561 = vld [vmem:[%s3 + $0x1d8] sm:$0xff]
    %v562 = vld [vmem:[%s3 + $0x1e0] sm:$0xff]
    %v563 = vld [vmem:[%s3 + $0x1e8] sm:$0xff]
    %v564 = vld [vmem:[%s3 + $0x1f0] sm:$0xff]
    %v565 = vld [vmem:[%s3 + $0x1f8] sm:$0xff]
    %v566 = vld [vmem:[%s4] sm:$0xf]
    %v568 = vlaneseq
    %v569 = vshrl.u32 %v568, 7
    %v570 = vsub.s32 0, %v569
    %v571 = vrot.slane %v566, %v570
    %v572 = vlaneseq
    %v573 = vshrl.u32 %v572, 7
    %v574 = vsub.s32 1, %v573
    %v575 = vrot.slane %v566, %v574
    %v576 = vlaneseq
    %v577 = vshrl.u32 %v576, 7
    %v578 = vsub.s32 2, %v577
    %v579 = vrot.slane %v566, %v578
    %v580 = vlaneseq
    %v581 = vshrl.u32 %v580, 7
    %v582 = vsub.s32 3, %v581
    %v583 = vrot.slane %v566, %v582
    %588 = vmatprep.subr.mxu0 %v503
    %589 = vmatpush1.msra.mxu0 %v502
    %590 = vmatprep.subr.mxu0 %v507
    %591 = vmatpush1.msra.mxu0 %v506
    %592 = vmatprep.subr.mxu0 %v511
    %593 = vmatpush1.msra.mxu0 %v510
    %594 = vmatprep.subr.mxu0 %v515
    %595 = vmatpush1.msra.mxu0 %v514
    %596 = vmatprep.subr.mxu0 %v519
    %597 = vmatpush1.msra.mxu0 %v518
    %598 = vmatprep.subr.mxu0 %v523
    %599 = vmatpush1.msra.mxu0 %v522
    %600 = vmatprep.subr.mxu0 %v527
    %601 = vmatpush1.msra.mxu0 %v526
    %602 = vmatprep.subr.mxu0 %v531
    %603 = vmatpush1.msra.mxu0 %v530
    %604 = vmatprep.subr.mxu0 %v535
    %605 = vmatpush1.msra.mxu0 %v534
    %606 = vmatprep.subr.mxu0 %v539
    %607 = vmatpush1.msra.mxu0 %v538
    %608 = vmatprep.subr.mxu0 %v543
    %609 = vmatpush1.msra.mxu0 %v542
    %610 = vmatprep.subr.mxu0 %v547
    %611 = vmatpush1.msra.mxu0 %v546
    %612 = vmatprep.subr.mxu0 %v551
    %613 = vmatpush1.msra.mxu0 %v550
    %614 = vmatprep.subr.mxu0 %v555
    %615 = vmatpush1.msra.mxu0 %v554
    %616 = vmatprep.subr.mxu0 %v559
    %617 = vmatpush1.msra.mxu0 %v558
    %618 = vmatprep.subr.mxu0 %v563
    %619 = vmatpush1.msra.mxu0 %v562
    %620 = vmatprep.subr.mxu0 0.0
    %621 = vmatpush1.msra.mxu0 0.0
    %622 = vmatprep.subr.mxu0 0.0
    %623 = vmatpush1.msra.mxu0 0.0
    %624 = vmatprep.subr.mxu0 0.0
    %625 = vmatpush1.msra.mxu0 0.0
    %626 = vmatprep.subr.mxu0 0.0
    %627 = vmatpush1.msra.mxu0 0.0
    %628 = vmatprep.subr.mxu0 0.0
    %629 = vmatpush1.msra.mxu0 0.0
    %630 = vmatprep.subr.mxu0 0.0
    %631 = vmatpush1.msra.mxu0 0.0
    %632 = vmatprep.subr.mxu0 0.0
    %633 = vmatpush1.msra.mxu0 0.0
    %634 = vmatprep.subr.mxu0 0.0
    %635 = vmatpush1.msra.mxu0 0.0
    %636 = vmatprep.subr.mxu0 0.0
    %637 = vmatpush1.msra.mxu0 0.0
    %638 = vmatprep.subr.mxu0 0.0
    %639 = vmatpush1.msra.mxu0 0.0
    %640 = vmatprep.subr.mxu0 0.0
    %641 = vmatpush1.msra.mxu0 0.0
    %642 = vmatprep.subr.mxu0 0.0
    %643 = vmatpush1.msra.mxu0 0.0
    %644 = vmatprep.subr.mxu0 0.0
    %645 = vmatpush1.msra.mxu0 0.0
    %646 = vmatprep.subr.mxu0 0.0
    %647 = vmatpush1.msra.mxu0 0.0
    %648 = vmatprep.subr.mxu0 0.0
    %649 = vmatpush1.msra.mxu0 0.0
    %650 = vmatprep.subr.mxu0 0.0
    %651 = vmatpush1.msra.mxu0 0.0
    %652 = vmatprep.mubr.f32.mxu0 0.0
    %653 = vmatmul.mubr.f32.gmra.mrb[0].mxu0 %v470
    %v654 = vpop.f32.mrb[0].mxu0
    %v655 = vadd.f32 %v571, %v654
    %v656 = vpop.f32.mrb[0].mxu0
    %v657 = vadd.f32 %v575, %v656
    %658 = vmatprep.mubr.f32.mxu0 0.0
    %659 = vmatmul.mubr.f32.gmra.mrb[0].mxu0 %v471
    %v660 = vpop.f32.mrb[0].mxu0
    %v661 = vadd.f32 %v571, %v660
    %v662 = vpop.f32.mrb[0].mxu0
    %v663 = vadd.f32 %v575, %v662
    %664 = vmatprep.mubr.f32.mxu0 0.0
    %665 = vmatmul.mubr.f32.gmra.mrb[0].mxu0 %v472
    %v666 = vpop.f32.mrb[0].mxu0
    %v667 = vadd.f32 %v571, %v666
    %v668 = vpop.f32.mrb[0].mxu0
    %v669 = vadd.f32 %v575, %v668
    %670 = vmatprep.mubr.f32.mxu0 0.0
    %671 = vmatmul.mubr.f32.gmra.mrb[0].mxu0 %v473
    %v672 = vpop.f32.mrb[0].mxu0
    %v673 = vadd.f32 %v571, %v672
    %v674 = vpop.f32.mrb[0].mxu0
    %v675 = vadd.f32 %v575, %v674
    %676 = vmatprep.mubr.f32.mxu0 0.0
    %677 = vmatmul.mubr.f32.gmra.mrb[0].mxu0 %v474
    %v678 = vpop.f32.mrb[0].mxu0
    %v679 = vadd.f32 %v571, %v678
    %v680 = vpop.f32.mrb[0].mxu0
    %v681 = vadd.f32 %v575, %v680
    %682 = vmatprep.mubr.f32.mxu0 0.0
    %683 = vmatmul.mubr.f32.gmra.mrb[0].mxu0 %v475
    %v684 = vpop.f32.mrb[0].mxu0
    %v685 = vadd.f32 %v571, %v684
    %v686 = vpop.f32.mrb[0].mxu0
    %v687 = vadd.f32 %v575, %v686
    %688 = vmatprep.mubr.f32.mxu0 0.0
    %689 = vmatmul.mubr.f32.gmra.mrb[0].mxu0 %v476
    %v690 = vpop.f32.mrb[0].mxu0
    %v691 = vadd.f32 %v571, %v690
    %v692 = vpop.f32.mrb[0].mxu0
    %v693 = vadd.f32 %v575, %v692
    %694 = vmatprep.mubr.f32.mxu0 0.0
    %695 = vmatmul.mubr.f32.gmra.mrb[0].mxu0 %v477
    %v696 = vpop.f32.mrb[0].mxu0
    %v697 = vadd.f32 %v571, %v696
    %v698 = vpop.f32.mrb[0].mxu0
    %v699 = vadd.f32 %v575, %v698
    %700 = vmatprep.mubr.f32.mxu0 0.0
    %701 = vmatmul.mubr.f32.gmra.mrb[0].mxu0 %v478
    %v702 = vpop.f32.mrb[0].mxu0
    %v703 = vadd.f32 %v571, %v702
    %v704 = vpop.f32.mrb[0].mxu0
    %v705 = vadd.f32 %v575, %v704
    %706 = vmatprep.mubr.f32.mxu0 0.0
    %707 = vmatmul.mubr.f32.gmra.mrb[0].mxu0 %v479
    %v708 = vpop.f32.mrb[0].mxu0
    %v709 = vadd.f32 %v571, %v708
    %v710 = vpop.f32.mrb[0].mxu0
    %v711 = vadd.f32 %v575, %v710
    %712 = vmatprep.mubr.f32.mxu0 0.0
    %713 = vmatmul.mubr.f32.gmra.mrb[0].mxu0 %v480
    %v714 = vpop.f32.mrb[0].mxu0
    %v715 = vadd.f32 %v571, %v714
    %v716 = vpop.f32.mrb[0].mxu0
    %v717 = vadd.f32 %v575, %v716
    %718 = vmatprep.mubr.f32.mxu0 0.0
    %719 = vmatmul.mubr.f32.gmra.mrb[0].mxu0 %v481
    %v720 = vpop.f32.mrb[0].mxu0
    %v721 = vadd.f32 %v571, %v720
    %v722 = vpop.f32.mrb[0].mxu0
    %v723 = vadd.f32 %v575, %v722
    %724 = vmatprep.mubr.f32.mxu0 0.0
    %725 = vmatmul.mubr.f32.gmra.mrb[0].mxu0 %v482
    %v726 = vpop.f32.mrb[0].mxu0
    %v727 = vadd.f32 %v571, %v726
    %v728 = vpop.f32.mrb[0].mxu0
    %v729 = vadd.f32 %v575, %v728
    %730 = vmatprep.mubr.f32.mxu0 0.0
    %731 = vmatmul.mubr.f32.gmra.mrb[0].mxu0 %v483
    %v732 = vpop.f32.mrb[0].mxu0
    %v733 = vadd.f32 %v571, %v732
    %v734 = vpop.f32.mrb[0].mxu0
    %v735 = vadd.f32 %v575, %v734
    %736 = vmatprep.mubr.f32.mxu0 0.0
    %737 = vmatmul.mubr.f32.gmra.mrb[0].mxu0 %v484
    %v738 = vpop.f32.mrb[0].mxu0
    %v739 = vadd.f32 %v571, %v738
    %v740 = vpop.f32.mrb[0].mxu0
    %v741 = vadd.f32 %v575, %v740
    %742 = vmatprep.mubr.f32.mxu0 0.0
    %743 = vmatmul.mubr.f32.gmra.mrb[0].mxu0 %v485
    %v744 = vpop.f32.mrb[0].mxu0
    %v745 = vadd.f32 %v571, %v744
    %v746 = vpop.f32.mrb[0].mxu0
    %v747 = vadd.f32 %v575, %v746
    %748 = vmatprep.mubr.f32.mxu0 0.0
    %749 = vmatmul.mubr.f32.gmra.mrb[0].mxu0 %v486
    %v750 = vpop.f32.mrb[0].mxu0
    %v751 = vadd.f32 %v571, %v750
    %v752 = vpop.f32.mrb[0].mxu0
    %v753 = vadd.f32 %v575, %v752
    %754 = vmatprep.mubr.f32.mxu0 0.0
    %755 = vmatmul.mubr.f32.gmra.mrb[0].mxu0 %v487
    %v756 = vpop.f32.mrb[0].mxu0
    %v757 = vadd.f32 %v571, %v756
    %v758 = vpop.f32.mrb[0].mxu0
    %v759 = vadd.f32 %v575, %v758
    %760 = vmatprep.mubr.f32.mxu0 0.0
    %761 = vmatmul.mubr.f32.gmra.mrb[0].mxu0 %v488
    %v762 = vpop.f32.mrb[0].mxu0
    %v763 = vadd.f32 %v571, %v762
    %v764 = vpop.f32.mrb[0].mxu0
    %v765 = vadd.f32 %v575, %v764
    %766 = vmatprep.mubr.f32.mxu0 0.0
    %767 = vmatmul.mubr.f32.gmra.mrb[0].mxu0 %v489
    %v768 = vpop.f32.mrb[0].mxu0
    %v769 = vadd.f32 %v571, %v768
    %v770 = vpop.f32.mrb[0].mxu0
    %v771 = vadd.f32 %v575, %v770
    %772 = vmatprep.mubr.f32.mxu0 0.0
    %773 = vmatmul.mubr.f32.gmra.mrb[0].mxu0 %v490
    %v774 = vpop.f32.mrb[0].mxu0
    %v775 = vadd.f32 %v571, %v774
    %v776 = vpop.f32.mrb[0].mxu0
    %v777 = vadd.f32 %v575, %v776
    %778 = vmatprep.mubr.f32.mxu0 0.0
    %779 = vmatmul.mubr.f32.gmra.mrb[0].mxu0 %v491
    %v780 = vpop.f32.mrb[0].mxu0
    %v781 = vadd.f32 %v571, %v780
    %v782 = vpop.f32.mrb[0].mxu0
    %v783 = vadd.f32 %v575, %v782
    %784 = vmatprep.mubr.f32.mxu0 0.0
    %785 = vmatmul.mubr.f32.gmra.mrb[0].mxu0 %v492
    %v786 = vpop.f32.mrb[0].mxu0
    %v787 = vadd.f32 %v571, %v786
    %v788 = vpop.f32.mrb[0].mxu0
    %v789 = vadd.f32 %v575, %v788
    %790 = vmatprep.mubr.f32.mxu0 0.0
    %791 = vmatmul.mubr.f32.gmra.mrb[0].mxu0 %v493
    %v792 = vpop.f32.mrb[0].mxu0
    %v793 = vadd.f32 %v571, %v792
    %v794 = vpop.f32.mrb[0].mxu0
    %v795 = vadd.f32 %v575, %v794
    %796 = vmatprep.mubr.f32.mxu0 0.0
    %797 = vmatmul.mubr.f32.gmra.mrb[0].mxu0 %v494
    %v798 = vpop.f32.mrb[0].mxu0
    %v799 = vadd.f32 %v571, %v798
    %v800 = vpop.f32.mrb[0].mxu0
    %v801 = vadd.f32 %v575, %v800
    %802 = vmatprep.mubr.f32.mxu0 0.0
    %803 = vmatmul.mubr.f32.gmra.mrb[0].mxu0 %v495
    %v804 = vpop.f32.mrb[0].mxu0
    %v805 = vadd.f32 %v571, %v804
    %v806 = vpop.f32.mrb[0].mxu0
    %v807 = vadd.f32 %v575, %v806
    %808 = vmatprep.mubr.f32.mxu0 0.0
    %809 = vmatmul.mubr.f32.gmra.mrb[0].mxu0 %v496
    %v810 = vpop.f32.mrb[0].mxu0
    %v811 = vadd.f32 %v571, %v810
    %v812 = vpop.f32.mrb[0].mxu0
    %v813 = vadd.f32 %v575, %v812
    %814 = vmatprep.mubr.f32.mxu0 0.0
    %815 = vmatmul.mubr.f32.gmra.mrb[0].mxu0 %v497
    %v816 = vpop.f32.mrb[0].mxu0
    %v817 = vadd.f32 %v571, %v816
    %v818 = vpop.f32.mrb[0].mxu0
    %v819 = vadd.f32 %v575, %v818
    %820 = vmatprep.mubr.f32.mxu0 0.0
    %821 = vmatmul.mubr.f32.gmra.mrb[0].mxu0 %v498
    %v822 = vpop.f32.mrb[0].mxu0
    %v823 = vadd.f32 %v571, %v822
    %v824 = vpop.f32.mrb[0].mxu0
    %v825 = vadd.f32 %v575, %v824
    %826 = vmatprep.mubr.f32.mxu0 0.0
    %827 = vmatmul.mubr.f32.gmra.mrb[0].mxu0 %v499
    %v828 = vpop.f32.mrb[0].mxu0
    %v829 = vadd.f32 %v571, %v828
    %v830 = vpop.f32.mrb[0].mxu0
    %v831 = vadd.f32 %v575, %v830
    %832 = vmatprep.mubr.f32.mxu0 0.0
    %833 = vmatmul.mubr.f32.gmra.mrb[0].mxu0 %v500
    %v834 = vpop.f32.mrb[0].mxu0
    %v835 = vadd.f32 %v571, %v834
    %v836 = vpop.f32.mrb[0].mxu0
    %v837 = vadd.f32 %v575, %v836
    %838 = vmatprep.mubr.f32.mxu0 0.0
    %839 = vmatmul.mubr.f32.gmra.mrb[0].mxu0 %v501
    %v840 = vpop.f32.mrb[0].mxu0
    %v841 = vadd.f32 %v571, %v840
    %v842 = vpop.f32.mrb[0].mxu0
    %v843 = vadd.f32 %v575, %v842
    %844 = vdwg.mxu0
    %845 = vmatprep.subr.mxu0 %v505
    %846 = vmatpush1.msra.mxu0 %v504
    %847 = vmatprep.subr.mxu0 %v509
    %848 = vmatpush1.msra.mxu0 %v508
    %849 = vmatprep.subr.mxu0 %v513
    %850 = vmatpush1.msra.mxu0 %v512
    %851 = vmatprep.subr.mxu0 %v517
    %852 = vmatpush1.msra.mxu0 %v516
    %853 = vmatprep.subr.mxu0 %v521
    %854 = vmatpush1.msra.mxu0 %v520
    %855 = vmatprep.subr.mxu0 %v525
    %856 = vmatpush1.msra.mxu0 %v524
    %857 = vmatprep.subr.mxu0 %v529
    %858 = vmatpush1.msra.mxu0 %v528
    %859 = vmatprep.subr.mxu0 %v533
    %860 = vmatpush1.msra.mxu0 %v532
    %861 = vmatprep.subr.mxu0 %v537
    %862 = vmatpush1.msra.mxu0 %v536
    %863 = vmatprep.subr.mxu0 %v541
    %864 = vmatpush1.msra.mxu0 %v540
    %865 = vmatprep.subr.mxu0 %v545
    %866 = vmatpush1.msra.mxu0 %v544
    %867 = vmatprep.subr.mxu0 %v549
    %868 = vmatpush1.msra.mxu0 %v548
    %869 = vmatprep.subr.mxu0 %v553
    %870 = vmatpush1.msra.mxu0 %v552
    %871 = vmatprep.subr.mxu0 %v557
    %872 = vmatpush1.msra.mxu0 %v556
    %873 = vmatprep.subr.mxu0 %v561
    %874 = vmatpush1.msra.mxu0 %v560
    %875 = vmatprep.subr.mxu0 %v565
    %876 = vmatpush1.msra.mxu0 %v564
    %877 = vmatprep.subr.mxu0 0.0
    %878 = vmatpush1.msra.mxu0 0.0
    %879 = vmatprep.subr.mxu0 0.0
    %880 = vmatpush1.msra.mxu0 0.0
    %881 = vmatprep.subr.mxu0 0.0
    %882 = vmatpush1.msra.mxu0 0.0
    %883 = vmatprep.subr.mxu0 0.0
    %884 = vmatpush1.msra.mxu0 0.0
    %885 = vmatprep.subr.mxu0 0.0
    %886 = vmatpush1.msra.mxu0 0.0
    %887 = vmatprep.subr.mxu0 0.0
    %888 = vmatpush1.msra.mxu0 0.0
    %889 = vmatprep.subr.mxu0 0.0
    %890 = vmatpush1.msra.mxu0 0.0
    %891 = vmatprep.subr.mxu0 0.0
    %892 = vmatpush1.msra.mxu0 0.0
    %893 = vmatprep.subr.mxu0 0.0
    %894 = vmatpush1.msra.mxu0 0.0
    %895 = vmatprep.subr.mxu0 0.0
    %896 = vmatpush1.msra.mxu0 0.0
    %897 = vmatprep.subr.mxu0 0.0
    %898 = vmatpush1.msra.mxu0 0.0
    %899 = vmatprep.subr.mxu0 0.0
    %900 = vmatpush1.msra.mxu0 0.0
    %901 = vmatprep.subr.mxu0 0.0
    %902 = vmatpush1.msra.mxu0 0.0
    %903 = vmatprep.subr.mxu0 0.0
    %904 = vmatpush1.msra.mxu0 0.0
    %905 = vmatprep.subr.mxu0 0.0
    %906 = vmatpush1.msra.mxu0 0.0
    %907 = vmatprep.subr.mxu0 0.0
    %908 = vmatpush1.msra.mxu0 0.0
    %909 = vmatprep.mubr.f32.mxu0 0.0
    %910 = vmatmul.mubr.f32.gmra.mrb[0].mxu0 %v470
    %v911 = vpop.f32.mrb[0].mxu0
    %v912 = vadd.f32 %v579, %v911
    %v913 = vpop.f32.mrb[0].mxu0
    %v914 = vadd.f32 %v583, %v913
    %915 = vmatprep.mubr.f32.mxu0 0.0
    %916 = vmatmul.mubr.f32.gmra.mrb[0].mxu0 %v471
    %v917 = vpop.f32.mrb[0].mxu0
    %v918 = vadd.f32 %v579, %v917
    %v919 = vpop.f32.mrb[0].mxu0
    %v920 = vadd.f32 %v583, %v919
    %921 = vmatprep.mubr.f32.mxu0 0.0
    %922 = vmatmul.mubr.f32.gmra.mrb[0].mxu0 %v472
    %v923 = vpop.f32.mrb[0].mxu0
    %v924 = vadd.f32 %v579, %v923
    %v925 = vpop.f32.mrb[0].mxu0
    %v926 = vadd.f32 %v583, %v925
    %927 = vmatprep.mubr.f32.mxu0 0.0
    %928 = vmatmul.mubr.f32.gmra.mrb[0].mxu0 %v473
    %v929 = vpop.f32.mrb[0].mxu0
    %v930 = vadd.f32 %v579, %v929
    %v931 = vpop.f32.mrb[0].mxu0
    %v932 = vadd.f32 %v583, %v931
    %933 = vmatprep.mubr.f32.mxu0 0.0
    %934 = vmatmul.mubr.f32.gmra.mrb[0].mxu0 %v474
    %v935 = vpop.f32.mrb[0].mxu0
    %v936 = vadd.f32 %v579, %v935
    %v937 = vpop.f32.mrb[0].mxu0
    %v938 = vadd.f32 %v583, %v937
    %939 = vmatprep.mubr.f32.mxu0 0.0
    %940 = vmatmul.mubr.f32.gmra.mrb[0].mxu0 %v475
    %v941 = vpop.f32.mrb[0].mxu0
    %v942 = vadd.f32 %v579, %v941
    %v943 = vpop.f32.mrb[0].mxu0
    %v944 = vadd.f32 %v583, %v943
    %945 = vmatprep.mubr.f32.mxu0 0.0
    %946 = vmatmul.mubr.f32.gmra.mrb[0].mxu0 %v476
    %v947 = vpop.f32.mrb[0].mxu0
    %v948 = vadd.f32 %v579, %v947
    %v949 = vpop.f32.mrb[0].mxu0
    %v950 = vadd.f32 %v583, %v949
    %951 = vmatprep.mubr.f32.mxu0 0.0
    %952 = vmatmul.mubr.f32.gmra.mrb[0].mxu0 %v477
    %v953 = vpop.f32.mrb[0].mxu0
    %v954 = vadd.f32 %v579, %v953
    %v955 = vpop.f32.mrb[0].mxu0
    %v956 = vadd.f32 %v583, %v955
    %957 = vmatprep.mubr.f32.mxu0 0.0
    %958 = vmatmul.mubr.f32.gmra.mrb[0].mxu0 %v478
    %v959 = vpop.f32.mrb[0].mxu0
    %v960 = vadd.f32 %v579, %v959
    %v961 = vpop.f32.mrb[0].mxu0
    %v962 = vadd.f32 %v583, %v961
    %963 = vmatprep.mubr.f32.mxu0 0.0
    %964 = vmatmul.mubr.f32.gmra.mrb[0].mxu0 %v479
    %v965 = vpop.f32.mrb[0].mxu0
    %v966 = vadd.f32 %v579, %v965
    %v967 = vpop.f32.mrb[0].mxu0
    %v968 = vadd.f32 %v583, %v967
    %969 = vmatprep.mubr.f32.mxu0 0.0
    %970 = vmatmul.mubr.f32.gmra.mrb[0].mxu0 %v480
    %v971 = vpop.f32.mrb[0].mxu0
    %v972 = vadd.f32 %v579, %v971
    %v973 = vpop.f32.mrb[0].mxu0
    %v974 = vadd.f32 %v583, %v973
    %975 = vmatprep.mubr.f32.mxu0 0.0
    %976 = vmatmul.mubr.f32.gmra.mrb[0].mxu0 %v481
    %v977 = vpop.f32.mrb[0].mxu0
    %v978 = vadd.f32 %v579, %v977
    %v979 = vpop.f32.mrb[0].mxu0
    %v980 = vadd.f32 %v583, %v979
    %981 = vmatprep.mubr.f32.mxu0 0.0
    %982 = vmatmul.mubr.f32.gmra.mrb[0].mxu0 %v482
    %v983 = vpop.f32.mrb[0].mxu0
    %v984 = vadd.f32 %v579, %v983
    %v985 = vpop.f32.mrb[0].mxu0
    %v986 = vadd.f32 %v583, %v985
    %987 = vmatprep.mubr.f32.mxu0 0.0
    %988 = vmatmul.mubr.f32.gmra.mrb[0].mxu0 %v483
    %v989 = vpop.f32.mrb[0].mxu0
    %v990 = vadd.f32 %v579, %v989
    %v991 = vpop.f32.mrb[0].mxu0
    %v992 = vadd.f32 %v583, %v991
    %993 = vmatprep.mubr.f32.mxu0 0.0
    %994 = vmatmul.mubr.f32.gmra.mrb[0].mxu0 %v484
    %v995 = vpop.f32.mrb[0].mxu0
    %v996 = vadd.f32 %v579, %v995
    %v997 = vpop.f32.mrb[0].mxu0
    %v998 = vadd.f32 %v583, %v997
    %999 = vmatprep.mubr.f32.mxu0 0.0
    %1000 = vmatmul.mubr.f32.gmra.mrb[0].mxu0 %v485
    %v1001 = vpop.f32.mrb[0].mxu0
    %v1002 = vadd.f32 %v579, %v1001
    %v1003 = vpop.f32.mrb[0].mxu0
    %v1004 = vadd.f32 %v583, %v1003
    %1005 = vmatprep.mubr.f32.mxu0 0.0
    %1006 = vmatmul.mubr.f32.gmra.mrb[0].mxu0 %v486
    %v1007 = vpop.f32.mrb[0].mxu0
    %v1008 = vadd.f32 %v579, %v1007
    %v1009 = vpop.f32.mrb[0].mxu0
    %v1010 = vadd.f32 %v583, %v1009
    %1011 = vmatprep.mubr.f32.mxu0 0.0
    %1012 = vmatmul.mubr.f32.gmra.mrb[0].mxu0 %v487
    %v1013 = vpop.f32.mrb[0].mxu0
    %v1014 = vadd.f32 %v579, %v1013
    %v1015 = vpop.f32.mrb[0].mxu0
    %v1016 = vadd.f32 %v583, %v1015
    %1017 = vmatprep.mubr.f32.mxu0 0.0
    %1018 = vmatmul.mubr.f32.gmra.mrb[0].mxu0 %v488
    %v1019 = vpop.f32.mrb[0].mxu0
    %v1020 = vadd.f32 %v579, %v1019
    %v1021 = vpop.f32.mrb[0].mxu0
    %v1022 = vadd.f32 %v583, %v1021
    %1023 = vmatprep.mubr.f32.mxu0 0.0
    %1024 = vmatmul.mubr.f32.gmra.mrb[0].mxu0 %v489
    %v1025 = vpop.f32.mrb[0].mxu0
    %v1026 = vadd.f32 %v579, %v1025
    %v1027 = vpop.f32.mrb[0].mxu0
    %v1028 = vadd.f32 %v583, %v1027
    %1029 = vmatprep.mubr.f32.mxu0 0.0
    %1030 = vmatmul.mubr.f32.gmra.mrb[0].mxu0 %v490
    %v1031 = vpop.f32.mrb[0].mxu0
    %v1032 = vadd.f32 %v579, %v1031
    %v1033 = vpop.f32.mrb[0].mxu0
    %v1034 = vadd.f32 %v583, %v1033
    %1035 = vmatprep.mubr.f32.mxu0 0.0
    %1036 = vmatmul.mubr.f32.gmra.mrb[0].mxu0 %v491
    %v1037 = vpop.f32.mrb[0].mxu0
    %v1038 = vadd.f32 %v579, %v1037
    %v1039 = vpop.f32.mrb[0].mxu0
    %v1040 = vadd.f32 %v583, %v1039
    %1041 = vmatprep.mubr.f32.mxu0 0.0
    %1042 = vmatmul.mubr.f32.gmra.mrb[0].mxu0 %v492
    %v1043 = vpop.f32.mrb[0].mxu0
    %v1044 = vadd.f32 %v579, %v1043
    %v1045 = vpop.f32.mrb[0].mxu0
    %v1046 = vadd.f32 %v583, %v1045
    %1047 = vmatprep.mubr.f32.mxu0 0.0
    %1048 = vmatmul.mubr.f32.gmra.mrb[0].mxu0 %v493
    %v1049 = vpop.f32.mrb[0].mxu0
    %v1050 = vadd.f32 %v579, %v1049
    %v1051 = vpop.f32.mrb[0].mxu0
    %v1052 = vadd.f32 %v583, %v1051
    %1053 = vmatprep.mubr.f32.mxu0 0.0
    %1054 = vmatmul.mubr.f32.gmra.mrb[0].mxu0 %v494
    %v1055 = vpop.f32.mrb[0].mxu0
    %v1056 = vadd.f32 %v579, %v1055
    %v1057 = vpop.f32.mrb[0].mxu0
    %v1058 = vadd.f32 %v583, %v1057
    %1059 = vmatprep.mubr.f32.mxu0 0.0
    %1060 = vmatmul.mubr.f32.gmra.mrb[0].mxu0 %v495
    %v1061 = vpop.f32.mrb[0].mxu0
    %v1062 = vadd.f32 %v579, %v1061
    %v1063 = vpop.f32.mrb[0].mxu0
    %v1064 = vadd.f32 %v583, %v1063
    %1065 = vmatprep.mubr.f32.mxu0 0.0
    %1066 = vmatmul.mubr.f32.gmra.mrb[0].mxu0 %v496
    %v1067 = vpop.f32.mrb[0].mxu0
    %v1068 = vadd.f32 %v579, %v1067
    %v1069 = vpop.f32.mrb[0].mxu0
    %v1070 = vadd.f32 %v583, %v1069
    %1071 = vmatprep.mubr.f32.mxu0 0.0
    %1072 = vmatmul.mubr.f32.gmra.mrb[0].mxu0 %v497
    %v1073 = vpop.f32.mrb[0].mxu0
    %v1074 = vadd.f32 %v579, %v1073
    %v1075 = vpop.f32.mrb[0].mxu0
    %v1076 = vadd.f32 %v583, %v1075
    %1077 = vmatprep.mubr.f32.mxu0 0.0
    %1078 = vmatmul.mubr.f32.gmra.mrb[0].mxu0 %v498
    %v1079 = vpop.f32.mrb[0].mxu0
    %v1080 = vadd.f32 %v579, %v1079
    %v1081 = vpop.f32.mrb[0].mxu0
    %v1082 = vadd.f32 %v583, %v1081
    %1083 = vmatprep.mubr.f32.mxu0 0.0
    %1084 = vmatmul.mubr.f32.gmra.mrb[0].mxu0 %v499
    %v1085 = vpop.f32.mrb[0].mxu0
    %v1086 = vadd.f32 %v579, %v1085
    %v1087 = vpop.f32.mrb[0].mxu0
    %v1088 = vadd.f32 %v583, %v1087
    %1089 = vmatprep.mubr.f32.mxu0 0.0
    %1090 = vmatmul.mubr.f32.gmra.mrb[0].mxu0 %v500
    %v1091 = vpop.f32.mrb[0].mxu0
    %v1092 = vadd.f32 %v579, %v1091
    %v1093 = vpop.f32.mrb[0].mxu0
    %v1094 = vadd.f32 %v583, %v1093
    %1095 = vmatprep.mubr.f32.mxu0 0.0
    %1096 = vmatmul.mubr.f32.gmra.mrb[0].mxu0 %v501
    %v1097 = vpop.f32.mrb[0].mxu0
    %v1098 = vadd.f32 %v579, %v1097
    %v1099 = vpop.f32.mrb[0].mxu0
    %v1100 = vadd.f32 %v583, %v1099
    %1101 = vdwg.mxu0
    %v1102 = vmul.f32 %v655, 0.5
    %v1103 = vmul.f32 %v657, 0.5
    %v1104 = vmul.f32 %v912, 0.5
    %v1105 = vmul.f32 %v914, 0.5
    %v1106 = vmul.f32 %v661, 0.5
    %v1107 = vmul.f32 %v663, 0.5
    %v1108 = vmul.f32 %v918, 0.5
    %v1109 = vmul.f32 %v920, 0.5
    %v1110 = vmul.f32 %v667, 0.5
    %v1111 = vmul.f32 %v669, 0.5
    %v1112 = vmul.f32 %v924, 0.5
    %v1113 = vmul.f32 %v926, 0.5
    %v1114 = vmul.f32 %v673, 0.5
    %v1115 = vmul.f32 %v675, 0.5
    %v1116 = vmul.f32 %v930, 0.5
    %v1117 = vmul.f32 %v932, 0.5
    %v1118 = vmul.f32 %v679, 0.5
    %v1119 = vmul.f32 %v681, 0.5
    %v1120 = vmul.f32 %v936, 0.5
    %v1121 = vmul.f32 %v938, 0.5
    %v1122 = vmul.f32 %v685, 0.5
    %v1123 = vmul.f32 %v687, 0.5
    %v1124 = vmul.f32 %v942, 0.5
    %v1125 = vmul.f32 %v944, 0.5
    %v1126 = vmul.f32 %v691, 0.5
    %v1127 = vmul.f32 %v693, 0.5
    %v1128 = vmul.f32 %v948, 0.5
    %v1129 = vmul.f32 %v950, 0.5
    %v1130 = vmul.f32 %v697, 0.5
    %v1131 = vmul.f32 %v699, 0.5
    %v1132 = vmul.f32 %v954, 0.5
    %v1133 = vmul.f32 %v956, 0.5
    %v1134 = vmul.f32 %v703, 0.5
    %v1135 = vmul.f32 %v705, 0.5
    %v1136 = vmul.f32 %v960, 0.5
    %v1137 = vmul.f32 %v962, 0.5
    %v1138 = vmul.f32 %v709, 0.5
    %v1139 = vmul.f32 %v711, 0.5
    %v1140 = vmul.f32 %v966, 0.5
    %v1141 = vmul.f32 %v968, 0.5
    %v1142 = vmul.f32 %v715, 0.5
    %v1143 = vmul.f32 %v717, 0.5
    %v1144 = vmul.f32 %v972, 0.5
    %v1145 = vmul.f32 %v974, 0.5
    %v1146 = vmul.f32 %v721, 0.5
    %v1147 = vmul.f32 %v723, 0.5
    %v1148 = vmul.f32 %v978, 0.5
    %v1149 = vmul.f32 %v980, 0.5
    %v1150 = vmul.f32 %v727, 0.5
    %v1151 = vmul.f32 %v729, 0.5
    %v1152 = vmul.f32 %v984, 0.5
    %v1153 = vmul.f32 %v986, 0.5
    %v1154 = vmul.f32 %v733, 0.5
    %v1155 = vmul.f32 %v735, 0.5
    %v1156 = vmul.f32 %v990, 0.5
    %v1157 = vmul.f32 %v992, 0.5
    %v1158 = vmul.f32 %v739, 0.5
    %v1159 = vmul.f32 %v741, 0.5
    %v1160 = vmul.f32 %v996, 0.5
    %v1161 = vmul.f32 %v998, 0.5
    %v1162 = vmul.f32 %v745, 0.5
    %v1163 = vmul.f32 %v747, 0.5
    %v1164 = vmul.f32 %v1002, 0.5
    %v1165 = vmul.f32 %v1004, 0.5
    %v1166 = vmul.f32 %v751, 0.5
    %v1167 = vmul.f32 %v753, 0.5
    %v1168 = vmul.f32 %v1008, 0.5
    %v1169 = vmul.f32 %v1010, 0.5
    %v1170 = vmul.f32 %v757, 0.5
    %v1171 = vmul.f32 %v759, 0.5
    %v1172 = vmul.f32 %v1014, 0.5
    %v1173 = vmul.f32 %v1016, 0.5
    %v1174 = vmul.f32 %v763, 0.5
    %v1175 = vmul.f32 %v765, 0.5
    %v1176 = vmul.f32 %v1020, 0.5
    %v1177 = vmul.f32 %v1022, 0.5
    %v1178 = vmul.f32 %v769, 0.5
    %v1179 = vmul.f32 %v771, 0.5
    %v1180 = vmul.f32 %v1026, 0.5
    %v1181 = vmul.f32 %v1028, 0.5
    %v1182 = vmul.f32 %v775, 0.5
    %v1183 = vmul.f32 %v777, 0.5
    %v1184 = vmul.f32 %v1032, 0.5
    %v1185 = vmul.f32 %v1034, 0.5
    %v1186 = vmul.f32 %v781, 0.5
    %v1187 = vmul.f32 %v783, 0.5
    %v1188 = vmul.f32 %v1038, 0.5
    %v1189 = vmul.f32 %v1040, 0.5
    %v1190 = vmul.f32 %v787, 0.5
    %v1191 = vmul.f32 %v789, 0.5
    %v1192 = vmul.f32 %v1044, 0.5
    %v1193 = vmul.f32 %v1046, 0.5
    %v1194 = vmul.f32 %v793, 0.5
    %v1195 = vmul.f32 %v795, 0.5
    %v1196 = vmul.f32 %v1050, 0.5
    %v1197 = vmul.f32 %v1052, 0.5
    %v1198 = vmul.f32 %v799, 0.5
    %v1199 = vmul.f32 %v801, 0.5
    %v1200 = vmul.f32 %v1056, 0.5
    %v1201 = vmul.f32 %v1058, 0.5
    %v1202 = vmul.f32 %v805, 0.5
    %v1203 = vmul.f32 %v807, 0.5
    %v1204 = vmul.f32 %v1062, 0.5
    %v1205 = vmul.f32 %v1064, 0.5
    %v1206 = vmul.f32 %v811, 0.5
    %v1207 = vmul.f32 %v813, 0.5
    %v1208 = vmul.f32 %v1068, 0.5
    %v1209 = vmul.f32 %v1070, 0.5
    %v1210 = vmul.f32 %v817, 0.5
    %v1211 = vmul.f32 %v819, 0.5
    %v1212 = vmul.f32 %v1074, 0.5
    %v1213 = vmul.f32 %v1076, 0.5
    %v1214 = vmul.f32 %v823, 0.5
    %v1215 = vmul.f32 %v825, 0.5
    %v1216 = vmul.f32 %v1080, 0.5
    %v1217 = vmul.f32 %v1082, 0.5
    %v1218 = vmul.f32 %v829, 0.5
    %v1219 = vmul.f32 %v831, 0.5
    %v1220 = vmul.f32 %v1086, 0.5
    %v1221 = vmul.f32 %v1088, 0.5
    %v1222 = vmul.f32 %v835, 0.5
    %v1223 = vmul.f32 %v837, 0.5
    %v1224 = vmul.f32 %v1092, 0.5
    %v1225 = vmul.f32 %v1094, 0.5
    %v1226 = vmul.f32 %v841, 0.5
    %v1227 = vmul.f32 %v843, 0.5
    %v1228 = vmul.f32 %v1098, 0.5
    %v1229 = vmul.f32 %v1100, 0.5
    %v1230 = vmul.f32 %v655, 0.70710677
    %v1231 = vmul.f32 %v657, 0.70710677
    %v1232 = vmul.f32 %v912, 0.70710677
    %v1233 = vmul.f32 %v914, 0.70710677
    %v1234 = vmul.f32 %v661, 0.70710677
    %v1235 = vmul.f32 %v663, 0.70710677
    %v1236 = vmul.f32 %v918, 0.70710677
    %v1237 = vmul.f32 %v920, 0.70710677
    %v1238 = vmul.f32 %v667, 0.70710677
    %v1239 = vmul.f32 %v669, 0.70710677
    %v1240 = vmul.f32 %v924, 0.70710677
    %v1241 = vmul.f32 %v926, 0.70710677
    %v1242 = vmul.f32 %v673, 0.70710677
    %v1243 = vmul.f32 %v675, 0.70710677
    %v1244 = vmul.f32 %v930, 0.70710677
    %v1245 = vmul.f32 %v932, 0.70710677
    %v1246 = vmul.f32 %v679, 0.70710677
    %v1247 = vmul.f32 %v681, 0.70710677
    %v1248 = vmul.f32 %v936, 0.70710677
    %v1249 = vmul.f32 %v938, 0.70710677
    %v1250 = vmul.f32 %v685, 0.70710677
    %v1251 = vmul.f32 %v687, 0.70710677
    %v1252 = vmul.f32 %v942, 0.70710677
    %v1253 = vmul.f32 %v944, 0.70710677
    %v1254 = vmul.f32 %v691, 0.70710677
    %v1255 = vmul.f32 %v693, 0.70710677
    %v1256 = vmul.f32 %v948, 0.70710677
    %v1257 = vmul.f32 %v950, 0.70710677
    %v1258 = vmul.f32 %v697, 0.70710677
    %v1259 = vmul.f32 %v699, 0.70710677
    %v1260 = vmul.f32 %v954, 0.70710677
    %v1261 = vmul.f32 %v956, 0.70710677
    %v1262 = vmul.f32 %v703, 0.70710677
    %v1263 = vmul.f32 %v705, 0.70710677
    %v1264 = vmul.f32 %v960, 0.70710677
    %v1265 = vmul.f32 %v962, 0.70710677
    %v1266 = vmul.f32 %v709, 0.70710677
    %v1267 = vmul.f32 %v711, 0.70710677
    %v1268 = vmul.f32 %v966, 0.70710677
    %v1269 = vmul.f32 %v968, 0.70710677
    %v1270 = vmul.f32 %v715, 0.70710677
    %v1271 = vmul.f32 %v717, 0.70710677
    %v1272 = vmul.f32 %v972, 0.70710677
    %v1273 = vmul.f32 %v974, 0.70710677
    %v1274 = vmul.f32 %v721, 0.70710677
    %v1275 = vmul.f32 %v723, 0.70710677
    %v1276 = vmul.f32 %v978, 0.70710677
    %v1277 = vmul.f32 %v980, 0.70710677
    %v1278 = vmul.f32 %v727, 0.70710677
    %v1279 = vmul.f32 %v729, 0.70710677
    %v1280 = vmul.f32 %v984, 0.70710677
    %v1281 = vmul.f32 %v986, 0.70710677
    %v1282 = vmul.f32 %v733, 0.70710677
    %v1283 = vmul.f32 %v735, 0.70710677
    %v1284 = vmul.f32 %v990, 0.70710677
    %v1285 = vmul.f32 %v992, 0.70710677
    %v1286 = vmul.f32 %v739, 0.70710677
    %v1287 = vmul.f32 %v741, 0.70710677
    %v1288 = vmul.f32 %v996, 0.70710677
    %v1289 = vmul.f32 %v998, 0.70710677
    %v1290 = vmul.f32 %v745, 0.70710677
    %v1291 = vmul.f32 %v747, 0.70710677
    %v1292 = vmul.f32 %v1002, 0.70710677
    %v1293 = vmul.f32 %v1004, 0.70710677
    %v1294 = vmul.f32 %v751, 0.70710677
    %v1295 = vmul.f32 %v753, 0.70710677
    %v1296 = vmul.f32 %v1008, 0.70710677
    %v1297 = vmul.f32 %v1010, 0.70710677
    %v1298 = vmul.f32 %v757, 0.70710677
    %v1299 = vmul.f32 %v759, 0.70710677
    %v1300 = vmul.f32 %v1014, 0.70710677
    %v1301 = vmul.f32 %v1016, 0.70710677
    %v1302 = vmul.f32 %v763, 0.70710677
    %v1303 = vmul.f32 %v765, 0.70710677
    %v1304 = vmul.f32 %v1020, 0.70710677
    %v1305 = vmul.f32 %v1022, 0.70710677
    %v1306 = vmul.f32 %v769, 0.70710677
    %v1307 = vmul.f32 %v771, 0.70710677
    %v1308 = vmul.f32 %v1026, 0.70710677
    %v1309 = vmul.f32 %v1028, 0.70710677
    %v1310 = vmul.f32 %v775, 0.70710677
    %v1311 = vmul.f32 %v777, 0.70710677
    %v1312 = vmul.f32 %v1032, 0.70710677
    %v1313 = vmul.f32 %v1034, 0.70710677
    %v1314 = vmul.f32 %v781, 0.70710677
    %v1315 = vmul.f32 %v783, 0.70710677
    %v1316 = vmul.f32 %v1038, 0.70710677
    %v1317 = vmul.f32 %v1040, 0.70710677
    %v1318 = vmul.f32 %v787, 0.70710677
    %v1319 = vmul.f32 %v789, 0.70710677
    %v1320 = vmul.f32 %v1044, 0.70710677
    %v1321 = vmul.f32 %v1046, 0.70710677
    %v1322 = vmul.f32 %v793, 0.70710677
    %v1323 = vmul.f32 %v795, 0.70710677
    %v1324 = vmul.f32 %v1050, 0.70710677
    %v1325 = vmul.f32 %v1052, 0.70710677
    %v1326 = vmul.f32 %v799, 0.70710677
    %v1327 = vmul.f32 %v801, 0.70710677
    %v1328 = vmul.f32 %v1056, 0.70710677
    %v1329 = vmul.f32 %v1058, 0.70710677
    %v1330 = vmul.f32 %v805, 0.70710677
    %v1331 = vmul.f32 %v807, 0.70710677
    %v1332 = vmul.f32 %v1062, 0.70710677
    %v1333 = vmul.f32 %v1064, 0.70710677
    %v1334 = vmul.f32 %v811, 0.70710677
    %v1335 = vmul.f32 %v813, 0.70710677
    %v1336 = vmul.f32 %v1068, 0.70710677
    %v1337 = vmul.f32 %v1070, 0.70710677
    %v1338 = vmul.f32 %v817, 0.70710677
    %v1339 = vmul.f32 %v819, 0.70710677
    %v1340 = vmul.f32 %v1074, 0.70710677
    %v1341 = vmul.f32 %v1076, 0.70710677
    %v1342 = vmul.f32 %v823, 0.70710677
    %v1343 = vmul.f32 %v825, 0.70710677
    %v1344 = vmul.f32 %v1080, 0.70710677
    %v1345 = vmul.f32 %v1082, 0.70710677
    %v1346 = vmul.f32 %v829, 0.70710677
    %v1347 = vmul.f32 %v831, 0.70710677
    %v1348 = vmul.f32 %v1086, 0.70710677
    %v1349 = vmul.f32 %v1088, 0.70710677
    %v1350 = vmul.f32 %v835, 0.70710677
    %v1351 = vmul.f32 %v837, 0.70710677
    %v1352 = vmul.f32 %v1092, 0.70710677
    %v1353 = vmul.f32 %v1094, 0.70710677
    %v1354 = vmul.f32 %v841, 0.70710677
    %v1355 = vmul.f32 %v843, 0.70710677
    %v1356 = vmul.f32 %v1098, 0.70710677
    %v1357 = vmul.f32 %v1100, 0.70710677
    %v1358 = verf.f32.pop %v1230
    %v1359 = verf.f32.pop %v1231
    %v1360 = verf.f32.pop %v1232
    %v1361 = verf.f32.pop %v1233
    %v1362 = verf.f32.pop %v1234
    %v1363 = verf.f32.pop %v1235
    %v1364 = verf.f32.pop %v1236
    %v1365 = verf.f32.pop %v1237
    %v1366 = verf.f32.pop %v1238
    %v1367 = verf.f32.pop %v1239
    %v1368 = verf.f32.pop %v1240
    %v1369 = verf.f32.pop %v1241
    %v1370 = verf.f32.pop %v1242
    %v1371 = verf.f32.pop %v1243
    %v1372 = verf.f32.pop %v1244
    %v1373 = verf.f32.pop %v1245
    %v1374 = verf.f32.pop %v1246
    %v1375 = verf.f32.pop %v1247
    %v1376 = verf.f32.pop %v1248
    %v1377 = verf.f32.pop %v1249
    %v1378 = verf.f32.pop %v1250
    %v1379 = verf.f32.pop %v1251
    %v1380 = verf.f32.pop %v1252
    %v1381 = verf.f32.pop %v1253
    %v1382 = verf.f32.pop %v1254
    %v1383 = verf.f32.pop %v1255
    %v1384 = verf.f32.pop %v1256
    %v1385 = verf.f32.pop %v1257
    %v1386 = verf.f32.pop %v1258
    %v1387 = verf.f32.pop %v1259
    %v1388 = verf.f32.pop %v1260
    %v1389 = verf.f32.pop %v1261
    %v1390 = verf.f32.pop %v1262
    %v1391 = verf.f32.pop %v1263
    %v1392 = verf.f32.pop %v1264
    %v1393 = verf.f32.pop %v1265
    %v1394 = verf.f32.pop %v1266
    %v1395 = verf.f32.pop %v1267
    %v1396 = verf.f32.pop %v1268
    %v1397 = verf.f32.pop %v1269
    %v1398 = verf.f32.pop %v1270
    %v1399 = verf.f32.pop %v1271
    %v1400 = verf.f32.pop %v1272
    %v1401 = verf.f32.pop %v1273
    %v1402 = verf.f32.pop %v1274
    %v1403 = verf.f32.pop %v1275
    %v1404 = verf.f32.pop %v1276
    %v1405 = verf.f32.pop %v1277
    %v1406 = verf.f32.pop %v1278
    %v1407 = verf.f32.pop %v1279
    %v1408 = verf.f32.pop %v1280
    %v1409 = verf.f32.pop %v1281
    %v1410 = verf.f32.pop %v1282
    %v1411 = verf.f32.pop %v1283
    %v1412 = verf.f32.pop %v1284
    %v1413 = verf.f32.pop %v1285
    %v1414 = verf.f32.pop %v1286
    %v1415 = verf.f32.pop %v1287
    %v1416 = verf.f32.pop %v1288
    %v1417 = verf.f32.pop %v1289
    %v1418 = verf.f32.pop %v1290
    %v1419 = verf.f32.pop %v1291
    %v1420 = verf.f32.pop %v1292
    %v1421 = verf.f32.pop %v1293
    %v1422 = verf.f32.pop %v1294
    %v1423 = verf.f32.pop %v1295
    %v1424 = verf.f32.pop %v1296
    %v1425 = verf.f32.pop %v1297
    %v1426 = verf.f32.pop %v1298
    %v1427 = verf.f32.pop %v1299
    %v1428 = verf.f32.pop %v1300
    %v1429 = verf.f32.pop %v1301
    %v1430 = verf.f32.pop %v1302
    %v1431 = verf.f32.pop %v1303
    %v1432 = verf.f32.pop %v1304
    %v1433 = verf.f32.pop %v1305
    %v1434 = verf.f32.pop %v1306
    %v1435 = verf.f32.pop %v1307
    %v1436 = verf.f32.pop %v1308
    %v1437 = verf.f32.pop %v1309
    %v1438 = verf.f32.pop %v1310
    %v1439 = verf.f32.pop %v1311
    %v1440 = verf.f32.pop %v1312
    %v1441 = verf.f32.pop %v1313
    %v1442 = verf.f32.pop %v1314
    %v1443 = verf.f32.pop %v1315
    %v1444 = verf.f32.pop %v1316
    %v1445 = verf.f32.pop %v1317
    %v1446 = verf.f32.pop %v1318
    %v1447 = verf.f32.pop %v1319
    %v1448 = verf.f32.pop %v1320
    %v1449 = verf.f32.pop %v1321
    %v1450 = verf.f32.pop %v1322
    %v1451 = verf.f32.pop %v1323
    %v1452 = verf.f32.pop %v1324
    %v1453 = verf.f32.pop %v1325
    %v1454 = verf.f32.pop %v1326
    %v1455 = verf.f32.pop %v1327
    %v1456 = verf.f32.pop %v1328
    %v1457 = verf.f32.pop %v1329
    %v1458 = verf.f32.pop %v1330
    %v1459 = verf.f32.pop %v1331
    %v1460 = verf.f32.pop %v1332
    %v1461 = verf.f32.pop %v1333
    %v1462 = verf.f32.pop %v1334
    %v1463 = verf.f32.pop %v1335
    %v1464 = verf.f32.pop %v1336
    %v1465 = verf.f32.pop %v1337
    %v1466 = verf.f32.pop %v1338
    %v1467 = verf.f32.pop %v1339
    %v1468 = verf.f32.pop %v1340
    %v1469 = verf.f32.pop %v1341
    %v1470 = verf.f32.pop %v1342
    %v1471 = verf.f32.pop %v1343
    %v1472 = verf.f32.pop %v1344
    %v1473 = verf.f32.pop %v1345
    %v1474 = verf.f32.pop %v1346
    %v1475 = verf.f32.pop %v1347
    %v1476 = verf.f32.pop %v1348
    %v1477 = verf.f32.pop %v1349
    %v1478 = verf.f32.pop %v1350
    %v1479 = verf.f32.pop %v1351
    %v1480 = verf.f32.pop %v1352
    %v1481 = verf.f32.pop %v1353
    %v1482 = verf.f32.pop %v1354
    %v1483 = verf.f32.pop %v1355
    %v1484 = verf.f32.pop %v1356
    %v1485 = verf.f32.pop %v1357
    %v1486 = vadd.f32 %v1358, 1.0
    %v1487 = vadd.f32 %v1359, 1.0
    %v1488 = vadd.f32 %v1360, 1.0
    %v1489 = vadd.f32 %v1361, 1.0
    %v1490 = vadd.f32 %v1362, 1.0
    %v1491 = vadd.f32 %v1363, 1.0
    %v1492 = vadd.f32 %v1364, 1.0
    %v1493 = vadd.f32 %v1365, 1.0
    %v1494 = vadd.f32 %v1366, 1.0
    %v1495 = vadd.f32 %v1367, 1.0
    %v1496 = vadd.f32 %v1368, 1.0
    %v1497 = vadd.f32 %v1369, 1.0
    %v1498 = vadd.f32 %v1370, 1.0
    %v1499 = vadd.f32 %v1371, 1.0
    %v1500 = vadd.f32 %v1372, 1.0
    %v1501 = vadd.f32 %v1373, 1.0
    %v1502 = vadd.f32 %v1374, 1.0
    %v1503 = vadd.f32 %v1375, 1.0
    %v1504 = vadd.f32 %v1376, 1.0
    %v1505 = vadd.f32 %v1377, 1.0
    %v1506 = vadd.f32 %v1378, 1.0
    %v1507 = vadd.f32 %v1379, 1.0
    %v1508 = vadd.f32 %v1380, 1.0
    %v1509 = vadd.f32 %v1381, 1.0
    %v1510 = vadd.f32 %v1382, 1.0
    %v1511 = vadd.f32 %v1383, 1.0
    %v1512 = vadd.f32 %v1384, 1.0
    %v1513 = vadd.f32 %v1385, 1.0
    %v1514 = vadd.f32 %v1386, 1.0
    %v1515 = vadd.f32 %v1387, 1.0
    %v1516 = vadd.f32 %v1388, 1.0
    %v1517 = vadd.f32 %v1389, 1.0
    %v1518 = vadd.f32 %v1390, 1.0
    %v1519 = vadd.f32 %v1391, 1.0
    %v1520 = vadd.f32 %v1392, 1.0
    %v1521 = vadd.f32 %v1393, 1.0
    %v1522 = vadd.f32 %v1394, 1.0
    %v1523 = vadd.f32 %v1395, 1.0
    %v1524 = vadd.f32 %v1396, 1.0
    %v1525 = vadd.f32 %v1397, 1.0
    %v1526 = vadd.f32 %v1398, 1.0
    %v1527 = vadd.f32 %v1399, 1.0
    %v1528 = vadd.f32 %v1400, 1.0
    %v1529 = vadd.f32 %v1401, 1.0
    %v1530 = vadd.f32 %v1402, 1.0
    %v1531 = vadd.f32 %v1403, 1.0
    %v1532 = vadd.f32 %v1404, 1.0
    %v1533 = vadd.f32 %v1405, 1.0
    %v1534 = vadd.f32 %v1406, 1.0
    %v1535 = vadd.f32 %v1407, 1.0
    %v1536 = vadd.f32 %v1408, 1.0
    %v1537 = vadd.f32 %v1409, 1.0
    %v1538 = vadd.f32 %v1410, 1.0
    %v1539 = vadd.f32 %v1411, 1.0
    %v1540 = vadd.f32 %v1412, 1.0
    %v1541 = vadd.f32 %v1413, 1.0
    %v1542 = vadd.f32 %v1414, 1.0
    %v1543 = vadd.f32 %v1415, 1.0
    %v1544 = vadd.f32 %v1416, 1.0
    %v1545 = vadd.f32 %v1417, 1.0
    %v1546 = vadd.f32 %v1418, 1.0
    %v1547 = vadd.f32 %v1419, 1.0
    %v1548 = vadd.f32 %v1420, 1.0
    %v1549 = vadd.f32 %v1421, 1.0
    %v1550 = vadd.f32 %v1422, 1.0
    %v1551 = vadd.f32 %v1423, 1.0
    %v1552 = vadd.f32 %v1424, 1.0
    %v1553 = vadd.f32 %v1425, 1.0
    %v1554 = vadd.f32 %v1426, 1.0
    %v1555 = vadd.f32 %v1427, 1.0
    %v1556 = vadd.f32 %v1428, 1.0
    %v1557 = vadd.f32 %v1429, 1.0
    %v1558 = vadd.f32 %v1430, 1.0
    %v1559 = vadd.f32 %v1431, 1.0
    %v1560 = vadd.f32 %v1432, 1.0
    %v1561 = vadd.f32 %v1433, 1.0
    %v1562 = vadd.f32 %v1434, 1.0
    %v1563 = vadd.f32 %v1435, 1.0
    %v1564 = vadd.f32 %v1436, 1.0
    %v1565 = vadd.f32 %v1437, 1.0
    %v1566 = vadd.f32 %v1438, 1.0
    %v1567 = vadd.f32 %v1439, 1.0
    %v1568 = vadd.f32 %v1440, 1.0
    %v1569 = vadd.f32 %v1441, 1.0
    %v1570 = vadd.f32 %v1442, 1.0
    %v1571 = vadd.f32 %v1443, 1.0
    %v1572 = vadd.f32 %v1444, 1.0
    %v1573 = vadd.f32 %v1445, 1.0
    %v1574 = vadd.f32 %v1446, 1.0
    %v1575 = vadd.f32 %v1447, 1.0
    %v1576 = vadd.f32 %v1448, 1.0
    %v1577 = vadd.f32 %v1449, 1.0
    %v1578 = vadd.f32 %v1450, 1.0
    %v1579 = vadd.f32 %v1451, 1.0
    %v1580 = vadd.f32 %v1452, 1.0
    %v1581 = vadd.f32 %v1453, 1.0
    %v1582 = vadd.f32 %v1454, 1.0
    %v1583 = vadd.f32 %v1455, 1.0
    %v1584 = vadd.f32 %v1456, 1.0
    %v1585 = vadd.f32 %v1457, 1.0
    %v1586 = vadd.f32 %v1458, 1.0
    %v1587 = vadd.f32 %v1459, 1.0
    %v1588 = vadd.f32 %v1460, 1.0
    %v1589 = vadd.f32 %v1461, 1.0
    %v1590 = vadd.f32 %v1462, 1.0
    %v1591 = vadd.f32 %v1463, 1.0
    %v1592 = vadd.f32 %v1464, 1.0
    %v1593 = vadd.f32 %v1465, 1.0
    %v1594 = vadd.f32 %v1466, 1.0
    %v1595 = vadd.f32 %v1467, 1.0
    %v1596 = vadd.f32 %v1468, 1.0
    %v1597 = vadd.f32 %v1469, 1.0
    %v1598 = vadd.f32 %v1470, 1.0
    %v1599 = vadd.f32 %v1471, 1.0
    %v1600 = vadd.f32 %v1472, 1.0
    %v1601 = vadd.f32 %v1473, 1.0
    %v1602 = vadd.f32 %v1474, 1.0
    %v1603 = vadd.f32 %v1475, 1.0
    %v1604 = vadd.f32 %v1476, 1.0
    %v1605 = vadd.f32 %v1477, 1.0
    %v1606 = vadd.f32 %v1478, 1.0
    %v1607 = vadd.f32 %v1479, 1.0
    %v1608 = vadd.f32 %v1480, 1.0
    %v1609 = vadd.f32 %v1481, 1.0
    %v1610 = vadd.f32 %v1482, 1.0
    %v1611 = vadd.f32 %v1483, 1.0
    %v1612 = vadd.f32 %v1484, 1.0
    %v1613 = vadd.f32 %v1485, 1.0
    %v1614 = vmul.f32 %v1102, %v1486
    %v1615 = vmul.f32 %v1103, %v1487
    %v1616 = vmul.f32 %v1104, %v1488
    %v1617 = vmul.f32 %v1105, %v1489
    %v1618 = vmul.f32 %v1106, %v1490
    %v1619 = vmul.f32 %v1107, %v1491
    %v1620 = vmul.f32 %v1108, %v1492
    %v1621 = vmul.f32 %v1109, %v1493
    %v1622 = vmul.f32 %v1110, %v1494
    %v1623 = vmul.f32 %v1111, %v1495
    %v1624 = vmul.f32 %v1112, %v1496
    %v1625 = vmul.f32 %v1113, %v1497
    %v1626 = vmul.f32 %v1114, %v1498
    %v1627 = vmul.f32 %v1115, %v1499
    %v1628 = vmul.f32 %v1116, %v1500
    %v1629 = vmul.f32 %v1117, %v1501
    %v1630 = vmul.f32 %v1118, %v1502
    %v1631 = vmul.f32 %v1119, %v1503
    %v1632 = vmul.f32 %v1120, %v1504
    %v1633 = vmul.f32 %v1121, %v1505
    %v1634 = vmul.f32 %v1122, %v1506
    %v1635 = vmul.f32 %v1123, %v1507
    %v1636 = vmul.f32 %v1124, %v1508
    %v1637 = vmul.f32 %v1125, %v1509
    %v1638 = vmul.f32 %v1126, %v1510
    %v1639 = vmul.f32 %v1127, %v1511
    %v1640 = vmul.f32 %v1128, %v1512
    %v1641 = vmul.f32 %v1129, %v1513
    %v1642 = vmul.f32 %v1130, %v1514
    %v1643 = vmul.f32 %v1131, %v1515
    %v1644 = vmul.f32 %v1132, %v1516
    %v1645 = vmul.f32 %v1133, %v1517
    %v1646 = vmul.f32 %v1134, %v1518
    %v1647 = vmul.f32 %v1135, %v1519
    %v1648 = vmul.f32 %v1136, %v1520
    %v1649 = vmul.f32 %v1137, %v1521
    %v1650 = vmul.f32 %v1138, %v1522
    %v1651 = vmul.f32 %v1139, %v1523
    %v1652 = vmul.f32 %v1140, %v1524
    %v1653 = vmul.f32 %v1141, %v1525
    %v1654 = vmul.f32 %v1142, %v1526
    %v1655 = vmul.f32 %v1143, %v1527
    %v1656 = vmul.f32 %v1144, %v1528
    %v1657 = vmul.f32 %v1145, %v1529
    %v1658 = vmul.f32 %v1146, %v1530
    %v1659 = vmul.f32 %v1147, %v1531
    %v1660 = vmul.f32 %v1148, %v1532
    %v1661 = vmul.f32 %v1149, %v1533
    %v1662 = vmul.f32 %v1150, %v1534
    %v1663 = vmul.f32 %v1151, %v1535
    %v1664 = vmul.f32 %v1152, %v1536
    %v1665 = vmul.f32 %v1153, %v1537
    %v1666 = vmul.f32 %v1154, %v1538
    %v1667 = vmul.f32 %v1155, %v1539
    %v1668 = vmul.f32 %v1156, %v1540
    %v1669 = vmul.f32 %v1157, %v1541
    %v1670 = vmul.f32 %v1158, %v1542
    %v1671 = vmul.f32 %v1159, %v1543
    %v1672 = vmul.f32 %v1160, %v1544
    %v1673 = vmul.f32 %v1161, %v1545
    %v1674 = vmul.f32 %v1162, %v1546
    %v1675 = vmul.f32 %v1163, %v1547
    %v1676 = vmul.f32 %v1164, %v1548
    %v1677 = vmul.f32 %v1165, %v1549
    %v1678 = vmul.f32 %v1166, %v1550
    %v1679 = vmul.f32 %v1167, %v1551
    %v1680 = vmul.f32 %v1168, %v1552
    %v1681 = vmul.f32 %v1169, %v1553
    %v1682 = vmul.f32 %v1170, %v1554
    %v1683 = vmul.f32 %v1171, %v1555
    %v1684 = vmul.f32 %v1172, %v1556
    %v1685 = vmul.f32 %v1173, %v1557
    %v1686 = vmul.f32 %v1174, %v1558
    %v1687 = vmul.f32 %v1175, %v1559
    %v1688 = vmul.f32 %v1176, %v1560
    %v1689 = vmul.f32 %v1177, %v1561
    %v1690 = vmul.f32 %v1178, %v1562
    %v1691 = vmul.f32 %v1179, %v1563
    %v1692 = vmul.f32 %v1180, %v1564
    %v1693 = vmul.f32 %v1181, %v1565
    %v1694 = vmul.f32 %v1182, %v1566
    %v1695 = vmul.f32 %v1183, %v1567
    %v1696 = vmul.f32 %v1184, %v1568
    %v1697 = vmul.f32 %v1185, %v1569
    %v1698 = vmul.f32 %v1186, %v1570
    %v1699 = vmul.f32 %v1187, %v1571
    %v1700 = vmul.f32 %v1188, %v1572
    %v1701 = vmul.f32 %v1189, %v1573
    %v1702 = vmul.f32 %v1190, %v1574
    %v1703 = vmul.f32 %v1191, %v1575
    %v1704 = vmul.f32 %v1192, %v1576
    %v1705 = vmul.f32 %v1193, %v1577
    %v1706 = vmul.f32 %v1194, %v1578
    %v1707 = vmul.f32 %v1195, %v1579
    %v1708 = vmul.f32 %v1196, %v1580
    %v1709 = vmul.f32 %v1197, %v1581
    %v1710 = vmul.f32 %v1198, %v1582
    %v1711 = vmul.f32 %v1199, %v1583
    %v1712 = vmul.f32 %v1200, %v1584
    %v1713 = vmul.f32 %v1201, %v1585
    %v1714 = vmul.f32 %v1202, %v1586
    %v1715 = vmul.f32 %v1203, %v1587
    %v1716 = vmul.f32 %v1204, %v1588
    %v1717 = vmul.f32 %v1205, %v1589
    %v1718 = vmul.f32 %v1206, %v1590
    %v1719 = vmul.f32 %v1207, %v1591
    %v1720 = vmul.f32 %v1208, %v1592
    %v1721 = vmul.f32 %v1209, %v1593
    %v1722 = vmul.f32 %v1210, %v1594
    %v1723 = vmul.f32 %v1211, %v1595
    %v1724 = vmul.f32 %v1212, %v1596
    %v1725 = vmul.f32 %v1213, %v1597
    %v1726 = vmul.f32 %v1214, %v1598
    %v1727 = vmul.f32 %v1215, %v1599
    %v1728 = vmul.f32 %v1216, %v1600
    %v1729 = vmul.f32 %v1217, %v1601
    %v1730 = vmul.f32 %v1218, %v1602
    %v1731 = vmul.f32 %v1219, %v1603
    %v1732 = vmul.f32 %v1220, %v1604
    %v1733 = vmul.f32 %v1221, %v1605
    %v1734 = vmul.f32 %v1222, %v1606
    %v1735 = vmul.f32 %v1223, %v1607
    %v1736 = vmul.f32 %v1224, %v1608
    %v1737 = vmul.f32 %v1225, %v1609
    %v1738 = vmul.f32 %v1226, %v1610
    %v1739 = vmul.f32 %v1227, %v1611
    %v1740 = vmul.f32 %v1228, %v1612
    %v1741 = vmul.f32 %v1229, %v1613
    %v1742 = vld [vmem:[%s5] sm:$0xff]
    %v1743 = vld [vmem:[%s5 + $0x8] sm:$0xff]
    %v1744 = vld [vmem:[%s5 + $0x10] sm:$0xff]
    %v1745 = vld [vmem:[%s5 + $0x18] sm:$0xff]
    %v1746 = vld [vmem:[%s5 + $0x20] sm:$0xff]
    %v1747 = vld [vmem:[%s5 + $0x28] sm:$0xff]
    %v1748 = vld [vmem:[%s5 + $0x30] sm:$0xff]
    %v1749 = vld [vmem:[%s5 + $0x38] sm:$0xff]
    %v1750 = vld [vmem:[%s5 + $0x40] sm:$0xff]
    %v1751 = vld [vmem:[%s5 + $0x48] sm:$0xff]
    %v1752 = vld [vmem:[%s5 + $0x50] sm:$0xff]
    %v1753 = vld [vmem:[%s5 + $0x58] sm:$0xff]
    %v1754 = vld [vmem:[%s5 + $0x60] sm:$0xff]
    %v1755 = vld [vmem:[%s5 + $0x68] sm:$0xff]
    %v1756 = vld [vmem:[%s5 + $0x70] sm:$0xff]
    %v1757 = vld [vmem:[%s5 + $0x78] sm:$0xff]
    %v1758 = vld [vmem:[%s5 + $0x80] sm:$0xff]
    %v1759 = vld [vmem:[%s5 + $0x88] sm:$0xff]
    %v1760 = vld [vmem:[%s5 + $0x90] sm:$0xff]
    %v1761 = vld [vmem:[%s5 + $0x98] sm:$0xff]
    %v1762 = vld [vmem:[%s5 + $0xa0] sm:$0xff]
    %v1763 = vld [vmem:[%s5 + $0xa8] sm:$0xff]
    %v1764 = vld [vmem:[%s5 + $0xb0] sm:$0xff]
    %v1765 = vld [vmem:[%s5 + $0xb8] sm:$0xff]
    %v1766 = vld [vmem:[%s5 + $0xc0] sm:$0xff]
    %v1767 = vld [vmem:[%s5 + $0xc8] sm:$0xff]
    %v1768 = vld [vmem:[%s5 + $0xd0] sm:$0xff]
    %v1769 = vld [vmem:[%s5 + $0xd8] sm:$0xff]
    %v1770 = vld [vmem:[%s5 + $0xe0] sm:$0xff]
    %v1771 = vld [vmem:[%s5 + $0xe8] sm:$0xff]
    %v1772 = vld [vmem:[%s5 + $0xf0] sm:$0xff]
    %v1773 = vld [vmem:[%s5 + $0xf8] sm:$0xff]
    %v1774 = vld [vmem:[%s5 + $0x100] sm:$0xff]
    %v1775 = vld [vmem:[%s5 + $0x108] sm:$0xff]
    %v1776 = vld [vmem:[%s5 + $0x110] sm:$0xff]
    %v1777 = vld [vmem:[%s5 + $0x118] sm:$0xff]
    %v1778 = vld [vmem:[%s5 + $0x120] sm:$0xff]
    %v1779 = vld [vmem:[%s5 + $0x128] sm:$0xff]
    %v1780 = vld [vmem:[%s5 + $0x130] sm:$0xff]
    %v1781 = vld [vmem:[%s5 + $0x138] sm:$0xff]
    %v1782 = vld [vmem:[%s5 + $0x140] sm:$0xff]
    %v1783 = vld [vmem:[%s5 + $0x148] sm:$0xff]
    %v1784 = vld [vmem:[%s5 + $0x150] sm:$0xff]
    %v1785 = vld [vmem:[%s5 + $0x158] sm:$0xff]
    %v1786 = vld [vmem:[%s5 + $0x160] sm:$0xff]
    %v1787 = vld [vmem:[%s5 + $0x168] sm:$0xff]
    %v1788 = vld [vmem:[%s5 + $0x170] sm:$0xff]
    %v1789 = vld [vmem:[%s5 + $0x178] sm:$0xff]
    %v1790 = vld [vmem:[%s5 + $0x180] sm:$0xff]
    %v1791 = vld [vmem:[%s5 + $0x188] sm:$0xff]
    %v1792 = vld [vmem:[%s5 + $0x190] sm:$0xff]
    %v1793 = vld [vmem:[%s5 + $0x198] sm:$0xff]
    %v1794 = vld [vmem:[%s5 + $0x1a0] sm:$0xff]
    %v1795 = vld [vmem:[%s5 + $0x1a8] sm:$0xff]
    %v1796 = vld [vmem:[%s5 + $0x1b0] sm:$0xff]
    %v1797 = vld [vmem:[%s5 + $0x1b8] sm:$0xff]
    %v1798 = vld [vmem:[%s5 + $0x1c0] sm:$0xff]
    %v1799 = vld [vmem:[%s5 + $0x1c8] sm:$0xff]
    %v1800 = vld [vmem:[%s5 + $0x1d0] sm:$0xff]
    %v1801 = vld [vmem:[%s5 + $0x1d8] sm:$0xff]
    %v1802 = vld [vmem:[%s5 + $0x1e0] sm:$0xff]
    %v1803 = vld [vmem:[%s5 + $0x1e8] sm:$0xff]
    %v1804 = vld [vmem:[%s5 + $0x1f0] sm:$0xff]
    %v1805 = vld [vmem:[%s5 + $0x1f8] sm:$0xff]
    %v1806 = vld [vmem:[#allocation2] sm:$0x1]
    %v1808 = vlaneseq
    %v1809 = vshrl.u32 %v1808, 7
    %v1810 = vsub.s32 0, %v1809
    %v1811 = vrot.slane %v1806, %v1810
    %1813 = vmatprep.subr.mxu0 0.0
    %1814 = vmatpush1.msra.mxu0 %v1742
    %1815 = vmatprep.subr.mxu0 0.0
    %1816 = vmatpush1.msra.mxu0 %v1743
    %1817 = vmatprep.subr.mxu0 0.0
    %1818 = vmatpush1.msra.mxu0 %v1744
    %1819 = vmatprep.subr.mxu0 0.0
    %1820 = vmatpush1.msra.mxu0 %v1745
    %1821 = vmatprep.subr.mxu0 0.0
    %1822 = vmatpush1.msra.mxu0 %v1746
    %1823 = vmatprep.subr.mxu0 0.0
    %1824 = vmatpush1.msra.mxu0 %v1747
    %1825 = vmatprep.subr.mxu0 0.0
    %1826 = vmatpush1.msra.mxu0 %v1748
    %1827 = vmatprep.subr.mxu0 0.0
    %1828 = vmatpush1.msra.mxu0 %v1749
    %1829 = vmatprep.subr.mxu0 0.0
    %1830 = vmatpush1.msra.mxu0 %v1750
    %1831 = vmatprep.subr.mxu0 0.0
    %1832 = vmatpush1.msra.mxu0 %v1751
    %1833 = vmatprep.subr.mxu0 0.0
    %1834 = vmatpush1.msra.mxu0 %v1752
    %1835 = vmatprep.subr.mxu0 0.0
    %1836 = vmatpush1.msra.mxu0 %v1753
    %1837 = vmatprep.subr.mxu0 0.0
    %1838 = vmatpush1.msra.mxu0 %v1754
    %1839 = vmatprep.subr.mxu0 0.0
    %1840 = vmatpush1.msra.mxu0 %v1755
    %1841 = vmatprep.subr.mxu0 0.0
    %1842 = vmatpush1.msra.mxu0 %v1756
    %1843 = vmatprep.subr.mxu0 0.0
    %1844 = vmatpush1.msra.mxu0 %v1757
    %1845 = vmatprep.subr.mxu0 0.0
    %1846 = vmatpush1.msra.mxu0 %v1758
    %1847 = vmatprep.subr.mxu0 0.0
    %1848 = vmatpush1.msra.mxu0 %v1759
    %1849 = vmatprep.subr.mxu0 0.0
    %1850 = vmatpush1.msra.mxu0 %v1760
    %1851 = vmatprep.subr.mxu0 0.0
    %1852 = vmatpush1.msra.mxu0 %v1761
    %1853 = vmatprep.subr.mxu0 0.0
    %1854 = vmatpush1.msra.mxu0 %v1762
    %1855 = vmatprep.subr.mxu0 0.0
    %1856 = vmatpush1.msra.mxu0 %v1763
    %1857 = vmatprep.subr.mxu0 0.0
    %1858 = vmatpush1.msra.mxu0 %v1764
    %1859 = vmatprep.subr.mxu0 0.0
    %1860 = vmatpush1.msra.mxu0 %v1765
    %1861 = vmatprep.subr.mxu0 0.0
    %1862 = vmatpush1.msra.mxu0 %v1766
    %1863 = vmatprep.subr.mxu0 0.0
    %1864 = vmatpush1.msra.mxu0 %v1767
    %1865 = vmatprep.subr.mxu0 0.0
    %1866 = vmatpush1.msra.mxu0 %v1768
    %1867 = vmatprep.subr.mxu0 0.0
    %1868 = vmatpush1.msra.mxu0 %v1769
    %1869 = vmatprep.subr.mxu0 0.0
    %1870 = vmatpush1.msra.mxu0 %v1770
    %1871 = vmatprep.subr.mxu0 0.0
    %1872 = vmatpush1.msra.mxu0 %v1771
    %1873 = vmatprep.subr.mxu0 0.0
    %1874 = vmatpush1.msra.mxu0 %v1772
    %1875 = vmatprep.subr.mxu0 0.0
    %1876 = vmatpush1.msra.mxu0 %v1773
    %1877 = vmatprep.mubr.f32.mxu0 %v1615
    %1878 = vmatmul.mubr.f32.gmra.mrb[0].mxu0 %v1614
    %v1879 = vpop.f32.mrb[0].mxu0
    %v1880 = vadd.f32 %v1811, %v1879
    %v1881 = vpop.f32.mrb[0].mxu0
    %1882 = vmatprep.mubr.f32.mxu0 %v1619
    %1883 = vmatmul.mubr.f32.gmra.mrb[0].mxu0 %v1618
    %v1884 = vpop.f32.mrb[0].mxu0
    %v1885 = vadd.f32 %v1811, %v1884
    %v1886 = vpop.f32.mrb[0].mxu0
    %1887 = vmatprep.mubr.f32.mxu0 %v1623
    %1888 = vmatmul.mubr.f32.gmra.mrb[0].mxu0 %v1622
    %v1889 = vpop.f32.mrb[0].mxu0
    %v1890 = vadd.f32 %v1811, %v1889
    %v1891 = vpop.f32.mrb[0].mxu0
    %1892 = vmatprep.mubr.f32.mxu0 %v1627
    %1893 = vmatmul.mubr.f32.gmra.mrb[0].mxu0 %v1626
    %v1894 = vpop.f32.mrb[0].mxu0
    %v1895 = vadd.f32 %v1811, %v1894
    %v1896 = vpop.f32.mrb[0].mxu0
    %1897 = vmatprep.mubr.f32.mxu0 %v1631
    %1898 = vmatmul.mubr.f32.gmra.mrb[0].mxu0 %v1630
    %v1899 = vpop.f32.mrb[0].mxu0
    %v1900 = vadd.f32 %v1811, %v1899
    %v1901 = vpop.f32.mrb[0].mxu0
    %1902 = vmatprep.mubr.f32.mxu0 %v1635
    %1903 = vmatmul.mubr.f32.gmra.mrb[0].mxu0 %v1634
    %v1904 = vpop.f32.mrb[0].mxu0
    %v1905 = vadd.f32 %v1811, %v1904
    %v1906 = vpop.f32.mrb[0].mxu0
    %1907 = vmatprep.mubr.f32.mxu0 %v1639
    %1908 = vmatmul.mubr.f32.gmra.mrb[0].mxu0 %v1638
    %v1909 = vpop.f32.mrb[0].mxu0
    %v1910 = vadd.f32 %v1811, %v1909
    %v1911 = vpop.f32.mrb[0].mxu0
    %1912 = vmatprep.mubr.f32.mxu0 %v1643
    %1913 = vmatmul.mubr.f32.gmra.mrb[0].mxu0 %v1642
    %v1914 = vpop.f32.mrb[0].mxu0
    %v1915 = vadd.f32 %v1811, %v1914
    %v1916 = vpop.f32.mrb[0].mxu0
    %1917 = vmatprep.mubr.f32.mxu0 %v1647
    %1918 = vmatmul.mubr.f32.gmra.mrb[0].mxu0 %v1646
    %v1919 = vpop.f32.mrb[0].mxu0
    %v1920 = vadd.f32 %v1811, %v1919
    %v1921 = vpop.f32.mrb[0].mxu0
    %1922 = vmatprep.mubr.f32.mxu0 %v1651
    %1923 = vmatmul.mubr.f32.gmra.mrb[0].mxu0 %v1650
    %v1924 = vpop.f32.mrb[0].mxu0
    %v1925 = vadd.f32 %v1811, %v1924
    %v1926 = vpop.f32.mrb[0].mxu0
    %1927 = vmatprep.mubr.f32.mxu0 %v1655
    %1928 = vmatmul.mubr.f32.gmra.mrb[0].mxu0 %v1654
    %v1929 = vpop.f32.mrb[0].mxu0
    %v1930 = vadd.f32 %v1811, %v1929
    %v1931 = vpop.f32.mrb[0].mxu0
    %1932 = vmatprep.mubr.f32.mxu0 %v1659
    %1933 = vmatmul.mubr.f32.gmra.mrb[0].mxu0 %v1658
    %v1934 = vpop.f32.mrb[0].mxu0
    %v1935 = vadd.f32 %v1811, %v1934
    %v1936 = vpop.f32.mrb[0].mxu0
    %1937 = vmatprep.mubr.f32.mxu0 %v1663
    %1938 = vmatmul.mubr.f32.gmra.mrb[0].mxu0 %v1662
    %v1939 = vpop.f32.mrb[0].mxu0
    %v1940 = vadd.f32 %v1811, %v1939
    %v1941 = vpop.f32.mrb[0].mxu0
    %1942 = vmatprep.mubr.f32.mxu0 %v1667
    %1943 = vmatmul.mubr.f32.gmra.mrb[0].mxu0 %v1666
    %v1944 = vpop.f32.mrb[0].mxu0
    %v1945 = vadd.f32 %v1811, %v1944
    %v1946 = vpop.f32.mrb[0].mxu0
    %1947 = vmatprep.mubr.f32.mxu0 %v1671
    %1948 = vmatmul.mubr.f32.gmra.mrb[0].mxu0 %v1670
    %v1949 = vpop.f32.mrb[0].mxu0
    %v1950 = vadd.f32 %v1811, %v1949
    %v1951 = vpop.f32.mrb[0].mxu0
    %1952 = vmatprep.mubr.f32.mxu0 %v1675
    %1953 = vmatmul.mubr.f32.gmra.mrb[0].mxu0 %v1674
    %v1954 = vpop.f32.mrb[0].mxu0
    %v1955 = vadd.f32 %v1811, %v1954
    %v1956 = vpop.f32.mrb[0].mxu0
    %1957 = vmatprep.mubr.f32.mxu0 %v1679
    %1958 = vmatmul.mubr.f32.gmra.mrb[0].mxu0 %v1678
    %v1959 = vpop.f32.mrb[0].mxu0
    %v1960 = vadd.f32 %v1811, %v1959
    %v1961 = vpop.f32.mrb[0].mxu0
    %1962 = vmatprep.mubr.f32.mxu0 %v1683
    %1963 = vmatmul.mubr.f32.gmra.mrb[0].mxu0 %v1682
    %v1964 = vpop.f32.mrb[0].mxu0
    %v1965 = vadd.f32 %v1811, %v1964
    %v1966 = vpop.f32.mrb[0].mxu0
    %1967 = vmatprep.mubr.f32.mxu0 %v1687
    %1968 = vmatmul.mubr.f32.gmra.mrb[0].mxu0 %v1686
    %v1969 = vpop.f32.mrb[0].mxu0
    %v1970 = vadd.f32 %v1811, %v1969
    %v1971 = vpop.f32.mrb[0].mxu0
    %1972 = vmatprep.mubr.f32.mxu0 %v1691
    %1973 = vmatmul.mubr.f32.gmra.mrb[0].mxu0 %v1690
    %v1974 = vpop.f32.mrb[0].mxu0
    %v1975 = vadd.f32 %v1811, %v1974
    %v1976 = vpop.f32.mrb[0].mxu0
    %1977 = vmatprep.mubr.f32.mxu0 %v1695
    %1978 = vmatmul.mubr.f32.gmra.mrb[0].mxu0 %v1694
    %v1979 = vpop.f32.mrb[0].mxu0
    %v1980 = vadd.f32 %v1811, %v1979
    %v1981 = vpop.f32.mrb[0].mxu0
    %1982 = vmatprep.mubr.f32.mxu0 %v1699
    %1983 = vmatmul.mubr.f32.gmra.mrb[0].mxu0 %v1698
    %v1984 = vpop.f32.mrb[0].mxu0
    %v1985 = vadd.f32 %v1811, %v1984
    %v1986 = vpop.f32.mrb[0].mxu0
    %1987 = vmatprep.mubr.f32.mxu0 %v1703
    %1988 = vmatmul.mubr.f32.gmra.mrb[0].mxu0 %v1702
    %v1989 = vpop.f32.mrb[0].mxu0
    %v1990 = vadd.f32 %v1811, %v1989
    %v1991 = vpop.f32.mrb[0].mxu0
    %1992 = vmatprep.mubr.f32.mxu0 %v1707
    %1993 = vmatmul.mubr.f32.gmra.mrb[0].mxu0 %v1706
    %v1994 = vpop.f32.mrb[0].mxu0
    %v1995 = vadd.f32 %v1811, %v1994
    %v1996 = vpop.f32.mrb[0].mxu0
    %1997 = vmatprep.mubr.f32.mxu0 %v1711
    %1998 = vmatmul.mubr.f32.gmra.mrb[0].mxu0 %v1710
    %v1999 = vpop.f32.mrb[0].mxu0
    %v2000 = vadd.f32 %v1811, %v1999
    %v2001 = vpop.f32.mrb[0].mxu0
    %2002 = vmatprep.mubr.f32.mxu0 %v1715
    %2003 = vmatmul.mubr.f32.gmra.mrb[0].mxu0 %v1714
    %v2004 = vpop.f32.mrb[0].mxu0
    %v2005 = vadd.f32 %v1811, %v2004
    %v2006 = vpop.f32.mrb[0].mxu0
    %2007 = vmatprep.mubr.f32.mxu0 %v1719
    %2008 = vmatmul.mubr.f32.gmra.mrb[0].mxu0 %v1718
    %v2009 = vpop.f32.mrb[0].mxu0
    %v2010 = vadd.f32 %v1811, %v2009
    %v2011 = vpop.f32.mrb[0].mxu0
    %2012 = vmatprep.mubr.f32.mxu0 %v1723
    %2013 = vmatmul.mubr.f32.gmra.mrb[0].mxu0 %v1722
    %v2014 = vpop.f32.mrb[0].mxu0
    %v2015 = vadd.f32 %v1811, %v2014
    %v2016 = vpop.f32.mrb[0].mxu0
    %2017 = vmatprep.mubr.f32.mxu0 %v1727
    %2018 = vmatmul.mubr.f32.gmra.mrb[0].mxu0 %v1726
    %v2019 = vpop.f32.mrb[0].mxu0
    %v2020 = vadd.f32 %v1811, %v2019
    %v2021 = vpop.f32.mrb[0].mxu0
    %2022 = vmatprep.mubr.f32.mxu0 %v1731
    %2023 = vmatmul.mubr.f32.gmra.mrb[0].mxu0 %v1730
    %v2024 = vpop.f32.mrb[0].mxu0
    %v2025 = vadd.f32 %v1811, %v2024
    %v2026 = vpop.f32.mrb[0].mxu0
    %2027 = vmatprep.mubr.f32.mxu0 %v1735
    %2028 = vmatmul.mubr.f32.gmra.mrb[0].mxu0 %v1734
    %v2029 = vpop.f32.mrb[0].mxu0
    %v2030 = vadd.f32 %v1811, %v2029
    %v2031 = vpop.f32.mrb[0].mxu0
    %2032 = vmatprep.mubr.f32.mxu0 %v1739
    %2033 = vmatmul.mubr.f32.gmra.mrb[0].mxu0 %v1738
    %v2034 = vpop.f32.mrb[0].mxu0
    %v2035 = vadd.f32 %v1811, %v2034
    %v2036 = vpop.f32.mrb[0].mxu0
    %2037 = vdwg.mxu0
    %2038 = vmatprep.subr.mxu0 0.0
    %2039 = vmatpush1.msra.mxu0 %v1774
    %2040 = vmatprep.subr.mxu0 0.0
    %2041 = vmatpush1.msra.mxu0 %v1775
    %2042 = vmatprep.subr.mxu0 0.0
    %2043 = vmatpush1.msra.mxu0 %v1776
    %2044 = vmatprep.subr.mxu0 0.0
    %2045 = vmatpush1.msra.mxu0 %v1777
    %2046 = vmatprep.subr.mxu0 0.0
    %2047 = vmatpush1.msra.mxu0 %v1778
    %2048 = vmatprep.subr.mxu0 0.0
    %2049 = vmatpush1.msra.mxu0 %v1779
    %2050 = vmatprep.subr.mxu0 0.0
    %2051 = vmatpush1.msra.mxu0 %v1780
    %2052 = vmatprep.subr.mxu0 0.0
    %2053 = vmatpush1.msra.mxu0 %v1781
    %2054 = vmatprep.subr.mxu0 0.0
    %2055 = vmatpush1.msra.mxu0 %v1782
    %2056 = vmatprep.subr.mxu0 0.0
    %2057 = vmatpush1.msra.mxu0 %v1783
    %2058 = vmatprep.subr.mxu0 0.0
    %2059 = vmatpush1.msra.mxu0 %v1784
    %2060 = vmatprep.subr.mxu0 0.0
    %2061 = vmatpush1.msra.mxu0 %v1785
    %2062 = vmatprep.subr.mxu0 0.0
    %2063 = vmatpush1.msra.mxu0 %v1786
    %2064 = vmatprep.subr.mxu0 0.0
    %2065 = vmatpush1.msra.mxu0 %v1787
    %2066 = vmatprep.subr.mxu0 0.0
    %2067 = vmatpush1.msra.mxu0 %v1788
    %2068 = vmatprep.subr.mxu0 0.0
    %2069 = vmatpush1.msra.mxu0 %v1789
    %2070 = vmatprep.subr.mxu0 0.0
    %2071 = vmatpush1.msra.mxu0 %v1790
    %2072 = vmatprep.subr.mxu0 0.0
    %2073 = vmatpush1.msra.mxu0 %v1791
    %2074 = vmatprep.subr.mxu0 0.0
    %2075 = vmatpush1.msra.mxu0 %v1792
    %2076 = vmatprep.subr.mxu0 0.0
    %2077 = vmatpush1.msra.mxu0 %v1793
    %2078 = vmatprep.subr.mxu0 0.0
    %2079 = vmatpush1.msra.mxu0 %v1794
    %2080 = vmatprep.subr.mxu0 0.0
    %2081 = vmatpush1.msra.mxu0 %v1795
    %2082 = vmatprep.subr.mxu0 0.0
    %2083 = vmatpush1.msra.mxu0 %v1796
    %2084 = vmatprep.subr.mxu0 0.0
    %2085 = vmatpush1.msra.mxu0 %v1797
    %2086 = vmatprep.subr.mxu0 0.0
    %2087 = vmatpush1.msra.mxu0 %v1798
    %2088 = vmatprep.subr.mxu0 0.0
    %2089 = vmatpush1.msra.mxu0 %v1799
    %2090 = vmatprep.subr.mxu0 0.0
    %2091 = vmatpush1.msra.mxu0 %v1800
    %2092 = vmatprep.subr.mxu0 0.0
    %2093 = vmatpush1.msra.mxu0 %v1801
    %2094 = vmatprep.subr.mxu0 0.0
    %2095 = vmatpush1.msra.mxu0 %v1802
    %2096 = vmatprep.subr.mxu0 0.0
    %2097 = vmatpush1.msra.mxu0 %v1803
    %2098 = vmatprep.subr.mxu0 0.0
    %2099 = vmatpush1.msra.mxu0 %v1804
    %2100 = vmatprep.subr.mxu0 0.0
    %2101 = vmatpush1.msra.mxu0 %v1805
    %2102 = vmatprep.mubr.f32.mxu0 %v1617
    %2103 = vmatmul.mubr.f32.gmra.mrb[0].mxu0 %v1616
    %v2104 = vpop.f32.mrb[0].mxu0
    %v2105 = vadd.f32 %v1880, %v2104
    %v2106 = vpop.f32.mrb[0].mxu0
    %2107 = vmatprep.mubr.f32.mxu0 %v1621
    %2108 = vmatmul.mubr.f32.gmra.mrb[0].mxu0 %v1620
    %v2109 = vpop.f32.mrb[0].mxu0
    %v2110 = vadd.f32 %v1885, %v2109
    %v2111 = vpop.f32.mrb[0].mxu0
    %2112 = vmatprep.mubr.f32.mxu0 %v1625
    %2113 = vmatmul.mubr.f32.gmra.mrb[0].mxu0 %v1624
    %v2114 = vpop.f32.mrb[0].mxu0
    %v2115 = vadd.f32 %v1890, %v2114
    %v2116 = vpop.f32.mrb[0].mxu0
    %2117 = vmatprep.mubr.f32.mxu0 %v1629
    %2118 = vmatmul.mubr.f32.gmra.mrb[0].mxu0 %v1628
    %v2119 = vpop.f32.mrb[0].mxu0
    %v2120 = vadd.f32 %v1895, %v2119
    %v2121 = vpop.f32.mrb[0].mxu0
    %2122 = vmatprep.mubr.f32.mxu0 %v1633
    %2123 = vmatmul.mubr.f32.gmra.mrb[0].mxu0 %v1632
    %v2124 = vpop.f32.mrb[0].mxu0
    %v2125 = vadd.f32 %v1900, %v2124
    %v2126 = vpop.f32.mrb[0].mxu0
    %2127 = vmatprep.mubr.f32.mxu0 %v1637
    %2128 = vmatmul.mubr.f32.gmra.mrb[0].mxu0 %v1636
    %v2129 = vpop.f32.mrb[0].mxu0
    %v2130 = vadd.f32 %v1905, %v2129
    %v2131 = vpop.f32.mrb[0].mxu0
    %2132 = vmatprep.mubr.f32.mxu0 %v1641
    %2133 = vmatmul.mubr.f32.gmra.mrb[0].mxu0 %v1640
    %v2134 = vpop.f32.mrb[0].mxu0
    %v2135 = vadd.f32 %v1910, %v2134
    %v2136 = vpop.f32.mrb[0].mxu0
    %2137 = vmatprep.mubr.f32.mxu0 %v1645
    %2138 = vmatmul.mubr.f32.gmra.mrb[0].mxu0 %v1644
    %v2139 = vpop.f32.mrb[0].mxu0
    %v2140 = vadd.f32 %v1915, %v2139
    %v2141 = vpop.f32.mrb[0].mxu0
    %2142 = vmatprep.mubr.f32.mxu0 %v1649
    %2143 = vmatmul.mubr.f32.gmra.mrb[0].mxu0 %v1648
    %v2144 = vpop.f32.mrb[0].mxu0
    %v2145 = vadd.f32 %v1920, %v2144
    %v2146 = vpop.f32.mrb[0].mxu0
    %2147 = vmatprep.mubr.f32.mxu0 %v1653
    %2148 = vmatmul.mubr.f32.gmra.mrb[0].mxu0 %v1652
    %v2149 = vpop.f32.mrb[0].mxu0
    %v2150 = vadd.f32 %v1925, %v2149
    %v2151 = vpop.f32.mrb[0].mxu0
    %2152 = vmatprep.mubr.f32.mxu0 %v1657
    %2153 = vmatmul.mubr.f32.gmra.mrb[0].mxu0 %v1656
    %v2154 = vpop.f32.mrb[0].mxu0
    %v2155 = vadd.f32 %v1930, %v2154
    %v2156 = vpop.f32.mrb[0].mxu0
    %2157 = vmatprep.mubr.f32.mxu0 %v1661
    %2158 = vmatmul.mubr.f32.gmra.mrb[0].mxu0 %v1660
    %v2159 = vpop.f32.mrb[0].mxu0
    %v2160 = vadd.f32 %v1935, %v2159
    %v2161 = vpop.f32.mrb[0].mxu0
    %2162 = vmatprep.mubr.f32.mxu0 %v1665
    %2163 = vmatmul.mubr.f32.gmra.mrb[0].mxu0 %v1664
    %v2164 = vpop.f32.mrb[0].mxu0
    %v2165 = vadd.f32 %v1940, %v2164
    %v2166 = vpop.f32.mrb[0].mxu0
    %2167 = vmatprep.mubr.f32.mxu0 %v1669
    %2168 = vmatmul.mubr.f32.gmra.mrb[0].mxu0 %v1668
    %v2169 = vpop.f32.mrb[0].mxu0
    %v2170 = vadd.f32 %v1945, %v2169
    %v2171 = vpop.f32.mrb[0].mxu0
    %2172 = vmatprep.mubr.f32.mxu0 %v1673
    %2173 = vmatmul.mubr.f32.gmra.mrb[0].mxu0 %v1672
    %v2174 = vpop.f32.mrb[0].mxu0
    %v2175 = vadd.f32 %v1950, %v2174
    %v2176 = vpop.f32.mrb[0].mxu0
    %2177 = vmatprep.mubr.f32.mxu0 %v1677
    %2178 = vmatmul.mubr.f32.gmra.mrb[0].mxu0 %v1676
    %v2179 = vpop.f32.mrb[0].mxu0
    %v2180 = vadd.f32 %v1955, %v2179
    %v2181 = vpop.f32.mrb[0].mxu0
    %2182 = vmatprep.mubr.f32.mxu0 %v1681
    %2183 = vmatmul.mubr.f32.gmra.mrb[0].mxu0 %v1680
    %v2184 = vpop.f32.mrb[0].mxu0
    %v2185 = vadd.f32 %v1960, %v2184
    %v2186 = vpop.f32.mrb[0].mxu0
    %2187 = vmatprep.mubr.f32.mxu0 %v1685
    %2188 = vmatmul.mubr.f32.gmra.mrb[0].mxu0 %v1684
    %v2189 = vpop.f32.mrb[0].mxu0
    %v2190 = vadd.f32 %v1965, %v2189
    %v2191 = vpop.f32.mrb[0].mxu0
    %2192 = vmatprep.mubr.f32.mxu0 %v1689
    %2193 = vmatmul.mubr.f32.gmra.mrb[0].mxu0 %v1688
    %v2194 = vpop.f32.mrb[0].mxu0
    %v2195 = vadd.f32 %v1970, %v2194
    %v2196 = vpop.f32.mrb[0].mxu0
    %2197 = vmatprep.mubr.f32.mxu0 %v1693
    %2198 = vmatmul.mubr.f32.gmra.mrb[0].mxu0 %v1692
    %v2199 = vpop.f32.mrb[0].mxu0
    %v2200 = vadd.f32 %v1975, %v2199
    %v2201 = vpop.f32.mrb[0].mxu0
    %2202 = vmatprep.mubr.f32.mxu0 %v1697
    %2203 = vmatmul.mubr.f32.gmra.mrb[0].mxu0 %v1696
    %v2204 = vpop.f32.mrb[0].mxu0
    %v2205 = vadd.f32 %v1980, %v2204
    %v2206 = vpop.f32.mrb[0].mxu0
    %2207 = vmatprep.mubr.f32.mxu0 %v1701
    %2208 = vmatmul.mubr.f32.gmra.mrb[0].mxu0 %v1700
    %v2209 = vpop.f32.mrb[0].mxu0
    %v2210 = vadd.f32 %v1985, %v2209
    %v2211 = vpop.f32.mrb[0].mxu0
    %2212 = vmatprep.mubr.f32.mxu0 %v1705
    %2213 = vmatmul.mubr.f32.gmra.mrb[0].mxu0 %v1704
    %v2214 = vpop.f32.mrb[0].mxu0
    %v2215 = vadd.f32 %v1990, %v2214
    %v2216 = vpop.f32.mrb[0].mxu0
    %2217 = vmatprep.mubr.f32.mxu0 %v1709
    %2218 = vmatmul.mubr.f32.gmra.mrb[0].mxu0 %v1708
    %v2219 = vpop.f32.mrb[0].mxu0
    %v2220 = vadd.f32 %v1995, %v2219
    %v2221 = vpop.f32.mrb[0].mxu0
    %2222 = vmatprep.mubr.f32.mxu0 %v1713
    %2223 = vmatmul.mubr.f32.gmra.mrb[0].mxu0 %v1712
    %v2224 = vpop.f32.mrb[0].mxu0
    %v2225 = vadd.f32 %v2000, %v2224
    %v2226 = vpop.f32.mrb[0].mxu0
    %2227 = vmatprep.mubr.f32.mxu0 %v1717
    %2228 = vmatmul.mubr.f32.gmra.mrb[0].mxu0 %v1716
    %v2229 = vpop.f32.mrb[0].mxu0
    %v2230 = vadd.f32 %v2005, %v2229
    %v2231 = vpop.f32.mrb[0].mxu0
    %2232 = vmatprep.mubr.f32.mxu0 %v1721
    %2233 = vmatmul.mubr.f32.gmra.mrb[0].mxu0 %v1720
    %v2234 = vpop.f32.mrb[0].mxu0
    %v2235 = vadd.f32 %v2010, %v2234
    %v2236 = vpop.f32.mrb[0].mxu0
    %2237 = vmatprep.mubr.f32.mxu0 %v1725
    %2238 = vmatmul.mubr.f32.gmra.mrb[0].mxu0 %v1724
    %v2239 = vpop.f32.mrb[0].mxu0
    %v2240 = vadd.f32 %v2015, %v2239
    %v2241 = vpop.f32.mrb[0].mxu0
    %2242 = vmatprep.mubr.f32.mxu0 %v1729
    %2243 = vmatmul.mubr.f32.gmra.mrb[0].mxu0 %v1728
    %v2244 = vpop.f32.mrb[0].mxu0
    %v2245 = vadd.f32 %v2020, %v2244
    %v2246 = vpop.f32.mrb[0].mxu0
    %2247 = vmatprep.mubr.f32.mxu0 %v1733
    %2248 = vmatmul.mubr.f32.gmra.mrb[0].mxu0 %v1732
    %v2249 = vpop.f32.mrb[0].mxu0
    %v2250 = vadd.f32 %v2025, %v2249
    %v2251 = vpop.f32.mrb[0].mxu0
    %2252 = vmatprep.mubr.f32.mxu0 %v1737
    %2253 = vmatmul.mubr.f32.gmra.mrb[0].mxu0 %v1736
    %v2254 = vpop.f32.mrb[0].mxu0
    %v2255 = vadd.f32 %v2030, %v2254
    %v2256 = vpop.f32.mrb[0].mxu0
    %2257 = vmatprep.mubr.f32.mxu0 %v1741
    %2258 = vmatmul.mubr.f32.gmra.mrb[0].mxu0 %v1740
    %v2259 = vpop.f32.mrb[0].mxu0
    %v2260 = vadd.f32 %v2035, %v2259
    %v2261 = vpop.f32.mrb[0].mxu0
    %2262 = vdwg.mxu0
    %v2263 = vadd.f32 %v39, %v2105
    %v2264 = vadd.f32 %v40, %v2110
    %v2265 = vadd.f32 %v41, %v2115
    %v2266 = vadd.f32 %v42, %v2120
    %v2267 = vadd.f32 %v43, %v2125
    %v2268 = vadd.f32 %v44, %v2130
    %v2269 = vadd.f32 %v45, %v2135
    %v2270 = vadd.f32 %v46, %v2140
    %v2271 = vadd.f32 %v47, %v2145
    %v2272 = vadd.f32 %v48, %v2150
    %v2273 = vadd.f32 %v49, %v2155
    %v2274 = vadd.f32 %v50, %v2160
    %v2275 = vadd.f32 %v51, %v2165
    %v2276 = vadd.f32 %v52, %v2170
    %v2277 = vadd.f32 %v53, %v2175
    %v2278 = vadd.f32 %v54, %v2180
    %v2279 = vadd.f32 %v55, %v2185
    %v2280 = vadd.f32 %v56, %v2190
    %v2281 = vadd.f32 %v57, %v2195
    %v2282 = vadd.f32 %v58, %v2200
    %v2283 = vadd.f32 %v59, %v2205
    %v2284 = vadd.f32 %v60, %v2210
    %v2285 = vadd.f32 %v61, %v2215
    %v2286 = vadd.f32 %v62, %v2220
    %v2287 = vadd.f32 %v63, %v2225
    %v2288 = vadd.f32 %v64, %v2230
    %v2289 = vadd.f32 %v65, %v2235
    %v2290 = vadd.f32 %v66, %v2240
    %v2291 = vadd.f32 %v67, %v2245
    %v2292 = vadd.f32 %v68, %v2250
    %v2293 = vadd.f32 %v69, %v2255
    %v2294 = vadd.f32 %v70, %v2260
    %2295 = vst [vmem:[#allocation5] sm:$0xff] %v2263
    %2296 = vst [vmem:[#allocation5 + $0x8] sm:$0xff] %v2264
    %2297 = vst [vmem:[#allocation5 + $0x10] sm:$0xff] %v2265
    %2298 = vst [vmem:[#allocation5 + $0x18] sm:$0xff] %v2266
    %2299 = vst [vmem:[#allocation5 + $0x20] sm:$0xff] %v2267
    %2300 = vst [vmem:[#allocation5 + $0x28] sm:$0xff] %v2268
    %2301 = vst [vmem:[#allocation5 + $0x30] sm:$0xff] %v2269
    %2302 = vst [vmem:[#allocation5 + $0x38] sm:$0xff] %v2270
    %2303 = vst [vmem:[#allocation5 + $0x40] sm:$0xff] %v2271
    %2304 = vst [vmem:[#allocation5 + $0x48] sm:$0xff] %v2272
    %2305 = vst [vmem:[#allocation5 + $0x50] sm:$0xff] %v2273
    %2306 = vst [vmem:[#allocation5 + $0x58] sm:$0xff] %v2274
    %2307 = vst [vmem:[#allocation5 + $0x60] sm:$0xff] %v2275
    %2308 = vst [vmem:[#allocation5 + $0x68] sm:$0xff] %v2276
    %2309 = vst [vmem:[#allocation5 + $0x70] sm:$0xff] %v2277
    %2310 = vst [vmem:[#allocation5 + $0x78] sm:$0xff] %v2278
    %2311 = vst [vmem:[#allocation5 + $0x80] sm:$0xff] %v2279
    %2312 = vst [vmem:[#allocation5 + $0x88] sm:$0xff] %v2280
    %2313 = vst [vmem:[#allocation5 + $0x90] sm:$0xff] %v2281
    %2314 = vst [vmem:[#allocation5 + $0x98] sm:$0xff] %v2282
    %2315 = vst [vmem:[#allocation5 + $0xa0] sm:$0xff] %v2283
    %2316 = vst [vmem:[#allocation5 + $0xa8] sm:$0xff] %v2284
    %2317 = vst [vmem:[#allocation5 + $0xb0] sm:$0xff] %v2285
    %2318 = vst [vmem:[#allocation5 + $0xb8] sm:$0xff] %v2286
    %2319 = vst [vmem:[#allocation5 + $0xc0] sm:$0xff] %v2287
    %2320 = vst [vmem:[#allocation5 + $0xc8] sm:$0xff] %v2288
    %2321 = vst [vmem:[#allocation5 + $0xd0] sm:$0xff] %v2289
    %2322 = vst [vmem:[#allocation5 + $0xd8] sm:$0xff] %v2290
    %2323 = vst [vmem:[#allocation5 + $0xe0] sm:$0xff] %v2291
    %2324 = vst [vmem:[#allocation5 + $0xe8] sm:$0xff] %v2292
    %2325 = vst [vmem:[#allocation5 + $0xf0] sm:$0xff] %v2293
    %2326 = vst [vmem:[#allocation5 + $0xf8] sm:$0xff] %v2294
    // Predicated region
    $region34: #{vit_block_forward.3} parent=1 // pred_check
      _
    $region35: #{vit_block_forward.3} parent=1 // pred_check_branch
      %2328 = sbr.rel (0) target = $region37
    $region36: #{vit_block_forward.3} parent=1 // pred_region
      %s2330 = ssub.s32 4096, 4096
      %2331 = vsyncadd [#allocation4], %s2330
      %s2332 = sshll.u32 [#allocation5], 4
      %s2333 = int_to_ptr.vmem [resolvable:$true] %s2332
      %2338 = dma.vmem_to_hbm [thread:$0]  %s2333, 4096, %s7, [#allocation4], 128, 128, 8
    $region37: #{vit_block_forward.3} parent=1 // pred_fallthru
      _
    // Predicated region
    $region38: #{vit_block_forward.3} parent=1 // pred_check
      _
    $region39: #{vit_block_forward.3} parent=1 // pred_check_branch
      %2340 = sbr.rel (0) target = $region41
    $region40: #{vit_block_forward.3} parent=1 // pred_region
      %2341 = dma.done [#allocation4], 4096
    $region41: #{vit_block_forward.3} parent=1 // pred_fallthru
      _
    %2342 = vsyncpa [#allocation3], 1
    %2343 = vsyncpa [#allocation4], 1

// kernel: vit_block_forward.2
$region0: #{vit_block_forward.2}
  #allocation0 [shape = 'u32[]', space=smem, size = 0x4, offset = 0x4, fixed_abs, tag = 'smem constant byte address 0x4 - core index']
  #allocation1 [shape = 'u32[144,128]{1,0:T(1,128)}', space=vmem, size = 0x12000, scoped, tag = 'internal scratch']
  %s0 = inlined_call_operand.hbm [shape: f32[2,128,128], index: 0, kind: input, shape index: {}]
  %s1 = inlined_call_operand.vmem [shape: f32[1,128], index: 1, kind: input, shape index: {}]
  %s2 = inlined_call_operand.vmem [shape: f32[1,128], index: 2, kind: input, shape index: {}]
  %s3 = inlined_call_operand.hbm [shape: f32[128,384], index: 3, kind: input, shape index: {}]
  %s4 = inlined_call_operand.hbm [shape: f32[128,128], index: 4, kind: input, shape index: {}]
  %s5 = inlined_call_operand.vmem [shape: f32[1,128], index: 5, kind: input, shape index: {}]
  %s6 = inlined_call_operand.vmem [shape: f32[2,128,128], index: 6, kind: output, shape index: {}]
  %s7 = sld [smem:[#allocation0]]
  $region69: #{vit_block_forward.2} parent=0
    _
  %s9 = ssub.s32 1, %s7
  %s10 = scalar_select 0, %s9, %s7
  $region1: #{vit_block_forward.2} parent=0
    #allocation2 [shape = 'u8[131072]{0}', space=vmem, size = 0x20000, scoped, tag = 'input window, operand 0']
    #allocation3 [shape = 's32[2]{0}', space=sflag, size = 0x8, scoped, tag = 'scoped memory for vit_block_forward.2']
    #allocation4 [shape = 'u8[196608]{0}', space=vmem, size = 0x30000, scoped, tag = 'input window, operand 3, single buffered']
    #allocation5 [shape = 's32[1]{0}', space=sflag, size = 0x4, scoped, tag = 'scoped memory for vit_block_forward.2']
    #allocation6 [shape = 'u8[65536]{0}', space=vmem, size = 0x10000, scoped, tag = 'input window, operand 4, single buffered']
    %11 = vsyncpa [#allocation3], 0
    %s12 = scalar_lea.sflag [#allocation3], 1
    %13 = vsyncpa %s12, 0
    %14 = vsyncpa [#allocation5], 0
    loop: start=0, step=1, limit=4
    $region2: #{vit_block_forward.2} parent=1 // loop_pre_header
      _
    $region3: #{vit_block_forward.2} parent=1 // loop_header
      %s16 = sphi 0, %s20
      %p17 = scmp.ge.s32.totalorder %s16, 4
      %s26 = sphi 0, %s28
      %s29 = sphi 0, %s26
      %s30 = sphi 0, %s29
      %s46 = sphi 0, %s30
      %s50 = sphi 0, %s50
      %s52 = sphi 0, %s50
      %s53 = sphi 0, %s52
      %s67 = sphi 0, %s53
      %s71 = sphi 0, %s71
      %s73 = sphi 0, %s71
      %s74 = sphi 0, %s73
      %s88 = sphi 0, %s74
      %s92 = sphi 0, %s92
      %s94 = sphi 0, %s92
      %s95 = sphi 0, %s94
      %s109 = sphi 0, %s95
      %s113 = sphi 0, %s113
      %s115 = sphi 0, %s113
      %s116 = sphi 0, %s115
      %s130 = sphi 0, %s116
      %s134 = sphi 0, %s134
      %s136 = sphi 0, %s134
      %s137 = sphi 0, %s136
      %s151 = sphi 0, %s137
      %s157 = sphi 0, %s159
      %s160 = sphi 0, %s157
      %s161 = sphi 0, %s160
      %s177 = sphi 0, %s161
    $region4: #{vit_block_forward.2} parent=1 // loop_header_branch
      %19 = sbr.rel (%p17) target = $region8
    $region5: #{vit_block_forward.2} parent=1 // loop_body
      %s21 = ssub.s32 %s16, 1
      %s22 = ssub.s32 %s16, 2
      %s23 = sadd.s32 %s16, 1
      %s24 = ssub.s32 %s16, %s23
      %p25 = scmp.eq.s32.totalorder %s24, 0
      %s27 = sadd.s32 %s26, 1
      %s28 = scalar_select %p25, %s26, %s27
      %p31 = pneg %p25
      %p32 = scmp.eq.s32.totalorder %s16, 1
      %p33 = por %p31, %p32
      %p34 = scmp.ne.s32.totalorder %s26, %s29
      %p35 = scmp.eq.s32.totalorder %s16, 0
      %p36 = por %p34, %p35
      %p37 = scmp.ne.s32.totalorder %s26, %s29
      %p38 = scmp.eq.s32.totalorder %s21, 1
      %p39 = por %p37, %p38
      %p40 = scmp.ne.s32.totalorder %s29, %s30
      %p41 = scmp.eq.s32.totalorder %s21, 0
      %p42 = por %p40, %p41
      %p43 = scmp.ne.s32.totalorder %s29, %s30
      %p44 = scmp.eq.s32.totalorder %s22, 1
      %p45 = por %p43, %p44
      %p47 = scmp.ne.s32.totalorder %s30, %s46
      %p48 = scmp.eq.s32.totalorder %s22, 0
      %p49 = por %p47, %p48
      %s51 = sadd.s32 %s50, 1
      %p54 = scmp.eq.s32.totalorder %s16, 1
      %p55 = scmp.ne.s32.totalorder %s50, %s52
      %p56 = scmp.eq.s32.totalorder %s16, 0
      %p57 = por %p55, %p56
      %p58 = scmp.ne.s32.totalorder %s50, %s52
      %p59 = scmp.eq.s32.totalorder %s21, 1
      %p60 = por %p58, %p59
      %p61 = scmp.ne.s32.totalorder %s52, %s53
      %p62 = scmp.eq.s32.totalorder %s21, 0
      %p63 = por %p61, %p62
      %p64 = scmp.ne.s32.totalorder %s52, %s53
      %p65 = scmp.eq.s32.totalorder %s22, 1
      %p66 = por %p64, %p65
      %p68 = scmp.ne.s32.totalorder %s53, %s67
      %p69 = scmp.eq.s32.totalorder %s22, 0
      %p70 = por %p68, %p69
      %s72 = sadd.s32 %s71, 1
      %p75 = scmp.eq.s32.totalorder %s16, 1
      %p76 = scmp.ne.s32.totalorder %s71, %s73
      %p77 = scmp.eq.s32.totalorder %s16, 0
      %p78 = por %p76, %p77
      %p79 = scmp.ne.s32.totalorder %s71, %s73
      %p80 = scmp.eq.s32.totalorder %s21, 1
      %p81 = por %p79, %p80
      %p82 = scmp.ne.s32.totalorder %s73, %s74
      %p83 = scmp.eq.s32.totalorder %s21, 0
      %p84 = por %p82, %p83
      %p85 = scmp.ne.s32.totalorder %s73, %s74
      %p86 = scmp.eq.s32.totalorder %s22, 1
      %p87 = por %p85, %p86
      %p89 = scmp.ne.s32.totalorder %s74, %s88
      %p90 = scmp.eq.s32.totalorder %s22, 0
      %p91 = por %p89, %p90
      %s93 = sadd.s32 %s92, 1
      %p96 = scmp.eq.s32.totalorder %s16, 1
      %p97 = scmp.ne.s32.totalorder %s92, %s94
      %p98 = scmp.eq.s32.totalorder %s16, 0
      %p99 = por %p97, %p98
      %p100 = scmp.ne.s32.totalorder %s92, %s94
      %p101 = scmp.eq.s32.totalorder %s21, 1
      %p102 = por %p100, %p101
      %p103 = scmp.ne.s32.totalorder %s94, %s95
      %p104 = scmp.eq.s32.totalorder %s21, 0
      %p105 = por %p103, %p104
      %p106 = scmp.ne.s32.totalorder %s94, %s95
      %p107 = scmp.eq.s32.totalorder %s22, 1
      %p108 = por %p106, %p107
      %p110 = scmp.ne.s32.totalorder %s95, %s109
      %p111 = scmp.eq.s32.totalorder %s22, 0
      %p112 = por %p110, %p111
      %s114 = sadd.s32 %s113, 1
      %p117 = scmp.eq.s32.totalorder %s16, 1
      %p118 = scmp.ne.s32.totalorder %s113, %s115
      %p119 = scmp.eq.s32.totalorder %s16, 0
      %p120 = por %p118, %p119
      %p121 = scmp.ne.s32.totalorder %s113, %s115
      %p122 = scmp.eq.s32.totalorder %s21, 1
      %p123 = por %p121, %p122
      %p124 = scmp.ne.s32.totalorder %s115, %s116
      %p125 = scmp.eq.s32.totalorder %s21, 0
      %p126 = por %p124, %p125
      %p127 = scmp.ne.s32.totalorder %s115, %s116
      %p128 = scmp.eq.s32.totalorder %s22, 1
      %p129 = por %p127, %p128
      %p131 = scmp.ne.s32.totalorder %s116, %s130
      %p132 = scmp.eq.s32.totalorder %s22, 0
      %p133 = por %p131, %p132
      %s135 = sadd.s32 %s134, 1
      %p138 = scmp.eq.s32.totalorder %s16, 1
      %p139 = scmp.ne.s32.totalorder %s134, %s136
      %p140 = scmp.eq.s32.totalorder %s16, 0
      %p141 = por %p139, %p140
      %p142 = scmp.ne.s32.totalorder %s134, %s136
      %p143 = scmp.eq.s32.totalorder %s21, 1
      %p144 = por %p142, %p143
      %p145 = scmp.ne.s32.totalorder %s136, %s137
      %p146 = scmp.eq.s32.totalorder %s21, 0
      %p147 = por %p145, %p146
      %p148 = scmp.ne.s32.totalorder %s136, %s137
      %p149 = scmp.eq.s32.totalorder %s22, 1
      %p150 = por %p148, %p149
      %p152 = scmp.ne.s32.totalorder %s137, %s151
      %p153 = scmp.eq.s32.totalorder %s22, 0
      %p154 = por %p152, %p153
      %s155 = ssub.s32 %s16, %s23
      %p156 = scmp.eq.s32.totalorder %s155, 0
      %s158 = sadd.s32 %s157, 1
      %s159 = scalar_select %p156, %s157, %s158
      %p162 = pneg %p156
      %p163 = scmp.eq.s32.totalorder %s16, 1
      %p164 = por %p162, %p163
      %p165 = scmp.ne.s32.totalorder %s157, %s160
      %p166 = scmp.eq.s32.totalorder %s16, 0
      %p167 = por %p165, %p166
      %p168 = scmp.ne.s32.totalorder %s157, %s160
      %p169 = scmp.eq.s32.totalorder %s21, 1
      %p170 = por %p168, %p169
      %p171 = scmp.ne.s32.totalorder %s160, %s161
      %p172 = scmp.eq.s32.totalorder %s21, 0
      %p173 = por %p171, %p172
      %p174 = scmp.ne.s32.totalorder %s160, %s161
      %p175 = scmp.eq.s32.totalorder %s22, 1
      %p176 = por %p174, %p175
      %p178 = scmp.ne.s32.totalorder %s161, %s177
      %p179 = scmp.eq.s32.totalorder %s22, 0
      %p180 = por %p178, %p179
      %p181 = scmp.le.s32.totalorder 1, %s16
      %p182 = scmp.lt.s32.totalorder %s16, 3
      %p183 = pnand %p181, %p182
      %p184 = pneg %p183
      // Predicated region
      $region9: #{vit_block_forward.2} parent=5 // pred_check
        _
      $region10: #{vit_block_forward.2} parent=5 // pred_check_branch
        %186 = sbr.rel (%p183) target = $region12
      $region11: #{vit_block_forward.2} parent=5 // pred_region
        %s187 = ssub.s32 %s16, 1
        // Predicated region
        $region13: #{vit_block_forward.2} parent=11 // pred_check
          %p188 = pneg %p63
        $region14: #{vit_block_forward.2} parent=11 // pred_check_branch
          %190 = sbr.rel (%p188) target = $region16
        $region15: #{vit_block_forward.2} parent=11 // pred_region
          _
        $region16: #{vit_block_forward.2} parent=11 // pred_fallthru
          _
        // Predicated region
        $region17: #{vit_block_forward.2} parent=11 // pred_check
          %p191 = pneg %p84
        $region18: #{vit_block_forward.2} parent=11 // pred_check_branch
          %193 = sbr.rel (%p191) target = $region20
        $region19: #{vit_block_forward.2} parent=11 // pred_region
          _
        $region20: #{vit_block_forward.2} parent=11 // pred_fallthru
          _
        // Predicated region
        $region21: #{vit_block_forward.2} parent=11 // pred_check
          %p194 = pneg %p105
        $region22: #{vit_block_forward.2} parent=11 // pred_check_branch
          %196 = sbr.rel (%p194) target = $region24
        $region23: #{vit_block_forward.2} parent=11 // pred_region
          %s198 = ssub.s32 6144, 6144
          %199 = vsyncadd [#allocation5], %s198
          %s200 = sshll.u32 [#allocation4], 4
          %s201 = int_to_ptr.vmem [resolvable:$true] %s200
          %206 = dma.hbm_to_vmem [thread:$0]  %s3, 6144, %s201, [#allocation5], 384, 384, 24
        $region24: #{vit_block_forward.2} parent=11 // pred_fallthru
          _
        // Predicated region
        $region25: #{vit_block_forward.2} parent=11 // pred_check
          %p207 = pneg %p126
        $region26: #{vit_block_forward.2} parent=11 // pred_check_branch
          %209 = sbr.rel (%p207) target = $region28
        $region27: #{vit_block_forward.2} parent=11 // pred_region
          %s211 = ssub.s32 2048, 2048
          %212 = vsyncadd [#allocation5], %s211
          %s213 = sshll.u32 [#allocation6], 4
          %s214 = int_to_ptr.vmem [resolvable:$true] %s213
          %219 = dma.hbm_to_vmem [thread:$0]  %s4, 2048, %s214, [#allocation5], 128, 128, 8
        $region28: #{vit_block_forward.2} parent=11 // pred_fallthru
          _
        // Predicated region
        $region29: #{vit_block_forward.2} parent=11 // pred_check
          %p220 = pneg %p147
        $region30: #{vit_block_forward.2} parent=11 // pred_check_branch
          %222 = sbr.rel (%p220) target = $region32
        $region31: #{vit_block_forward.2} parent=11 // pred_region
          _
        $region32: #{vit_block_forward.2} parent=11 // pred_fallthru
          _
      $region12: #{vit_block_forward.2} parent=5 // pred_fallthru
        _
      %p223 = scmp.lt.s32.totalorder %s16, 2
      // Predicated region
      $region33: #{vit_block_forward.2} parent=5 // pred_check
        %p224 = pneg %p223
      $region34: #{vit_block_forward.2} parent=5 // pred_check_branch
        %226 = sbr.rel (%p224) target = $region36
      $region35: #{vit_block_forward.2} parent=5 // pred_region
        // Predicated region
        $region37: #{vit_block_forward.2} parent=35 // pred_check
          %p227 = pneg %p36
        $region38: #{vit_block_forward.2} parent=35 // pred_check_branch
          %229 = sbr.rel (%p227) target = $region40
        $region39: #{vit_block_forward.2} parent=35 // pred_region
          %s230 = sand.u32 %s26, 1
          %s231 = scalar_lea.sflag [#allocation3], %s230
          %s232 = sand.u32 %s26, 1
          %s233 = smul.addr %s232, 128
          %s234 = scalar_lea.vmem [#allocation2], %s233
          %s236 = ssub.s32 2048, 2048
          %237 = vsyncadd %s231, %s236
          %s238 = smul.addr %s16, 16
          %s239 = smul.addr %s238, 128
          %s240 = scalar_lea.hbm %s0, %s239
          %s241 = sshll.u32 %s234, 4
          %s242 = int_to_ptr.vmem [resolvable:$true] %s241
          %247 = dma.hbm_to_vmem [thread:$0]  %s240, 2048, %s242, %s231, 128, 128, 8
        $region40: #{vit_block_forward.2} parent=35 // pred_fallthru
          _
      $region36: #{vit_block_forward.2} parent=5 // pred_fallthru
        _
      %p248 = scmp.le.s32.totalorder 1, %s16
      %p249 = scmp.lt.s32.totalorder %s16, 3
      %p250 = pnand %p248, %p249
      %p251 = pneg %p250
      // Predicated region
      $region41: #{vit_block_forward.2} parent=5 // pred_check
        _
      $region42: #{vit_block_forward.2} parent=5 // pred_check_branch
        %253 = sbr.rel (%p250) target = $region44
      $region43: #{vit_block_forward.2} parent=5 // pred_region
        %s254 = ssub.s32 %s16, 1
        %s255 = sand.u32 %s29, 1
        %s256 = scalar_lea.sflag [#allocation3], %s255
        %s257 = sand.u32 %s29, 1
        %s258 = smul.addr %s257, 128
        %s259 = scalar_lea.vmem [#allocation2], %s258
        // Predicated region
        $region45: #{vit_block_forward.2} parent=43 // pred_check
          %p260 = pneg %p42
        $region46: #{vit_block_forward.2} parent=43 // pred_check_branch
          %262 = sbr.rel (%p260) target = $region48
        $region47: #{vit_block_forward.2} parent=43 // pred_region
          %263 = dma.done %s256, 2048
        $region48: #{vit_block_forward.2} parent=43 // pred_fallthru
          _
        // Predicated region
        $region49: #{vit_block_forward.2} parent=43 // pred_check
          %p264 = pneg %p105
        $region50: #{vit_block_forward.2} parent=43 // pred_check_branch
          %266 = sbr.rel (%p264) target = $region52
        $region51: #{vit_block_forward.2} parent=43 // pred_region
          %267 = dma.done [#allocation5], 6144
        $region52: #{vit_block_forward.2} parent=43 // pred_fallthru
          _
        // Predicated region
        $region53: #{vit_block_forward.2} parent=43 // pred_check
          %p268 = pneg %p126
        $region54: #{vit_block_forward.2} parent=43 // pred_check_branch
          %270 = sbr.rel (%p268) target = $region56
        $region55: #{vit_block_forward.2} parent=43 // pred_region
          %271 = dma.done [#allocation5], 2048
        $region56: #{vit_block_forward.2} parent=43 // pred_fallthru
          _
        %s272 = sand.u32 %s29, 1
        %s273 = scalar_lea.sflag [#allocation3], %s272
        %s274 = sand.u32 %s29, 1
        %s275 = smul.addr %s274, 128
        %s276 = scalar_lea.vmem [#allocation2], %s275
        %p277 = pneg %p42
        %p278 = pneg %p39
        %p279 = pneg %p63
        %p280 = pneg %p60
        %p281 = pneg %p84
        %p282 = pneg %p81
        %p283 = pneg %p105
        %p284 = pneg %p102
        %p285 = pneg %p126
        %p286 = pneg %p123
        %p287 = pneg %p147
        %p288 = pneg %p144
        %p289 = pneg %p173
        %p290 = pneg %p170
        %p291 = scmp.lt.s32.totalorder %s21, 1
        %s292 = scalar_select %p291, %s21, 1
        %s293 = smul.addr %s292, 16
        %s294 = smul.addr %s293, 8
        %s295 = scalar_lea.vmem %s6, %s294
        %p296 = scmp.lt.s32.totalorder %s21, 1
        %s297 = scalar_select %p296, %s21, 1
        %s298 = smul.addr %s297, 16
        %s299 = smul.addr %s298, 8
        %s300 = scalar_lea.vmem %s6, %s299
        %v301 = vld [vmem:[%s259] sm:$0xff]
        %v302 = vld [vmem:[%s259 + $0x8] sm:$0xff]
        %v303 = vld [vmem:[%s259 + $0x10] sm:$0xff]
        %v304 = vld [vmem:[%s259 + $0x18] sm:$0xff]
        %v305 = vld [vmem:[%s259 + $0x20] sm:$0xff]
        %v306 = vld [vmem:[%s259 + $0x28] sm:$0xff]
        %v307 = vld [vmem:[%s259 + $0x30] sm:$0xff]
        %v308 = vld [vmem:[%s259 + $0x38] sm:$0xff]
        %v309 = vld [vmem:[%s259 + $0x40] sm:$0xff]
        %v310 = vld [vmem:[%s259 + $0x48] sm:$0xff]
        %v311 = vld [vmem:[%s259 + $0x50] sm:$0xff]
        %v312 = vld [vmem:[%s259 + $0x58] sm:$0xff]
        %v313 = vld [vmem:[%s259 + $0x60] sm:$0xff]
        %v314 = vld [vmem:[%s259 + $0x68] sm:$0xff]
        %v315 = vld [vmem:[%s259 + $0x70] sm:$0xff]
        %v316 = vld [vmem:[%s259 + $0x78] sm:$0xff]
        %v317 = vld [vmem:[%s1] sm:$0x1]
        %v318 = vld [vmem:[%s2] sm:$0x1]
        %319 = vadd.xlane.f32.xlu0 %v301
        %v320 = vpop.xlane.xlu0 %319
        %321 = vadd.xlane.f32.xlu0 %v302
        %v322 = vpop.xlane.xlu0 %321
        %323 = vadd.xlane.f32.xlu0 %v303
        %v324 = vpop.xlane.xlu0 %323
        %325 = vadd.xlane.f32.xlu0 %v304
        %v326 = vpop.xlane.xlu0 %325
        %327 = vadd.xlane.f32.xlu0 %v305
        %v328 = vpop.xlane.xlu0 %327
        %329 = vadd.xlane.f32.xlu0 %v306
        %v330 = vpop.xlane.xlu0 %329
        %331 = vadd.xlane.f32.xlu0 %v307
        %v332 = vpop.xlane.xlu0 %331
        %333 = vadd.xlane.f32.xlu0 %v308
        %v334 = vpop.xlane.xlu0 %333
        %335 = vadd.xlane.f32.xlu0 %v309
        %v336 = vpop.xlane.xlu0 %335
        %337 = vadd.xlane.f32.xlu0 %v310
        %v338 = vpop.xlane.xlu0 %337
        %339 = vadd.xlane.f32.xlu0 %v311
        %v340 = vpop.xlane.xlu0 %339
        %341 = vadd.xlane.f32.xlu0 %v312
        %v342 = vpop.xlane.xlu0 %341
        %343 = vadd.xlane.f32.xlu0 %v313
        %v344 = vpop.xlane.xlu0 %343
        %345 = vadd.xlane.f32.xlu0 %v314
        %v346 = vpop.xlane.xlu0 %345
        %347 = vadd.xlane.f32.xlu0 %v315
        %v348 = vpop.xlane.xlu0 %347
        %349 = vadd.xlane.f32.xlu0 %v316
        %v350 = vpop.xlane.xlu0 %349
        %v351 = vrcp.pop 128.0
        %v352 = vmul.f32 %v320, %v351
        %v353 = vmul.f32 %v322, %v351
        %v354 = vmul.f32 %v324, %v351
        %v355 = vmul.f32 %v326, %v351
        %v356 = vmul.f32 %v328, %v351
        %v357 = vmul.f32 %v330, %v351
        %v358 = vmul.f32 %v332, %v351
        %v359 = vmul.f32 %v334, %v351
        %v360 = vmul.f32 %v336, %v351
        %v361 = vmul.f32 %v338, %v351
        %v362 = vmul.f32 %v340, %v351
        %v363 = vmul.f32 %v342, %v351
        %v364 = vmul.f32 %v344, %v351
        %v365 = vmul.f32 %v346, %v351
        %v366 = vmul.f32 %v348, %v351
        %v367 = vmul.f32 %v350, %v351
        %v368 = vsub.f32 %v301, %v352
        %v369 = vsub.f32 %v302, %v353
        %v370 = vsub.f32 %v303, %v354
        %v371 = vsub.f32 %v304, %v355
        %v372 = vsub.f32 %v305, %v356
        %v373 = vsub.f32 %v306, %v357
        %v374 = vsub.f32 %v307, %v358
        %v375 = vsub.f32 %v308, %v359
        %v376 = vsub.f32 %v309, %v360
        %v377 = vsub.f32 %v310, %v361
        %v378 = vsub.f32 %v311, %v362
        %v379 = vsub.f32 %v312, %v363
        %v380 = vsub.f32 %v313, %v364
        %v381 = vsub.f32 %v314, %v365
        %v382 = vsub.f32 %v315, %v366
        %v383 = vsub.f32 %v316, %v367
        %v384 = vmul.f32 %v368, %v368
        %v385 = vmul.f32 %v369, %v369
        %v386 = vmul.f32 %v370, %v370
        %v387 = vmul.f32 %v371, %v371
        %v388 = vmul.f32 %v372, %v372
        %v389 = vmul.f32 %v373, %v373
        %v390 = vmul.f32 %v374, %v374
        %v391 = vmul.f32 %v375, %v375
        %v392 = vmul.f32 %v376, %v376
        %v393 = vmul.f32 %v377, %v377
        %v394 = vmul.f32 %v378, %v378
        %v395 = vmul.f32 %v379, %v379
        %v396 = vmul.f32 %v380, %v380
        %v397 = vmul.f32 %v381, %v381
        %v398 = vmul.f32 %v382, %v382
        %v399 = vmul.f32 %v383, %v383
        %400 = vadd.xlane.f32.xlu0 %v384
        %v401 = vpop.xlane.xlu0 %400
        %402 = vadd.xlane.f32.xlu0 %v385
        %v403 = vpop.xlane.xlu0 %402
        %404 = vadd.xlane.f32.xlu0 %v386
        %v405 = vpop.xlane.xlu0 %404
        %406 = vadd.xlane.f32.xlu0 %v387
        %v407 = vpop.xlane.xlu0 %406
        %408 = vadd.xlane.f32.xlu0 %v388
        %v409 = vpop.xlane.xlu0 %408
        %410 = vadd.xlane.f32.xlu0 %v389
        %v411 = vpop.xlane.xlu0 %410
        %412 = vadd.xlane.f32.xlu0 %v390
        %v413 = vpop.xlane.xlu0 %412
        %414 = vadd.xlane.f32.xlu0 %v391
        %v415 = vpop.xlane.xlu0 %414
        %416 = vadd.xlane.f32.xlu0 %v392
        %v417 = vpop.xlane.xlu0 %416
        %418 = vadd.xlane.f32.xlu0 %v393
        %v419 = vpop.xlane.xlu0 %418
        %420 = vadd.xlane.f32.xlu0 %v394
        %v421 = vpop.xlane.xlu0 %420
        %422 = vadd.xlane.f32.xlu0 %v395
        %v423 = vpop.xlane.xlu0 %422
        %424 = vadd.xlane.f32.xlu0 %v396
        %v425 = vpop.xlane.xlu0 %424
        %426 = vadd.xlane.f32.xlu0 %v397
        %v427 = vpop.xlane.xlu0 %426
        %428 = vadd.xlane.f32.xlu0 %v398
        %v429 = vpop.xlane.xlu0 %428
        %430 = vadd.xlane.f32.xlu0 %v399
        %v431 = vpop.xlane.xlu0 %430
        %v432 = vmul.f32 %v401, %v351
        %v433 = vmul.f32 %v403, %v351
        %v434 = vmul.f32 %v405, %v351
        %v435 = vmul.f32 %v407, %v351
        %v436 = vmul.f32 %v409, %v351
        %v437 = vmul.f32 %v411, %v351
        %v438 = vmul.f32 %v413, %v351
        %v439 = vmul.f32 %v415, %v351
        %v440 = vmul.f32 %v417, %v351
        %v441 = vmul.f32 %v419, %v351
        %v442 = vmul.f32 %v421, %v351
        %v443 = vmul.f32 %v423, %v351
        %v444 = vmul.f32 %v425, %v351
        %v445 = vmul.f32 %v427, %v351
        %v446 = vmul.f32 %v429, %v351
        %v447 = vmul.f32 %v431, %v351
        %v448 = vadd.f32 %v432, 1e-05
        %v449 = vadd.f32 %v433, 1e-05
        %v450 = vadd.f32 %v434, 1e-05
        %v451 = vadd.f32 %v435, 1e-05
        %v452 = vadd.f32 %v436, 1e-05
        %v453 = vadd.f32 %v437, 1e-05
        %v454 = vadd.f32 %v438, 1e-05
        %v455 = vadd.f32 %v439, 1e-05
        %v456 = vadd.f32 %v440, 1e-05
        %v457 = vadd.f32 %v441, 1e-05
        %v458 = vadd.f32 %v442, 1e-05
        %v459 = vadd.f32 %v443, 1e-05
        %v460 = vadd.f32 %v444, 1e-05
        %v461 = vadd.f32 %v445, 1e-05
        %v462 = vadd.f32 %v446, 1e-05
        %v463 = vadd.f32 %v447, 1e-05
        %v464 = vrsqrt.pop %v448
        %v465 = vrsqrt.pop %v449
        %v466 = vrsqrt.pop %v450
        %v467 = vrsqrt.pop %v451
        %v468 = vrsqrt.pop %v452
        %v469 = vrsqrt.pop %v453
        %v470 = vrsqrt.pop %v454
        %v471 = vrsqrt.pop %v455
        %v472 = vrsqrt.pop %v456
        %v473 = vrsqrt.pop %v457
        %v474 = vrsqrt.pop %v458
        %v475 = vrsqrt.pop %v459
        %v476 = vrsqrt.pop %v460
        %v477 = vrsqrt.pop %v461
        %v478 = vrsqrt.pop %v462
        %v479 = vrsqrt.pop %v463
        %v480 = vmul.f32 %v368, %v464
        %v481 = vmul.f32 %v369, %v465
        %v482 = vmul.f32 %v370, %v466
        %v483 = vmul.f32 %v371, %v467
        %v484 = vmul.f32 %v372, %v468
        %v485 = vmul.f32 %v373, %v469
        %v486 = vmul.f32 %v374, %v470
        %v487 = vmul.f32 %v375, %v471
        %v488 = vmul.f32 %v376, %v472
        %v489 = vmul.f32 %v377, %v473
        %v490 = vmul.f32 %v378, %v474
        %v491 = vmul.f32 %v379, %v475
        %v492 = vmul.f32 %v380, %v476
        %v493 = vmul.f32 %v381, %v477
        %v494 = vmul.f32 %v382, %v478
        %v495 = vmul.f32 %v383, %v479
        %v497 = vlaneseq
        %v498 = vshrl.u32 %v497, 7
        %v499 = vsub.s32 0, %v498
        %v500 = vrot.slane %v317, %v499
        %v502 = vmul.f32 %v480, %v500
        %v503 = vmul.f32 %v481, %v500
        %v504 = vmul.f32 %v482, %v500
        %v505 = vmul.f32 %v483, %v500
        %v506 = vmul.f32 %v484, %v500
        %v507 = vmul.f32 %v485, %v500
        %v508 = vmul.f32 %v486, %v500
        %v509 = vmul.f32 %v487, %v500
        %v510 = vmul.f32 %v488, %v500
        %v511 = vmul.f32 %v489, %v500
        %v512 = vmul.f32 %v490, %v500
        %v513 = vmul.f32 %v491, %v500
        %v514 = vmul.f32 %v492, %v500
        %v515 = vmul.f32 %v493, %v500
        %v516 = vmul.f32 %v494, %v500
        %v517 = vmul.f32 %v495, %v500
        %v519 = vlaneseq
        %v520 = vshrl.u32 %v519, 7
        %v521 = vsub.s32 0, %v520
        %v522 = vrot.slane %v318, %v521
        %v524 = vadd.f32 %v502, %v522
        %v525 = vadd.f32 %v503, %v522
        %v526 = vadd.f32 %v504, %v522
        %v527 = vadd.f32 %v505, %v522
        %v528 = vadd.f32 %v506, %v522
        %v529 = vadd.f32 %v507, %v522
        %v530 = vadd.f32 %v508, %v522
        %v531 = vadd.f32 %v509, %v522
        %v532 = vadd.f32 %v510, %v522
        %v533 = vadd.f32 %v511, %v522
        %v534 = vadd.f32 %v512, %v522
        %v535 = vadd.f32 %v513, %v522
        %v536 = vadd.f32 %v514, %v522
        %v537 = vadd.f32 %v515, %v522
        %v538 = vadd.f32 %v516, %v522
        %v539 = vadd.f32 %v517, %v522
        %v540 = vld [vmem:[#allocation4] sm:$0xff]
        %v541 = vld [vmem:[#allocation4 + $0x8] sm:$0xff]
        %v542 = vld [vmem:[#allocation4 + $0x10] sm:$0xff]
        %v543 = vld [vmem:[#allocation4 + $0x18] sm:$0xff]
        %v544 = vld [vmem:[#allocation4 + $0x20] sm:$0xff]
        %v545 = vld [vmem:[#allocation4 + $0x28] sm:$0xff]
        %v546 = vld [vmem:[#allocation4 + $0x30] sm:$0xff]
        %v547 = vld [vmem:[#allocation4 + $0x38] sm:$0xff]
        %v548 = vld [vmem:[#allocation4 + $0x40] sm:$0xff]
        %v549 = vld [vmem:[#allocation4 + $0x48] sm:$0xff]
        %v550 = vld [vmem:[#allocation4 + $0x50] sm:$0xff]
        %v551 = vld [vmem:[#allocation4 + $0x58] sm:$0xff]
        %v552 = vld [vmem:[#allocation4 + $0x60] sm:$0xff]
        %v553 = vld [vmem:[#allocation4 + $0x68] sm:$0xff]
        %v554 = vld [vmem:[#allocation4 + $0x70] sm:$0xff]
        %v555 = vld [vmem:[#allocation4 + $0x78] sm:$0xff]
        %v556 = vld [vmem:[#allocation4 + $0x80] sm:$0xff]
        %v557 = vld [vmem:[#allocation4 + $0x88] sm:$0xff]
        %v558 = vld [vmem:[#allocation4 + $0x90] sm:$0xff]
        %v559 = vld [vmem:[#allocation4 + $0x98] sm:$0xff]
        %v560 = vld [vmem:[#allocation4 + $0xa0] sm:$0xff]
        %v561 = vld [vmem:[#allocation4 + $0xa8] sm:$0xff]
        %v562 = vld [vmem:[#allocation4 + $0xb0] sm:$0xff]
        %v563 = vld [vmem:[#allocation4 + $0xb8] sm:$0xff]
        %v564 = vld [vmem:[#allocation4 + $0xc0] sm:$0xff]
        %v565 = vld [vmem:[#allocation4 + $0xc8] sm:$0xff]
        %v566 = vld [vmem:[#allocation4 + $0xd0] sm:$0xff]
        %v567 = vld [vmem:[#allocation4 + $0xd8] sm:$0xff]
        %v568 = vld [vmem:[#allocation4 + $0xe0] sm:$0xff]
        %v569 = vld [vmem:[#allocation4 + $0xe8] sm:$0xff]
        %v570 = vld [vmem:[#allocation4 + $0xf0] sm:$0xff]
        %v571 = vld [vmem:[#allocation4 + $0xf8] sm:$0xff]
        %v572 = vld [vmem:[#allocation4 + $0x100] sm:$0xff]
        %v573 = vld [vmem:[#allocation4 + $0x108] sm:$0xff]
        %v574 = vld [vmem:[#allocation4 + $0x110] sm:$0xff]
        %v575 = vld [vmem:[#allocation4 + $0x118] sm:$0xff]
        %v576 = vld [vmem:[#allocation4 + $0x120] sm:$0xff]
        %v577 = vld [vmem:[#allocation4 + $0x128] sm:$0xff]
        %v578 = vld [vmem:[#allocation4 + $0x130] sm:$0xff]
        %v579 = vld [vmem:[#allocation4 + $0x138] sm:$0xff]
        %v580 = vld [vmem:[#allocation4 + $0x140] sm:$0xff]
        %v581 = vld [vmem:[#allocation4 + $0x148] sm:$0xff]
        %v582 = vld [vmem:[#allocation4 + $0x150] sm:$0xff]
        %v583 = vld [vmem:[#allocation4 + $0x158] sm:$0xff]
        %v584 = vld [vmem:[#allocation4 + $0x160] sm:$0xff]
        %v585 = vld [vmem:[#allocation4 + $0x168] sm:$0xff]
        %v586 = vld [vmem:[#allocation4 + $0x170] sm:$0xff]
        %v587 = vld [vmem:[#allocation4 + $0x178] sm:$0xff]
        %588 = vmatprep.subr.mxu0 %v541
        %589 = vmatpush1.msra.mxu0 %v540
        %590 = vmatprep.subr.mxu0 %v544
        %591 = vmatpush1.msra.mxu0 %v543
        %592 = vmatprep.subr.mxu0 %v547
        %593 = vmatpush1.msra.mxu0 %v546
        %594 = vmatprep.subr.mxu0 %v550
        %595 = vmatpush1.msra.mxu0 %v549
        %596 = vmatprep.subr.mxu0 %v553
        %597 = vmatpush1.msra.mxu0 %v552
        %598 = vmatprep.subr.mxu0 %v556
        %599 = vmatpush1.msra.mxu0 %v555
        %600 = vmatprep.subr.mxu0 %v559
        %601 = vmatpush1.msra.mxu0 %v558
        %602 = vmatprep.subr.mxu0 %v562
        %603 = vmatpush1.msra.mxu0 %v561
        %604 = vmatprep.subr.mxu0 %v565
        %605 = vmatpush1.msra.mxu0 %v564
        %606 = vmatprep.subr.mxu0 %v568
        %607 = vmatpush1.msra.mxu0 %v567
        %608 = vmatprep.subr.mxu0 %v571
        %609 = vmatpush1.msra.mxu0 %v570
        %610 = vmatprep.subr.mxu0 %v574
        %611 = vmatpush1.msra.mxu0 %v573
        %612 = vmatprep.subr.mxu0 %v577
        %613 = vmatpush1.msra.mxu0 %v576
        %614 = vmatprep.subr.mxu0 %v580
        %615 = vmatpush1.msra.mxu0 %v579
        %616 = vmatprep.subr.mxu0 %v583
        %617 = vmatpush1.msra.mxu0 %v582
        %618 = vmatprep.subr.mxu0 %v586
        %619 = vmatpush1.msra.mxu0 %v585
        %620 = vmatprep.subr.mxu0 0.0
        %621 = vmatpush1.msra.mxu0 0.0
        %622 = vmatprep.subr.mxu0 0.0
        %623 = vmatpush1.msra.mxu0 0.0
        %624 = vmatprep.subr.mxu0 0.0
        %625 = vmatpush1.msra.mxu0 0.0
        %626 = vmatprep.subr.mxu0 0.0
        %627 = vmatpush1.msra.mxu0 0.0
        %628 = vmatprep.subr.mxu0 0.0
        %629 = vmatpush1.msra.mxu0 0.0
        %630 = vmatprep.subr.mxu0 0.0
        %631 = vmatpush1.msra.mxu0 0.0
        %632 = vmatprep.subr.mxu0 0.0
        %633 = vmatpush1.msra.mxu0 0.0
        %634 = vmatprep.subr.mxu0 0.0
        %635 = vmatpush1.msra.mxu0 0.0
        %636 = vmatprep.subr.mxu0 0.0
        %637 = vmatpush1.msra.mxu0 0.0
        %638 = vmatprep.subr.mxu0 0.0
        %639 = vmatpush1.msra.mxu0 0.0
        %640 = vmatprep.subr.mxu0 0.0
        %641 = vmatpush1.msra.mxu0 0.0
        %642 = vmatprep.subr.mxu0 0.0
        %643 = vmatpush1.msra.mxu0 0.0
        %644 = vmatprep.subr.mxu0 0.0
        %645 = vmatpush1.msra.mxu0 0.0
        %646 = vmatprep.subr.mxu0 0.0
        %647 = vmatpush1.msra.mxu0 0.0
        %648 = vmatprep.subr.mxu0 0.0
        %649 = vmatpush1.msra.mxu0 0.0
        %650 = vmatprep.subr.mxu0 0.0
        %651 = vmatpush1.msra.mxu0 0.0
        %652 = vmatprep.mubr.f32.mxu0 0.0
        %653 = vmatmul.mubr.f32.gmra.mrb[0].mxu0 %v524
        %v654 = vpop.f32.mrb[0].mxu0
        %v655 = vadd.f32 0.0, %v654
        %v656 = vpop.f32.mrb[0].mxu0
        %v657 = vadd.f32 0.0, %v656
        %658 = vmatprep.mubr.f32.mxu0 0.0
        %659 = vmatmul.mubr.f32.gmra.mrb[0].mxu0 %v525
        %v660 = vpop.f32.mrb[0].mxu0
        %v661 = vadd.f32 0.0, %v660
        %v662 = vpop.f32.mrb[0].mxu0
        %v663 = vadd.f32 0.0, %v662
        %664 = vmatprep.mubr.f32.mxu0 0.0
        %665 = vmatmul.mubr.f32.gmra.mrb[0].mxu0 %v526
        %v666 = vpop.f32.mrb[0].mxu0
        %v667 = vadd.f32 0.0, %v666
        %v668 = vpop.f32.mrb[0].mxu0
        %v669 = vadd.f32 0.0, %v668
        %670 = vmatprep.mubr.f32.mxu0 0.0
        %671 = vmatmul.mubr.f32.gmra.mrb[0].mxu0 %v527
        %v672 = vpop.f32.mrb[0].mxu0
        %v673 = vadd.f32 0.0, %v672
        %v674 = vpop.f32.mrb[0].mxu0
        %v675 = vadd.f32 0.0, %v674
        %676 = vmatprep.mubr.f32.mxu0 0.0
        %677 = vmatmul.mubr.f32.gmra.mrb[0].mxu0 %v528
        %v678 = vpop.f32.mrb[0].mxu0
        %v679 = vadd.f32 0.0, %v678
        %v680 = vpop.f32.mrb[0].mxu0
        %v681 = vadd.f32 0.0, %v680
        %682 = vmatprep.mubr.f32.mxu0 0.0
        %683 = vmatmul.mubr.f32.gmra.mrb[0].mxu0 %v529
        %v684 = vpop.f32.mrb[0].mxu0
        %v685 = vadd.f32 0.0, %v684
        %v686 = vpop.f32.mrb[0].mxu0
        %v687 = vadd.f32 0.0, %v686
        %688 = vmatprep.mubr.f32.mxu0 0.0
        %689 = vmatmul.mubr.f32.gmra.mrb[0].mxu0 %v530
        %v690 = vpop.f32.mrb[0].mxu0
        %v691 = vadd.f32 0.0, %v690
        %v692 = vpop.f32.mrb[0].mxu0
        %v693 = vadd.f32 0.0, %v692
        %694 = vmatprep.mubr.f32.mxu0 0.0
        %695 = vmatmul.mubr.f32.gmra.mrb[0].mxu0 %v531
        %v696 = vpop.f32.mrb[0].mxu0
        %v697 = vadd.f32 0.0, %v696
        %v698 = vpop.f32.mrb[0].mxu0
        %v699 = vadd.f32 0.0, %v698
        %700 = vmatprep.mubr.f32.mxu0 0.0
        %701 = vmatmul.mubr.f32.gmra.mrb[0].mxu0 %v532
        %v702 = vpop.f32.mrb[0].mxu0
        %v703 = vadd.f32 0.0, %v702
        %v704 = vpop.f32.mrb[0].mxu0
        %v705 = vadd.f32 0.0, %v704
        %706 = vmatprep.mubr.f32.mxu0 0.0
        %707 = vmatmul.mubr.f32.gmra.mrb[0].mxu0 %v533
        %v708 = vpop.f32.mrb[0].mxu0
        %v709 = vadd.f32 0.0, %v708
        %v710 = vpop.f32.mrb[0].mxu0
        %v711 = vadd.f32 0.0, %v710
        %712 = vmatprep.mubr.f32.mxu0 0.0
        %713 = vmatmul.mubr.f32.gmra.mrb[0].mxu0 %v534
        %v714 = vpop.f32.mrb[0].mxu0
        %v715 = vadd.f32 0.0, %v714
        %v716 = vpop.f32.mrb[0].mxu0
        %v717 = vadd.f32 0.0, %v716
        %718 = vmatprep.mubr.f32.mxu0 0.0
        %719 = vmatmul.mubr.f32.gmra.mrb[0].mxu0 %v535
        %v720 = vpop.f32.mrb[0].mxu0
        %v721 = vadd.f32 0.0, %v720
        %v722 = vpop.f32.mrb[0].mxu0
        %v723 = vadd.f32 0.0, %v722
        %724 = vmatprep.mubr.f32.mxu0 0.0
        %725 = vmatmul.mubr.f32.gmra.mrb[0].mxu0 %v536
        %v726 = vpop.f32.mrb[0].mxu0
        %v727 = vadd.f32 0.0, %v726
        %v728 = vpop.f32.mrb[0].mxu0
        %v729 = vadd.f32 0.0, %v728
        %730 = vmatprep.mubr.f32.mxu0 0.0
        %731 = vmatmul.mubr.f32.gmra.mrb[0].mxu0 %v537
        %v732 = vpop.f32.mrb[0].mxu0
        %v733 = vadd.f32 0.0, %v732
        %v734 = vpop.f32.mrb[0].mxu0
        %v735 = vadd.f32 0.0, %v734
        %736 = vmatprep.mubr.f32.mxu0 0.0
        %737 = vmatmul.mubr.f32.gmra.mrb[0].mxu0 %v538
        %v738 = vpop.f32.mrb[0].mxu0
        %v739 = vadd.f32 0.0, %v738
        %v740 = vpop.f32.mrb[0].mxu0
        %v741 = vadd.f32 0.0, %v740
        %742 = vmatprep.mubr.f32.mxu0 0.0
        %743 = vmatmul.mubr.f32.gmra.mrb[0].mxu0 %v539
        %v744 = vpop.f32.mrb[0].mxu0
        %v745 = vadd.f32 0.0, %v744
        %v746 = vpop.f32.mrb[0].mxu0
        %v747 = vadd.f32 0.0, %v746
        %748 = vdwg.mxu0
        %749 = vmatprep.subr.mxu0 0.0
        %750 = vmatpush1.msra.mxu0 %v542
        %751 = vmatprep.subr.mxu0 0.0
        %752 = vmatpush1.msra.mxu0 %v545
        %753 = vmatprep.subr.mxu0 0.0
        %754 = vmatpush1.msra.mxu0 %v548
        %755 = vmatprep.subr.mxu0 0.0
        %756 = vmatpush1.msra.mxu0 %v551
        %757 = vmatprep.subr.mxu0 0.0
        %758 = vmatpush1.msra.mxu0 %v554
        %759 = vmatprep.subr.mxu0 0.0
        %760 = vmatpush1.msra.mxu0 %v557
        %761 = vmatprep.subr.mxu0 0.0
        %762 = vmatpush1.msra.mxu0 %v560
        %763 = vmatprep.subr.mxu0 0.0
        %764 = vmatpush1.msra.mxu0 %v563
        %765 = vmatprep.subr.mxu0 0.0
        %766 = vmatpush1.msra.mxu0 %v566
        %767 = vmatprep.subr.mxu0 0.0
        %768 = vmatpush1.msra.mxu0 %v569
        %769 = vmatprep.subr.mxu0 0.0
        %770 = vmatpush1.msra.mxu0 %v572
        %771 = vmatprep.subr.mxu0 0.0
        %772 = vmatpush1.msra.mxu0 %v575
        %773 = vmatprep.subr.mxu0 0.0
        %774 = vmatpush1.msra.mxu0 %v578
        %775 = vmatprep.subr.mxu0 0.0
        %776 = vmatpush1.msra.mxu0 %v581
        %777 = vmatprep.subr.mxu0 0.0
        %778 = vmatpush1.msra.mxu0 %v584
        %779 = vmatprep.subr.mxu0 0.0
        %780 = vmatpush1.msra.mxu0 %v587
        %781 = vmatprep.subr.mxu0 0.0
        %782 = vmatpush1.msra.mxu0 0.0
        %783 = vmatprep.subr.mxu0 0.0
        %784 = vmatpush1.msra.mxu0 0.0
        %785 = vmatprep.subr.mxu0 0.0
        %786 = vmatpush1.msra.mxu0 0.0
        %787 = vmatprep.subr.mxu0 0.0
        %788 = vmatpush1.msra.mxu0 0.0
        %789 = vmatprep.subr.mxu0 0.0
        %790 = vmatpush1.msra.mxu0 0.0
        %791 = vmatprep.subr.mxu0 0.0
        %792 = vmatpush1.msra.mxu0 0.0
        %793 = vmatprep.subr.mxu0 0.0
        %794 = vmatpush1.msra.mxu0 0.0
        %795 = vmatprep.subr.mxu0 0.0
        %796 = vmatpush1.msra.mxu0 0.0
        %797 = vmatprep.subr.mxu0 0.0
        %798 = vmatpush1.msra.mxu0 0.0
        %799 = vmatprep.subr.mxu0 0.0
        %800 = vmatpush1.msra.mxu0 0.0
        %801 = vmatprep.subr.mxu0 0.0
        %802 = vmatpush1.msra.mxu0 0.0
        %803 = vmatprep.subr.mxu0 0.0
        %804 = vmatpush1.msra.mxu0 0.0
        %805 = vmatprep.subr.mxu0 0.0
        %806 = vmatpush1.msra.mxu0 0.0
        %807 = vmatprep.subr.mxu0 0.0
        %808 = vmatpush1.msra.mxu0 0.0
        %809 = vmatprep.subr.mxu0 0.0
        %810 = vmatpush1.msra.mxu0 0.0
        %811 = vmatprep.subr.mxu0 0.0
        %812 = vmatpush1.msra.mxu0 0.0
        %813 = vmatprep.mubr.f32.mxu0 0.0
        %814 = vmatmul.mubr.f32.gmra.mrb[0].mxu0 %v524
        %v815 = vpop.f32.mrb[0].mxu0
        %v816 = vadd.f32 0.0, %v815
        %v817 = vpop.f32.mrb[0].mxu0
        %818 = vmatprep.mubr.f32.mxu0 0.0
        %819 = vmatmul.mubr.f32.gmra.mrb[0].mxu0 %v525
        %v820 = vpop.f32.mrb[0].mxu0
        %v821 = vadd.f32 0.0, %v820
        %v822 = vpop.f32.mrb[0].mxu0
        %823 = vmatprep.mubr.f32.mxu0 0.0
        %824 = vmatmul.mubr.f32.gmra.mrb[0].mxu0 %v526
        %v825 = vpop.f32.mrb[0].mxu0
        %v826 = vadd.f32 0.0, %v825
        %v827 = vpop.f32.mrb[0].mxu0
        %828 = vmatprep.mubr.f32.mxu0 0.0
        %829 = vmatmul.mubr.f32.gmra.mrb[0].mxu0 %v527
        %v830 = vpop.f32.mrb[0].mxu0
        %v831 = vadd.f32 0.0, %v830
        %v832 = vpop.f32.mrb[0].mxu0
        %833 = vmatprep.mubr.f32.mxu0 0.0
        %834 = vmatmul.mubr.f32.gmra.mrb[0].mxu0 %v528
        %v835 = vpop.f32.mrb[0].mxu0
        %v836 = vadd.f32 0.0, %v835
        %v837 = vpop.f32.mrb[0].mxu0
        %838 = vmatprep.mubr.f32.mxu0 0.0
        %839 = vmatmul.mubr.f32.gmra.mrb[0].mxu0 %v529
        %v840 = vpop.f32.mrb[0].mxu0
        %v841 = vadd.f32 0.0, %v840
        %v842 = vpop.f32.mrb[0].mxu0
        %843 = vmatprep.mubr.f32.mxu0 0.0
        %844 = vmatmul.mubr.f32.gmra.mrb[0].mxu0 %v530
        %v845 = vpop.f32.mrb[0].mxu0
        %v846 = vadd.f32 0.0, %v845
        %v847 = vpop.f32.mrb[0].mxu0
        %848 = vmatprep.mubr.f32.mxu0 0.0
        %849 = vmatmul.mubr.f32.gmra.mrb[0].mxu0 %v531
        %v850 = vpop.f32.mrb[0].mxu0
        %v851 = vadd.f32 0.0, %v850
        %v852 = vpop.f32.mrb[0].mxu0
        %853 = vmatprep.mubr.f32.mxu0 0.0
        %854 = vmatmul.mubr.f32.gmra.mrb[0].mxu0 %v532
        %v855 = vpop.f32.mrb[0].mxu0
        %v856 = vadd.f32 0.0, %v855
        %v857 = vpop.f32.mrb[0].mxu0
        %858 = vmatprep.mubr.f32.mxu0 0.0
        %859 = vmatmul.mubr.f32.gmra.mrb[0].mxu0 %v533
        %v860 = vpop.f32.mrb[0].mxu0
        %v861 = vadd.f32 0.0, %v860
        %v862 = vpop.f32.mrb[0].mxu0
        %863 = vmatprep.mubr.f32.mxu0 0.0
        %864 = vmatmul.mubr.f32.gmra.mrb[0].mxu0 %v534
        %v865 = vpop.f32.mrb[0].mxu0
        %v866 = vadd.f32 0.0, %v865
        %v867 = vpop.f32.mrb[0].mxu0
        %868 = vmatprep.mubr.f32.mxu0 0.0
        %869 = vmatmul.mubr.f32.gmra.mrb[0].mxu0 %v535
        %v870 = vpop.f32.mrb[0].mxu0
        %v871 = vadd.f32 0.0, %v870
        %v872 = vpop.f32.mrb[0].mxu0
        %873 = vmatprep.mubr.f32.mxu0 0.0
        %874 = vmatmul.mubr.f32.gmra.mrb[0].mxu0 %v536
        %v875 = vpop.f32.mrb[0].mxu0
        %v876 = vadd.f32 0.0, %v875
        %v877 = vpop.f32.mrb[0].mxu0
        %878 = vmatprep.mubr.f32.mxu0 0.0
        %879 = vmatmul.mubr.f32.gmra.mrb[0].mxu0 %v537
        %v880 = vpop.f32.mrb[0].mxu0
        %v881 = vadd.f32 0.0, %v880
        %v882 = vpop.f32.mrb[0].mxu0
        %883 = vmatprep.mubr.f32.mxu0 0.0
        %884 = vmatmul.mubr.f32.gmra.mrb[0].mxu0 %v538
        %v885 = vpop.f32.mrb[0].mxu0
        %v886 = vadd.f32 0.0, %v885
        %v887 = vpop.f32.mrb[0].mxu0
        %888 = vmatprep.mubr.f32.mxu0 0.0
        %889 = vmatmul.mubr.f32.gmra.mrb[0].mxu0 %v539
        %v890 = vpop.f32.mrb[0].mxu0
        %v891 = vadd.f32 0.0, %v890
        %v892 = vpop.f32.mrb[0].mxu0
        %893 = vdwg.mxu0
        %vm894 = vcmask 261120
        %v896 = vsel %vm894, %v655, 0
        %v899 = vsel %vm894, %v661, 0
        %v902 = vsel %vm894, %v667, 0
        %v905 = vsel %vm894, %v673, 0
        %v908 = vsel %vm894, %v679, 0
        %v911 = vsel %vm894, %v685, 0
        %v914 = vsel %vm894, %v691, 0
        %v917 = vsel %vm894, %v697, 0
        %v920 = vsel %vm894, %v703, 0
        %v923 = vsel %vm894, %v709, 0
        %v926 = vsel %vm894, %v715, 0
        %v929 = vsel %vm894, %v721, 0
        %v932 = vsel %vm894, %v727, 0
        %v935 = vsel %vm894, %v733, 0
        %v938 = vsel %vm894, %v739, 0
        %v941 = vsel %vm894, %v745, 0
        %v944 = vsel %vm894, %v657, 0
        %v947 = vsel %vm894, %v663, 0
        %v950 = vsel %vm894, %v669, 0
        %v953 = vsel %vm894, %v675, 0
        %v956 = vsel %vm894, %v681, 0
        %v959 = vsel %vm894, %v687, 0
        %v962 = vsel %vm894, %v693, 0
        %v965 = vsel %vm894, %v699, 0
        %v968 = vsel %vm894, %v705, 0
        %v971 = vsel %vm894, %v711, 0
        %v974 = vsel %vm894, %v717, 0
        %v977 = vsel %vm894, %v723, 0
        %v980 = vsel %vm894, %v729, 0
        %v983 = vsel %vm894, %v735, 0
        %v986 = vsel %vm894, %v741, 0
        %v989 = vsel %vm894, %v747, 0
        %991 = vmatprep.subr.mxu0 0.0
        %992 = vmatpush1.xpose.msra.mxu0 %v944
        %993 = vmatprep.subr.mxu0 0.0
        %994 = vmatpush1.xpose.msra.mxu0 %v947
        %995 = vmatprep.subr.mxu0 0.0
        %996 = vmatpush1.xpose.msra.mxu0 %v950
        %997 = vmatprep.subr.mxu0 0.0
        %998 = vmatpush1.xpose.msra.mxu0 %v953
        %999 = vmatprep.subr.mxu0 0.0
        %1000 = vmatpush1.xpose.msra.mxu0 %v956
        %1001 = vmatprep.subr.mxu0 0.0
        %1002 = vmatpush1.xpose.msra.mxu0 %v959
        %1003 = vmatprep.subr.mxu0 0.0
        %1004 = vmatpush1.xpose.msra.mxu0 %v962
        %1005 = vmatprep.subr.mxu0 0.0
        %1006 = vmatpush1.xpose.msra.mxu0 %v965
        %1007 = vmatprep.subr.mxu0 0.0
        %1008 = vmatpush1.xpose.msra.mxu0 %v968
        %1009 = vmatprep.subr.mxu0 0.0
        %1010 = vmatpush1.xpose.msra.mxu0 %v971
        %1011 = vmatprep.subr.mxu0 0.0
        %1012 = vmatpush1.xpose.msra.mxu0 %v974
        %1013 = vmatprep.subr.mxu0 0.0
        %1014 = vmatpush1.xpose.msra.mxu0 %v977
        %1015 = vmatprep.subr.mxu0 0.0
        %1016 = vmatpush1.xpose.msra.mxu0 %v980
        %1017 = vmatprep.subr.mxu0 0.0
        %1018 = vmatpush1.xpose.msra.mxu0 %v983
        %1019 = vmatprep.subr.mxu0 0.0
        %1020 = vmatpush1.xpose.msra.mxu0 %v986
        %1021 = vmatprep.subr.mxu0 0.0
        %1022 = vmatpush1.xpose.msra.mxu0 %v989
        %1023 = vmatprep.subr.mxu0 0.0
        %1024 = vmatpush1.xpose.msra.mxu0 0.0
        %1025 = vmatprep.subr.mxu0 0.0
        %1026 = vmatpush1.xpose.msra.mxu0 0.0
        %1027 = vmatprep.subr.mxu0 0.0
        %1028 = vmatpush1.xpose.msra.mxu0 0.0
        %1029 = vmatprep.subr.mxu0 0.0
        %1030 = vmatpush1.xpose.msra.mxu0 0.0
        %1031 = vmatprep.subr.mxu0 0.0
        %1032 = vmatpush1.xpose.msra.mxu0 0.0
        %1033 = vmatprep.subr.mxu0 0.0
        %1034 = vmatpush1.xpose.msra.mxu0 0.0
        %1035 = vmatprep.subr.mxu0 0.0
        %1036 = vmatpush1.xpose.msra.mxu0 0.0
        %1037 = vmatprep.subr.mxu0 0.0
        %1038 = vmatpush1.xpose.msra.mxu0 0.0
        %1039 = vmatprep.subr.mxu0 0.0
        %1040 = vmatpush1.xpose.msra.mxu0 0.0
        %1041 = vmatprep.subr.mxu0 0.0
        %1042 = vmatpush1.xpose.msra.mxu0 0.0
        %1043 = vmatprep.subr.mxu0 0.0
        %1044 = vmatpush1.xpose.msra.mxu0 0.0
        %1045 = vmatprep.subr.mxu0 0.0
        %1046 = vmatpush1.xpose.msra.mxu0 0.0
        %1047 = vmatprep.subr.mxu0 0.0
        %1048 = vmatpush1.xpose.msra.mxu0 0.0
        %1049 = vmatprep.subr.mxu0 0.0
        %1050 = vmatpush1.xpose.msra.mxu0 0.0
        %1051 = vmatprep.subr.mxu0 0.0
        %1052 = vmatpush1.xpose.msra.mxu0 0.0
        %1053 = vmatprep.subr.mxu0 0.0
        %1054 = vmatpush1.xpose.msra.mxu0 0.0
        %1055 = vmatprep.mubr.f32.mxu0 0.0
        %1056 = vmatmul.mubr.f32.gmra.mrb[0].mxu0 %v896
        %v1057 = vpop.f32.mrb[0].mxu0
        %v1058 = vadd.f32 0.0, %v1057
        %v1059 = vpop.f32.mrb[0].mxu0
        %1060 = vmatprep.mubr.f32.mxu0 0.0
        %1061 = vmatmul.mubr.f32.gmra.mrb[0].mxu0 %v899
        %v1062 = vpop.f32.mrb[0].mxu0
        %v1063 = vadd.f32 0.0, %v1062
        %v1064 = vpop.f32.mrb[0].mxu0
        %1065 = vmatprep.mubr.f32.mxu0 0.0
        %1066 = vmatmul.mubr.f32.gmra.mrb[0].mxu0 %v902
        %v1067 = vpop.f32.mrb[0].mxu0
        %v1068 = vadd.f32 0.0, %v1067
        %v1069 = vpop.f32.mrb[0].mxu0
        %1070 = vmatprep.mubr.f32.mxu0 0.0
        %1071 = vmatmul.mubr.f32.gmra.mrb[0].mxu0 %v905
        %v1072 = vpop.f32.mrb[0].mxu0
        %v1073 = vadd.f32 0.0, %v1072
        %v1074 = vpop.f32.mrb[0].mxu0
        %1075 = vmatprep.mubr.f32.mxu0 0.0
        %1076 = vmatmul.mubr.f32.gmra.mrb[0].mxu0 %v908
        %v1077 = vpop.f32.mrb[0].mxu0
        %v1078 = vadd.f32 0.0, %v1077
        %v1079 = vpop.f32.mrb[0].mxu0
        %1080 = vmatprep.mubr.f32.mxu0 0.0
        %1081 = vmatmul.mubr.f32.gmra.mrb[0].mxu0 %v911
        %v1082 = vpop.f32.mrb[0].mxu0
        %v1083 = vadd.f32 0.0, %v1082
        %v1084 = vpop.f32.mrb[0].mxu0
        %1085 = vmatprep.mubr.f32.mxu0 0.0
        %1086 = vmatmul.mubr.f32.gmra.mrb[0].mxu0 %v914
        %v1087 = vpop.f32.mrb[0].mxu0
        %v1088 = vadd.f32 0.0, %v1087
        %v1089 = vpop.f32.mrb[0].mxu0
        %1090 = vmatprep.mubr.f32.mxu0 0.0
        %1091 = vmatmul.mubr.f32.gmra.mrb[0].mxu0 %v917
        %v1092 = vpop.f32.mrb[0].mxu0
        %v1093 = vadd.f32 0.0, %v1092
        %v1094 = vpop.f32.mrb[0].mxu0
        %1095 = vmatprep.mubr.f32.mxu0 0.0
        %1096 = vmatmul.mubr.f32.gmra.mrb[0].mxu0 %v920
        %v1097 = vpop.f32.mrb[0].mxu0
        %v1098 = vadd.f32 0.0, %v1097
        %v1099 = vpop.f32.mrb[0].mxu0
        %1100 = vmatprep.mubr.f32.mxu0 0.0
        %1101 = vmatmul.mubr.f32.gmra.mrb[0].mxu0 %v923
        %v1102 = vpop.f32.mrb[0].mxu0
        %v1103 = vadd.f32 0.0, %v1102
        %v1104 = vpop.f32.mrb[0].mxu0
        %1105 = vmatprep.mubr.f32.mxu0 0.0
        %1106 = vmatmul.mubr.f32.gmra.mrb[0].mxu0 %v926
        %v1107 = vpop.f32.mrb[0].mxu0
        %v1108 = vadd.f32 0.0, %v1107
        %v1109 = vpop.f32.mrb[0].mxu0
        %1110 = vmatprep.mubr.f32.mxu0 0.0
        %1111 = vmatmul.mubr.f32.gmra.mrb[0].mxu0 %v929
        %v1112 = vpop.f32.mrb[0].mxu0
        %v1113 = vadd.f32 0.0, %v1112
        %v1114 = vpop.f32.mrb[0].mxu0
        %1115 = vmatprep.mubr.f32.mxu0 0.0
        %1116 = vmatmul.mubr.f32.gmra.mrb[0].mxu0 %v932
        %v1117 = vpop.f32.mrb[0].mxu0
        %v1118 = vadd.f32 0.0, %v1117
        %v1119 = vpop.f32.mrb[0].mxu0
        %1120 = vmatprep.mubr.f32.mxu0 0.0
        %1121 = vmatmul.mubr.f32.gmra.mrb[0].mxu0 %v935
        %v1122 = vpop.f32.mrb[0].mxu0
        %v1123 = vadd.f32 0.0, %v1122
        %v1124 = vpop.f32.mrb[0].mxu0
        %1125 = vmatprep.mubr.f32.mxu0 0.0
        %1126 = vmatmul.mubr.f32.gmra.mrb[0].mxu0 %v938
        %v1127 = vpop.f32.mrb[0].mxu0
        %v1128 = vadd.f32 0.0, %v1127
        %v1129 = vpop.f32.mrb[0].mxu0
        %1130 = vmatprep.mubr.f32.mxu0 0.0
        %1131 = vmatmul.mubr.f32.gmra.mrb[0].mxu0 %v941
        %v1132 = vpop.f32.mrb[0].mxu0
        %v1133 = vadd.f32 0.0, %v1132
        %v1134 = vpop.f32.mrb[0].mxu0
        %1135 = vdwg.mxu0
        %v1136 = vmul.f32 %v1058, 0.17677669
        %v1137 = vmul.f32 %v1063, 0.17677669
        %v1138 = vmul.f32 %v1068, 0.17677669
        %v1139 = vmul.f32 %v1073, 0.17677669
        %v1140 = vmul.f32 %v1078, 0.17677669
        %v1141 = vmul.f32 %v1083, 0.17677669
        %v1142 = vmul.f32 %v1088, 0.17677669
        %v1143 = vmul.f32 %v1093, 0.17677669
        %v1144 = vmul.f32 %v1098, 0.17677669
        %v1145 = vmul.f32 %v1103, 0.17677669
        %v1146 = vmul.f32 %v1108, 0.17677669
        %v1147 = vmul.f32 %v1113, 0.17677669
        %v1148 = vmul.f32 %v1118, 0.17677669
        %v1149 = vmul.f32 %v1123, 0.17677669
        %v1150 = vmul.f32 %v1128, 0.17677669
        %v1151 = vmul.f32 %v1133, 0.17677669
        %1152 = vmax.xlane.f32.xlu0 %v1136
        %v1153 = vpop.xlane.xlu0 %1152
        %1154 = vmax.xlane.f32.xlu0 %v1137
        %v1155 = vpop.xlane.xlu0 %1154
        %1156 = vmax.xlane.f32.xlu0 %v1138
        %v1157 = vpop.xlane.xlu0 %1156
        %1158 = vmax.xlane.f32.xlu0 %v1139
        %v1159 = vpop.xlane.xlu0 %1158
        %1160 = vmax.xlane.f32.xlu0 %v1140
        %v1161 = vpop.xlane.xlu0 %1160
        %1162 = vmax.xlane.f32.xlu0 %v1141
        %v1163 = vpop.xlane.xlu0 %1162
        %1164 = vmax.xlane.f32.xlu0 %v1142
        %v1165 = vpop.xlane.xlu0 %1164
        %1166 = vmax.xlane.f32.xlu0 %v1143
        %v1167 = vpop.xlane.xlu0 %1166
        %1168 = vmax.xlane.f32.xlu0 %v1144
        %v1169 = vpop.xlane.xlu0 %1168
        %1170 = vmax.xlane.f32.xlu0 %v1145
        %v1171 = vpop.xlane.xlu0 %1170
        %1172 = vmax.xlane.f32.xlu0 %v1146
        %v1173 = vpop.xlane.xlu0 %1172
        %1174 = vmax.xlane.f32.xlu0 %v1147
        %v1175 = vpop.xlane.xlu0 %1174
        %1176 = vmax.xlane.f32.xlu0 %v1148
        %v1177 = vpop.xlane.xlu0 %1176
        %1178 = vmax.xlane.f32.xlu0 %v1149
        %v1179 = vpop.xlane.xlu0 %1178
        %1180 = vmax.xlane.f32.xlu0 %v1150
        %v1181 = vpop.xlane.xlu0 %1180
        %1182 = vmax.xlane.f32.xlu0 %v1151
        %v1183 = vpop.xlane.xlu0 %1182
        %v1184 = vsub.f32 %v1136, %v1153
        %v1185 = vsub.f32 %v1137, %v1155
        %v1186 = vsub.f32 %v1138, %v1157
        %v1187 = vsub.f32 %v1139, %v1159
        %v1188 = vsub.f32 %v1140, %v1161
        %v1189 = vsub.f32 %v1141, %v1163
        %v1190 = vsub.f32 %v1142, %v1165
        %v1191 = vsub.f32 %v1143, %v1167
        %v1192 = vsub.f32 %v1144, %v1169
        %v1193 = vsub.f32 %v1145, %v1171
        %v1194 = vsub.f32 %v1146, %v1173
        %v1195 = vsub.f32 %v1147, %v1175
        %v1196 = vsub.f32 %v1148, %v1177
        %v1197 = vsub.f32 %v1149, %v1179
        %v1198 = vsub.f32 %v1150, %v1181
        %v1199 = vsub.f32 %v1151, %v1183
        %v1200 = vmul.f32 %v1184, 1.442695
        %v1201 = vpow.pop %v1200
        %v1202 = vmul.f32 %v1185, 1.442695
        %v1203 = vpow.pop %v1202
        %v1204 = vmul.f32 %v1186, 1.442695
        %v1205 = vpow.pop %v1204
        %v1206 = vmul.f32 %v1187, 1.442695
        %v1207 = vpow.pop %v1206
        %v1208 = vmul.f32 %v1188, 1.442695
        %v1209 = vpow.pop %v1208
        %v1210 = vmul.f32 %v1189, 1.442695
        %v1211 = vpow.pop %v1210
        %v1212 = vmul.f32 %v1190, 1.442695
        %v1213 = vpow.pop %v1212
        %v1214 = vmul.f32 %v1191, 1.442695
        %v1215 = vpow.pop %v1214
        %v1216 = vmul.f32 %v1192, 1.442695
        %v1217 = vpow.pop %v1216
        %v1218 = vmul.f32 %v1193, 1.442695
        %v1219 = vpow.pop %v1218
        %v1220 = vmul.f32 %v1194, 1.442695
        %v1221 = vpow.pop %v1220
        %v1222 = vmul.f32 %v1195, 1.442695
        %v1223 = vpow.pop %v1222
        %v1224 = vmul.f32 %v1196, 1.442695
        %v1225 = vpow.pop %v1224
        %v1226 = vmul.f32 %v1197, 1.442695
        %v1227 = vpow.pop %v1226
        %v1228 = vmul.f32 %v1198, 1.442695
        %v1229 = vpow.pop %v1228
        %v1230 = vmul.f32 %v1199, 1.442695
        %v1231 = vpow.pop %v1230
        %1232 = vadd.xlane.f32.xlu0 %v1201
        %v1233 = vpop.xlane.xlu0 %1232
        %1234 = vadd.xlane.f32.xlu0 %v1203
        %v1235 = vpop.xlane.xlu0 %1234
        %1236 = vadd.xlane.f32.xlu0 %v1205
        %v1237 = vpop.xlane.xlu0 %1236
        %1238 = vadd.xlane.f32.xlu0 %v1207
        %v1239 = vpop.xlane.xlu0 %1238
        %1240 = vadd.xlane.f32.xlu0 %v1209
        %v1241 = vpop.xlane.xlu0 %1240
        %1242 = vadd.xlane.f32.xlu0 %v1211
        %v1243 = vpop.xlane.xlu0 %1242
        %1244 = vadd.xlane.f32.xlu0 %v1213
        %v1245 = vpop.xlane.xlu0 %1244
        %1246 = vadd.xlane.f32.xlu0 %v1215
        %v1247 = vpop.xlane.xlu0 %1246
        %1248 = vadd.xlane.f32.xlu0 %v1217
        %v1249 = vpop.xlane.xlu0 %1248
        %1250 = vadd.xlane.f32.xlu0 %v1219
        %v1251 = vpop.xlane.xlu0 %1250
        %1252 = vadd.xlane.f32.xlu0 %v1221
        %v1253 = vpop.xlane.xlu0 %1252
        %1254 = vadd.xlane.f32.xlu0 %v1223
        %v1255 = vpop.xlane.xlu0 %1254
        %1256 = vadd.xlane.f32.xlu0 %v1225
        %v1257 = vpop.xlane.xlu0 %1256
        %1258 = vadd.xlane.f32.xlu0 %v1227
        %v1259 = vpop.xlane.xlu0 %1258
        %1260 = vadd.xlane.f32.xlu0 %v1229
        %v1261 = vpop.xlane.xlu0 %1260
        %1262 = vadd.xlane.f32.xlu0 %v1231
        %v1263 = vpop.xlane.xlu0 %1262
        %v1264 = vrcp.pop %v1233
        %v1265 = vrcp.pop %v1235
        %v1266 = vrcp.pop %v1237
        %v1267 = vrcp.pop %v1239
        %v1268 = vrcp.pop %v1241
        %v1269 = vrcp.pop %v1243
        %v1270 = vrcp.pop %v1245
        %v1271 = vrcp.pop %v1247
        %v1272 = vrcp.pop %v1249
        %v1273 = vrcp.pop %v1251
        %v1274 = vrcp.pop %v1253
        %v1275 = vrcp.pop %v1255
        %v1276 = vrcp.pop %v1257
        %v1277 = vrcp.pop %v1259
        %v1278 = vrcp.pop %v1261
        %v1279 = vrcp.pop %v1263
        %v1280 = vmul.f32 %v1233, %v1264
        %v1281 = vmul.f32 %v1235, %v1265
        %v1282 = vmul.f32 %v1237, %v1266
        %v1283 = vmul.f32 %v1239, %v1267
        %v1284 = vmul.f32 %v1241, %v1268
        %v1285 = vmul.f32 %v1243, %v1269
        %v1286 = vmul.f32 %v1245, %v1270
        %v1287 = vmul.f32 %v1247, %v1271
        %v1288 = vmul.f32 %v1249, %v1272
        %v1289 = vmul.f32 %v1251, %v1273
        %v1290 = vmul.f32 %v1253, %v1274
        %v1291 = vmul.f32 %v1255, %v1275
        %v1292 = vmul.f32 %v1257, %v1276
        %v1293 = vmul.f32 %v1259, %v1277
        %v1294 = vmul.f32 %v1261, %v1278
        %v1295 = vmul.f32 %v1263, %v1279
        %v1296 = vsub.f32 2.0, %v1280
        %v1297 = vsub.f32 2.0, %v1281
        %v1298 = vsub.f32 2.0, %v1282
        %v1299 = vsub.f32 2.0, %v1283
        %v1300 = vsub.f32 2.0, %v1284
        %v1301 = vsub.f32 2.0, %v1285
        %v1302 = vsub.f32 2.0, %v1286
        %v1303 = vsub.f32 2.0, %v1287
        %v1304 = vsub.f32 2.0, %v1288
        %v1305 = vsub.f32 2.0, %v1289
        %v1306 = vsub.f32 2.0, %v1290
        %v1307 = vsub.f32 2.0, %v1291
        %v1308 = vsub.f32 2.0, %v1292
        %v1309 = vsub.f32 2.0, %v1293
        %v1310 = vsub.f32 2.0, %v1294
        %v1311 = vsub.f32 2.0, %v1295
        %v1312 = vmul.f32 %v1264, %v1296
        %v1313 = vmul.f32 %v1265, %v1297
        %v1314 = vmul.f32 %v1266, %v1298
        %v1315 = vmul.f32 %v1267, %v1299
        %v1316 = vmul.f32 %v1268, %v1300
        %v1317 = vmul.f32 %v1269, %v1301
        %v1318 = vmul.f32 %v1270, %v1302
        %v1319 = vmul.f32 %v1271, %v1303
        %v1320 = vmul.f32 %v1272, %v1304
        %v1321 = vmul.f32 %v1273, %v1305
        %v1322 = vmul.f32 %v1274, %v1306
        %v1323 = vmul.f32 %v1275, %v1307
        %v1324 = vmul.f32 %v1276, %v1308
        %v1325 = vmul.f32 %v1277, %v1309
        %v1326 = vmul.f32 %v1278, %v1310
        %v1327 = vmul.f32 %v1279, %v1311
        %v1328 = vmul.f32 %v1201, %v1312
        %v1329 = vmul.f32 %v1203, %v1313
        %v1330 = vmul.f32 %v1205, %v1314
        %v1331 = vmul.f32 %v1207, %v1315
        %v1332 = vmul.f32 %v1209, %v1316
        %v1333 = vmul.f32 %v1211, %v1317
        %v1334 = vmul.f32 %v1213, %v1318
        %v1335 = vmul.f32 %v1215, %v1319
        %v1336 = vmul.f32 %v1217, %v1320
        %v1337 = vmul.f32 %v1219, %v1321
        %v1338 = vmul.f32 %v1221, %v1322
        %v1339 = vmul.f32 %v1223, %v1323
        %v1340 = vmul.f32 %v1225, %v1324
        %v1341 = vmul.f32 %v1227, %v1325
        %v1342 = vmul.f32 %v1229, %v1326
        %v1343 = vmul.f32 %v1231, %v1327
        %1344 = vmatprep.subr.mxu0 0.0
        %1345 = vmatpush1.msra.mxu0 %v816
        %1346 = vmatprep.subr.mxu0 0.0
        %1347 = vmatpush1.msra.mxu0 %v821
        %1348 = vmatprep.subr.mxu0 0.0
        %1349 = vmatpush1.msra.mxu0 %v826
        %1350 = vmatprep.subr.mxu0 0.0
        %1351 = vmatpush1.msra.mxu0 %v831
        %1352 = vmatprep.subr.mxu0 0.0
        %1353 = vmatpush1.msra.mxu0 %v836
        %1354 = vmatprep.subr.mxu0 0.0
        %1355 = vmatpush1.msra.mxu0 %v841
        %1356 = vmatprep.subr.mxu0 0.0
        %1357 = vmatpush1.msra.mxu0 %v846
        %1358 = vmatprep.subr.mxu0 0.0
        %1359 = vmatpush1.msra.mxu0 %v851
        %1360 = vmatprep.subr.mxu0 0.0
        %1361 = vmatpush1.msra.mxu0 %v856
        %1362 = vmatprep.subr.mxu0 0.0
        %1363 = vmatpush1.msra.mxu0 %v861
        %1364 = vmatprep.subr.mxu0 0.0
        %1365 = vmatpush1.msra.mxu0 %v866
        %1366 = vmatprep.subr.mxu0 0.0
        %1367 = vmatpush1.msra.mxu0 %v871
        %1368 = vmatprep.subr.mxu0 0.0
        %1369 = vmatpush1.msra.mxu0 %v876
        %1370 = vmatprep.subr.mxu0 0.0
        %1371 = vmatpush1.msra.mxu0 %v881
        %1372 = vmatprep.subr.mxu0 0.0
        %1373 = vmatpush1.msra.mxu0 %v886
        %1374 = vmatprep.subr.mxu0 0.0
        %1375 = vmatpush1.msra.mxu0 %v891
        %1376 = vmatprep.subr.mxu0 0.0
        %1377 = vmatpush1.msra.mxu0 0.0
        %1378 = vmatprep.subr.mxu0 0.0
        %1379 = vmatpush1.msra.mxu0 0.0
        %1380 = vmatprep.subr.mxu0 0.0
        %1381 = vmatpush1.msra.mxu0 0.0
        %1382 = vmatprep.subr.mxu0 0.0
        %1383 = vmatpush1.msra.mxu0 0.0
        %1384 = vmatprep.subr.mxu0 0.0
        %1385 = vmatpush1.msra.mxu0 0.0
        %1386 = vmatprep.subr.mxu0 0.0
        %1387 = vmatpush1.msra.mxu0 0.0
        %1388 = vmatprep.subr.mxu0 0.0
        %1389 = vmatpush1.msra.mxu0 0.0
        %1390 = vmatprep.subr.mxu0 0.0
        %1391 = vmatpush1.msra.mxu0 0.0
        %1392 = vmatprep.subr.mxu0 0.0
        %1393 = vmatpush1.msra.mxu0 0.0
        %1394 = vmatprep.subr.mxu0 0.0
        %1395 = vmatpush1.msra.mxu0 0.0
        %1396 = vmatprep.subr.mxu0 0.0
        %1397 = vmatpush1.msra.mxu0 0.0
        %1398 = vmatprep.subr.mxu0 0.0
        %1399 = vmatpush1.msra.mxu0 0.0
        %1400 = vmatprep.subr.mxu0 0.0
        %1401 = vmatpush1.msra.mxu0 0.0
        %1402 = vmatprep.subr.mxu0 0.0
        %1403 = vmatpush1.msra.mxu0 0.0
        %1404 = vmatprep.subr.mxu0 0.0
        %1405 = vmatpush1.msra.mxu0 0.0
        %1406 = vmatprep.subr.mxu0 0.0
        %1407 = vmatpush1.msra.mxu0 0.0
        %1408 = vmatprep.mubr.f32.mxu0 0.0
        %1409 = vmatmul.mubr.f32.gmra.mrb[0].mxu0 %v1328
        %v1410 = vpop.f32.mrb[0].mxu0
        %v1411 = vadd.f32 0.0, %v1410
        %v1412 = vpop.f32.mrb[0].mxu0
        %1413 = vmatprep.mubr.f32.mxu0 0.0
        %1414 = vmatmul.mubr.f32.gmra.mrb[0].mxu0 %v1329
        %v1415 = vpop.f32.mrb[0].mxu0
        %v1416 = vadd.f32 0.0, %v1415
        %v1417 = vpop.f32.mrb[0].mxu0
        %1418 = vmatprep.mubr.f32.mxu0 0.0
        %1419 = vmatmul.mubr.f32.gmra.mrb[0].mxu0 %v1330
        %v1420 = vpop.f32.mrb[0].mxu0
        %v1421 = vadd.f32 0.0, %v1420
        %v1422 = vpop.f32.mrb[0].mxu0
        %1423 = vmatprep.mubr.f32.mxu0 0.0
        %1424 = vmatmul.mubr.f32.gmra.mrb[0].mxu0 %v1331
        %v1425 = vpop.f32.mrb[0].mxu0
        %v1426 = vadd.f32 0.0, %v1425
        %v1427 = vpop.f32.mrb[0].mxu0
        %1428 = vmatprep.mubr.f32.mxu0 0.0
        %1429 = vmatmul.mubr.f32.gmra.mrb[0].mxu0 %v1332
        %v1430 = vpop.f32.mrb[0].mxu0
        %v1431 = vadd.f32 0.0, %v1430
        %v1432 = vpop.f32.mrb[0].mxu0
        %1433 = vmatprep.mubr.f32.mxu0 0.0
        %1434 = vmatmul.mubr.f32.gmra.mrb[0].mxu0 %v1333
        %v1435 = vpop.f32.mrb[0].mxu0
        %v1436 = vadd.f32 0.0, %v1435
        %v1437 = vpop.f32.mrb[0].mxu0
        %1438 = vmatprep.mubr.f32.mxu0 0.0
        %1439 = vmatmul.mubr.f32.gmra.mrb[0].mxu0 %v1334
        %v1440 = vpop.f32.mrb[0].mxu0
        %v1441 = vadd.f32 0.0, %v1440
        %v1442 = vpop.f32.mrb[0].mxu0
        %1443 = vmatprep.mubr.f32.mxu0 0.0
        %1444 = vmatmul.mubr.f32.gmra.mrb[0].mxu0 %v1335
        %v1445 = vpop.f32.mrb[0].mxu0
        %v1446 = vadd.f32 0.0, %v1445
        %v1447 = vpop.f32.mrb[0].mxu0
        %1448 = vmatprep.mubr.f32.mxu0 0.0
        %1449 = vmatmul.mubr.f32.gmra.mrb[0].mxu0 %v1336
        %v1450 = vpop.f32.mrb[0].mxu0
        %v1451 = vadd.f32 0.0, %v1450
        %v1452 = vpop.f32.mrb[0].mxu0
        %1453 = vmatprep.mubr.f32.mxu0 0.0
        %1454 = vmatmul.mubr.f32.gmra.mrb[0].mxu0 %v1337
        %v1455 = vpop.f32.mrb[0].mxu0
        %v1456 = vadd.f32 0.0, %v1455
        %v1457 = vpop.f32.mrb[0].mxu0
        %1458 = vmatprep.mubr.f32.mxu0 0.0
        %1459 = vmatmul.mubr.f32.gmra.mrb[0].mxu0 %v1338
        %v1460 = vpop.f32.mrb[0].mxu0
        %v1461 = vadd.f32 0.0, %v1460
        %v1462 = vpop.f32.mrb[0].mxu0
        %1463 = vmatprep.mubr.f32.mxu0 0.0
        %1464 = vmatmul.mubr.f32.gmra.mrb[0].mxu0 %v1339
        %v1465 = vpop.f32.mrb[0].mxu0
        %v1466 = vadd.f32 0.0, %v1465
        %v1467 = vpop.f32.mrb[0].mxu0
        %1468 = vmatprep.mubr.f32.mxu0 0.0
        %1469 = vmatmul.mubr.f32.gmra.mrb[0].mxu0 %v1340
        %v1470 = vpop.f32.mrb[0].mxu0
        %v1471 = vadd.f32 0.0, %v1470
        %v1472 = vpop.f32.mrb[0].mxu0
        %1473 = vmatprep.mubr.f32.mxu0 0.0
        %1474 = vmatmul.mubr.f32.gmra.mrb[0].mxu0 %v1341
        %v1475 = vpop.f32.mrb[0].mxu0
        %v1476 = vadd.f32 0.0, %v1475
        %v1477 = vpop.f32.mrb[0].mxu0
        %1478 = vmatprep.mubr.f32.mxu0 0.0
        %1479 = vmatmul.mubr.f32.gmra.mrb[0].mxu0 %v1342
        %v1480 = vpop.f32.mrb[0].mxu0
        %v1481 = vadd.f32 0.0, %v1480
        %v1482 = vpop.f32.mrb[0].mxu0
        %1483 = vmatprep.mubr.f32.mxu0 0.0
        %1484 = vmatmul.mubr.f32.gmra.mrb[0].mxu0 %v1343
        %v1485 = vpop.f32.mrb[0].mxu0
        %v1486 = vadd.f32 0.0, %v1485
        %v1487 = vpop.f32.mrb[0].mxu0
        %1488 = vdwg.mxu0
        %1489 = vrot.lane.b32.xlu0 %v655, 96
        %v1490 = vpop.permute.xlu0 %1489
        %1491 = vrot.lane.b32.xlu0 %v661, 96
        %v1492 = vpop.permute.xlu0 %1491
        %1493 = vrot.lane.b32.xlu0 %v667, 96
        %v1494 = vpop.permute.xlu0 %1493
        %1495 = vrot.lane.b32.xlu0 %v673, 96
        %v1496 = vpop.permute.xlu0 %1495
        %1497 = vrot.lane.b32.xlu0 %v679, 96
        %v1498 = vpop.permute.xlu0 %1497
        %1499 = vrot.lane.b32.xlu0 %v685, 96
        %v1500 = vpop.permute.xlu0 %1499
        %1501 = vrot.lane.b32.xlu0 %v691, 96
        %v1502 = vpop.permute.xlu0 %1501
        %1503 = vrot.lane.b32.xlu0 %v697, 96
        %v1504 = vpop.permute.xlu0 %1503
        %1505 = vrot.lane.b32.xlu0 %v703, 96
        %v1506 = vpop.permute.xlu0 %1505
        %1507 = vrot.lane.b32.xlu0 %v709, 96
        %v1508 = vpop.permute.xlu0 %1507
        %1509 = vrot.lane.b32.xlu0 %v715, 96
        %v1510 = vpop.permute.xlu0 %1509
        %1511 = vrot.lane.b32.xlu0 %v721, 96
        %v1512 = vpop.permute.xlu0 %1511
        %1513 = vrot.lane.b32.xlu0 %v727, 96
        %v1514 = vpop.permute.xlu0 %1513
        %1515 = vrot.lane.b32.xlu0 %v733, 96
        %v1516 = vpop.permute.xlu0 %1515
        %1517 = vrot.lane.b32.xlu0 %v739, 96
        %v1518 = vpop.permute.xlu0 %1517
        %1519 = vrot.lane.b32.xlu0 %v745, 96
        %v1520 = vpop.permute.xlu0 %1519
        %1521 = vrot.lane.b32.xlu0 %v657, 96
        %v1522 = vpop.permute.xlu0 %1521
        %1523 = vrot.lane.b32.xlu0 %v663, 96
        %v1524 = vpop.permute.xlu0 %1523
        %1525 = vrot.lane.b32.xlu0 %v669, 96
        %v1526 = vpop.permute.xlu0 %1525
        %1527 = vrot.lane.b32.xlu0 %v675, 96
        %v1528 = vpop.permute.xlu0 %1527
        %1529 = vrot.lane.b32.xlu0 %v681, 96
        %v1530 = vpop.permute.xlu0 %1529
        %1531 = vrot.lane.b32.xlu0 %v687, 96
        %v1532 = vpop.permute.xlu0 %1531
        %1533 = vrot.lane.b32.xlu0 %v693, 96
        %v1534 = vpop.permute.xlu0 %1533
        %1535 = vrot.lane.b32.xlu0 %v699, 96
        %v1536 = vpop.permute.xlu0 %1535
        %1537 = vrot.lane.b32.xlu0 %v705, 96
        %v1538 = vpop.permute.xlu0 %1537
        %1539 = vrot.lane.b32.xlu0 %v711, 96
        %v1540 = vpop.permute.xlu0 %1539
        %1541 = vrot.lane.b32.xlu0 %v717, 96
        %v1542 = vpop.permute.xlu0 %1541
        %1543 = vrot.lane.b32.xlu0 %v723, 96
        %v1544 = vpop.permute.xlu0 %1543
        %1545 = vrot.lane.b32.xlu0 %v729, 96
        %v1546 = vpop.permute.xlu0 %1545
        %1547 = vrot.lane.b32.xlu0 %v735, 96
        %v1548 = vpop.permute.xlu0 %1547
        %1549 = vrot.lane.b32.xlu0 %v741, 96
        %v1550 = vpop.permute.xlu0 %1549
        %1551 = vrot.lane.b32.xlu0 %v747, 96
        %v1552 = vpop.permute.xlu0 %1551
        %v1553 = vsel %vm894, %v1490, 0
        %v1555 = vsel %vm894, %v1492, 0
        %v1557 = vsel %vm894, %v1494, 0
        %v1559 = vsel %vm894, %v1496, 0
        %v1561 = vsel %vm894, %v1498, 0
        %v1563 = vsel %vm894, %v1500, 0
        %v1565 = vsel %vm894, %v1502, 0
        %v1567 = vsel %vm894, %v1504, 0
        %v1569 = vsel %vm894, %v1506, 0
        %v1571 = vsel %vm894, %v1508, 0
        %v1573 = vsel %vm894, %v1510, 0
        %v1575 = vsel %vm894, %v1512, 0
        %v1577 = vsel %vm894, %v1514, 0
        %v1579 = vsel %vm894, %v1516, 0
        %v1581 = vsel %vm894, %v1518, 0
        %v1583 = vsel %vm894, %v1520, 0
        %v1585 = vsel %vm894, %v1522, 0
        %v1587 = vsel %vm894, %v1524, 0
        %v1589 = vsel %vm894, %v1526, 0
        %v1591 = vsel %vm894, %v1528, 0
        %v1593 = vsel %vm894, %v1530, 0
        %v1595 = vsel %vm894, %v1532, 0
        %v1597 = vsel %vm894, %v1534, 0
        %v1599 = vsel %vm894, %v1536, 0
        %v1601 = vsel %vm894, %v1538, 0
        %v1603 = vsel %vm894, %v1540, 0
        %v1605 = vsel %vm894, %v1542, 0
        %v1607 = vsel %vm894, %v1544, 0
        %v1609 = vsel %vm894, %v1546, 0
        %v1611 = vsel %vm894, %v1548, 0
        %v1613 = vsel %vm894, %v1550, 0
        %v1615 = vsel %vm894, %v1552, 0
        %1617 = vmatprep.subr.mxu0 0.0
        %1618 = vmatpush1.xpose.msra.mxu0 %v1585
        %1619 = vmatprep.subr.mxu0 0.0
        %1620 = vmatpush1.xpose.msra.mxu0 %v1587
        %1621 = vmatprep.subr.mxu0 0.0
        %1622 = vmatpush1.xpose.msra.mxu0 %v1589
        %1623 = vmatprep.subr.mxu0 0.0
        %1624 = vmatpush1.xpose.msra.mxu0 %v1591
        %1625 = vmatprep.subr.mxu0 0.0
        %1626 = vmatpush1.xpose.msra.mxu0 %v1593
        %1627 = vmatprep.subr.mxu0 0.0
        %1628 = vmatpush1.xpose.msra.mxu0 %v1595
        %1629 = vmatprep.subr.mxu0 0.0
        %1630 = vmatpush1.xpose.msra.mxu0 %v1597
        %1631 = vmatprep.subr.mxu0 0.0
        %1632 = vmatpush1.xpose.msra.mxu0 %v1599
        %1633 = vmatprep.subr.mxu0 0.0
        %1634 = vmatpush1.xpose.msra.mxu0 %v1601
        %1635 = vmatprep.subr.mxu0 0.0
        %1636 = vmatpush1.xpose.msra.mxu0 %v1603
        %1637 = vmatprep.subr.mxu0 0.0
        %1638 = vmatpush1.xpose.msra.mxu0 %v1605
        %1639 = vmatprep.subr.mxu0 0.0
        %1640 = vmatpush1.xpose.msra.mxu0 %v1607
        %1641 = vmatprep.subr.mxu0 0.0
        %1642 = vmatpush1.xpose.msra.mxu0 %v1609
        %1643 = vmatprep.subr.mxu0 0.0
        %1644 = vmatpush1.xpose.msra.mxu0 %v1611
        %1645 = vmatprep.subr.mxu0 0.0
        %1646 = vmatpush1.xpose.msra.mxu0 %v1613
        %1647 = vmatprep.subr.mxu0 0.0
        %1648 = vmatpush1.xpose.msra.mxu0 %v1615
        %1649 = vmatprep.subr.mxu0 0.0
        %1650 = vmatpush1.xpose.msra.mxu0 0.0
        %1651 = vmatprep.subr.mxu0 0.0
        %1652 = vmatpush1.xpose.msra.mxu0 0.0
        %1653 = vmatprep.subr.mxu0 0.0
        %1654 = vmatpush1.xpose.msra.mxu0 0.0
        %1655 = vmatprep.subr.mxu0 0.0
        %1656 = vmatpush1.xpose.msra.mxu0 0.0
        %1657 = vmatprep.subr.mxu0 0.0
        %1658 = vmatpush1.xpose.msra.mxu0 0.0
        %1659 = vmatprep.subr.mxu0 0.0
        %1660 = vmatpush1.xpose.msra.mxu0 0.0
        %1661 = vmatprep.subr.mxu0 0.0
        %1662 = vmatpush1.xpose.msra.mxu0 0.0
        %1663 = vmatprep.subr.mxu0 0.0
        %1664 = vmatpush1.xpose.msra.mxu0 0.0
        %1665 = vmatprep.subr.mxu0 0.0
        %1666 = vmatpush1.xpose.msra.mxu0 0.0
        %1667 = vmatprep.subr.mxu0 0.0
        %1668 = vmatpush1.xpose.msra.mxu0 0.0
        %1669 = vmatprep.subr.mxu0 0.0
        %1670 = vmatpush1.xpose.msra.mxu0 0.0
        %1671 = vmatprep.subr.mxu0 0.0
        %1672 = vmatpush1.xpose.msra.mxu0 0.0
        %1673 = vmatprep.subr.mxu0 0.0
        %1674 = vmatpush1.xpose.msra.mxu0 0.0
        %1675 = vmatprep.subr.mxu0 0.0
        %1676 = vmatpush1.xpose.msra.mxu0 0.0
        %1677 = vmatprep.subr.mxu0 0.0
        %1678 = vmatpush1.xpose.msra.mxu0 0.0
        %1679 = vmatprep.subr.mxu0 0.0
        %1680 = vmatpush1.xpose.msra.mxu0 0.0
        %1681 = vmatprep.mubr.f32.mxu0 0.0
        %1682 = vmatmul.mubr.f32.gmra.mrb[0].mxu0 %v1553
        %v1683 = vpop.f32.mrb[0].mxu0
        %v1684 = vadd.f32 0.0, %v1683
        %v1685 = vpop.f32.mrb[0].mxu0
        %1686 = vmatprep.mubr.f32.mxu0 0.0
        %1687 = vmatmul.mubr.f32.gmra.mrb[0].mxu0 %v1555
        %v1688 = vpop.f32.mrb[0].mxu0
        %v1689 = vadd.f32 0.0, %v1688
        %v1690 = vpop.f32.mrb[0].mxu0
        %1691 = vmatprep.mubr.f32.mxu0 0.0
        %1692 = vmatmul.mubr.f32.gmra.mrb[0].mxu0 %v1557
        %v1693 = vpop.f32.mrb[0].mxu0
        %v1694 = vadd.f32 0.0, %v1693
        %v1695 = vpop.f32.mrb[0].mxu0
        %1696 = vmatprep.mubr.f32.mxu0 0.0
        %1697 = vmatmul.mubr.f32.gmra.mrb[0].mxu0 %v1559
        %v1698 = vpop.f32.mrb[0].mxu0
        %v1699 = vadd.f32 0.0, %v1698
        %v1700 = vpop.f32.mrb[0].mxu0
        %1701 = vmatprep.mubr.f32.mxu0 0.0
        %1702 = vmatmul.mubr.f32.gmra.mrb[0].mxu0 %v1561
        %v1703 = vpop.f32.mrb[0].mxu0
        %v1704 = vadd.f32 0.0, %v1703
        %v1705 = vpop.f32.mrb[0].mxu0
        %1706 = vmatprep.mubr.f32.mxu0 0.0
        %1707 = vmatmul.mubr.f32.gmra.mrb[0].mxu0 %v1563
        %v1708 = vpop.f32.mrb[0].mxu0
        %v1709 = vadd.f32 0.0, %v1708
        %v1710 = vpop.f32.mrb[0].mxu0
        %1711 = vmatprep.mubr.f32.mxu0 0.0
        %1712 = vmatmul.mubr.f32.gmra.mrb[0].mxu0 %v1565
        %v1713 = vpop.f32.mrb[0].mxu0
        %v1714 = vadd.f32 0.0, %v1713
        %v1715 = vpop.f32.mrb[0].mxu0
        %1716 = vmatprep.mubr.f32.mxu0 0.0
        %1717 = vmatmul.mubr.f32.gmra.mrb[0].mxu0 %v1567
        %v1718 = vpop.f32.mrb[0].mxu0
        %v1719 = vadd.f32 0.0, %v1718
        %v1720 = vpop.f32.mrb[0].mxu0
        %1721 = vmatprep.mubr.f32.mxu0 0.0
        %1722 = vmatmul.mubr.f32.gmra.mrb[0].mxu0 %v1569
        %v1723 = vpop.f32.mrb[0].mxu0
        %v1724 = vadd.f32 0.0, %v1723
        %v1725 = vpop.f32.mrb[0].mxu0
        %1726 = vmatprep.mubr.f32.mxu0 0.0
        %1727 = vmatmul.mubr.f32.gmra.mrb[0].mxu0 %v1571
        %v1728 = vpop.f32.mrb[0].mxu0
        %v1729 = vadd.f32 0.0, %v1728
        %v1730 = vpop.f32.mrb[0].mxu0
        %1731 = vmatprep.mubr.f32.mxu0 0.0
        %1732 = vmatmul.mubr.f32.gmra.mrb[0].mxu0 %v1573
        %v1733 = vpop.f32.mrb[0].mxu0
        %v1734 = vadd.f32 0.0, %v1733
        %v1735 = vpop.f32.mrb[0].mxu0
        %1736 = vmatprep.mubr.f32.mxu0 0.0
        %1737 = vmatmul.mubr.f32.gmra.mrb[0].mxu0 %v1575
        %v1738 = vpop.f32.mrb[0].mxu0
        %v1739 = vadd.f32 0.0, %v1738
        %v1740 = vpop.f32.mrb[0].mxu0
        %1741 = vmatprep.mubr.f32.mxu0 0.0
        %1742 = vmatmul.mubr.f32.gmra.mrb[0].mxu0 %v1577
        %v1743 = vpop.f32.mrb[0].mxu0
        %v1744 = vadd.f32 0.0, %v1743
        %v1745 = vpop.f32.mrb[0].mxu0
        %1746 = vmatprep.mubr.f32.mxu0 0.0
        %1747 = vmatmul.mubr.f32.gmra.mrb[0].mxu0 %v1579
        %v1748 = vpop.f32.mrb[0].mxu0
        %v1749 = vadd.f32 0.0, %v1748
        %v1750 = vpop.f32.mrb[0].mxu0
        %1751 = vmatprep.mubr.f32.mxu0 0.0
        %1752 = vmatmul.mubr.f32.gmra.mrb[0].mxu0 %v1581
        %v1753 = vpop.f32.mrb[0].mxu0
        %v1754 = vadd.f32 0.0, %v1753
        %v1755 = vpop.f32.mrb[0].mxu0
        %1756 = vmatprep.mubr.f32.mxu0 0.0
        %1757 = vmatmul.mubr.f32.gmra.mrb[0].mxu0 %v1583
        %v1758 = vpop.f32.mrb[0].mxu0
        %v1759 = vadd.f32 0.0, %v1758
        %v1760 = vpop.f32.mrb[0].mxu0
        %1761 = vdwg.mxu0
        %v1762 = vmul.f32 %v1684, 0.17677669
        %v1763 = vmul.f32 %v1689, 0.17677669
        %v1764 = vmul.f32 %v1694, 0.17677669
        %v1765 = vmul.f32 %v1699, 0.17677669
        %v1766 = vmul.f32 %v1704, 0.17677669
        %v1767 = vmul.f32 %v1709, 0.17677669
        %v1768 = vmul.f32 %v1714, 0.17677669
        %v1769 = vmul.f32 %v1719, 0.17677669
        %v1770 = vmul.f32 %v1724, 0.17677669
        %v1771 = vmul.f32 %v1729, 0.17677669
        %v1772 = vmul.f32 %v1734, 0.17677669
        %v1773 = vmul.f32 %v1739, 0.17677669
        %v1774 = vmul.f32 %v1744, 0.17677669
        %v1775 = vmul.f32 %v1749, 0.17677669
        %v1776 = vmul.f32 %v1754, 0.17677669
        %v1777 = vmul.f32 %v1759, 0.17677669
        %1778 = vmax.xlane.f32.xlu0 %v1762
        %v1779 = vpop.xlane.xlu0 %1778
        %1780 = vmax.xlane.f32.xlu0 %v1763
        %v1781 = vpop.xlane.xlu0 %1780
        %1782 = vmax.xlane.f32.xlu0 %v1764
        %v1783 = vpop.xlane.xlu0 %1782
        %1784 = vmax.xlane.f32.xlu0 %v1765
        %v1785 = vpop.xlane.xlu0 %1784
        %1786 = vmax.xlane.f32.xlu0 %v1766
        %v1787 = vpop.xlane.xlu0 %1786
        %1788 = vmax.xlane.f32.xlu0 %v1767
        %v1789 = vpop.xlane.xlu0 %1788
        %1790 = vmax.xlane.f32.xlu0 %v1768
        %v1791 = vpop.xlane.xlu0 %1790
        %1792 = vmax.xlane.f32.xlu0 %v1769
        %v1793 = vpop.xlane.xlu0 %1792
        %1794 = vmax.xlane.f32.xlu0 %v1770
        %v1795 = vpop.xlane.xlu0 %1794
        %1796 = vmax.xlane.f32.xlu0 %v1771
        %v1797 = vpop.xlane.xlu0 %1796
        %1798 = vmax.xlane.f32.xlu0 %v1772
        %v1799 = vpop.xlane.xlu0 %1798
        %1800 = vmax.xlane.f32.xlu0 %v1773
        %v1801 = vpop.xlane.xlu0 %1800
        %1802 = vmax.xlane.f32.xlu0 %v1774
        %v1803 = vpop.xlane.xlu0 %1802
        %1804 = vmax.xlane.f32.xlu0 %v1775
        %v1805 = vpop.xlane.xlu0 %1804
        %1806 = vmax.xlane.f32.xlu0 %v1776
        %v1807 = vpop.xlane.xlu0 %1806
        %1808 = vmax.xlane.f32.xlu0 %v1777
        %v1809 = vpop.xlane.xlu0 %1808
        %v1810 = vsub.f32 %v1762, %v1779
        %v1811 = vsub.f32 %v1763, %v1781
        %v1812 = vsub.f32 %v1764, %v1783
        %v1813 = vsub.f32 %v1765, %v1785
        %v1814 = vsub.f32 %v1766, %v1787
        %v1815 = vsub.f32 %v1767, %v1789
        %v1816 = vsub.f32 %v1768, %v1791
        %v1817 = vsub.f32 %v1769, %v1793
        %v1818 = vsub.f32 %v1770, %v1795
        %v1819 = vsub.f32 %v1771, %v1797
        %v1820 = vsub.f32 %v1772, %v1799
        %v1821 = vsub.f32 %v1773, %v1801
        %v1822 = vsub.f32 %v1774, %v1803
        %v1823 = vsub.f32 %v1775, %v1805
        %v1824 = vsub.f32 %v1776, %v1807
        %v1825 = vsub.f32 %v1777, %v1809
        %v1826 = vmul.f32 %v1810, 1.442695
        %v1827 = vpow.pop %v1826
        %v1828 = vmul.f32 %v1811, 1.442695
        %v1829 = vpow.pop %v1828
        %v1830 = vmul.f32 %v1812, 1.442695
        %v1831 = vpow.pop %v1830
        %v1832 = vmul.f32 %v1813, 1.442695
        %v1833 = vpow.pop %v1832
        %v1834 = vmul.f32 %v1814, 1.442695
        %v1835 = vpow.pop %v1834
        %v1836 = vmul.f32 %v1815, 1.442695
        %v1837 = vpow.pop %v1836
        %v1838 = vmul.f32 %v1816, 1.442695
        %v1839 = vpow.pop %v1838
        %v1840 = vmul.f32 %v1817, 1.442695
        %v1841 = vpow.pop %v1840
        %v1842 = vmul.f32 %v1818, 1.442695
        %v1843 = vpow.pop %v1842
        %v1844 = vmul.f32 %v1819, 1.442695
        %v1845 = vpow.pop %v1844
        %v1846 = vmul.f32 %v1820, 1.442695
        %v1847 = vpow.pop %v1846
        %v1848 = vmul.f32 %v1821, 1.442695
        %v1849 = vpow.pop %v1848
        %v1850 = vmul.f32 %v1822, 1.442695
        %v1851 = vpow.pop %v1850
        %v1852 = vmul.f32 %v1823, 1.442695
        %v1853 = vpow.pop %v1852
        %v1854 = vmul.f32 %v1824, 1.442695
        %v1855 = vpow.pop %v1854
        %v1856 = vmul.f32 %v1825, 1.442695
        %v1857 = vpow.pop %v1856
        %1858 = vadd.xlane.f32.xlu0 %v1827
        %v1859 = vpop.xlane.xlu0 %1858
        %1860 = vadd.xlane.f32.xlu0 %v1829
        %v1861 = vpop.xlane.xlu0 %1860
        %1862 = vadd.xlane.f32.xlu0 %v1831
        %v1863 = vpop.xlane.xlu0 %1862
        %1864 = vadd.xlane.f32.xlu0 %v1833
        %v1865 = vpop.xlane.xlu0 %1864
        %1866 = vadd.xlane.f32.xlu0 %v1835
        %v1867 = vpop.xlane.xlu0 %1866
        %1868 = vadd.xlane.f32.xlu0 %v1837
        %v1869 = vpop.xlane.xlu0 %1868
        %1870 = vadd.xlane.f32.xlu0 %v1839
        %v1871 = vpop.xlane.xlu0 %1870
        %1872 = vadd.xlane.f32.xlu0 %v1841
        %v1873 = vpop.xlane.xlu0 %1872
        %1874 = vadd.xlane.f32.xlu0 %v1843
        %v1875 = vpop.xlane.xlu0 %1874
        %1876 = vadd.xlane.f32.xlu0 %v1845
        %v1877 = vpop.xlane.xlu0 %1876
        %1878 = vadd.xlane.f32.xlu0 %v1847
        %v1879 = vpop.xlane.xlu0 %1878
        %1880 = vadd.xlane.f32.xlu0 %v1849
        %v1881 = vpop.xlane.xlu0 %1880
        %1882 = vadd.xlane.f32.xlu0 %v1851
        %v1883 = vpop.xlane.xlu0 %1882
        %1884 = vadd.xlane.f32.xlu0 %v1853
        %v1885 = vpop.xlane.xlu0 %1884
        %1886 = vadd.xlane.f32.xlu0 %v1855
        %v1887 = vpop.xlane.xlu0 %1886
        %1888 = vadd.xlane.f32.xlu0 %v1857
        %v1889 = vpop.xlane.xlu0 %1888
        %v1890 = vrcp.pop %v1859
        %v1891 = vrcp.pop %v1861
        %v1892 = vrcp.pop %v1863
        %v1893 = vrcp.pop %v1865
        %v1894 = vrcp.pop %v1867
        %v1895 = vrcp.pop %v1869
        %v1896 = vrcp.pop %v1871
        %v1897 = vrcp.pop %v1873
        %v1898 = vrcp.pop %v1875
        %v1899 = vrcp.pop %v1877
        %v1900 = vrcp.pop %v1879
        %v1901 = vrcp.pop %v1881
        %v1902 = vrcp.pop %v1883
        %v1903 = vrcp.pop %v1885
        %v1904 = vrcp.pop %v1887
        %v1905 = vrcp.pop %v1889
        %v1906 = vmul.f32 %v1859, %v1890
        %v1907 = vmul.f32 %v1861, %v1891
        %v1908 = vmul.f32 %v1863, %v1892
        %v1909 = vmul.f32 %v1865, %v1893
        %v1910 = vmul.f32 %v1867, %v1894
        %v1911 = vmul.f32 %v1869, %v1895
        %v1912 = vmul.f32 %v1871, %v1896
        %v1913 = vmul.f32 %v1873, %v1897
        %v1914 = vmul.f32 %v1875, %v1898
        %v1915 = vmul.f32 %v1877, %v1899
        %v1916 = vmul.f32 %v1879, %v1900
        %v1917 = vmul.f32 %v1881, %v1901
        %v1918 = vmul.f32 %v1883, %v1902
        %v1919 = vmul.f32 %v1885, %v1903
        %v1920 = vmul.f32 %v1887, %v1904
        %v1921 = vmul.f32 %v1889, %v1905
        %v1922 = vsub.f32 2.0, %v1906
        %v1923 = vsub.f32 2.0, %v1907
        %v1924 = vsub.f32 2.0, %v1908
        %v1925 = vsub.f32 2.0, %v1909
        %v1926 = vsub.f32 2.0, %v1910
        %v1927 = vsub.f32 2.0, %v1911
        %v1928 = vsub.f32 2.0, %v1912
        %v1929 = vsub.f32 2.0, %v1913
        %v1930 = vsub.f32 2.0, %v1914
        %v1931 = vsub.f32 2.0, %v1915
        %v1932 = vsub.f32 2.0, %v1916
        %v1933 = vsub.f32 2.0, %v1917
        %v1934 = vsub.f32 2.0, %v1918
        %v1935 = vsub.f32 2.0, %v1919
        %v1936 = vsub.f32 2.0, %v1920
        %v1937 = vsub.f32 2.0, %v1921
        %v1938 = vmul.f32 %v1890, %v1922
        %v1939 = vmul.f32 %v1891, %v1923
        %v1940 = vmul.f32 %v1892, %v1924
        %v1941 = vmul.f32 %v1893, %v1925
        %v1942 = vmul.f32 %v1894, %v1926
        %v1943 = vmul.f32 %v1895, %v1927
        %v1944 = vmul.f32 %v1896, %v1928
        %v1945 = vmul.f32 %v1897, %v1929
        %v1946 = vmul.f32 %v1898, %v1930
        %v1947 = vmul.f32 %v1899, %v1931
        %v1948 = vmul.f32 %v1900, %v1932
        %v1949 = vmul.f32 %v1901, %v1933
        %v1950 = vmul.f32 %v1902, %v1934
        %v1951 = vmul.f32 %v1903, %v1935
        %v1952 = vmul.f32 %v1904, %v1936
        %v1953 = vmul.f32 %v1905, %v1937
        %v1954 = vmul.f32 %v1827, %v1938
        %v1955 = vmul.f32 %v1829, %v1939
        %v1956 = vmul.f32 %v1831, %v1940
        %v1957 = vmul.f32 %v1833, %v1941
        %v1958 = vmul.f32 %v1835, %v1942
        %v1959 = vmul.f32 %v1837, %v1943
        %v1960 = vmul.f32 %v1839, %v1944
        %v1961 = vmul.f32 %v1841, %v1945
        %v1962 = vmul.f32 %v1843, %v1946
        %v1963 = vmul.f32 %v1845, %v1947
        %v1964 = vmul.f32 %v1847, %v1948
        %v1965 = vmul.f32 %v1849, %v1949
        %v1966 = vmul.f32 %v1851, %v1950
        %v1967 = vmul.f32 %v1853, %v1951
        %v1968 = vmul.f32 %v1855, %v1952
        %v1969 = vmul.f32 %v1857, %v1953
        %1986 = vrot.lane.b32.xlu0 %v816, 96
        %v1987 = vpop.permute.xlu0 %1986
        %1988 = vrot.lane.b32.xlu0 %v821, 96
        %v1989 = vpop.permute.xlu0 %1988
        %1990 = vrot.lane.b32.xlu0 %v826, 96
        %v1991 = vpop.permute.xlu0 %1990
        %1992 = vrot.lane.b32.xlu0 %v831, 96
        %v1993 = vpop.permute.xlu0 %1992
        %1994 = vrot.lane.b32.xlu0 %v836, 96
        %v1995 = vpop.permute.xlu0 %1994
        %1996 = vrot.lane.b32.xlu0 %v841, 96
        %v1997 = vpop.permute.xlu0 %1996
        %1998 = vrot.lane.b32.xlu0 %v846, 96
        %v1999 = vpop.permute.xlu0 %1998
        %2000 = vrot.lane.b32.xlu0 %v851, 96
        %v2001 = vpop.permute.xlu0 %2000
        %2002 = vrot.lane.b32.xlu0 %v856, 96
        %v2003 = vpop.permute.xlu0 %2002
        %2004 = vrot.lane.b32.xlu0 %v861, 96
        %v2005 = vpop.permute.xlu0 %2004
        %2006 = vrot.lane.b32.xlu0 %v866, 96
        %v2007 = vpop.permute.xlu0 %2006
        %2008 = vrot.lane.b32.xlu0 %v871, 96
        %v2009 = vpop.permute.xlu0 %2008
        %2010 = vrot.lane.b32.xlu0 %v876, 96
        %v2011 = vpop.permute.xlu0 %2010
        %2012 = vrot.lane.b32.xlu0 %v881, 96
        %v2013 = vpop.permute.xlu0 %2012
        %2014 = vrot.lane.b32.xlu0 %v886, 96
        %v2015 = vpop.permute.xlu0 %2014
        %2016 = vrot.lane.b32.xlu0 %v891, 96
        %v2017 = vpop.permute.xlu0 %2016
        %2034 = vmatprep.subr.mxu0 0.0
        %2035 = vmatpush1.msra.mxu0 %v1987
        %2036 = vmatprep.subr.mxu0 0.0
        %2037 = vmatpush1.msra.mxu0 %v1989
        %2038 = vmatprep.subr.mxu0 0.0
        %2039 = vmatpush1.msra.mxu0 %v1991
        %2040 = vmatprep.subr.mxu0 0.0
        %2041 = vmatpush1.msra.mxu0 %v1993
        %2042 = vmatprep.subr.mxu0 0.0
        %2043 = vmatpush1.msra.mxu0 %v1995
        %2044 = vmatprep.subr.mxu0 0.0
        %2045 = vmatpush1.msra.mxu0 %v1997
        %2046 = vmatprep.subr.mxu0 0.0
        %2047 = vmatpush1.msra.mxu0 %v1999
        %2048 = vmatprep.subr.mxu0 0.0
        %2049 = vmatpush1.msra.mxu0 %v2001
        %2050 = vmatprep.subr.mxu0 0.0
        %2051 = vmatpush1.msra.mxu0 %v2003
        %2052 = vmatprep.subr.mxu0 0.0
        %2053 = vmatpush1.msra.mxu0 %v2005
        %2054 = vmatprep.subr.mxu0 0.0
        %2055 = vmatpush1.msra.mxu0 %v2007
        %2056 = vmatprep.subr.mxu0 0.0
        %2057 = vmatpush1.msra.mxu0 %v2009
        %2058 = vmatprep.subr.mxu0 0.0
        %2059 = vmatpush1.msra.mxu0 %v2011
        %2060 = vmatprep.subr.mxu0 0.0
        %2061 = vmatpush1.msra.mxu0 %v2013
        %2062 = vmatprep.subr.mxu0 0.0
        %2063 = vmatpush1.msra.mxu0 %v2015
        %2064 = vmatprep.subr.mxu0 0.0
        %2065 = vmatpush1.msra.mxu0 %v2017
        %2066 = vmatprep.subr.mxu0 0.0
        %2067 = vmatpush1.msra.mxu0 0.0
        %2068 = vmatprep.subr.mxu0 0.0
        %2069 = vmatpush1.msra.mxu0 0.0
        %2070 = vmatprep.subr.mxu0 0.0
        %2071 = vmatpush1.msra.mxu0 0.0
        %2072 = vmatprep.subr.mxu0 0.0
        %2073 = vmatpush1.msra.mxu0 0.0
        %2074 = vmatprep.subr.mxu0 0.0
        %2075 = vmatpush1.msra.mxu0 0.0
        %2076 = vmatprep.subr.mxu0 0.0
        %2077 = vmatpush1.msra.mxu0 0.0
        %2078 = vmatprep.subr.mxu0 0.0
        %2079 = vmatpush1.msra.mxu0 0.0
        %2080 = vmatprep.subr.mxu0 0.0
        %2081 = vmatpush1.msra.mxu0 0.0
        %2082 = vmatprep.subr.mxu0 0.0
        %2083 = vmatpush1.msra.mxu0 0.0
        %2084 = vmatprep.subr.mxu0 0.0
        %2085 = vmatpush1.msra.mxu0 0.0
        %2086 = vmatprep.subr.mxu0 0.0
        %2087 = vmatpush1.msra.mxu0 0.0
        %2088 = vmatprep.subr.mxu0 0.0
        %2089 = vmatpush1.msra.mxu0 0.0
        %2090 = vmatprep.subr.mxu0 0.0
        %2091 = vmatpush1.msra.mxu0 0.0
        %2092 = vmatprep.subr.mxu0 0.0
        %2093 = vmatpush1.msra.mxu0 0.0
        %2094 = vmatprep.subr.mxu0 0.0
        %2095 = vmatpush1.msra.mxu0 0.0
        %2096 = vmatprep.subr.mxu0 0.0
        %2097 = vmatpush1.msra.mxu0 0.0
        %2098 = vmatprep.mubr.f32.mxu0 0.0
        %2099 = vmatmul.mubr.f32.gmra.mrb[0].mxu0 %v1954
        %v2100 = vpop.f32.mrb[0].mxu0
        %v2101 = vadd.f32 0.0, %v2100
        %v2102 = vpop.f32.mrb[0].mxu0
        %2103 = vmatprep.mubr.f32.mxu0 0.0
        %2104 = vmatmul.mubr.f32.gmra.mrb[0].mxu0 %v1955
        %v2105 = vpop.f32.mrb[0].mxu0
        %v2106 = vadd.f32 0.0, %v2105
        %v2107 = vpop.f32.mrb[0].mxu0
        %2108 = vmatprep.mubr.f32.mxu0 0.0
        %2109 = vmatmul.mubr.f32.gmra.mrb[0].mxu0 %v1956
        %v2110 = vpop.f32.mrb[0].mxu0
        %v2111 = vadd.f32 0.0, %v2110
        %v2112 = vpop.f32.mrb[0].mxu0
        %2113 = vmatprep.mubr.f32.mxu0 0.0
        %2114 = vmatmul.mubr.f32.gmra.mrb[0].mxu0 %v1957
        %v2115 = vpop.f32.mrb[0].mxu0
        %v2116 = vadd.f32 0.0, %v2115
        %v2117 = vpop.f32.mrb[0].mxu0
        %2118 = vmatprep.mubr.f32.mxu0 0.0
        %2119 = vmatmul.mubr.f32.gmra.mrb[0].mxu0 %v1958
        %v2120 = vpop.f32.mrb[0].mxu0
        %v2121 = vadd.f32 0.0, %v2120
        %v2122 = vpop.f32.mrb[0].mxu0
        %2123 = vmatprep.mubr.f32.mxu0 0.0
        %2124 = vmatmul.mubr.f32.gmra.mrb[0].mxu0 %v1959
        %v2125 = vpop.f32.mrb[0].mxu0
        %v2126 = vadd.f32 0.0, %v2125
        %v2127 = vpop.f32.mrb[0].mxu0
        %2128 = vmatprep.mubr.f32.mxu0 0.0
        %2129 = vmatmul.mubr.f32.gmra.mrb[0].mxu0 %v1960
        %v2130 = vpop.f32.mrb[0].mxu0
        %v2131 = vadd.f32 0.0, %v2130
        %v2132 = vpop.f32.mrb[0].mxu0
        %2133 = vmatprep.mubr.f32.mxu0 0.0
        %2134 = vmatmul.mubr.f32.gmra.mrb[0].mxu0 %v1961
        %v2135 = vpop.f32.mrb[0].mxu0
        %v2136 = vadd.f32 0.0, %v2135
        %v2137 = vpop.f32.mrb[0].mxu0
        %2138 = vmatprep.mubr.f32.mxu0 0.0
        %2139 = vmatmul.mubr.f32.gmra.mrb[0].mxu0 %v1962
        %v2140 = vpop.f32.mrb[0].mxu0
        %v2141 = vadd.f32 0.0, %v2140
        %v2142 = vpop.f32.mrb[0].mxu0
        %2143 = vmatprep.mubr.f32.mxu0 0.0
        %2144 = vmatmul.mubr.f32.gmra.mrb[0].mxu0 %v1963
        %v2145 = vpop.f32.mrb[0].mxu0
        %v2146 = vadd.f32 0.0, %v2145
        %v2147 = vpop.f32.mrb[0].mxu0
        %2148 = vmatprep.mubr.f32.mxu0 0.0
        %2149 = vmatmul.mubr.f32.gmra.mrb[0].mxu0 %v1964
        %v2150 = vpop.f32.mrb[0].mxu0
        %v2151 = vadd.f32 0.0, %v2150
        %v2152 = vpop.f32.mrb[0].mxu0
        %2153 = vmatprep.mubr.f32.mxu0 0.0
        %2154 = vmatmul.mubr.f32.gmra.mrb[0].mxu0 %v1965
        %v2155 = vpop.f32.mrb[0].mxu0
        %v2156 = vadd.f32 0.0, %v2155
        %v2157 = vpop.f32.mrb[0].mxu0
        %2158 = vmatprep.mubr.f32.mxu0 0.0
        %2159 = vmatmul.mubr.f32.gmra.mrb[0].mxu0 %v1966
        %v2160 = vpop.f32.mrb[0].mxu0
        %v2161 = vadd.f32 0.0, %v2160
        %v2162 = vpop.f32.mrb[0].mxu0
        %2163 = vmatprep.mubr.f32.mxu0 0.0
        %2164 = vmatmul.mubr.f32.gmra.mrb[0].mxu0 %v1967
        %v2165 = vpop.f32.mrb[0].mxu0
        %v2166 = vadd.f32 0.0, %v2165
        %v2167 = vpop.f32.mrb[0].mxu0
        %2168 = vmatprep.mubr.f32.mxu0 0.0
        %2169 = vmatmul.mubr.f32.gmra.mrb[0].mxu0 %v1968
        %v2170 = vpop.f32.mrb[0].mxu0
        %v2171 = vadd.f32 0.0, %v2170
        %v2172 = vpop.f32.mrb[0].mxu0
        %2173 = vmatprep.mubr.f32.mxu0 0.0
        %2174 = vmatmul.mubr.f32.gmra.mrb[0].mxu0 %v1969
        %v2175 = vpop.f32.mrb[0].mxu0
        %v2176 = vadd.f32 0.0, %v2175
        %v2177 = vpop.f32.mrb[0].mxu0
        %2178 = vdwg.mxu0
        %2179 = vrot.lane.b32.xlu0 %v655, 64
        %v2180 = vpop.permute.xlu0 %2179
        %2181 = vrot.lane.b32.xlu0 %v661, 64
        %v2182 = vpop.permute.xlu0 %2181
        %2183 = vrot.lane.b32.xlu0 %v667, 64
        %v2184 = vpop.permute.xlu0 %2183
        %2185 = vrot.lane.b32.xlu0 %v673, 64
        %v2186 = vpop.permute.xlu0 %2185
        %2187 = vrot.lane.b32.xlu0 %v679, 64
        %v2188 = vpop.permute.xlu0 %2187
        %2189 = vrot.lane.b32.xlu0 %v685, 64
        %v2190 = vpop.permute.xlu0 %2189
        %2191 = vrot.lane.b32.xlu0 %v691, 64
        %v2192 = vpop.permute.xlu0 %2191
        %2193 = vrot.lane.b32.xlu0 %v697, 64
        %v2194 = vpop.permute.xlu0 %2193
        %2195 = vrot.lane.b32.xlu0 %v703, 64
        %v2196 = vpop.permute.xlu0 %2195
        %2197 = vrot.lane.b32.xlu0 %v709, 64
        %v2198 = vpop.permute.xlu0 %2197
        %2199 = vrot.lane.b32.xlu0 %v715, 64
        %v2200 = vpop.permute.xlu0 %2199
        %2201 = vrot.lane.b32.xlu0 %v721, 64
        %v2202 = vpop.permute.xlu0 %2201
        %2203 = vrot.lane.b32.xlu0 %v727, 64
        %v2204 = vpop.permute.xlu0 %2203
        %2205 = vrot.lane.b32.xlu0 %v733, 64
        %v2206 = vpop.permute.xlu0 %2205
        %2207 = vrot.lane.b32.xlu0 %v739, 64
        %v2208 = vpop.permute.xlu0 %2207
        %2209 = vrot.lane.b32.xlu0 %v745, 64
        %v2210 = vpop.permute.xlu0 %2209
        %2211 = vrot.lane.b32.xlu0 %v657, 64
        %v2212 = vpop.permute.xlu0 %2211
        %2213 = vrot.lane.b32.xlu0 %v663, 64
        %v2214 = vpop.permute.xlu0 %2213
        %2215 = vrot.lane.b32.xlu0 %v669, 64
        %v2216 = vpop.permute.xlu0 %2215
        %2217 = vrot.lane.b32.xlu0 %v675, 64
        %v2218 = vpop.permute.xlu0 %2217
        %2219 = vrot.lane.b32.xlu0 %v681, 64
        %v2220 = vpop.permute.xlu0 %2219
        %2221 = vrot.lane.b32.xlu0 %v687, 64
        %v2222 = vpop.permute.xlu0 %2221
        %2223 = vrot.lane.b32.xlu0 %v693, 64
        %v2224 = vpop.permute.xlu0 %2223
        %2225 = vrot.lane.b32.xlu0 %v699, 64
        %v2226 = vpop.permute.xlu0 %2225
        %2227 = vrot.lane.b32.xlu0 %v705, 64
        %v2228 = vpop.permute.xlu0 %2227
        %2229 = vrot.lane.b32.xlu0 %v711, 64
        %v2230 = vpop.permute.xlu0 %2229
        %2231 = vrot.lane.b32.xlu0 %v717, 64
        %v2232 = vpop.permute.xlu0 %2231
        %2233 = vrot.lane.b32.xlu0 %v723, 64
        %v2234 = vpop.permute.xlu0 %2233
        %2235 = vrot.lane.b32.xlu0 %v729, 64
        %v2236 = vpop.permute.xlu0 %2235
        %2237 = vrot.lane.b32.xlu0 %v735, 64
        %v2238 = vpop.permute.xlu0 %2237
        %2239 = vrot.lane.b32.xlu0 %v741, 64
        %v2240 = vpop.permute.xlu0 %2239
        %2241 = vrot.lane.b32.xlu0 %v747, 64
        %v2242 = vpop.permute.xlu0 %2241
        %v2243 = vsel %vm894, %v2180, 0
        %v2245 = vsel %vm894, %v2182, 0
        %v2247 = vsel %vm894, %v2184, 0
        %v2249 = vsel %vm894, %v2186, 0
        %v2251 = vsel %vm894, %v2188, 0
        %v2253 = vsel %vm894, %v2190, 0
        %v2255 = vsel %vm894, %v2192, 0
        %v2257 = vsel %vm894, %v2194, 0
        %v2259 = vsel %vm894, %v2196, 0
        %v2261 = vsel %vm894, %v2198, 0
        %v2263 = vsel %vm894, %v2200, 0
        %v2265 = vsel %vm894, %v2202, 0
        %v2267 = vsel %vm894, %v2204, 0
        %v2269 = vsel %vm894, %v2206, 0
        %v2271 = vsel %vm894, %v2208, 0
        %v2273 = vsel %vm894, %v2210, 0
        %v2275 = vsel %vm894, %v2212, 0
        %v2277 = vsel %vm894, %v2214, 0
        %v2279 = vsel %vm894, %v2216, 0
        %v2281 = vsel %vm894, %v2218, 0
        %v2283 = vsel %vm894, %v2220, 0
        %v2285 = vsel %vm894, %v2222, 0
        %v2287 = vsel %vm894, %v2224, 0
        %v2289 = vsel %vm894, %v2226, 0
        %v2291 = vsel %vm894, %v2228, 0
        %v2293 = vsel %vm894, %v2230, 0
        %v2295 = vsel %vm894, %v2232, 0
        %v2297 = vsel %vm894, %v2234, 0
        %v2299 = vsel %vm894, %v2236, 0
        %v2301 = vsel %vm894, %v2238, 0
        %v2303 = vsel %vm894, %v2240, 0
        %v2305 = vsel %vm894, %v2242, 0
        %2307 = vmatprep.subr.mxu0 0.0
        %2308 = vmatpush1.xpose.msra.mxu0 %v2275
        %2309 = vmatprep.subr.mxu0 0.0
        %2310 = vmatpush1.xpose.msra.mxu0 %v2277
        %2311 = vmatprep.subr.mxu0 0.0
        %2312 = vmatpush1.xpose.msra.mxu0 %v2279
        %2313 = vmatprep.subr.mxu0 0.0
        %2314 = vmatpush1.xpose.msra.mxu0 %v2281
        %2315 = vmatprep.subr.mxu0 0.0
        %2316 = vmatpush1.xpose.msra.mxu0 %v2283
        %2317 = vmatprep.subr.mxu0 0.0
        %2318 = vmatpush1.xpose.msra.mxu0 %v2285
        %2319 = vmatprep.subr.mxu0 0.0
        %2320 = vmatpush1.xpose.msra.mxu0 %v2287
        %2321 = vmatprep.subr.mxu0 0.0
        %2322 = vmatpush1.xpose.msra.mxu0 %v2289
        %2323 = vmatprep.subr.mxu0 0.0
        %2324 = vmatpush1.xpose.msra.mxu0 %v2291
        %2325 = vmatprep.subr.mxu0 0.0
        %2326 = vmatpush1.xpose.msra.mxu0 %v2293
        %2327 = vmatprep.subr.mxu0 0.0
        %2328 = vmatpush1.xpose.msra.mxu0 %v2295
        %2329 = vmatprep.subr.mxu0 0.0
        %2330 = vmatpush1.xpose.msra.mxu0 %v2297
        %2331 = vmatprep.subr.mxu0 0.0
        %2332 = vmatpush1.xpose.msra.mxu0 %v2299
        %2333 = vmatprep.subr.mxu0 0.0
        %2334 = vmatpush1.xpose.msra.mxu0 %v2301
        %2335 = vmatprep.subr.mxu0 0.0
        %2336 = vmatpush1.xpose.msra.mxu0 %v2303
        %2337 = vmatprep.subr.mxu0 0.0
        %2338 = vmatpush1.xpose.msra.mxu0 %v2305
        %2339 = vmatprep.subr.mxu0 0.0
        %2340 = vmatpush1.xpose.msra.mxu0 0.0
        %2341 = vmatprep.subr.mxu0 0.0
        %2342 = vmatpush1.xpose.msra.mxu0 0.0
        %2343 = vmatprep.subr.mxu0 0.0
        %2344 = vmatpush1.xpose.msra.mxu0 0.0
        %2345 = vmatprep.subr.mxu0 0.0
        %2346 = vmatpush1.xpose.msra.mxu0 0.0
        %2347 = vmatprep.subr.mxu0 0.0
        %2348 = vmatpush1.xpose.msra.mxu0 0.0
        %2349 = vmatprep.subr.mxu0 0.0
        %2350 = vmatpush1.xpose.msra.mxu0 0.0
        %2351 = vmatprep.subr.mxu0 0.0
        %2352 = vmatpush1.xpose.msra.mxu0 0.0
        %2353 = vmatprep.subr.mxu0 0.0
        %2354 = vmatpush1.xpose.msra.mxu0 0.0
        %2355 = vmatprep.subr.mxu0 0.0
        %2356 = vmatpush1.xpose.msra.mxu0 0.0
        %2357 = vmatprep.subr.mxu0 0.0
        %2358 = vmatpush1.xpose.msra.mxu0 0.0
        %2359 = vmatprep.subr.mxu0 0.0
        %2360 = vmatpush1.xpose.msra.mxu0 0.0
        %2361 = vmatprep.subr.mxu0 0.0
        %2362 = vmatpush1.xpose.msra.mxu0 0.0
        %2363 = vmatprep.subr.mxu0 0.0
        %2364 = vmatpush1.xpose.msra.mxu0 0.0
        %2365 = vmatprep.subr.mxu0 0.0
        %2366 = vmatpush1.xpose.msra.mxu0 0.0
        %2367 = vmatprep.subr.mxu0 0.0
        %2368 = vmatpush1.xpose.msra.mxu0 0.0
        %2369 = vmatprep.subr.mxu0 0.0
        %2370 = vmatpush1.xpose.msra.mxu0 0.0
        %2371 = vmatprep.mubr.f32.mxu0 0.0
        %2372 = vmatmul.mubr.f32.gmra.mrb[0].mxu0 %v2243
        %v2373 = vpop.f32.mrb[0].mxu0
        %v2374 = vadd.f32 0.0, %v2373
        %v2375 = vpop.f32.mrb[0].mxu0
        %2376 = vmatprep.mubr.f32.mxu0 0.0
        %2377 = vmatmul.mubr.f32.gmra.mrb[0].mxu0 %v2245
        %v2378 = vpop.f32.mrb[0].mxu0
        %v2379 = vadd.f32 0.0, %v2378
        %v2380 = vpop.f32.mrb[0].mxu0
        %2381 = vmatprep.mubr.f32.mxu0 0.0
        %2382 = vmatmul.mubr.f32.gmra.mrb[0].mxu0 %v2247
        %v2383 = vpop.f32.mrb[0].mxu0
        %v2384 = vadd.f32 0.0, %v2383
        %v2385 = vpop.f32.mrb[0].mxu0
        %2386 = vmatprep.mubr.f32.mxu0 0.0
        %2387 = vmatmul.mubr.f32.gmra.mrb[0].mxu0 %v2249
        %v2388 = vpop.f32.mrb[0].mxu0
        %v2389 = vadd.f32 0.0, %v2388
        %v2390 = vpop.f32.mrb[0].mxu0
        %2391 = vmatprep.mubr.f32.mxu0 0.0
        %2392 = vmatmul.mubr.f32.gmra.mrb[0].mxu0 %v2251
        %v2393 = vpop.f32.mrb[0].mxu0
        %v2394 = vadd.f32 0.0, %v2393
        %v2395 = vpop.f32.mrb[0].mxu0
        %2396 = vmatprep.mubr.f32.mxu0 0.0
        %2397 = vmatmul.mubr.f32.gmra.mrb[0].mxu0 %v2253
        %v2398 = vpop.f32.mrb[0].mxu0
        %v2399 = vadd.f32 0.0, %v2398
        %v2400 = vpop.f32.mrb[0].mxu0
        %2401 = vmatprep.mubr.f32.mxu0 0.0
        %2402 = vmatmul.mubr.f32.gmra.mrb[0].mxu0 %v2255
        %v2403 = vpop.f32.mrb[0].mxu0
        %v2404 = vadd.f32 0.0, %v2403
        %v2405 = vpop.f32.mrb[0].mxu0
        %2406 = vmatprep.mubr.f32.mxu0 0.0
        %2407 = vmatmul.mubr.f32.gmra.mrb[0].mxu0 %v2257
        %v2408 = vpop.f32.mrb[0].mxu0
        %v2409 = vadd.f32 0.0, %v2408
        %v2410 = vpop.f32.mrb[0].mxu0
        %2411 = vmatprep.mubr.f32.mxu0 0.0
        %2412 = vmatmul.mubr.f32.gmra.mrb[0].mxu0 %v2259
        %v2413 = vpop.f32.mrb[0].mxu0
        %v2414 = vadd.f32 0.0, %v2413
        %v2415 = vpop.f32.mrb[0].mxu0
        %2416 = vmatprep.mubr.f32.mxu0 0.0
        %2417 = vmatmul.mubr.f32.gmra.mrb[0].mxu0 %v2261
        %v2418 = vpop.f32.mrb[0].mxu0
        %v2419 = vadd.f32 0.0, %v2418
        %v2420 = vpop.f32.mrb[0].mxu0
        %2421 = vmatprep.mubr.f32.mxu0 0.0
        %2422 = vmatmul.mubr.f32.gmra.mrb[0].mxu0 %v2263
        %v2423 = vpop.f32.mrb[0].mxu0
        %v2424 = vadd.f32 0.0, %v2423
        %v2425 = vpop.f32.mrb[0].mxu0
        %2426 = vmatprep.mubr.f32.mxu0 0.0
        %2427 = vmatmul.mubr.f32.gmra.mrb[0].mxu0 %v2265
        %v2428 = vpop.f32.mrb[0].mxu0
        %v2429 = vadd.f32 0.0, %v2428
        %v2430 = vpop.f32.mrb[0].mxu0
        %2431 = vmatprep.mubr.f32.mxu0 0.0
        %2432 = vmatmul.mubr.f32.gmra.mrb[0].mxu0 %v2267
        %v2433 = vpop.f32.mrb[0].mxu0
        %v2434 = vadd.f32 0.0, %v2433
        %v2435 = vpop.f32.mrb[0].mxu0
        %2436 = vmatprep.mubr.f32.mxu0 0.0
        %2437 = vmatmul.mubr.f32.gmra.mrb[0].mxu0 %v2269
        %v2438 = vpop.f32.mrb[0].mxu0
        %v2439 = vadd.f32 0.0, %v2438
        %v2440 = vpop.f32.mrb[0].mxu0
        %2441 = vmatprep.mubr.f32.mxu0 0.0
        %2442 = vmatmul.mubr.f32.gmra.mrb[0].mxu0 %v2271
        %v2443 = vpop.f32.mrb[0].mxu0
        %v2444 = vadd.f32 0.0, %v2443
        %v2445 = vpop.f32.mrb[0].mxu0
        %2446 = vmatprep.mubr.f32.mxu0 0.0
        %2447 = vmatmul.mubr.f32.gmra.mrb[0].mxu0 %v2273
        %v2448 = vpop.f32.mrb[0].mxu0
        %v2449 = vadd.f32 0.0, %v2448
        %v2450 = vpop.f32.mrb[0].mxu0
        %2451 = vdwg.mxu0
        %v2452 = vmul.f32 %v2374, 0.17677669
        %v2453 = vmul.f32 %v2379, 0.17677669
        %v2454 = vmul.f32 %v2384, 0.17677669
        %v2455 = vmul.f32 %v2389, 0.17677669
        %v2456 = vmul.f32 %v2394, 0.17677669
        %v2457 = vmul.f32 %v2399, 0.17677669
        %v2458 = vmul.f32 %v2404, 0.17677669
        %v2459 = vmul.f32 %v2409, 0.17677669
        %v2460 = vmul.f32 %v2414, 0.17677669
        %v2461 = vmul.f32 %v2419, 0.17677669
        %v2462 = vmul.f32 %v2424, 0.17677669
        %v2463 = vmul.f32 %v2429, 0.17677669
        %v2464 = vmul.f32 %v2434, 0.17677669
        %v2465 = vmul.f32 %v2439, 0.17677669
        %v2466 = vmul.f32 %v2444, 0.17677669
        %v2467 = vmul.f32 %v2449, 0.17677669
        %2468 = vmax.xlane.f32.xlu0 %v2452
        %v2469 = vpop.xlane.xlu0 %2468
        %2470 = vmax.xlane.f32.xlu0 %v2453
        %v2471 = vpop.xlane.xlu0 %2470
        %2472 = vmax.xlane.f32.xlu0 %v2454
        %v2473 = vpop.xlane.xlu0 %2472
        %2474 = vmax.xlane.f32.xlu0 %v2455
        %v2475 = vpop.xlane.xlu0 %2474
        %2476 = vmax.xlane.f32.xlu0 %v2456
        %v2477 = vpop.xlane.xlu0 %2476
        %2478 = vmax.xlane.f32.xlu0 %v2457
        %v2479 = vpop.xlane.xlu0 %2478
        %2480 = vmax.xlane.f32.xlu0 %v2458
        %v2481 = vpop.xlane.xlu0 %2480
        %2482 = vmax.xlane.f32.xlu0 %v2459
        %v2483 = vpop.xlane.xlu0 %2482
        %2484 = vmax.xlane.f32.xlu0 %v2460
        %v2485 = vpop.xlane.xlu0 %2484
        %2486 = vmax.xlane.f32.xlu0 %v2461
        %v2487 = vpop.xlane.xlu0 %2486
        %2488 = vmax.xlane.f32.xlu0 %v2462
        %v2489 = vpop.xlane.xlu0 %2488
        %2490 = vmax.xlane.f32.xlu0 %v2463
        %v2491 = vpop.xlane.xlu0 %2490
        %2492 = vmax.xlane.f32.xlu0 %v2464
        %v2493 = vpop.xlane.xlu0 %2492
        %2494 = vmax.xlane.f32.xlu0 %v2465
        %v2495 = vpop.xlane.xlu0 %2494
        %2496 = vmax.xlane.f32.xlu0 %v2466
        %v2497 = vpop.xlane.xlu0 %2496
        %2498 = vmax.xlane.f32.xlu0 %v2467
        %v2499 = vpop.xlane.xlu0 %2498
        %v2500 = vsub.f32 %v2452, %v2469
        %v2501 = vsub.f32 %v2453, %v2471
        %v2502 = vsub.f32 %v2454, %v2473
        %v2503 = vsub.f32 %v2455, %v2475
        %v2504 = vsub.f32 %v2456, %v2477
        %v2505 = vsub.f32 %v2457, %v2479
        %v2506 = vsub.f32 %v2458, %v2481
        %v2507 = vsub.f32 %v2459, %v2483
        %v2508 = vsub.f32 %v2460, %v2485
        %v2509 = vsub.f32 %v2461, %v2487
        %v2510 = vsub.f32 %v2462, %v2489
        %v2511 = vsub.f32 %v2463, %v2491
        %v2512 = vsub.f32 %v2464, %v2493
        %v2513 = vsub.f32 %v2465, %v2495
        %v2514 = vsub.f32 %v2466, %v2497
        %v2515 = vsub.f32 %v2467, %v2499
        %v2516 = vmul.f32 %v2500, 1.442695
        %v2517 = vpow.pop %v2516
        %v2518 = vmul.f32 %v2501, 1.442695
        %v2519 = vpow.pop %v2518
        %v2520 = vmul.f32 %v2502, 1.442695
        %v2521 = vpow.pop %v2520
        %v2522 = vmul.f32 %v2503, 1.442695
        %v2523 = vpow.pop %v2522
        %v2524 = vmul.f32 %v2504, 1.442695
        %v2525 = vpow.pop %v2524
        %v2526 = vmul.f32 %v2505, 1.442695
        %v2527 = vpow.pop %v2526
        %v2528 = vmul.f32 %v2506, 1.442695
        %v2529 = vpow.pop %v2528
        %v2530 = vmul.f32 %v2507, 1.442695
        %v2531 = vpow.pop %v2530
        %v2532 = vmul.f32 %v2508, 1.442695
        %v2533 = vpow.pop %v2532
        %v2534 = vmul.f32 %v2509, 1.442695
        %v2535 = vpow.pop %v2534
        %v2536 = vmul.f32 %v2510, 1.442695
        %v2537 = vpow.pop %v2536
        %v2538 = vmul.f32 %v2511, 1.442695
        %v2539 = vpow.pop %v2538
        %v2540 = vmul.f32 %v2512, 1.442695
        %v2541 = vpow.pop %v2540
        %v2542 = vmul.f32 %v2513, 1.442695
        %v2543 = vpow.pop %v2542
        %v2544 = vmul.f32 %v2514, 1.442695
        %v2545 = vpow.pop %v2544
        %v2546 = vmul.f32 %v2515, 1.442695
        %v2547 = vpow.pop %v2546
        %2548 = vadd.xlane.f32.xlu0 %v2517
        %v2549 = vpop.xlane.xlu0 %2548
        %2550 = vadd.xlane.f32.xlu0 %v2519
        %v2551 = vpop.xlane.xlu0 %2550
        %2552 = vadd.xlane.f32.xlu0 %v2521
        %v2553 = vpop.xlane.xlu0 %2552
        %2554 = vadd.xlane.f32.xlu0 %v2523
        %v2555 = vpop.xlane.xlu0 %2554
        %2556 = vadd.xlane.f32.xlu0 %v2525
        %v2557 = vpop.xlane.xlu0 %2556
        %2558 = vadd.xlane.f32.xlu0 %v2527
        %v2559 = vpop.xlane.xlu0 %2558
        %2560 = vadd.xlane.f32.xlu0 %v2529
        %v2561 = vpop.xlane.xlu0 %2560
        %2562 = vadd.xlane.f32.xlu0 %v2531
        %v2563 = vpop.xlane.xlu0 %2562
        %2564 = vadd.xlane.f32.xlu0 %v2533
        %v2565 = vpop.xlane.xlu0 %2564
        %2566 = vadd.xlane.f32.xlu0 %v2535
        %v2567 = vpop.xlane.xlu0 %2566
        %2568 = vadd.xlane.f32.xlu0 %v2537
        %v2569 = vpop.xlane.xlu0 %2568
        %2570 = vadd.xlane.f32.xlu0 %v2539
        %v2571 = vpop.xlane.xlu0 %2570
        %2572 = vadd.xlane.f32.xlu0 %v2541
        %v2573 = vpop.xlane.xlu0 %2572
        %2574 = vadd.xlane.f32.xlu0 %v2543
        %v2575 = vpop.xlane.xlu0 %2574
        %2576 = vadd.xlane.f32.xlu0 %v2545
        %v2577 = vpop.xlane.xlu0 %2576
        %2578 = vadd.xlane.f32.xlu0 %v2547
        %v2579 = vpop.xlane.xlu0 %2578
        %v2580 = vrcp.pop %v2549
        %v2581 = vrcp.pop %v2551
        %v2582 = vrcp.pop %v2553
        %v2583 = vrcp.pop %v2555
        %v2584 = vrcp.pop %v2557
        %v2585 = vrcp.pop %v2559
        %v2586 = vrcp.pop %v2561
        %v2587 = vrcp.pop %v2563
        %v2588 = vrcp.pop %v2565
        %v2589 = vrcp.pop %v2567
        %v2590 = vrcp.pop %v2569
        %v2591 = vrcp.pop %v2571
        %v2592 = vrcp.pop %v2573
        %v2593 = vrcp.pop %v2575
        %v2594 = vrcp.pop %v2577
        %v2595 = vrcp.pop %v2579
        %v2596 = vmul.f32 %v2549, %v2580
        %v2597 = vmul.f32 %v2551, %v2581
        %v2598 = vmul.f32 %v2553, %v2582
        %v2599 = vmul.f32 %v2555, %v2583
        %v2600 = vmul.f32 %v2557, %v2584
        %v2601 = vmul.f32 %v2559, %v2585
        %v2602 = vmul.f32 %v2561, %v2586
        %v2603 = vmul.f32 %v2563, %v2587
        %v2604 = vmul.f32 %v2565, %v2588
        %v2605 = vmul.f32 %v2567, %v2589
        %v2606 = vmul.f32 %v2569, %v2590
        %v2607 = vmul.f32 %v2571, %v2591
        %v2608 = vmul.f32 %v2573, %v2592
        %v2609 = vmul.f32 %v2575, %v2593
        %v2610 = vmul.f32 %v2577, %v2594
        %v2611 = vmul.f32 %v2579, %v2595
        %v2612 = vsub.f32 2.0, %v2596
        %v2613 = vsub.f32 2.0, %v2597
        %v2614 = vsub.f32 2.0, %v2598
        %v2615 = vsub.f32 2.0, %v2599
        %v2616 = vsub.f32 2.0, %v2600
        %v2617 = vsub.f32 2.0, %v2601
        %v2618 = vsub.f32 2.0, %v2602
        %v2619 = vsub.f32 2.0, %v2603
        %v2620 = vsub.f32 2.0, %v2604
        %v2621 = vsub.f32 2.0, %v2605
        %v2622 = vsub.f32 2.0, %v2606
        %v2623 = vsub.f32 2.0, %v2607
        %v2624 = vsub.f32 2.0, %v2608
        %v2625 = vsub.f32 2.0, %v2609
        %v2626 = vsub.f32 2.0, %v2610
        %v2627 = vsub.f32 2.0, %v2611
        %v2628 = vmul.f32 %v2580, %v2612
        %v2629 = vmul.f32 %v2581, %v2613
        %v2630 = vmul.f32 %v2582, %v2614
        %v2631 = vmul.f32 %v2583, %v2615
        %v2632 = vmul.f32 %v2584, %v2616
        %v2633 = vmul.f32 %v2585, %v2617
        %v2634 = vmul.f32 %v2586, %v2618
        %v2635 = vmul.f32 %v2587, %v2619
        %v2636 = vmul.f32 %v2588, %v2620
        %v2637 = vmul.f32 %v2589, %v2621
        %v2638 = vmul.f32 %v2590, %v2622
        %v2639 = vmul.f32 %v2591, %v2623
        %v2640 = vmul.f32 %v2592, %v2624
        %v2641 = vmul.f32 %v2593, %v2625
        %v2642 = vmul.f32 %v2594, %v2626
        %v2643 = vmul.f32 %v2595, %v2627
        %v2644 = vmul.f32 %v2517, %v2628
        %v2645 = vmul.f32 %v2519, %v2629
        %v2646 = vmul.f32 %v2521, %v2630
        %v2647 = vmul.f32 %v2523, %v2631
        %v2648 = vmul.f32 %v2525, %v2632
        %v2649 = vmul.f32 %v2527, %v2633
        %v2650 = vmul.f32 %v2529, %v2634
        %v2651 = vmul.f32 %v2531, %v2635
        %v2652 = vmul.f32 %v2533, %v2636
        %v2653 = vmul.f32 %v2535, %v2637
        %v2654 = vmul.f32 %v2537, %v2638
        %v2655 = vmul.f32 %v2539, %v2639
        %v2656 = vmul.f32 %v2541, %v2640
        %v2657 = vmul.f32 %v2543, %v2641
        %v2658 = vmul.f32 %v2545, %v2642
        %v2659 = vmul.f32 %v2547, %v2643
        %2660 = vrot.lane.b32.xlu0 %v816, 64
        %v2661 = vpop.permute.xlu0 %2660
        %2662 = vrot.lane.b32.xlu0 %v821, 64
        %v2663 = vpop.permute.xlu0 %2662
        %2664 = vrot.lane.b32.xlu0 %v826, 64
        %v2665 = vpop.permute.xlu0 %2664
        %2666 = vrot.lane.b32.xlu0 %v831, 64
        %v2667 = vpop.permute.xlu0 %2666
        %2668 = vrot.lane.b32.xlu0 %v836, 64
        %v2669 = vpop.permute.xlu0 %2668
        %2670 = vrot.lane.b32.xlu0 %v841, 64
        %v2671 = vpop.permute.xlu0 %2670
        %2672 = vrot.lane.b32.xlu0 %v846, 64
        %v2673 = vpop.permute.xlu0 %2672
        %2674 = vrot.lane.b32.xlu0 %v851, 64
        %v2675 = vpop.permute.xlu0 %2674
        %2676 = vrot.lane.b32.xlu0 %v856, 64
        %v2677 = vpop.permute.xlu0 %2676
        %2678 = vrot.lane.b32.xlu0 %v861, 64
        %v2679 = vpop.permute.xlu0 %2678
        %2680 = vrot.lane.b32.xlu0 %v866, 64
        %v2681 = vpop.permute.xlu0 %2680
        %2682 = vrot.lane.b32.xlu0 %v871, 64
        %v2683 = vpop.permute.xlu0 %2682
        %2684 = vrot.lane.b32.xlu0 %v876, 64
        %v2685 = vpop.permute.xlu0 %2684
        %2686 = vrot.lane.b32.xlu0 %v881, 64
        %v2687 = vpop.permute.xlu0 %2686
        %2688 = vrot.lane.b32.xlu0 %v886, 64
        %v2689 = vpop.permute.xlu0 %2688
        %2690 = vrot.lane.b32.xlu0 %v891, 64
        %v2691 = vpop.permute.xlu0 %2690
        %2708 = vmatprep.subr.mxu0 0.0
        %2709 = vmatpush1.msra.mxu0 %v2661
        %2710 = vmatprep.subr.mxu0 0.0
        %2711 = vmatpush1.msra.mxu0 %v2663
        %2712 = vmatprep.subr.mxu0 0.0
        %2713 = vmatpush1.msra.mxu0 %v2665
        %2714 = vmatprep.subr.mxu0 0.0
        %2715 = vmatpush1.msra.mxu0 %v2667
        %2716 = vmatprep.subr.mxu0 0.0
        %2717 = vmatpush1.msra.mxu0 %v2669
        %2718 = vmatprep.subr.mxu0 0.0
        %2719 = vmatpush1.msra.mxu0 %v2671
        %2720 = vmatprep.subr.mxu0 0.0
        %2721 = vmatpush1.msra.mxu0 %v2673
        %2722 = vmatprep.subr.mxu0 0.0
        %2723 = vmatpush1.msra.mxu0 %v2675
        %2724 = vmatprep.subr.mxu0 0.0
        %2725 = vmatpush1.msra.mxu0 %v2677
        %2726 = vmatprep.subr.mxu0 0.0
        %2727 = vmatpush1.msra.mxu0 %v2679
        %2728 = vmatprep.subr.mxu0 0.0
        %2729 = vmatpush1.msra.mxu0 %v2681
        %2730 = vmatprep.subr.mxu0 0.0
        %2731 = vmatpush1.msra.mxu0 %v2683
        %2732 = vmatprep.subr.mxu0 0.0
        %2733 = vmatpush1.msra.mxu0 %v2685
        %2734 = vmatprep.subr.mxu0 0.0
        %2735 = vmatpush1.msra.mxu0 %v2687
        %2736 = vmatprep.subr.mxu0 0.0
        %2737 = vmatpush1.msra.mxu0 %v2689
        %2738 = vmatprep.subr.mxu0 0.0
        %2739 = vmatpush1.msra.mxu0 %v2691
        %2740 = vmatprep.subr.mxu0 0.0
        %2741 = vmatpush1.msra.mxu0 0.0
        %2742 = vmatprep.subr.mxu0 0.0
        %2743 = vmatpush1.msra.mxu0 0.0
        %2744 = vmatprep.subr.mxu0 0.0
        %2745 = vmatpush1.msra.mxu0 0.0
        %2746 = vmatprep.subr.mxu0 0.0
        %2747 = vmatpush1.msra.mxu0 0.0
        %2748 = vmatprep.subr.mxu0 0.0
        %2749 = vmatpush1.msra.mxu0 0.0
        %2750 = vmatprep.subr.mxu0 0.0
        %2751 = vmatpush1.msra.mxu0 0.0
        %2752 = vmatprep.subr.mxu0 0.0
        %2753 = vmatpush1.msra.mxu0 0.0
        %2754 = vmatprep.subr.mxu0 0.0
        %2755 = vmatpush1.msra.mxu0 0.0
        %2756 = vmatprep.subr.mxu0 0.0
        %2757 = vmatpush1.msra.mxu0 0.0
        %2758 = vmatprep.subr.mxu0 0.0
        %2759 = vmatpush1.msra.mxu0 0.0
        %2760 = vmatprep.subr.mxu0 0.0
        %2761 = vmatpush1.msra.mxu0 0.0
        %2762 = vmatprep.subr.mxu0 0.0
        %2763 = vmatpush1.msra.mxu0 0.0
        %2764 = vmatprep.subr.mxu0 0.0
        %2765 = vmatpush1.msra.mxu0 0.0
        %2766 = vmatprep.subr.mxu0 0.0
        %2767 = vmatpush1.msra.mxu0 0.0
        %2768 = vmatprep.subr.mxu0 0.0
        %2769 = vmatpush1.msra.mxu0 0.0
        %2770 = vmatprep.subr.mxu0 0.0
        %2771 = vmatpush1.msra.mxu0 0.0
        %2772 = vmatprep.mubr.f32.mxu0 0.0
        %2773 = vmatmul.mubr.f32.gmra.mrb[0].mxu0 %v2644
        %v2774 = vpop.f32.mrb[0].mxu0
        %v2775 = vadd.f32 0.0, %v2774
        %v2776 = vpop.f32.mrb[0].mxu0
        %2777 = vmatprep.mubr.f32.mxu0 0.0
        %2778 = vmatmul.mubr.f32.gmra.mrb[0].mxu0 %v2645
        %v2779 = vpop.f32.mrb[0].mxu0
        %v2780 = vadd.f32 0.0, %v2779
        %v2781 = vpop.f32.mrb[0].mxu0
        %2782 = vmatprep.mubr.f32.mxu0 0.0
        %2783 = vmatmul.mubr.f32.gmra.mrb[0].mxu0 %v2646
        %v2784 = vpop.f32.mrb[0].mxu0
        %v2785 = vadd.f32 0.0, %v2784
        %v2786 = vpop.f32.mrb[0].mxu0
        %2787 = vmatprep.mubr.f32.mxu0 0.0
        %2788 = vmatmul.mubr.f32.gmra.mrb[0].mxu0 %v2647
        %v2789 = vpop.f32.mrb[0].mxu0
        %v2790 = vadd.f32 0.0, %v2789
        %v2791 = vpop.f32.mrb[0].mxu0
        %2792 = vmatprep.mubr.f32.mxu0 0.0
        %2793 = vmatmul.mubr.f32.gmra.mrb[0].mxu0 %v2648
        %v2794 = vpop.f32.mrb[0].mxu0
        %v2795 = vadd.f32 0.0, %v2794
        %v2796 = vpop.f32.mrb[0].mxu0
        %2797 = vmatprep.mubr.f32.mxu0 0.0
        %2798 = vmatmul.mubr.f32.gmra.mrb[0].mxu0 %v2649
        %v2799 = vpop.f32.mrb[0].mxu0
        %v2800 = vadd.f32 0.0, %v2799
        %v2801 = vpop.f32.mrb[0].mxu0
        %2802 = vmatprep.mubr.f32.mxu0 0.0
        %2803 = vmatmul.mubr.f32.gmra.mrb[0].mxu0 %v2650
        %v2804 = vpop.f32.mrb[0].mxu0
        %v2805 = vadd.f32 0.0, %v2804
        %v2806 = vpop.f32.mrb[0].mxu0
        %2807 = vmatprep.mubr.f32.mxu0 0.0
        %2808 = vmatmul.mubr.f32.gmra.mrb[0].mxu0 %v2651
        %v2809 = vpop.f32.mrb[0].mxu0
        %v2810 = vadd.f32 0.0, %v2809
        %v2811 = vpop.f32.mrb[0].mxu0
        %2812 = vmatprep.mubr.f32.mxu0 0.0
        %2813 = vmatmul.mubr.f32.gmra.mrb[0].mxu0 %v2652
        %v2814 = vpop.f32.mrb[0].mxu0
        %v2815 = vadd.f32 0.0, %v2814
        %v2816 = vpop.f32.mrb[0].mxu0
        %2817 = vmatprep.mubr.f32.mxu0 0.0
        %2818 = vmatmul.mubr.f32.gmra.mrb[0].mxu0 %v2653
        %v2819 = vpop.f32.mrb[0].mxu0
        %v2820 = vadd.f32 0.0, %v2819
        %v2821 = vpop.f32.mrb[0].mxu0
        %2822 = vmatprep.mubr.f32.mxu0 0.0
        %2823 = vmatmul.mubr.f32.gmra.mrb[0].mxu0 %v2654
        %v2824 = vpop.f32.mrb[0].mxu0
        %v2825 = vadd.f32 0.0, %v2824
        %v2826 = vpop.f32.mrb[0].mxu0
        %2827 = vmatprep.mubr.f32.mxu0 0.0
        %2828 = vmatmul.mubr.f32.gmra.mrb[0].mxu0 %v2655
        %v2829 = vpop.f32.mrb[0].mxu0
        %v2830 = vadd.f32 0.0, %v2829
        %v2831 = vpop.f32.mrb[0].mxu0
        %2832 = vmatprep.mubr.f32.mxu0 0.0
        %2833 = vmatmul.mubr.f32.gmra.mrb[0].mxu0 %v2656
        %v2834 = vpop.f32.mrb[0].mxu0
        %v2835 = vadd.f32 0.0, %v2834
        %v2836 = vpop.f32.mrb[0].mxu0
        %2837 = vmatprep.mubr.f32.mxu0 0.0
        %2838 = vmatmul.mubr.f32.gmra.mrb[0].mxu0 %v2657
        %v2839 = vpop.f32.mrb[0].mxu0
        %v2840 = vadd.f32 0.0, %v2839
        %v2841 = vpop.f32.mrb[0].mxu0
        %2842 = vmatprep.mubr.f32.mxu0 0.0
        %2843 = vmatmul.mubr.f32.gmra.mrb[0].mxu0 %v2658
        %v2844 = vpop.f32.mrb[0].mxu0
        %v2845 = vadd.f32 0.0, %v2844
        %v2846 = vpop.f32.mrb[0].mxu0
        %2847 = vmatprep.mubr.f32.mxu0 0.0
        %2848 = vmatmul.mubr.f32.gmra.mrb[0].mxu0 %v2659
        %v2849 = vpop.f32.mrb[0].mxu0
        %v2850 = vadd.f32 0.0, %v2849
        %v2851 = vpop.f32.mrb[0].mxu0
        %2852 = vdwg.mxu0
        %2853 = vrot.lane.b32.xlu0 %v655, 32
        %v2854 = vpop.permute.xlu0 %2853
        %2855 = vrot.lane.b32.xlu0 %v661, 32
        %v2856 = vpop.permute.xlu0 %2855
        %2857 = vrot.lane.b32.xlu0 %v667, 32
        %v2858 = vpop.permute.xlu0 %2857
        %2859 = vrot.lane.b32.xlu0 %v673, 32
        %v2860 = vpop.permute.xlu0 %2859
        %2861 = vrot.lane.b32.xlu0 %v679, 32
        %v2862 = vpop.permute.xlu0 %2861
        %2863 = vrot.lane.b32.xlu0 %v685, 32
        %v2864 = vpop.permute.xlu0 %2863
        %2865 = vrot.lane.b32.xlu0 %v691, 32
        %v2866 = vpop.permute.xlu0 %2865
        %2867 = vrot.lane.b32.xlu0 %v697, 32
        %v2868 = vpop.permute.xlu0 %2867
        %2869 = vrot.lane.b32.xlu0 %v703, 32
        %v2870 = vpop.permute.xlu0 %2869
        %2871 = vrot.lane.b32.xlu0 %v709, 32
        %v2872 = vpop.permute.xlu0 %2871
        %2873 = vrot.lane.b32.xlu0 %v715, 32
        %v2874 = vpop.permute.xlu0 %2873
        %2875 = vrot.lane.b32.xlu0 %v721, 32
        %v2876 = vpop.permute.xlu0 %2875
        %2877 = vrot.lane.b32.xlu0 %v727, 32
        %v2878 = vpop.permute.xlu0 %2877
        %2879 = vrot.lane.b32.xlu0 %v733, 32
        %v2880 = vpop.permute.xlu0 %2879
        %2881 = vrot.lane.b32.xlu0 %v739, 32
        %v2882 = vpop.permute.xlu0 %2881
        %2883 = vrot.lane.b32.xlu0 %v745, 32
        %v2884 = vpop.permute.xlu0 %2883
        %2885 = vrot.lane.b32.xlu0 %v657, 32
        %v2886 = vpop.permute.xlu0 %2885
        %2887 = vrot.lane.b32.xlu0 %v663, 32
        %v2888 = vpop.permute.xlu0 %2887
        %2889 = vrot.lane.b32.xlu0 %v669, 32
        %v2890 = vpop.permute.xlu0 %2889
        %2891 = vrot.lane.b32.xlu0 %v675, 32
        %v2892 = vpop.permute.xlu0 %2891
        %2893 = vrot.lane.b32.xlu0 %v681, 32
        %v2894 = vpop.permute.xlu0 %2893
        %2895 = vrot.lane.b32.xlu0 %v687, 32
        %v2896 = vpop.permute.xlu0 %2895
        %2897 = vrot.lane.b32.xlu0 %v693, 32
        %v2898 = vpop.permute.xlu0 %2897
        %2899 = vrot.lane.b32.xlu0 %v699, 32
        %v2900 = vpop.permute.xlu0 %2899
        %2901 = vrot.lane.b32.xlu0 %v705, 32
        %v2902 = vpop.permute.xlu0 %2901
        %2903 = vrot.lane.b32.xlu0 %v711, 32
        %v2904 = vpop.permute.xlu0 %2903
        %2905 = vrot.lane.b32.xlu0 %v717, 32
        %v2906 = vpop.permute.xlu0 %2905
        %2907 = vrot.lane.b32.xlu0 %v723, 32
        %v2908 = vpop.permute.xlu0 %2907
        %2909 = vrot.lane.b32.xlu0 %v729, 32
        %v2910 = vpop.permute.xlu0 %2909
        %2911 = vrot.lane.b32.xlu0 %v735, 32
        %v2912 = vpop.permute.xlu0 %2911
        %2913 = vrot.lane.b32.xlu0 %v741, 32
        %v2914 = vpop.permute.xlu0 %2913
        %2915 = vrot.lane.b32.xlu0 %v747, 32
        %v2916 = vpop.permute.xlu0 %2915
        %v2917 = vsel %vm894, %v2854, 0
        %v2919 = vsel %vm894, %v2856, 0
        %v2921 = vsel %vm894, %v2858, 0
        %v2923 = vsel %vm894, %v2860, 0
        %v2925 = vsel %vm894, %v2862, 0
        %v2927 = vsel %vm894, %v2864, 0
        %v2929 = vsel %vm894, %v2866, 0
        %v2931 = vsel %vm894, %v2868, 0
        %v2933 = vsel %vm894, %v2870, 0
        %v2935 = vsel %vm894, %v2872, 0
        %v2937 = vsel %vm894, %v2874, 0
        %v2939 = vsel %vm894, %v2876, 0
        %v2941 = vsel %vm894, %v2878, 0
        %v2943 = vsel %vm894, %v2880, 0
        %v2945 = vsel %vm894, %v2882, 0
        %v2947 = vsel %vm894, %v2884, 0
        %v2949 = vsel %vm894, %v2886, 0
        %v2951 = vsel %vm894, %v2888, 0
        %v2953 = vsel %vm894, %v2890, 0
        %v2955 = vsel %vm894, %v2892, 0
        %v2957 = vsel %vm894, %v2894, 0
        %v2959 = vsel %vm894, %v2896, 0
        %v2961 = vsel %vm894, %v2898, 0
        %v2963 = vsel %vm894, %v2900, 0
        %v2965 = vsel %vm894, %v2902, 0
        %v2967 = vsel %vm894, %v2904, 0
        %v2969 = vsel %vm894, %v2906, 0
        %v2971 = vsel %vm894, %v2908, 0
        %v2973 = vsel %vm894, %v2910, 0
        %v2975 = vsel %vm894, %v2912, 0
        %v2977 = vsel %vm894, %v2914, 0
        %v2979 = vsel %vm894, %v2916, 0
        %2981 = vmatprep.subr.mxu0 0.0
        %2982 = vmatpush1.xpose.msra.mxu0 %v2949
        %2983 = vmatprep.subr.mxu0 0.0
        %2984 = vmatpush1.xpose.msra.mxu0 %v2951
        %2985 = vmatprep.subr.mxu0 0.0
        %2986 = vmatpush1.xpose.msra.mxu0 %v2953
        %2987 = vmatprep.subr.mxu0 0.0
        %2988 = vmatpush1.xpose.msra.mxu0 %v2955
        %2989 = vmatprep.subr.mxu0 0.0
        %2990 = vmatpush1.xpose.msra.mxu0 %v2957
        %2991 = vmatprep.subr.mxu0 0.0
        %2992 = vmatpush1.xpose.msra.mxu0 %v2959
        %2993 = vmatprep.subr.mxu0 0.0
        %2994 = vmatpush1.xpose.msra.mxu0 %v2961
        %2995 = vmatprep.subr.mxu0 0.0
        %2996 = vmatpush1.xpose.msra.mxu0 %v2963
        %2997 = vmatprep.subr.mxu0 0.0
        %2998 = vmatpush1.xpose.msra.mxu0 %v2965
        %2999 = vmatprep.subr.mxu0 0.0
        %3000 = vmatpush1.xpose.msra.mxu0 %v2967
        %3001 = vmatprep.subr.mxu0 0.0
        %3002 = vmatpush1.xpose.msra.mxu0 %v2969
        %3003 = vmatprep.subr.mxu0 0.0
        %3004 = vmatpush1.xpose.msra.mxu0 %v2971
        %3005 = vmatprep.subr.mxu0 0.0
        %3006 = vmatpush1.xpose.msra.mxu0 %v2973
        %3007 = vmatprep.subr.mxu0 0.0
        %3008 = vmatpush1.xpose.msra.mxu0 %v2975
        %3009 = vmatprep.subr.mxu0 0.0
        %3010 = vmatpush1.xpose.msra.mxu0 %v2977
        %3011 = vmatprep.subr.mxu0 0.0
        %3012 = vmatpush1.xpose.msra.mxu0 %v2979
        %3013 = vmatprep.subr.mxu0 0.0
        %3014 = vmatpush1.xpose.msra.mxu0 0.0
        %3015 = vmatprep.subr.mxu0 0.0
        %3016 = vmatpush1.xpose.msra.mxu0 0.0
        %3017 = vmatprep.subr.mxu0 0.0
        %3018 = vmatpush1.xpose.msra.mxu0 0.0
        %3019 = vmatprep.subr.mxu0 0.0
        %3020 = vmatpush1.xpose.msra.mxu0 0.0
        %3021 = vmatprep.subr.mxu0 0.0
        %3022 = vmatpush1.xpose.msra.mxu0 0.0
        %3023 = vmatprep.subr.mxu0 0.0
        %3024 = vmatpush1.xpose.msra.mxu0 0.0
        %3025 = vmatprep.subr.mxu0 0.0
        %3026 = vmatpush1.xpose.msra.mxu0 0.0
        %3027 = vmatprep.subr.mxu0 0.0
        %3028 = vmatpush1.xpose.msra.mxu0 0.0
        %3029 = vmatprep.subr.mxu0 0.0
        %3030 = vmatpush1.xpose.msra.mxu0 0.0
        %3031 = vmatprep.subr.mxu0 0.0
        %3032 = vmatpush1.xpose.msra.mxu0 0.0
        %3033 = vmatprep.subr.mxu0 0.0
        %3034 = vmatpush1.xpose.msra.mxu0 0.0
        %3035 = vmatprep.subr.mxu0 0.0
        %3036 = vmatpush1.xpose.msra.mxu0 0.0
        %3037 = vmatprep.subr.mxu0 0.0
        %3038 = vmatpush1.xpose.msra.mxu0 0.0
        %3039 = vmatprep.subr.mxu0 0.0
        %3040 = vmatpush1.xpose.msra.mxu0 0.0
        %3041 = vmatprep.subr.mxu0 0.0
        %3042 = vmatpush1.xpose.msra.mxu0 0.0
        %3043 = vmatprep.subr.mxu0 0.0
        %3044 = vmatpush1.xpose.msra.mxu0 0.0
        %3045 = vmatprep.mubr.f32.mxu0 0.0
        %3046 = vmatmul.mubr.f32.gmra.mrb[0].mxu0 %v2917
        %v3047 = vpop.f32.mrb[0].mxu0
        %v3048 = vadd.f32 0.0, %v3047
        %v3049 = vpop.f32.mrb[0].mxu0
        %3050 = vmatprep.mubr.f32.mxu0 0.0
        %3051 = vmatmul.mubr.f32.gmra.mrb[0].mxu0 %v2919
        %v3052 = vpop.f32.mrb[0].mxu0
        %v3053 = vadd.f32 0.0, %v3052
        %v3054 = vpop.f32.mrb[0].mxu0
        %3055 = vmatprep.mubr.f32.mxu0 0.0
        %3056 = vmatmul.mubr.f32.gmra.mrb[0].mxu0 %v2921
        %v3057 = vpop.f32.mrb[0].mxu0
        %v3058 = vadd.f32 0.0, %v3057
        %v3059 = vpop.f32.mrb[0].mxu0
        %3060 = vmatprep.mubr.f32.mxu0 0.0
        %3061 = vmatmul.mubr.f32.gmra.mrb[0].mxu0 %v2923
        %v3062 = vpop.f32.mrb[0].mxu0
        %v3063 = vadd.f32 0.0, %v3062
        %v3064 = vpop.f32.mrb[0].mxu0
        %3065 = vmatprep.mubr.f32.mxu0 0.0
        %3066 = vmatmul.mubr.f32.gmra.mrb[0].mxu0 %v2925
        %v3067 = vpop.f32.mrb[0].mxu0
        %v3068 = vadd.f32 0.0, %v3067
        %v3069 = vpop.f32.mrb[0].mxu0
        %3070 = vmatprep.mubr.f32.mxu0 0.0
        %3071 = vmatmul.mubr.f32.gmra.mrb[0].mxu0 %v2927
        %v3072 = vpop.f32.mrb[0].mxu0
        %v3073 = vadd.f32 0.0, %v3072
        %v3074 = vpop.f32.mrb[0].mxu0
        %3075 = vmatprep.mubr.f32.mxu0 0.0
        %3076 = vmatmul.mubr.f32.gmra.mrb[0].mxu0 %v2929
        %v3077 = vpop.f32.mrb[0].mxu0
        %v3078 = vadd.f32 0.0, %v3077
        %v3079 = vpop.f32.mrb[0].mxu0
        %3080 = vmatprep.mubr.f32.mxu0 0.0
        %3081 = vmatmul.mubr.f32.gmra.mrb[0].mxu0 %v2931
        %v3082 = vpop.f32.mrb[0].mxu0
        %v3083 = vadd.f32 0.0, %v3082
        %v3084 = vpop.f32.mrb[0].mxu0
        %3085 = vmatprep.mubr.f32.mxu0 0.0
        %3086 = vmatmul.mubr.f32.gmra.mrb[0].mxu0 %v2933
        %v3087 = vpop.f32.mrb[0].mxu0
        %v3088 = vadd.f32 0.0, %v3087
        %v3089 = vpop.f32.mrb[0].mxu0
        %3090 = vmatprep.mubr.f32.mxu0 0.0
        %3091 = vmatmul.mubr.f32.gmra.mrb[0].mxu0 %v2935
        %v3092 = vpop.f32.mrb[0].mxu0
        %v3093 = vadd.f32 0.0, %v3092
        %v3094 = vpop.f32.mrb[0].mxu0
        %3095 = vmatprep.mubr.f32.mxu0 0.0
        %3096 = vmatmul.mubr.f32.gmra.mrb[0].mxu0 %v2937
        %v3097 = vpop.f32.mrb[0].mxu0
        %v3098 = vadd.f32 0.0, %v3097
        %v3099 = vpop.f32.mrb[0].mxu0
        %3100 = vmatprep.mubr.f32.mxu0 0.0
        %3101 = vmatmul.mubr.f32.gmra.mrb[0].mxu0 %v2939
        %v3102 = vpop.f32.mrb[0].mxu0
        %v3103 = vadd.f32 0.0, %v3102
        %v3104 = vpop.f32.mrb[0].mxu0
        %3105 = vmatprep.mubr.f32.mxu0 0.0
        %3106 = vmatmul.mubr.f32.gmra.mrb[0].mxu0 %v2941
        %v3107 = vpop.f32.mrb[0].mxu0
        %v3108 = vadd.f32 0.0, %v3107
        %v3109 = vpop.f32.mrb[0].mxu0
        %3110 = vmatprep.mubr.f32.mxu0 0.0
        %3111 = vmatmul.mubr.f32.gmra.mrb[0].mxu0 %v2943
        %v3112 = vpop.f32.mrb[0].mxu0
        %v3113 = vadd.f32 0.0, %v3112
        %v3114 = vpop.f32.mrb[0].mxu0
        %3115 = vmatprep.mubr.f32.mxu0 0.0
        %3116 = vmatmul.mubr.f32.gmra.mrb[0].mxu0 %v2945
        %v3117 = vpop.f32.mrb[0].mxu0
        %v3118 = vadd.f32 0.0, %v3117
        %v3119 = vpop.f32.mrb[0].mxu0
        %3120 = vmatprep.mubr.f32.mxu0 0.0
        %3121 = vmatmul.mubr.f32.gmra.mrb[0].mxu0 %v2947
        %v3122 = vpop.f32.mrb[0].mxu0
        %v3123 = vadd.f32 0.0, %v3122
        %v3124 = vpop.f32.mrb[0].mxu0
        %3125 = vdwg.mxu0
        %v3126 = vmul.f32 %v3048, 0.17677669
        %v3127 = vmul.f32 %v3053, 0.17677669
        %v3128 = vmul.f32 %v3058, 0.17677669
        %v3129 = vmul.f32 %v3063, 0.17677669
        %v3130 = vmul.f32 %v3068, 0.17677669
        %v3131 = vmul.f32 %v3073, 0.17677669
        %v3132 = vmul.f32 %v3078, 0.17677669
        %v3133 = vmul.f32 %v3083, 0.17677669
        %v3134 = vmul.f32 %v3088, 0.17677669
        %v3135 = vmul.f32 %v3093, 0.17677669
        %v3136 = vmul.f32 %v3098, 0.17677669
        %v3137 = vmul.f32 %v3103, 0.17677669
        %v3138 = vmul.f32 %v3108, 0.17677669
        %v3139 = vmul.f32 %v3113, 0.17677669
        %v3140 = vmul.f32 %v3118, 0.17677669
        %v3141 = vmul.f32 %v3123, 0.17677669
        %3142 = vmax.xlane.f32.xlu0 %v3126
        %v3143 = vpop.xlane.xlu0 %3142
        %3144 = vmax.xlane.f32.xlu0 %v3127
        %v3145 = vpop.xlane.xlu0 %3144
        %3146 = vmax.xlane.f32.xlu0 %v3128
        %v3147 = vpop.xlane.xlu0 %3146
        %3148 = vmax.xlane.f32.xlu0 %v3129
        %v3149 = vpop.xlane.xlu0 %3148
        %3150 = vmax.xlane.f32.xlu0 %v3130
        %v3151 = vpop.xlane.xlu0 %3150
        %3152 = vmax.xlane.f32.xlu0 %v3131
        %v3153 = vpop.xlane.xlu0 %3152
        %3154 = vmax.xlane.f32.xlu0 %v3132
        %v3155 = vpop.xlane.xlu0 %3154
        %3156 = vmax.xlane.f32.xlu0 %v3133
        %v3157 = vpop.xlane.xlu0 %3156
        %3158 = vmax.xlane.f32.xlu0 %v3134
        %v3159 = vpop.xlane.xlu0 %3158
        %3160 = vmax.xlane.f32.xlu0 %v3135
        %v3161 = vpop.xlane.xlu0 %3160
        %3162 = vmax.xlane.f32.xlu0 %v3136
        %v3163 = vpop.xlane.xlu0 %3162
        %3164 = vmax.xlane.f32.xlu0 %v3137
        %v3165 = vpop.xlane.xlu0 %3164
        %3166 = vmax.xlane.f32.xlu0 %v3138
        %v3167 = vpop.xlane.xlu0 %3166
        %3168 = vmax.xlane.f32.xlu0 %v3139
        %v3169 = vpop.xlane.xlu0 %3168
        %3170 = vmax.xlane.f32.xlu0 %v3140
        %v3171 = vpop.xlane.xlu0 %3170
        %3172 = vmax.xlane.f32.xlu0 %v3141
        %v3173 = vpop.xlane.xlu0 %3172
        %v3174 = vsub.f32 %v3126, %v3143
        %v3175 = vsub.f32 %v3127, %v3145
        %v3176 = vsub.f32 %v3128, %v3147
        %v3177 = vsub.f32 %v3129, %v3149
        %v3178 = vsub.f32 %v3130, %v3151
        %v3179 = vsub.f32 %v3131, %v3153
        %v3180 = vsub.f32 %v3132, %v3155
        %v3181 = vsub.f32 %v3133, %v3157
        %v3182 = vsub.f32 %v3134, %v3159
        %v3183 = vsub.f32 %v3135, %v3161
        %v3184 = vsub.f32 %v3136, %v3163
        %v3185 = vsub.f32 %v3137, %v3165
        %v3186 = vsub.f32 %v3138, %v3167
        %v3187 = vsub.f32 %v3139, %v3169
        %v3188 = vsub.f32 %v3140, %v3171
        %v3189 = vsub.f32 %v3141, %v3173
        %v3190 = vmul.f32 %v3174, 1.442695
        %v3191 = vpow.pop %v3190
        %v3192 = vmul.f32 %v3175, 1.442695
        %v3193 = vpow.pop %v3192
        %v3194 = vmul.f32 %v3176, 1.442695
        %v3195 = vpow.pop %v3194
        %v3196 = vmul.f32 %v3177, 1.442695
        %v3197 = vpow.pop %v3196
        %v3198 = vmul.f32 %v3178, 1.442695
        %v3199 = vpow.pop %v3198
        %v3200 = vmul.f32 %v3179, 1.442695
        %v3201 = vpow.pop %v3200
        %v3202 = vmul.f32 %v3180, 1.442695
        %v3203 = vpow.pop %v3202
        %v3204 = vmul.f32 %v3181, 1.442695
        %v3205 = vpow.pop %v3204
        %v3206 = vmul.f32 %v3182, 1.442695
        %v3207 = vpow.pop %v3206
        %v3208 = vmul.f32 %v3183, 1.442695
        %v3209 = vpow.pop %v3208
        %v3210 = vmul.f32 %v3184, 1.442695
        %v3211 = vpow.pop %v3210
        %v3212 = vmul.f32 %v3185, 1.442695
        %v3213 = vpow.pop %v3212
        %v3214 = vmul.f32 %v3186, 1.442695
        %v3215 = vpow.pop %v3214
        %v3216 = vmul.f32 %v3187, 1.442695
        %v3217 = vpow.pop %v3216
        %v3218 = vmul.f32 %v3188, 1.442695
        %v3219 = vpow.pop %v3218
        %v3220 = vmul.f32 %v3189, 1.442695
        %v3221 = vpow.pop %v3220
        %3222 = vadd.xlane.f32.xlu0 %v3191
        %v3223 = vpop.xlane.xlu0 %3222
        %3224 = vadd.xlane.f32.xlu0 %v3193
        %v3225 = vpop.xlane.xlu0 %3224
        %3226 = vadd.xlane.f32.xlu0 %v3195
        %v3227 = vpop.xlane.xlu0 %3226
        %3228 = vadd.xlane.f32.xlu0 %v3197
        %v3229 = vpop.xlane.xlu0 %3228
        %3230 = vadd.xlane.f32.xlu0 %v3199
        %v3231 = vpop.xlane.xlu0 %3230
        %3232 = vadd.xlane.f32.xlu0 %v3201
        %v3233 = vpop.xlane.xlu0 %3232
        %3234 = vadd.xlane.f32.xlu0 %v3203
        %v3235 = vpop.xlane.xlu0 %3234
        %3236 = vadd.xlane.f32.xlu0 %v3205
        %v3237 = vpop.xlane.xlu0 %3236
        %3238 = vadd.xlane.f32.xlu0 %v3207
        %v3239 = vpop.xlane.xlu0 %3238
        %3240 = vadd.xlane.f32.xlu0 %v3209
        %v3241 = vpop.xlane.xlu0 %3240
        %3242 = vadd.xlane.f32.xlu0 %v3211
        %v3243 = vpop.xlane.xlu0 %3242
        %3244 = vadd.xlane.f32.xlu0 %v3213
        %v3245 = vpop.xlane.xlu0 %3244
        %3246 = vadd.xlane.f32.xlu0 %v3215
        %v3247 = vpop.xlane.xlu0 %3246
        %3248 = vadd.xlane.f32.xlu0 %v3217
        %v3249 = vpop.xlane.xlu0 %3248
        %3250 = vadd.xlane.f32.xlu0 %v3219
        %v3251 = vpop.xlane.xlu0 %3250
        %3252 = vadd.xlane.f32.xlu0 %v3221
        %v3253 = vpop.xlane.xlu0 %3252
        %v3254 = vrcp.pop %v3223
        %v3255 = vrcp.pop %v3225
        %v3256 = vrcp.pop %v3227
        %v3257 = vrcp.pop %v3229
        %v3258 = vrcp.pop %v3231
        %v3259 = vrcp.pop %v3233
        %v3260 = vrcp.pop %v3235
        %v3261 = vrcp.pop %v3237
        %v3262 = vrcp.pop %v3239
        %v3263 = vrcp.pop %v3241
        %v3264 = vrcp.pop %v3243
        %v3265 = vrcp.pop %v3245
        %v3266 = vrcp.pop %v3247
        %v3267 = vrcp.pop %v3249
        %v3268 = vrcp.pop %v3251
        %v3269 = vrcp.pop %v3253
        %v3270 = vmul.f32 %v3223, %v3254
        %v3271 = vmul.f32 %v3225, %v3255
        %v3272 = vmul.f32 %v3227, %v3256
        %v3273 = vmul.f32 %v3229, %v3257
        %v3274 = vmul.f32 %v3231, %v3258
        %v3275 = vmul.f32 %v3233, %v3259
        %v3276 = vmul.f32 %v3235, %v3260
        %v3277 = vmul.f32 %v3237, %v3261
        %v3278 = vmul.f32 %v3239, %v3262
        %v3279 = vmul.f32 %v3241, %v3263
        %v3280 = vmul.f32 %v3243, %v3264
        %v3281 = vmul.f32 %v3245, %v3265
        %v3282 = vmul.f32 %v3247, %v3266
        %v3283 = vmul.f32 %v3249, %v3267
        %v3284 = vmul.f32 %v3251, %v3268
        %v3285 = vmul.f32 %v3253, %v3269
        %v3286 = vsub.f32 2.0, %v3270
        %v3287 = vsub.f32 2.0, %v3271
        %v3288 = vsub.f32 2.0, %v3272
        %v3289 = vsub.f32 2.0, %v3273
        %v3290 = vsub.f32 2.0, %v3274
        %v3291 = vsub.f32 2.0, %v3275
        %v3292 = vsub.f32 2.0, %v3276
        %v3293 = vsub.f32 2.0, %v3277
        %v3294 = vsub.f32 2.0, %v3278
        %v3295 = vsub.f32 2.0, %v3279
        %v3296 = vsub.f32 2.0, %v3280
        %v3297 = vsub.f32 2.0, %v3281
        %v3298 = vsub.f32 2.0, %v3282
        %v3299 = vsub.f32 2.0, %v3283
        %v3300 = vsub.f32 2.0, %v3284
        %v3301 = vsub.f32 2.0, %v3285
        %v3302 = vmul.f32 %v3254, %v3286
        %v3303 = vmul.f32 %v3255, %v3287
        %v3304 = vmul.f32 %v3256, %v3288
        %v3305 = vmul.f32 %v3257, %v3289
        %v3306 = vmul.f32 %v3258, %v3290
        %v3307 = vmul.f32 %v3259, %v3291
        %v3308 = vmul.f32 %v3260, %v3292
        %v3309 = vmul.f32 %v3261, %v3293
        %v3310 = vmul.f32 %v3262, %v3294
        %v3311 = vmul.f32 %v3263, %v3295
        %v3312 = vmul.f32 %v3264, %v3296
        %v3313 = vmul.f32 %v3265, %v3297
        %v3314 = vmul.f32 %v3266, %v3298
        %v3315 = vmul.f32 %v3267, %v3299
        %v3316 = vmul.f32 %v3268, %v3300
        %v3317 = vmul.f32 %v3269, %v3301
        %v3318 = vmul.f32 %v3191, %v3302
        %v3319 = vmul.f32 %v3193, %v3303
        %v3320 = vmul.f32 %v3195, %v3304
        %v3321 = vmul.f32 %v3197, %v3305
        %v3322 = vmul.f32 %v3199, %v3306
        %v3323 = vmul.f32 %v3201, %v3307
        %v3324 = vmul.f32 %v3203, %v3308
        %v3325 = vmul.f32 %v3205, %v3309
        %v3326 = vmul.f32 %v3207, %v3310
        %v3327 = vmul.f32 %v3209, %v3311
        %v3328 = vmul.f32 %v3211, %v3312
        %v3329 = vmul.f32 %v3213, %v3313
        %v3330 = vmul.f32 %v3215, %v3314
        %v3331 = vmul.f32 %v3217, %v3315
        %v3332 = vmul.f32 %v3219, %v3316
        %v3333 = vmul.f32 %v3221, %v3317
        %3334 = vrot.lane.b32.xlu0 %v816, 32
        %v3335 = vpop.permute.xlu0 %3334
        %3336 = vrot.lane.b32.xlu0 %v821, 32
        %v3337 = vpop.permute.xlu0 %3336
        %3338 = vrot.lane.b32.xlu0 %v826, 32
        %v3339 = vpop.permute.xlu0 %3338
        %3340 = vrot.lane.b32.xlu0 %v831, 32
        %v3341 = vpop.permute.xlu0 %3340
        %3342 = vrot.lane.b32.xlu0 %v836, 32
        %v3343 = vpop.permute.xlu0 %3342
        %3344 = vrot.lane.b32.xlu0 %v841, 32
        %v3345 = vpop.permute.xlu0 %3344
        %3346 = vrot.lane.b32.xlu0 %v846, 32
        %v3347 = vpop.permute.xlu0 %3346
        %3348 = vrot.lane.b32.xlu0 %v851, 32
        %v3349 = vpop.permute.xlu0 %3348
        %3350 = vrot.lane.b32.xlu0 %v856, 32
        %v3351 = vpop.permute.xlu0 %3350
        %3352 = vrot.lane.b32.xlu0 %v861, 32
        %v3353 = vpop.permute.xlu0 %3352
        %3354 = vrot.lane.b32.xlu0 %v866, 32
        %v3355 = vpop.permute.xlu0 %3354
        %3356 = vrot.lane.b32.xlu0 %v871, 32
        %v3357 = vpop.permute.xlu0 %3356
        %3358 = vrot.lane.b32.xlu0 %v876, 32
        %v3359 = vpop.permute.xlu0 %3358
        %3360 = vrot.lane.b32.xlu0 %v881, 32
        %v3361 = vpop.permute.xlu0 %3360
        %3362 = vrot.lane.b32.xlu0 %v886, 32
        %v3363 = vpop.permute.xlu0 %3362
        %3364 = vrot.lane.b32.xlu0 %v891, 32
        %v3365 = vpop.permute.xlu0 %3364
        %3382 = vmatprep.subr.mxu0 0.0
        %3383 = vmatpush1.msra.mxu0 %v3335
        %3384 = vmatprep.subr.mxu0 0.0
        %3385 = vmatpush1.msra.mxu0 %v3337
        %3386 = vmatprep.subr.mxu0 0.0
        %3387 = vmatpush1.msra.mxu0 %v3339
        %3388 = vmatprep.subr.mxu0 0.0
        %3389 = vmatpush1.msra.mxu0 %v3341
        %3390 = vmatprep.subr.mxu0 0.0
        %3391 = vmatpush1.msra.mxu0 %v3343
        %3392 = vmatprep.subr.mxu0 0.0
        %3393 = vmatpush1.msra.mxu0 %v3345
        %3394 = vmatprep.subr.mxu0 0.0
        %3395 = vmatpush1.msra.mxu0 %v3347
        %3396 = vmatprep.subr.mxu0 0.0
        %3397 = vmatpush1.msra.mxu0 %v3349
        %3398 = vmatprep.subr.mxu0 0.0
        %3399 = vmatpush1.msra.mxu0 %v3351
        %3400 = vmatprep.subr.mxu0 0.0
        %3401 = vmatpush1.msra.mxu0 %v3353
        %3402 = vmatprep.subr.mxu0 0.0
        %3403 = vmatpush1.msra.mxu0 %v3355
        %3404 = vmatprep.subr.mxu0 0.0
        %3405 = vmatpush1.msra.mxu0 %v3357
        %3406 = vmatprep.subr.mxu0 0.0
        %3407 = vmatpush1.msra.mxu0 %v3359
        %3408 = vmatprep.subr.mxu0 0.0
        %3409 = vmatpush1.msra.mxu0 %v3361
        %3410 = vmatprep.subr.mxu0 0.0
        %3411 = vmatpush1.msra.mxu0 %v3363
        %3412 = vmatprep.subr.mxu0 0.0
        %3413 = vmatpush1.msra.mxu0 %v3365
        %3414 = vmatprep.subr.mxu0 0.0
        %3415 = vmatpush1.msra.mxu0 0.0
        %3416 = vmatprep.subr.mxu0 0.0
        %3417 = vmatpush1.msra.mxu0 0.0
        %3418 = vmatprep.subr.mxu0 0.0
        %3419 = vmatpush1.msra.mxu0 0.0
        %3420 = vmatprep.subr.mxu0 0.0
        %3421 = vmatpush1.msra.mxu0 0.0
        %3422 = vmatprep.subr.mxu0 0.0
        %3423 = vmatpush1.msra.mxu0 0.0
        %3424 = vmatprep.subr.mxu0 0.0
        %3425 = vmatpush1.msra.mxu0 0.0
        %3426 = vmatprep.subr.mxu0 0.0
        %3427 = vmatpush1.msra.mxu0 0.0
        %3428 = vmatprep.subr.mxu0 0.0
        %3429 = vmatpush1.msra.mxu0 0.0
        %3430 = vmatprep.subr.mxu0 0.0
        %3431 = vmatpush1.msra.mxu0 0.0
        %3432 = vmatprep.subr.mxu0 0.0
        %3433 = vmatpush1.msra.mxu0 0.0
        %3434 = vmatprep.subr.mxu0 0.0
        %3435 = vmatpush1.msra.mxu0 0.0
        %3436 = vmatprep.subr.mxu0 0.0
        %3437 = vmatpush1.msra.mxu0 0.0
        %3438 = vmatprep.subr.mxu0 0.0
        %3439 = vmatpush1.msra.mxu0 0.0
        %3440 = vmatprep.subr.mxu0 0.0
        %3441 = vmatpush1.msra.mxu0 0.0
        %3442 = vmatprep.subr.mxu0 0.0
        %3443 = vmatpush1.msra.mxu0 0.0
        %3444 = vmatprep.subr.mxu0 0.0
        %3445 = vmatpush1.msra.mxu0 0.0
        %3446 = vmatprep.mubr.f32.mxu0 0.0
        %3447 = vmatmul.mubr.f32.gmra.mrb[0].mxu0 %v3318
        %v3448 = vpop.f32.mrb[0].mxu0
        %v3449 = vadd.f32 0.0, %v3448
        %v3450 = vpop.f32.mrb[0].mxu0
        %3451 = vmatprep.mubr.f32.mxu0 0.0
        %3452 = vmatmul.mubr.f32.gmra.mrb[0].mxu0 %v3319
        %v3453 = vpop.f32.mrb[0].mxu0
        %v3454 = vadd.f32 0.0, %v3453
        %v3455 = vpop.f32.mrb[0].mxu0
        %3456 = vmatprep.mubr.f32.mxu0 0.0
        %3457 = vmatmul.mubr.f32.gmra.mrb[0].mxu0 %v3320
        %v3458 = vpop.f32.mrb[0].mxu0
        %v3459 = vadd.f32 0.0, %v3458
        %v3460 = vpop.f32.mrb[0].mxu0
        %3461 = vmatprep.mubr.f32.mxu0 0.0
        %3462 = vmatmul.mubr.f32.gmra.mrb[0].mxu0 %v3321
        %v3463 = vpop.f32.mrb[0].mxu0
        %v3464 = vadd.f32 0.0, %v3463
        %v3465 = vpop.f32.mrb[0].mxu0
        %3466 = vmatprep.mubr.f32.mxu0 0.0
        %3467 = vmatmul.mubr.f32.gmra.mrb[0].mxu0 %v3322
        %v3468 = vpop.f32.mrb[0].mxu0
        %v3469 = vadd.f32 0.0, %v3468
        %v3470 = vpop.f32.mrb[0].mxu0
        %3471 = vmatprep.mubr.f32.mxu0 0.0
        %3472 = vmatmul.mubr.f32.gmra.mrb[0].mxu0 %v3323
        %v3473 = vpop.f32.mrb[0].mxu0
        %v3474 = vadd.f32 0.0, %v3473
        %v3475 = vpop.f32.mrb[0].mxu0
        %3476 = vmatprep.mubr.f32.mxu0 0.0
        %3477 = vmatmul.mubr.f32.gmra.mrb[0].mxu0 %v3324
        %v3478 = vpop.f32.mrb[0].mxu0
        %v3479 = vadd.f32 0.0, %v3478
        %v3480 = vpop.f32.mrb[0].mxu0
        %3481 = vmatprep.mubr.f32.mxu0 0.0
        %3482 = vmatmul.mubr.f32.gmra.mrb[0].mxu0 %v3325
        %v3483 = vpop.f32.mrb[0].mxu0
        %v3484 = vadd.f32 0.0, %v3483
        %v3485 = vpop.f32.mrb[0].mxu0
        %3486 = vmatprep.mubr.f32.mxu0 0.0
        %3487 = vmatmul.mubr.f32.gmra.mrb[0].mxu0 %v3326
        %v3488 = vpop.f32.mrb[0].mxu0
        %v3489 = vadd.f32 0.0, %v3488
        %v3490 = vpop.f32.mrb[0].mxu0
        %3491 = vmatprep.mubr.f32.mxu0 0.0
        %3492 = vmatmul.mubr.f32.gmra.mrb[0].mxu0 %v3327
        %v3493 = vpop.f32.mrb[0].mxu0
        %v3494 = vadd.f32 0.0, %v3493
        %v3495 = vpop.f32.mrb[0].mxu0
        %3496 = vmatprep.mubr.f32.mxu0 0.0
        %3497 = vmatmul.mubr.f32.gmra.mrb[0].mxu0 %v3328
        %v3498 = vpop.f32.mrb[0].mxu0
        %v3499 = vadd.f32 0.0, %v3498
        %v3500 = vpop.f32.mrb[0].mxu0
        %3501 = vmatprep.mubr.f32.mxu0 0.0
        %3502 = vmatmul.mubr.f32.gmra.mrb[0].mxu0 %v3329
        %v3503 = vpop.f32.mrb[0].mxu0
        %v3504 = vadd.f32 0.0, %v3503
        %v3505 = vpop.f32.mrb[0].mxu0
        %3506 = vmatprep.mubr.f32.mxu0 0.0
        %3507 = vmatmul.mubr.f32.gmra.mrb[0].mxu0 %v3330
        %v3508 = vpop.f32.mrb[0].mxu0
        %v3509 = vadd.f32 0.0, %v3508
        %v3510 = vpop.f32.mrb[0].mxu0
        %3511 = vmatprep.mubr.f32.mxu0 0.0
        %3512 = vmatmul.mubr.f32.gmra.mrb[0].mxu0 %v3331
        %v3513 = vpop.f32.mrb[0].mxu0
        %v3514 = vadd.f32 0.0, %v3513
        %v3515 = vpop.f32.mrb[0].mxu0
        %3516 = vmatprep.mubr.f32.mxu0 0.0
        %3517 = vmatmul.mubr.f32.gmra.mrb[0].mxu0 %v3332
        %v3518 = vpop.f32.mrb[0].mxu0
        %v3519 = vadd.f32 0.0, %v3518
        %v3520 = vpop.f32.mrb[0].mxu0
        %3521 = vmatprep.mubr.f32.mxu0 0.0
        %3522 = vmatmul.mubr.f32.gmra.mrb[0].mxu0 %v3333
        %v3523 = vpop.f32.mrb[0].mxu0
        %v3524 = vadd.f32 0.0, %v3523
        %v3525 = vpop.f32.mrb[0].mxu0
        %3526 = vdwg.mxu0
        %3543 = vrot.lane.b32.xlu0 %v2101, 32
        %v3544 = vpop.permute.xlu0 %3543
        %3545 = vrot.lane.b32.xlu0 %v2106, 32
        %v3546 = vpop.permute.xlu0 %3545
        %3547 = vrot.lane.b32.xlu0 %v2111, 32
        %v3548 = vpop.permute.xlu0 %3547
        %3549 = vrot.lane.b32.xlu0 %v2116, 32
        %v3550 = vpop.permute.xlu0 %3549
        %3551 = vrot.lane.b32.xlu0 %v2121, 32
        %v3552 = vpop.permute.xlu0 %3551
        %3553 = vrot.lane.b32.xlu0 %v2126, 32
        %v3554 = vpop.permute.xlu0 %3553
        %3555 = vrot.lane.b32.xlu0 %v2131, 32
        %v3556 = vpop.permute.xlu0 %3555
        %3557 = vrot.lane.b32.xlu0 %v2136, 32
        %v3558 = vpop.permute.xlu0 %3557
        %3559 = vrot.lane.b32.xlu0 %v2141, 32
        %v3560 = vpop.permute.xlu0 %3559
        %3561 = vrot.lane.b32.xlu0 %v2146, 32
        %v3562 = vpop.permute.xlu0 %3561
        %3563 = vrot.lane.b32.xlu0 %v2151, 32
        %v3564 = vpop.permute.xlu0 %3563
        %3565 = vrot.lane.b32.xlu0 %v2156, 32
        %v3566 = vpop.permute.xlu0 %3565
        %3567 = vrot.lane.b32.xlu0 %v2161, 32
        %v3568 = vpop.permute.xlu0 %3567
        %3569 = vrot.lane.b32.xlu0 %v2166, 32
        %v3570 = vpop.permute.xlu0 %3569
        %3571 = vrot.lane.b32.xlu0 %v2171, 32
        %v3572 = vpop.permute.xlu0 %3571
        %3573 = vrot.lane.b32.xlu0 %v2176, 32
        %v3574 = vpop.permute.xlu0 %3573
        %3607 = vrot.lane.b32.xlu0 %v2775, 64
        %v3608 = vpop.permute.xlu0 %3607
        %3609 = vrot.lane.b32.xlu0 %v2780, 64
        %v3610 = vpop.permute.xlu0 %3609
        %3611 = vrot.lane.b32.xlu0 %v2785, 64
        %v3612 = vpop.permute.xlu0 %3611
        %3613 = vrot.lane.b32.xlu0 %v2790, 64
        %v3614 = vpop.permute.xlu0 %3613
        %3615 = vrot.lane.b32.xlu0 %v2795, 64
        %v3616 = vpop.permute.xlu0 %3615
        %3617 = vrot.lane.b32.xlu0 %v2800, 64
        %v3618 = vpop.permute.xlu0 %3617
        %3619 = vrot.lane.b32.xlu0 %v2805, 64
        %v3620 = vpop.permute.xlu0 %3619
        %3621 = vrot.lane.b32.xlu0 %v2810, 64
        %v3622 = vpop.permute.xlu0 %3621
        %3623 = vrot.lane.b32.xlu0 %v2815, 64
        %v3624 = vpop.permute.xlu0 %3623
        %3625 = vrot.lane.b32.xlu0 %v2820, 64
        %v3626 = vpop.permute.xlu0 %3625
        %3627 = vrot.lane.b32.xlu0 %v2825, 64
        %v3628 = vpop.permute.xlu0 %3627
        %3629 = vrot.lane.b32.xlu0 %v2830, 64
        %v3630 = vpop.permute.xlu0 %3629
        %3631 = vrot.lane.b32.xlu0 %v2835, 64
        %v3632 = vpop.permute.xlu0 %3631
        %3633 = vrot.lane.b32.xlu0 %v2840, 64
        %v3634 = vpop.permute.xlu0 %3633
        %3635 = vrot.lane.b32.xlu0 %v2845, 64
        %v3636 = vpop.permute.xlu0 %3635
        %3637 = vrot.lane.b32.xlu0 %v2850, 64
        %v3638 = vpop.permute.xlu0 %3637
        %3671 = vrot.lane.b32.xlu0 %v3449, 96
        %v3672 = vpop.permute.xlu0 %3671
        %3673 = vrot.lane.b32.xlu0 %v3454, 96
        %v3674 = vpop.permute.xlu0 %3673
        %3675 = vrot.lane.b32.xlu0 %v3459, 96
        %v3676 = vpop.permute.xlu0 %3675
        %3677 = vrot.lane.b32.xlu0 %v3464, 96
        %v3678 = vpop.permute.xlu0 %3677
        %3679 = vrot.lane.b32.xlu0 %v3469, 96
        %v3680 = vpop.permute.xlu0 %3679
        %3681 = vrot.lane.b32.xlu0 %v3474, 96
        %v3682 = vpop.permute.xlu0 %3681
        %3683 = vrot.lane.b32.xlu0 %v3479, 96
        %v3684 = vpop.permute.xlu0 %3683
        %3685 = vrot.lane.b32.xlu0 %v3484, 96
        %v3686 = vpop.permute.xlu0 %3685
        %3687 = vrot.lane.b32.xlu0 %v3489, 96
        %v3688 = vpop.permute.xlu0 %3687
        %3689 = vrot.lane.b32.xlu0 %v3494, 96
        %v3690 = vpop.permute.xlu0 %3689
        %3691 = vrot.lane.b32.xlu0 %v3499, 96
        %v3692 = vpop.permute.xlu0 %3691
        %3693 = vrot.lane.b32.xlu0 %v3504, 96
        %v3694 = vpop.permute.xlu0 %3693
        %3695 = vrot.lane.b32.xlu0 %v3509, 96
        %v3696 = vpop.permute.xlu0 %3695
        %3697 = vrot.lane.b32.xlu0 %v3514, 96
        %v3698 = vpop.permute.xlu0 %3697
        %3699 = vrot.lane.b32.xlu0 %v3519, 96
        %v3700 = vpop.permute.xlu0 %3699
        %3701 = vrot.lane.b32.xlu0 %v3524, 96
        %v3702 = vpop.permute.xlu0 %3701
        %v3719 = vsel %vm894, %v1411, %v3544
        %v3720 = vsel %vm894, %v1416, %v3546
        %v3721 = vsel %vm894, %v1421, %v3548
        %v3722 = vsel %vm894, %v1426, %v3550
        %v3723 = vsel %vm894, %v1431, %v3552
        %v3724 = vsel %vm894, %v1436, %v3554
        %v3725 = vsel %vm894, %v1441, %v3556
        %v3726 = vsel %vm894, %v1446, %v3558
        %v3727 = vsel %vm894, %v1451, %v3560
        %v3728 = vsel %vm894, %v1456, %v3562
        %v3729 = vsel %vm894, %v1461, %v3564
        %v3730 = vsel %vm894, %v1466, %v3566
        %v3731 = vsel %vm894, %v1471, %v3568
        %v3732 = vsel %vm894, %v1476, %v3570
        %v3733 = vsel %vm894, %v1481, %v3572
        %v3734 = vsel %vm894, %v1486, %v3574
        %vm3735 = vcmask 523264
        %v3736 = vsel %vm3735, %v3719, %v3608
        %v3737 = vsel %vm3735, %v3720, %v3610
        %v3738 = vsel %vm3735, %v3721, %v3612
        %v3739 = vsel %vm3735, %v3722, %v3614
        %v3740 = vsel %vm3735, %v3723, %v3616
        %v3741 = vsel %vm3735, %v3724, %v3618
        %v3742 = vsel %vm3735, %v3725, %v3620
        %v3743 = vsel %vm3735, %v3726, %v3622
        %v3744 = vsel %vm3735, %v3727, %v3624
        %v3745 = vsel %vm3735, %v3728, %v3626
        %v3746 = vsel %vm3735, %v3729, %v3628
        %v3747 = vsel %vm3735, %v3730, %v3630
        %v3748 = vsel %vm3735, %v3731, %v3632
        %v3749 = vsel %vm3735, %v3732, %v3634
        %v3750 = vsel %vm3735, %v3733, %v3636
        %v3751 = vsel %vm3735, %v3734, %v3638
        %vm3752 = vcmask 785408
        %v3753 = vsel %vm3752, %v3736, %v3672
        %v3754 = vsel %vm3752, %v3737, %v3674
        %v3755 = vsel %vm3752, %v3738, %v3676
        %v3756 = vsel %vm3752, %v3739, %v3678
        %v3757 = vsel %vm3752, %v3740, %v3680
        %v3758 = vsel %vm3752, %v3741, %v3682
        %v3759 = vsel %vm3752, %v3742, %v3684
        %v3760 = vsel %vm3752, %v3743, %v3686
        %v3761 = vsel %vm3752, %v3744, %v3688
        %v3762 = vsel %vm3752, %v3745, %v3690
        %v3763 = vsel %vm3752, %v3746, %v3692
        %v3764 = vsel %vm3752, %v3747, %v3694
        %v3765 = vsel %vm3752, %v3748, %v3696
        %v3766 = vsel %vm3752, %v3749, %v3698
        %v3767 = vsel %vm3752, %v3750, %v3700
        %v3768 = vsel %vm3752, %v3751, %v3702
        %v3769 = vld [vmem:[#allocation6] sm:$0xff]
        %v3770 = vld [vmem:[#allocation6 + $0x8] sm:$0xff]
        %v3771 = vld [vmem:[#allocation6 + $0x10] sm:$0xff]
        %v3772 = vld [vmem:[#allocation6 + $0x18] sm:$0xff]
        %v3773 = vld [vmem:[#allocation6 + $0x20] sm:$0xff]
        %v3774 = vld [vmem:[#allocation6 + $0x28] sm:$0xff]
        %v3775 = vld [vmem:[#allocation6 + $0x30] sm:$0xff]
        %v3776 = vld [vmem:[#allocation6 + $0x38] sm:$0xff]
        %v3777 = vld [vmem:[#allocation6 + $0x40] sm:$0xff]
        %v3778 = vld [vmem:[#allocation6 + $0x48] sm:$0xff]
        %v3779 = vld [vmem:[#allocation6 + $0x50] sm:$0xff]
        %v3780 = vld [vmem:[#allocation6 + $0x58] sm:$0xff]
        %v3781 = vld [vmem:[#allocation6 + $0x60] sm:$0xff]
        %v3782 = vld [vmem:[#allocation6 + $0x68] sm:$0xff]
        %v3783 = vld [vmem:[#allocation6 + $0x70] sm:$0xff]
        %v3784 = vld [vmem:[#allocation6 + $0x78] sm:$0xff]
        %v3785 = vld [vmem:[%s5] sm:$0x1]
        %v3787 = vlaneseq
        %v3788 = vshrl.u32 %v3787, 7
        %v3789 = vsub.s32 0, %v3788
        %v3790 = vrot.slane %v3785, %v3789
        %3792 = vmatprep.subr.mxu0 0.0
        %3793 = vmatpush1.msra.mxu0 %v3769
        %3794 = vmatprep.subr.mxu0 0.0
        %3795 = vmatpush1.msra.mxu0 %v3770
        %3796 = vmatprep.subr.mxu0 0.0
        %3797 = vmatpush1.msra.mxu0 %v3771
        %3798 = vmatprep.subr.mxu0 0.0
        %3799 = vmatpush1.msra.mxu0 %v3772
        %3800 = vmatprep.subr.mxu0 0.0
        %3801 = vmatpush1.msra.mxu0 %v3773
        %3802 = vmatprep.subr.mxu0 0.0
        %3803 = vmatpush1.msra.mxu0 %v3774
        %3804 = vmatprep.subr.mxu0 0.0
        %3805 = vmatpush1.msra.mxu0 %v3775
        %3806 = vmatprep.subr.mxu0 0.0
        %3807 = vmatpush1.msra.mxu0 %v3776
        %3808 = vmatprep.subr.mxu0 0.0
        %3809 = vmatpush1.msra.mxu0 %v3777
        %3810 = vmatprep.subr.mxu0 0.0
        %3811 = vmatpush1.msra.mxu0 %v3778
        %3812 = vmatprep.subr.mxu0 0.0
        %3813 = vmatpush1.msra.mxu0 %v3779
        %3814 = vmatprep.subr.mxu0 0.0
        %3815 = vmatpush1.msra.mxu0 %v3780
        %3816 = vmatprep.subr.mxu0 0.0
        %3817 = vmatpush1.msra.mxu0 %v3781
        %3818 = vmatprep.subr.mxu0 0.0
        %3819 = vmatpush1.msra.mxu0 %v3782
        %3820 = vmatprep.subr.mxu0 0.0
        %3821 = vmatpush1.msra.mxu0 %v3783
        %3822 = vmatprep.subr.mxu0 0.0
        %3823 = vmatpush1.msra.mxu0 %v3784
        %3824 = vmatprep.subr.mxu0 0.0
        %3825 = vmatpush1.msra.mxu0 0.0
        %3826 = vmatprep.subr.mxu0 0.0
        %3827 = vmatpush1.msra.mxu0 0.0
        %3828 = vmatprep.subr.mxu0 0.0
        %3829 = vmatpush1.msra.mxu0 0.0
        %3830 = vmatprep.subr.mxu0 0.0
        %3831 = vmatpush1.msra.mxu0 0.0
        %3832 = vmatprep.subr.mxu0 0.0
        %3833 = vmatpush1.msra.mxu0 0.0
        %3834 = vmatprep.subr.mxu0 0.0
        %3835 = vmatpush1.msra.mxu0 0.0
        %3836 = vmatprep.subr.mxu0 0.0
        %3837 = vmatpush1.msra.mxu0 0.0
        %3838 = vmatprep.subr.mxu0 0.0
        %3839 = vmatpush1.msra.mxu0 0.0
        %3840 = vmatprep.subr.mxu0 0.0
        %3841 = vmatpush1.msra.mxu0 0.0
        %3842 = vmatprep.subr.mxu0 0.0
        %3843 = vmatpush1.msra.mxu0 0.0
        %3844 = vmatprep.subr.mxu0 0.0
        %3845 = vmatpush1.msra.mxu0 0.0
        %3846 = vmatprep.subr.mxu0 0.0
        %3847 = vmatpush1.msra.mxu0 0.0
        %3848 = vmatprep.subr.mxu0 0.0
        %3849 = vmatpush1.msra.mxu0 0.0
        %3850 = vmatprep.subr.mxu0 0.0
        %3851 = vmatpush1.msra.mxu0 0.0
        %3852 = vmatprep.subr.mxu0 0.0
        %3853 = vmatpush1.msra.mxu0 0.0
        %3854 = vmatprep.subr.mxu0 0.0
        %3855 = vmatpush1.msra.mxu0 0.0
        %3856 = vmatprep.mubr.f32.mxu0 0.0
        %3857 = vmatmul.mubr.f32.gmra.mrb[0].mxu0 %v3753
        %v3858 = vpop.f32.mrb[0].mxu0
        %v3859 = vadd.f32 %v3790, %v3858
        %v3860 = vpop.f32.mrb[0].mxu0
        %3861 = vmatprep.mubr.f32.mxu0 0.0
        %3862 = vmatmul.mubr.f32.gmra.mrb[0].mxu0 %v3754
        %v3863 = vpop.f32.mrb[0].mxu0
        %v3864 = vadd.f32 %v3790, %v3863
        %v3865 = vpop.f32.mrb[0].mxu0
        %3866 = vmatprep.mubr.f32.mxu0 0.0
        %3867 = vmatmul.mubr.f32.gmra.mrb[0].mxu0 %v3755
        %v3868 = vpop.f32.mrb[0].mxu0
        %v3869 = vadd.f32 %v3790, %v3868
        %v3870 = vpop.f32.mrb[0].mxu0
        %3871 = vmatprep.mubr.f32.mxu0 0.0
        %3872 = vmatmul.mubr.f32.gmra.mrb[0].mxu0 %v3756
        %v3873 = vpop.f32.mrb[0].mxu0
        %v3874 = vadd.f32 %v3790, %v3873
        %v3875 = vpop.f32.mrb[0].mxu0
        %3876 = vmatprep.mubr.f32.mxu0 0.0
        %3877 = vmatmul.mubr.f32.gmra.mrb[0].mxu0 %v3757
        %v3878 = vpop.f32.mrb[0].mxu0
        %v3879 = vadd.f32 %v3790, %v3878
        %v3880 = vpop.f32.mrb[0].mxu0
        %3881 = vmatprep.mubr.f32.mxu0 0.0
        %3882 = vmatmul.mubr.f32.gmra.mrb[0].mxu0 %v3758
        %v3883 = vpop.f32.mrb[0].mxu0
        %v3884 = vadd.f32 %v3790, %v3883
        %v3885 = vpop.f32.mrb[0].mxu0
        %3886 = vmatprep.mubr.f32.mxu0 0.0
        %3887 = vmatmul.mubr.f32.gmra.mrb[0].mxu0 %v3759
        %v3888 = vpop.f32.mrb[0].mxu0
        %v3889 = vadd.f32 %v3790, %v3888
        %v3890 = vpop.f32.mrb[0].mxu0
        %3891 = vmatprep.mubr.f32.mxu0 0.0
        %3892 = vmatmul.mubr.f32.gmra.mrb[0].mxu0 %v3760
        %v3893 = vpop.f32.mrb[0].mxu0
        %v3894 = vadd.f32 %v3790, %v3893
        %v3895 = vpop.f32.mrb[0].mxu0
        %3896 = vmatprep.mubr.f32.mxu0 0.0
        %3897 = vmatmul.mubr.f32.gmra.mrb[0].mxu0 %v3761
        %v3898 = vpop.f32.mrb[0].mxu0
        %v3899 = vadd.f32 %v3790, %v3898
        %v3900 = vpop.f32.mrb[0].mxu0
        %3901 = vmatprep.mubr.f32.mxu0 0.0
        %3902 = vmatmul.mubr.f32.gmra.mrb[0].mxu0 %v3762
        %v3903 = vpop.f32.mrb[0].mxu0
        %v3904 = vadd.f32 %v3790, %v3903
        %v3905 = vpop.f32.mrb[0].mxu0
        %3906 = vmatprep.mubr.f32.mxu0 0.0
        %3907 = vmatmul.mubr.f32.gmra.mrb[0].mxu0 %v3763
        %v3908 = vpop.f32.mrb[0].mxu0
        %v3909 = vadd.f32 %v3790, %v3908
        %v3910 = vpop.f32.mrb[0].mxu0
        %3911 = vmatprep.mubr.f32.mxu0 0.0
        %3912 = vmatmul.mubr.f32.gmra.mrb[0].mxu0 %v3764
        %v3913 = vpop.f32.mrb[0].mxu0
        %v3914 = vadd.f32 %v3790, %v3913
        %v3915 = vpop.f32.mrb[0].mxu0
        %3916 = vmatprep.mubr.f32.mxu0 0.0
        %3917 = vmatmul.mubr.f32.gmra.mrb[0].mxu0 %v3765
        %v3918 = vpop.f32.mrb[0].mxu0
        %v3919 = vadd.f32 %v3790, %v3918
        %v3920 = vpop.f32.mrb[0].mxu0
        %3921 = vmatprep.mubr.f32.mxu0 0.0
        %3922 = vmatmul.mubr.f32.gmra.mrb[0].mxu0 %v3766
        %v3923 = vpop.f32.mrb[0].mxu0
        %v3924 = vadd.f32 %v3790, %v3923
        %v3925 = vpop.f32.mrb[0].mxu0
        %3926 = vmatprep.mubr.f32.mxu0 0.0
        %3927 = vmatmul.mubr.f32.gmra.mrb[0].mxu0 %v3767
        %v3928 = vpop.f32.mrb[0].mxu0
        %v3929 = vadd.f32 %v3790, %v3928
        %v3930 = vpop.f32.mrb[0].mxu0
        %3931 = vmatprep.mubr.f32.mxu0 0.0
        %3932 = vmatmul.mubr.f32.gmra.mrb[0].mxu0 %v3768
        %v3933 = vpop.f32.mrb[0].mxu0
        %v3934 = vadd.f32 %v3790, %v3933
        %v3935 = vpop.f32.mrb[0].mxu0
        %3936 = vdwg.mxu0
        %v3937 = vadd.f32 %v301, %v3859
        %v3938 = vadd.f32 %v302, %v3864
        %v3939 = vadd.f32 %v303, %v3869
        %v3940 = vadd.f32 %v304, %v3874
        %v3941 = vadd.f32 %v305, %v3879
        %v3942 = vadd.f32 %v306, %v3884
        %v3943 = vadd.f32 %v307, %v3889
        %v3944 = vadd.f32 %v308, %v3894
        %v3945 = vadd.f32 %v309, %v3899
        %v3946 = vadd.f32 %v310, %v3904
        %v3947 = vadd.f32 %v311, %v3909
        %v3948 = vadd.f32 %v312, %v3914
        %v3949 = vadd.f32 %v313, %v3919
        %v3950 = vadd.f32 %v314, %v3924
        %v3951 = vadd.f32 %v315, %v3929
        %v3952 = vadd.f32 %v316, %v3934
        %3953 = vst [vmem:[%s300] sm:$0xff] %v3937
        %3954 = vst [vmem:[%s300 + $0x8] sm:$0xff] %v3938
        %3955 = vst [vmem:[%s300 + $0x10] sm:$0xff] %v3939
        %3956 = vst [vmem:[%s300 + $0x18] sm:$0xff] %v3940
        %3957 = vst [vmem:[%s300 + $0x20] sm:$0xff] %v3941
        %3958 = vst [vmem:[%s300 + $0x28] sm:$0xff] %v3942
        %3959 = vst [vmem:[%s300 + $0x30] sm:$0xff] %v3943
        %3960 = vst [vmem:[%s300 + $0x38] sm:$0xff] %v3944
        %3961 = vst [vmem:[%s300 + $0x40] sm:$0xff] %v3945
        %3962 = vst [vmem:[%s300 + $0x48] sm:$0xff] %v3946
        %3963 = vst [vmem:[%s300 + $0x50] sm:$0xff] %v3947
        %3964 = vst [vmem:[%s300 + $0x58] sm:$0xff] %v3948
        %3965 = vst [vmem:[%s300 + $0x60] sm:$0xff] %v3949
        %3966 = vst [vmem:[%s300 + $0x68] sm:$0xff] %v3950
        %3967 = vst [vmem:[%s300 + $0x70] sm:$0xff] %v3951
        %3968 = vst [vmem:[%s300 + $0x78] sm:$0xff] %v3952
        %p3969 = scmp.lt.s32.totalorder %s21, 1
        %s3970 = scalar_select %p3969, %s21, 1
        %s3971 = smul.addr %s3970, 16
        %s3972 = smul.addr %s3971, 8
        %s3973 = scalar_lea.vmem %s6, %s3972
        // Predicated region
        $region57: #{vit_block_forward.2} parent=43 // pred_check
          %p3974 = pneg %p170
        $region58: #{vit_block_forward.2} parent=43 // pred_check_branch
          %3976 = sbr.rel (%p3974) target = $region60
        $region59: #{vit_block_forward.2} parent=43 // pred_region
          _
        $region60: #{vit_block_forward.2} parent=43 // pred_fallthru
          _
      $region44: #{vit_block_forward.2} parent=5 // pred_fallthru
        _
      %p3977 = scmp.le.s32.totalorder 2, %s16
      // Predicated region
      $region61: #{vit_block_forward.2} parent=5 // pred_check
        %p3978 = pneg %p3977
      $region62: #{vit_block_forward.2} parent=5 // pred_check_branch
        %3980 = sbr.rel (%p3978) target = $region64
      $region63: #{vit_block_forward.2} parent=5 // pred_region
        %s3981 = ssub.s32 %s16, 2
        // Predicated region
        $region65: #{vit_block_forward.2} parent=63 // pred_check
          %p3982 = pneg %p176
        $region66: #{vit_block_forward.2} parent=63 // pred_check_branch
          %3984 = sbr.rel (%p3982) target = $region68
        $region67: #{vit_block_forward.2} parent=63 // pred_region
          %p3985 = scmp.lt.s32.totalorder %s22, 1
          %s3986 = scalar_select %p3985, %s22, 1
          %s3987 = smul.addr %s3986, 16
          %s3988 = smul.addr %s3987, 8
          %s3989 = scalar_lea.vmem %s6, %s3988
        $region68: #{vit_block_forward.2} parent=63 // pred_fallthru
          _
      $region64: #{vit_block_forward.2} parent=5 // pred_fallthru
        _
    $region6: #{vit_block_forward.2} parent=1 // loop_footer
      %s20 = sadd.s32 1, %s16
    $region7: #{vit_block_forward.2} parent=1 // loop_footer_branch
      %15 = sbr.rel target = $region3
    $region8: #{vit_block_forward.2} parent=1 // loop_exit
      _
    %3990 = vsyncpa [#allocation3], 1
    %s3991 = scalar_lea.sflag [#allocation3], 1
    %3992 = vsyncpa %s3991, 1
    %3993 = vsyncpa [#allocation5], 1

</llo_original>
